<compile_context>
chip_gen: v5e
topology: v5e:2x2
jax: 0.10.0
libtpu: 0.0.40
codegen_flags: <defaults>
</compile_context>

<pallas_src>
import functools

import numpy as np
import jax
import jax.numpy as jnp
from jax.experimental import pallas as pl
from jax.experimental.pallas import tpu as pltpu


# ---------------------------------------------------------------------------
# Kernel 1: fused encoder conv (3x3, ReLU) + three dilated 3x3 convs.
# The image is spatially padded by 4, flattened, and flat-padded by Wp+1, so
# every 3x3 tap (and every dilated tap) is a contiguous row-shifted 2-D slice.
# ---------------------------------------------------------------------------

def _encode_ms_kernel(xf_ref, mask_ref, wenc_ref, benc_ref, wdil_ref, bdil_ref,
                      o_ref, enc_ref, *, Wp, Np, Cf):
    bf16 = jnp.bfloat16
    pad2 = 3 * Wp + 3

    # ---- stage 1: encoder 3x3 conv (dilation 1) + bias + ReLU + valid mask
    acc = jnp.zeros((Np, Cf), jnp.float32)
    for t in range(9):
        ky, kx = t // 3, t % 3
        a = xf_ref[0, pl.ds(ky * Wp + kx, Np), :].astype(bf16)
        acc = acc + jnp.dot(a, wenc_ref[t], preferred_element_type=jnp.float32)
    enc = jnp.maximum(acc + benc_ref[...], 0.0) * mask_ref[...]

    # masked encoder features -> zero-bordered flat VMEM scratch (never to HBM)
    zero = jnp.zeros((pad2, Cf), enc_ref.dtype)
    enc_ref[pl.ds(0, pad2), :] = zero
    enc_ref[pl.ds(pad2 + Np, pad2), :] = zero
    enc_ref[pl.ds(pad2, Np), :] = enc

    # ---- stage 2: dilated 3x3 convs (d = 1, 2, 3), lane-concatenated output
    outs = []
    for j, d in enumerate((1, 2, 3)):
        accj = jnp.zeros((Np, Cf), jnp.float32)
        for t in range(9):
            ky, kx = t // 3, t % 3
            off = pad2 + (ky - 1) * d * Wp + (kx - 1) * d
            e = enc_ref[pl.ds(off, Np), :].astype(bf16)
            accj = accj + jnp.dot(e, wdil_ref[j, t],
                                  preferred_element_type=jnp.float32)
        outs.append((accj + bdil_ref[j:j + 1, :]).astype(o_ref.dtype))
    o_ref[0] = jnp.concatenate(outs, axis=-1)


def encode_multiscale(x, w_enc, b_enc, w_dil_list, b_dil_list):
    """x: (B, H, W, Cin) f32 -> (B, H, W, 3*Cf) bf16 features (dilations 1,2,3)."""
    B, H, W, Cin = x.shape
    Cf = w_enc.shape[0]
    P = 4                                   # 1 (encoder) + 3 (max dilation)
    Hp, Wp = H + 2 * P, W + 2 * P
    Np = Hp * Wp
    pad2 = 3 * Wp + 3

    xp = jnp.pad(x, ((0, 0), (P, P), (P, P), (0, 0))).reshape(B, Np, Cin)
    xf = jnp.pad(xp, ((0, 0), (Wp + 1, Wp + 1), (0, 0)))        # f32, tiny

    m2 = np.zeros((Hp, Wp), np.float32)
    m2[P:P + H, P:P + W] = 1.0
    mask = jnp.asarray(m2.reshape(Np, 1))

    w_enc9 = jnp.transpose(w_enc, (2, 3, 1, 0)).reshape(9, Cin, Cf).astype(jnp.bfloat16)
    w_dil = jnp.stack(
        [jnp.transpose(wd, (2, 3, 1, 0)).reshape(9, Cf, Cf) for wd in w_dil_list],
        axis=0).astype(jnp.bfloat16)                             # (3, 9, Cf, Cf)
    b_enc2 = b_enc.reshape(1, Cf).astype(jnp.float32)
    b_dil = jnp.stack(b_dil_list, axis=0).astype(jnp.float32)    # (3, Cf)

    out = pl.pallas_call(
        functools.partial(_encode_ms_kernel, Wp=Wp, Np=Np, Cf=Cf),
        out_shape=jax.ShapeDtypeStruct((B, Np, 3 * Cf), jnp.bfloat16),
        grid=(B,),
        in_specs=[
            pl.BlockSpec((1, Np + 2 * Wp + 2, Cin), lambda b: (b, 0, 0)),
            pl.BlockSpec((Np, 1), lambda b: (0, 0)),
            pl.BlockSpec((9, Cin, Cf), lambda b: (0, 0, 0)),
            pl.BlockSpec((1, Cf), lambda b: (0, 0)),
            pl.BlockSpec((3, 9, Cf, Cf), lambda b: (0, 0, 0, 0)),
            pl.BlockSpec((3, Cf), lambda b: (0, 0)),
        ],
        out_specs=pl.BlockSpec((1, Np, 3 * Cf), lambda b: (b, 0, 0)),
        scratch_shapes=[pltpu.VMEM((Np + 2 * pad2, Cf), jnp.float32)],
        compiler_params=pltpu.CompilerParams(dimension_semantics=("parallel",)),
    )(xf, mask, w_enc9, b_enc2, w_dil, b_dil)

    return out.reshape(B, Hp, Wp, 3 * Cf)[:, P:P + H, P:P + W, :]


# ---------------------------------------------------------------------------
# Kernel 2: fused imnet MLP (3 branches x 4 offsets) + softmax gate + combine.
# ---------------------------------------------------------------------------

def _mlp_combine_kernel(scales_ref, featg_ref, guide_ref, rel_ref,
                        w0f_ref, w0g_ref, w0r_ref, b0_ref,
                        w1_ref, b1_ref, w2_ref, b2_ref, o_ref, *, Cf, nb):
    bf16 = jnp.bfloat16
    TM = featg_ref.shape[2]
    guide = guide_ref[0]                       # (TM, 3Cf) bf16
    w0f = w0f_ref[...]
    w0g = w0g_ref[...]
    w0r = w0r_ref[...]                         # (2, D1) f32
    b0 = b0_ref[...]
    w1 = w1_ref[...]
    b1 = b1_ref[...]
    w2 = w2_ref[...]
    b2 = b2_ref[...]

    # rel-coord contribution to layer 0 (K=2 -> keep on the VPU, not the MXU)
    rel_terms = []
    for s in range(4):
        rel = rel_ref[s]                       # (TM, 2) f32
        rel_terms.append(rel[:, 0:1] * w0r[0:1, :] + rel[:, 1:2] * w0r[1:2, :])

    acc = jnp.zeros((TM, nb), jnp.float32)
    for q in range(3):
        # guide contribution shared by the 4 offsets of this branch
        gq = jnp.dot(guide[:, q * Cf:(q + 1) * Cf], w0g,
                     preferred_element_type=jnp.float32)
        bands, logits = [], []
        for s in range(4):
            fqs = featg_ref[0, s, :, q * Cf:(q + 1) * Cf]        # (TM, Cf) bf16
            h = jnp.dot(fqs, w0f, preferred_element_type=jnp.float32)
            h = jnp.maximum(h + gq + rel_terms[s] + b0, 0.0)
            h = jnp.dot(h.astype(bf16), w1, preferred_element_type=jnp.float32) + b1
            h = jnp.maximum(h, 0.0)
            y = jnp.dot(h.astype(bf16), w2, preferred_element_type=jnp.float32) + b2
            bands.append(y[:, :nb])
            logits.append(y[:, nb:nb + 1])
        m = jnp.maximum(jnp.maximum(logits[0], logits[1]),
                        jnp.maximum(logits[2], logits[3]))
        e = [jnp.exp(l - m) for l in logits]
        inv = pl.reciprocal(e[0] + e[1] + e[2] + e[3], approx=True)
        gate = jnp.zeros((TM, nb), jnp.float32)
        for s in range(4):
            gate = gate + bands[s] * (e[s] * inv)
        acc = acc + scales_ref[q] * gate
    # lane-dense store: point axis last (already NCHW order)
    o_ref[0] = jnp.transpose(acc)


def _pick_point_tile(n):
    for t in (512, 256, 128):
        if n % t == 0:
            return t, n
    return 128, ((n + 127) // 128) * 128


def fused_mlp_combine(featg, guide, rel, scales,
                      w0f, w0g, w0r, b0, w1, b1, w2, b2, *, Cf, nb):
    B, _, N, C3 = featg.shape
    D1 = w0f.shape[1]
    D2 = w1.shape[1]
    TM, Npad = _pick_point_tile(N)
    if Npad != N:
        featg = jnp.pad(featg, ((0, 0), (0, 0), (0, Npad - N), (0, 0)))
        guide = jnp.pad(guide, ((0, 0), (0, Npad - N), (0, 0)))
        rel = jnp.pad(rel, ((0, 0), (0, Npad - N), (0, 0)))
    bf16 = jnp.bfloat16

    out = pl.pallas_call(
        functools.partial(_mlp_combine_kernel, Cf=Cf, nb=nb),
        out_shape=jax.ShapeDtypeStruct((B, nb, Npad), jnp.float32),
        grid=(B, Npad // TM),
        in_specs=[
            pl.BlockSpec(memory_space=pltpu.MemorySpace.SMEM),          # scales (3,)
            pl.BlockSpec((1, 4, TM, C3), lambda b, n: (b, 0, n, 0)),    # gathered LR feat
            pl.BlockSpec((1, TM, C3), lambda b, n: (b, n, 0)),          # HR guide
            pl.BlockSpec((4, TM, 2), lambda b, n: (0, n, 0)),           # rel coords
            pl.BlockSpec((Cf, D1), lambda b, n: (0, 0)),                # W0 (feat rows)
            pl.BlockSpec((Cf, D1), lambda b, n: (0, 0)),                # W0 (guide rows)
            pl.BlockSpec((2, D1), lambda b, n: (0, 0)),                 # W0 (rel rows)
            pl.BlockSpec((1, D1), lambda b, n: (0, 0)),                 # b0
            pl.BlockSpec((D1, D2), lambda b, n: (0, 0)),                # W1
            pl.BlockSpec((1, D2), lambda b, n: (0, 0)),                 # b1
            pl.BlockSpec((D2, nb + 1), lambda b, n: (0, 0)),            # W2
            pl.BlockSpec((1, nb + 1), lambda b, n: (0, 0)),             # b2
        ],
        out_specs=pl.BlockSpec((1, nb, TM), lambda b, n: (b, 0, n)),
        compiler_params=pltpu.CompilerParams(
            dimension_semantics=("parallel", "parallel")),
    )(scales.astype(jnp.float32),
      featg.astype(bf16), guide.astype(bf16), rel.astype(jnp.float32),
      w0f.astype(bf16), w0g.astype(bf16), w0r.astype(jnp.float32),
      b0.reshape(1, D1).astype(jnp.float32),
      w1.astype(bf16), b1.reshape(1, D2).astype(jnp.float32),
      w2.astype(bf16), b2.reshape(1, nb + 1).astype(jnp.float32))
    return out[:, :, :N]


# ------------------------- query geometry (static, numpy) -------------------

def make_coord_np(shape):
    seqs = []
    for n in shape:
        r = 1.0 / n
        seqs.append(-1.0 + r + 2.0 * r * np.arange(n, dtype=np.float64))
    return np.stack(np.meshgrid(*seqs, indexing="ij"), axis=-1)


def _query_gather_static(h, w, H, W):
    """For each (vx, vy) offset: flat nearest index into (h, w), validity mask
    (grid_sample padding_mode='zeros'), and the scaled rel_coord."""
    coord = make_coord_np((H, W)).reshape(-1, 2)  # [:, 0]=y(row), [:, 1]=x(col)
    rx, ry = 1.0 / h, 1.0 / w
    out = []
    for vx in (-1, 1):
        for vy in (-1, 1):
            y = coord[:, 0] + vx * rx
            x = coord[:, 1] + vy * ry
            # align_corners=False unnormalize + nearest (round half-to-even,
            # matching torch's nearbyint)
            iy = np.round(((y + 1.0) * h - 1.0) / 2.0).astype(np.int64)
            ix = np.round(((x + 1.0) * w - 1.0) / 2.0).astype(np.int64)
            valid = ((iy >= 0) & (iy < h) & (ix >= 0) & (ix < w)).astype(np.float32)
            iyc = np.clip(iy, 0, h - 1)
            ixc = np.clip(ix, 0, w - 1)
            qc0 = (-1.0 + (2.0 * iyc + 1.0) / h) * valid   # q_coord (0 if OOB)
            qc1 = (-1.0 + (2.0 * ixc + 1.0) / w) * valid
            rel = np.stack([(coord[:, 0] - qc0) * h,
                            (coord[:, 1] - qc1) * w], axis=-1).astype(np.float32)
            out.append((iyc * w + ixc, valid, rel))
    return out


# ------------------------- full forward -------------------------------------

def amgsgan_forward(params, HSI, MSI):
    """HSI: (B, n_bands, h, w), MSI: (B, n_select_bands, H, W) — NCHW like torch."""
    nb = params["mlp_w2"].shape[1] - 1
    Cf = params["enc_hsi_w"].shape[0]
    hsi = jnp.transpose(HSI, (0, 2, 3, 1)).astype(jnp.float32)
    msi = jnp.transpose(MSI, (0, 2, 3, 1)).astype(jnp.float32)
    B, h, w, _ = hsi.shape
    _, H, W, _ = msi.shape
    N = H * W

    # fused encoder + multi-dilation feature extraction (one kernel / modality)
    hsi_ms = encode_multiscale(hsi, params["enc_hsi_w"], params["enc_hsi_b"],
                               [params["c3h_w"], params["c5h_w"], params["c7h_w"]],
                               [params["c3h_b"], params["c5h_b"], params["c7h_b"]])
    msi_ms = encode_multiscale(msi, params["enc_msi_w"], params["enc_msi_b"],
                               [params["c3m_w"], params["c5m_w"], params["c7m_w"]],
                               [params["c3m_b"], params["c5m_b"], params["c7m_b"]])

    # static nearest-neighbour sampling geometry (depends only on shapes)
    offsets = _query_gather_static(h, w, H, W)
    hsi_flat = hsi_ms.reshape(B, h * w, 3 * Cf)
    featg = jnp.stack(
        [jnp.take(hsi_flat, jnp.asarray(idx, jnp.int32), axis=1)
         * jnp.asarray(valid, jnp.bfloat16)[None, :, None]
         for idx, valid, _ in offsets], axis=1)                  # (B, 4, N, 3Cf)
    rel_all = jnp.asarray(np.stack([r for _, _, r in offsets], axis=0),
                          jnp.float32)                           # (4, N, 2)
    guide = msi_ms.reshape(B, N, 3 * Cf)                         # nearest @ HR centers

    scales = jnp.stack([params["alpha"], params["beta"], params["gamma"]])
    w0 = params["mlp_w0"]
    out = fused_mlp_combine(featg, guide, rel_all, scales,
                            w0[:Cf], w0[Cf:2 * Cf], w0[2 * Cf:],
                            params["mlp_b0"], params["mlp_w1"], params["mlp_b1"],
                            params["mlp_w2"], params["mlp_b2"], Cf=Cf, nb=nb)
    return out.reshape(B, nb, H, W), 0, 0, 0, 0, 0


# ------------------------- deterministic param init -------------------------

def init_params(key, n_bands, n_select_bands, feature_dim, mlp_dim):
    keys = jax.random.split(key, 12)

    def conv_init(k, cout, cin):
        kw, kb = jax.random.split(k)
        w = jax.random.normal(kw, (cout, cin, 3, 3), jnp.float32) / np.sqrt(9 * cin)
        b = 0.01 * jax.random.normal(kb, (cout,), jnp.float32)
        return w, b

    def lin_init(k, din, dout):
        kw, kb = jax.random.split(k)
        w = jax.random.normal(kw, (din, dout), jnp.float32) / np.sqrt(din)
        b = 0.01 * jax.random.normal(kb, (dout,), jnp.float32)
        return w, b

    p = {}
    p["enc_hsi_w"], p["enc_hsi_b"] = conv_init(keys[0], feature_dim, n_bands)
    p["enc_msi_w"], p["enc_msi_b"] = conv_init(keys[1], feature_dim, n_select_bands)
    p["c3h_w"], p["c3h_b"] = conv_init(keys[2], feature_dim, feature_dim)
    p["c5h_w"], p["c5h_b"] = conv_init(keys[3], feature_dim, feature_dim)
    p["c7h_w"], p["c7h_b"] = conv_init(keys[4], feature_dim, feature_dim)
    p["c3m_w"], p["c3m_b"] = conv_init(keys[5], feature_dim, feature_dim)
    p["c5m_w"], p["c5m_b"] = conv_init(keys[6], feature_dim, feature_dim)
    p["c7m_w"], p["c7m_b"] = conv_init(keys[7], feature_dim, feature_dim)
    imnet_in = 2 * feature_dim + 2
    dims = [imnet_in] + list(mlp_dim) + [n_bands + 1]
    p["mlp_w0"], p["mlp_b0"] = lin_init(keys[8], dims[0], dims[1])
    p["mlp_w1"], p["mlp_b1"] = lin_init(keys[9], dims[1], dims[2])
    p["mlp_w2"], p["mlp_b2"] = lin_init(keys[10], dims[2], dims[3])
    p["alpha"] = jnp.float32(1.0)
    p["beta"] = jnp.float32(1.0)
    p["gamma"] = jnp.float32(1.0)
    return p


if __name__ == "__main__":
    # small, module-consistent shapes
    n_bands, n_select_bands, feature_dim = 8, 4, 32
    scale_ratio = 2
    mlp_dim = [64, 32]
    Bb, h, w = 2, 8, 8
    H, W = h * scale_ratio, w * scale_ratio

    key = jax.random.PRNGKey(0)
    kp, kh, km = jax.random.split(key, 3)
    params = init_params(kp, n_bands, n_select_bands, feature_dim, mlp_dim)
    HSI = jax.random.normal(kh, (Bb, n_bands, h, w), jnp.float32)
    MSI = jax.random.normal(km, (Bb, n_select_bands, H, W), jnp.float32)

    out, *_ = amgsgan_forward(params, HSI, MSI)
    out = jax.block_until_ready(out)
    assert out.shape == (Bb, n_bands, H, W), out.shape
    assert bool(jnp.all(jnp.isfinite(out)))
    print("KERNEL_OK")
</pallas_src>

<mosaic_0001>
module attributes {stable_mosaic.version = 11 : i64} {
  func.func @_encode_ms_kernel(%arg0: i32, %arg1: memref<1x290x8xf32, #tpu.memory_space<vmem>>, %arg2: memref<256x1xf32, #tpu.memory_space<vmem>>, %arg3: memref<9x8x32xbf16, #tpu.memory_space<vmem>>, %arg4: memref<1x32xf32, #tpu.memory_space<vmem>>, %arg5: memref<3x9x32x32xbf16, #tpu.memory_space<vmem>>, %arg6: memref<3x32xf32, #tpu.memory_space<vmem>>, %arg7: memref<1x256x96xbf16, #tpu.memory_space<vmem>>, %arg8: memref<358x32xf32, #tpu.memory_space<vmem>>) attributes {dimension_semantics = [#tpu.dimension_semantics<parallel>], iteration_bounds = array<i64: 2>, scalar_prefetch = 0 : i64, scratch_operands = 1 : i64, tpu.core_type = #tpu.core_type<tc>, window_params = [{transform_indices = @transform_0, window_bounds = array<i64: 1, 290, 8>}, {pipeline_mode = #tpu.pipeline_mode<synchronous>, transform_indices = @transform_1, window_bounds = array<i64: 256, 1>}, {pipeline_mode = #tpu.pipeline_mode<synchronous>, transform_indices = @transform_2, window_bounds = array<i64: 9, 8, 32>}, {pipeline_mode = #tpu.pipeline_mode<synchronous>, transform_indices = @transform_3, window_bounds = array<i64: 1, 32>}, {pipeline_mode = #tpu.pipeline_mode<synchronous>, transform_indices = @transform_4, window_bounds = array<i64: 3, 9, 32, 32>}, {pipeline_mode = #tpu.pipeline_mode<synchronous>, transform_indices = @transform_5, window_bounds = array<i64: 3, 32>}, {transform_indices = @transform_6, window_bounds = array<i64: 1, 256, 96>}]} {
    %cst = arith.constant 0.000000e+00 : f32
    %0 = vector.broadcast %cst : f32 to vector<256x32xf32>
    %c0 = arith.constant 0 : index
    %c0_0 = arith.constant 0 : index
    %c0_1 = arith.constant 0 : index
    %1 = vector.load %arg1[%c0, %c0_0, %c0_1] : memref<1x290x8xf32, #tpu.memory_space<vmem>>, vector<1x256x8xf32>
    %2 = vector.shape_cast %1 : vector<1x256x8xf32> to vector<256x8xf32>
    %3 = arith.truncf %2 : vector<256x8xf32> to vector<256x8xbf16>
    %c0_2 = arith.constant 0 : index
    %c0_3 = arith.constant 0 : index
    %c0_4 = arith.constant 0 : index
    %4 = vector.load %arg3[%c0_2, %c0_3, %c0_4] : memref<9x8x32xbf16, #tpu.memory_space<vmem>>, vector<1x8x32xbf16>
    %5 = vector.shape_cast %4 : vector<1x8x32xbf16> to vector<8x32xbf16>
    %cst_5 = arith.constant dense<0.000000e+00> : vector<256x32xf32>
    %6 = tpu.matmul %3, %5, %cst_5 {dimension_numbers = #tpu.dot_dimension_numbers<[1], [0], [0], [1], [0, 0, 1, 1], [], []>} : vector<256x8xbf16>, vector<8x32xbf16>, vector<256x32xf32> -> vector<256x32xf32>
    %7 = arith.addf %0, %6 : vector<256x32xf32>
    %c0_6 = arith.constant 0 : index
    %c1 = arith.constant 1 : index
    %c0_7 = arith.constant 0 : index
    %8 = vector.load %arg1[%c0_6, %c1, %c0_7] : memref<1x290x8xf32, #tpu.memory_space<vmem>>, vector<1x256x8xf32>
    %9 = vector.shape_cast %8 : vector<1x256x8xf32> to vector<256x8xf32>
    %10 = arith.truncf %9 : vector<256x8xf32> to vector<256x8xbf16>
    %c1_8 = arith.constant 1 : index
    %c0_9 = arith.constant 0 : index
    %c0_10 = arith.constant 0 : index
    %11 = vector.load %arg3[%c1_8, %c0_9, %c0_10] : memref<9x8x32xbf16, #tpu.memory_space<vmem>>, vector<1x8x32xbf16>
    %12 = vector.shape_cast %11 : vector<1x8x32xbf16> to vector<8x32xbf16>
    %cst_11 = arith.constant dense<0.000000e+00> : vector<256x32xf32>
    %13 = tpu.matmul %10, %12, %cst_11 {dimension_numbers = #tpu.dot_dimension_numbers<[1], [0], [0], [1], [0, 0, 1, 1], [], []>} : vector<256x8xbf16>, vector<8x32xbf16>, vector<256x32xf32> -> vector<256x32xf32>
    %14 = arith.addf %7, %13 : vector<256x32xf32>
    %c0_12 = arith.constant 0 : index
    %c2 = arith.constant 2 : index
    %c0_13 = arith.constant 0 : index
    %15 = vector.load %arg1[%c0_12, %c2, %c0_13] : memref<1x290x8xf32, #tpu.memory_space<vmem>>, vector<1x256x8xf32>
    %16 = vector.shape_cast %15 : vector<1x256x8xf32> to vector<256x8xf32>
    %17 = arith.truncf %16 : vector<256x8xf32> to vector<256x8xbf16>
    %c2_14 = arith.constant 2 : index
    %c0_15 = arith.constant 0 : index
    %c0_16 = arith.constant 0 : index
    %18 = vector.load %arg3[%c2_14, %c0_15, %c0_16] : memref<9x8x32xbf16, #tpu.memory_space<vmem>>, vector<1x8x32xbf16>
    %19 = vector.shape_cast %18 : vector<1x8x32xbf16> to vector<8x32xbf16>
    %cst_17 = arith.constant dense<0.000000e+00> : vector<256x32xf32>
    %20 = tpu.matmul %17, %19, %cst_17 {dimension_numbers = #tpu.dot_dimension_numbers<[1], [0], [0], [1], [0, 0, 1, 1], [], []>} : vector<256x8xbf16>, vector<8x32xbf16>, vector<256x32xf32> -> vector<256x32xf32>
    %21 = arith.addf %14, %20 : vector<256x32xf32>
    %c0_18 = arith.constant 0 : index
    %c16 = arith.constant 16 : index
    %c0_19 = arith.constant 0 : index
    %22 = vector.load %arg1[%c0_18, %c16, %c0_19] : memref<1x290x8xf32, #tpu.memory_space<vmem>>, vector<1x256x8xf32>
    %23 = vector.shape_cast %22 : vector<1x256x8xf32> to vector<256x8xf32>
    %24 = arith.truncf %23 : vector<256x8xf32> to vector<256x8xbf16>
    %c3 = arith.constant 3 : index
    %c0_20 = arith.constant 0 : index
    %c0_21 = arith.constant 0 : index
    %25 = vector.load %arg3[%c3, %c0_20, %c0_21] : memref<9x8x32xbf16, #tpu.memory_space<vmem>>, vector<1x8x32xbf16>
    %26 = vector.shape_cast %25 : vector<1x8x32xbf16> to vector<8x32xbf16>
    %cst_22 = arith.constant dense<0.000000e+00> : vector<256x32xf32>
    %27 = tpu.matmul %24, %26, %cst_22 {dimension_numbers = #tpu.dot_dimension_numbers<[1], [0], [0], [1], [0, 0, 1, 1], [], []>} : vector<256x8xbf16>, vector<8x32xbf16>, vector<256x32xf32> -> vector<256x32xf32>
    %28 = arith.addf %21, %27 : vector<256x32xf32>
    %c0_23 = arith.constant 0 : index
    %c17 = arith.constant 17 : index
    %c0_24 = arith.constant 0 : index
    %29 = vector.load %arg1[%c0_23, %c17, %c0_24] : memref<1x290x8xf32, #tpu.memory_space<vmem>>, vector<1x256x8xf32>
    %30 = vector.shape_cast %29 : vector<1x256x8xf32> to vector<256x8xf32>
    %31 = arith.truncf %30 : vector<256x8xf32> to vector<256x8xbf16>
    %c4 = arith.constant 4 : index
    %c0_25 = arith.constant 0 : index
    %c0_26 = arith.constant 0 : index
    %32 = vector.load %arg3[%c4, %c0_25, %c0_26] : memref<9x8x32xbf16, #tpu.memory_space<vmem>>, vector<1x8x32xbf16>
    %33 = vector.shape_cast %32 : vector<1x8x32xbf16> to vector<8x32xbf16>
    %cst_27 = arith.constant dense<0.000000e+00> : vector<256x32xf32>
    %34 = tpu.matmul %31, %33, %cst_27 {dimension_numbers = #tpu.dot_dimension_numbers<[1], [0], [0], [1], [0, 0, 1, 1], [], []>} : vector<256x8xbf16>, vector<8x32xbf16>, vector<256x32xf32> -> vector<256x32xf32>
    %35 = arith.addf %28, %34 : vector<256x32xf32>
    %c0_28 = arith.constant 0 : index
    %c18 = arith.constant 18 : index
    %c0_29 = arith.constant 0 : index
    %36 = vector.load %arg1[%c0_28, %c18, %c0_29] : memref<1x290x8xf32, #tpu.memory_space<vmem>>, vector<1x256x8xf32>
    %37 = vector.shape_cast %36 : vector<1x256x8xf32> to vector<256x8xf32>
    %38 = arith.truncf %37 : vector<256x8xf32> to vector<256x8xbf16>
    %c5 = arith.constant 5 : index
    %c0_30 = arith.constant 0 : index
    %c0_31 = arith.constant 0 : index
    %39 = vector.load %arg3[%c5, %c0_30, %c0_31] : memref<9x8x32xbf16, #tpu.memory_space<vmem>>, vector<1x8x32xbf16>
    %40 = vector.shape_cast %39 : vector<1x8x32xbf16> to vector<8x32xbf16>
    %cst_32 = arith.constant dense<0.000000e+00> : vector<256x32xf32>
    %41 = tpu.matmul %38, %40, %cst_32 {dimension_numbers = #tpu.dot_dimension_numbers<[1], [0], [0], [1], [0, 0, 1, 1], [], []>} : vector<256x8xbf16>, vector<8x32xbf16>, vector<256x32xf32> -> vector<256x32xf32>
    %42 = arith.addf %35, %41 : vector<256x32xf32>
    %c0_33 = arith.constant 0 : index
    %c32 = arith.constant 32 : index
    %c0_34 = arith.constant 0 : index
    %43 = vector.load %arg1[%c0_33, %c32, %c0_34] : memref<1x290x8xf32, #tpu.memory_space<vmem>>, vector<1x256x8xf32>
    %44 = vector.shape_cast %43 : vector<1x256x8xf32> to vector<256x8xf32>
    %45 = arith.truncf %44 : vector<256x8xf32> to vector<256x8xbf16>
    %c6 = arith.constant 6 : index
    %c0_35 = arith.constant 0 : index
    %c0_36 = arith.constant 0 : index
    %46 = vector.load %arg3[%c6, %c0_35, %c0_36] : memref<9x8x32xbf16, #tpu.memory_space<vmem>>, vector<1x8x32xbf16>
    %47 = vector.shape_cast %46 : vector<1x8x32xbf16> to vector<8x32xbf16>
    %cst_37 = arith.constant dense<0.000000e+00> : vector<256x32xf32>
    %48 = tpu.matmul %45, %47, %cst_37 {dimension_numbers = #tpu.dot_dimension_numbers<[1], [0], [0], [1], [0, 0, 1, 1], [], []>} : vector<256x8xbf16>, vector<8x32xbf16>, vector<256x32xf32> -> vector<256x32xf32>
    %49 = arith.addf %42, %48 : vector<256x32xf32>
    %c0_38 = arith.constant 0 : index
    %c33 = arith.constant 33 : index
    %c0_39 = arith.constant 0 : index
    %50 = vector.load %arg1[%c0_38, %c33, %c0_39] : memref<1x290x8xf32, #tpu.memory_space<vmem>>, vector<1x256x8xf32>
    %51 = vector.shape_cast %50 : vector<1x256x8xf32> to vector<256x8xf32>
    %52 = arith.truncf %51 : vector<256x8xf32> to vector<256x8xbf16>
    %c7 = arith.constant 7 : index
    %c0_40 = arith.constant 0 : index
    %c0_41 = arith.constant 0 : index
    %53 = vector.load %arg3[%c7, %c0_40, %c0_41] : memref<9x8x32xbf16, #tpu.memory_space<vmem>>, vector<1x8x32xbf16>
    %54 = vector.shape_cast %53 : vector<1x8x32xbf16> to vector<8x32xbf16>
    %cst_42 = arith.constant dense<0.000000e+00> : vector<256x32xf32>
    %55 = tpu.matmul %52, %54, %cst_42 {dimension_numbers = #tpu.dot_dimension_numbers<[1], [0], [0], [1], [0, 0, 1, 1], [], []>} : vector<256x8xbf16>, vector<8x32xbf16>, vector<256x32xf32> -> vector<256x32xf32>
    %56 = arith.addf %49, %55 : vector<256x32xf32>
    %c0_43 = arith.constant 0 : index
    %c34 = arith.constant 34 : index
    %c0_44 = arith.constant 0 : index
    %57 = vector.load %arg1[%c0_43, %c34, %c0_44] : memref<1x290x8xf32, #tpu.memory_space<vmem>>, vector<1x256x8xf32>
    %58 = vector.shape_cast %57 : vector<1x256x8xf32> to vector<256x8xf32>
    %59 = arith.truncf %58 : vector<256x8xf32> to vector<256x8xbf16>
    %c8 = arith.constant 8 : index
    %c0_45 = arith.constant 0 : index
    %c0_46 = arith.constant 0 : index
    %60 = vector.load %arg3[%c8, %c0_45, %c0_46] : memref<9x8x32xbf16, #tpu.memory_space<vmem>>, vector<1x8x32xbf16>
    %61 = vector.shape_cast %60 : vector<1x8x32xbf16> to vector<8x32xbf16>
    %cst_47 = arith.constant dense<0.000000e+00> : vector<256x32xf32>
    %62 = tpu.matmul %59, %61, %cst_47 {dimension_numbers = #tpu.dot_dimension_numbers<[1], [0], [0], [1], [0, 0, 1, 1], [], []>} : vector<256x8xbf16>, vector<8x32xbf16>, vector<256x32xf32> -> vector<256x32xf32>
    %63 = arith.addf %56, %62 : vector<256x32xf32>
    %c0_48 = arith.constant 0 : index
    %c0_49 = arith.constant 0 : index
    %64 = vector.load %arg4[%c0_48, %c0_49] : memref<1x32xf32, #tpu.memory_space<vmem>>, vector<1x32xf32>
    %65 = vector.broadcast %64 : vector<1x32xf32> to vector<256x32xf32>
    %66 = arith.addf %63, %65 : vector<256x32xf32>
    %cst_50 = arith.constant 0.000000e+00 : f32
    %67 = vector.broadcast %cst_50 : f32 to vector<256x32xf32>
    %68 = arith.maximumf %66, %67 : vector<256x32xf32>
    %c0_51 = arith.constant 0 : index
    %c0_52 = arith.constant 0 : index
    %69 = vector.load %arg2[%c0_51, %c0_52] : memref<256x1xf32, #tpu.memory_space<vmem>>, vector<256x1xf32>
    %70 = vector.broadcast %69 : vector<256x1xf32> to vector<256x32xf32>
    %71 = arith.mulf %68, %70 : vector<256x32xf32>
    %cst_53 = arith.constant 0.000000e+00 : f32
    %72 = vector.broadcast %cst_53 : f32 to vector<51x32xf32>
    %c0_54 = arith.constant 0 : index
    %c0_55 = arith.constant 0 : index
    %73 = vector.load %arg8[%c0_54, %c0_55] : memref<358x32xf32, #tpu.memory_space<vmem>>, vector<51x32xf32>
    tpu.vector_store %arg8[%c0_54, %c0_55], %72 {strides = array<i32>} : memref<358x32xf32, #tpu.memory_space<vmem>>, vector<51x32xf32>,
    %c307 = arith.constant 307 : index
    %c0_56 = arith.constant 0 : index
    %74 = vector.load %arg8[%c307, %c0_56] : memref<358x32xf32, #tpu.memory_space<vmem>>, vector<51x32xf32>
    tpu.vector_store %arg8[%c307, %c0_56], %72 {strides = array<i32>} : memref<358x32xf32, #tpu.memory_space<vmem>>, vector<51x32xf32>,
    %c51 = arith.constant 51 : index
    %c0_57 = arith.constant 0 : index
    %75 = vector.load %arg8[%c51, %c0_57] : memref<358x32xf32, #tpu.memory_space<vmem>>, vector<256x32xf32>
    tpu.vector_store %arg8[%c51, %c0_57], %71 {strides = array<i32>} : memref<358x32xf32, #tpu.memory_space<vmem>>, vector<256x32xf32>,
    %cst_58 = arith.constant 0.000000e+00 : f32
    %76 = vector.broadcast %cst_58 : f32 to vector<256x32xf32>
    %c34_59 = arith.constant 34 : index
    %c0_60 = arith.constant 0 : index
    %77 = vector.load %arg8[%c34_59, %c0_60] : memref<358x32xf32, #tpu.memory_space<vmem>>, vector<256x32xf32>
    %78 = arith.truncf %77 : vector<256x32xf32> to vector<256x32xbf16>
    %c0_61 = arith.constant 0 : index
    %c0_62 = arith.constant 0 : index
    %c0_63 = arith.constant 0 : index
    %c0_64 = arith.constant 0 : index
    %79 = vector.load %arg5[%c0_61, %c0_62, %c0_63, %c0_64] : memref<3x9x32x32xbf16, #tpu.memory_space<vmem>>, vector<1x1x32x32xbf16>
    %80 = vector.shape_cast %79 : vector<1x1x32x32xbf16> to vector<32x32xbf16>
    %cst_65 = arith.constant dense<0.000000e+00> : vector<256x32xf32>
    %81 = tpu.matmul %78, %80, %cst_65 {dimension_numbers = #tpu.dot_dimension_numbers<[1], [0], [0], [1], [0, 0, 1, 1], [], []>} : vector<256x32xbf16>, vector<32x32xbf16>, vector<256x32xf32> -> vector<256x32xf32>
    %82 = arith.addf %76, %81 : vector<256x32xf32>
    %c35 = arith.constant 35 : index
    %c0_66 = arith.constant 0 : index
    %83 = vector.load %arg8[%c35, %c0_66] : memref<358x32xf32, #tpu.memory_space<vmem>>, vector<256x32xf32>
    %84 = arith.truncf %83 : vector<256x32xf32> to vector<256x32xbf16>
    %c0_67 = arith.constant 0 : index
    %c1_68 = arith.constant 1 : index
    %c0_69 = arith.constant 0 : index
    %c0_70 = arith.constant 0 : index
    %85 = vector.load %arg5[%c0_67, %c1_68, %c0_69, %c0_70] : memref<3x9x32x32xbf16, #tpu.memory_space<vmem>>, vector<1x1x32x32xbf16>
    %86 = vector.shape_cast %85 : vector<1x1x32x32xbf16> to vector<32x32xbf16>
    %cst_71 = arith.constant dense<0.000000e+00> : vector<256x32xf32>
    %87 = tpu.matmul %84, %86, %cst_71 {dimension_numbers = #tpu.dot_dimension_numbers<[1], [0], [0], [1], [0, 0, 1, 1], [], []>} : vector<256x32xbf16>, vector<32x32xbf16>, vector<256x32xf32> -> vector<256x32xf32>
    %88 = arith.addf %82, %87 : vector<256x32xf32>
    %c36 = arith.constant 36 : index
    %c0_72 = arith.constant 0 : index
    %89 = vector.load %arg8[%c36, %c0_72] : memref<358x32xf32, #tpu.memory_space<vmem>>, vector<256x32xf32>
    %90 = arith.truncf %89 : vector<256x32xf32> to vector<256x32xbf16>
    %c0_73 = arith.constant 0 : index
    %c2_74 = arith.constant 2 : index
    %c0_75 = arith.constant 0 : index
    %c0_76 = arith.constant 0 : index
    %91 = vector.load %arg5[%c0_73, %c2_74, %c0_75, %c0_76] : memref<3x9x32x32xbf16, #tpu.memory_space<vmem>>, vector<1x1x32x32xbf16>
    %92 = vector.shape_cast %91 : vector<1x1x32x32xbf16> to vector<32x32xbf16>
    %cst_77 = arith.constant dense<0.000000e+00> : vector<256x32xf32>
    %93 = tpu.matmul %90, %92, %cst_77 {dimension_numbers = #tpu.dot_dimension_numbers<[1], [0], [0], [1], [0, 0, 1, 1], [], []>} : vector<256x32xbf16>, vector<32x32xbf16>, vector<256x32xf32> -> vector<256x32xf32>
    %94 = arith.addf %88, %93 : vector<256x32xf32>
    %c50 = arith.constant 50 : index
    %c0_78 = arith.constant 0 : index
    %95 = vector.load %arg8[%c50, %c0_78] : memref<358x32xf32, #tpu.memory_space<vmem>>, vector<256x32xf32>
    %96 = arith.truncf %95 : vector<256x32xf32> to vector<256x32xbf16>
    %c0_79 = arith.constant 0 : index
    %c3_80 = arith.constant 3 : index
    %c0_81 = arith.constant 0 : index
    %c0_82 = arith.constant 0 : index
    %97 = vector.load %arg5[%c0_79, %c3_80, %c0_81, %c0_82] : memref<3x9x32x32xbf16, #tpu.memory_space<vmem>>, vector<1x1x32x32xbf16>
    %98 = vector.shape_cast %97 : vector<1x1x32x32xbf16> to vector<32x32xbf16>
    %cst_83 = arith.constant dense<0.000000e+00> : vector<256x32xf32>
    %99 = tpu.matmul %96, %98, %cst_83 {dimension_numbers = #tpu.dot_dimension_numbers<[1], [0], [0], [1], [0, 0, 1, 1], [], []>} : vector<256x32xbf16>, vector<32x32xbf16>, vector<256x32xf32> -> vector<256x32xf32>
    %100 = arith.addf %94, %99 : vector<256x32xf32>
    %c51_84 = arith.constant 51 : index
    %c0_85 = arith.constant 0 : index
    %101 = vector.load %arg8[%c51_84, %c0_85] : memref<358x32xf32, #tpu.memory_space<vmem>>, vector<256x32xf32>
    %102 = arith.truncf %101 : vector<256x32xf32> to vector<256x32xbf16>
    %c0_86 = arith.constant 0 : index
    %c4_87 = arith.constant 4 : index
    %c0_88 = arith.constant 0 : index
    %c0_89 = arith.constant 0 : index
    %103 = vector.load %arg5[%c0_86, %c4_87, %c0_88, %c0_89] : memref<3x9x32x32xbf16, #tpu.memory_space<vmem>>, vector<1x1x32x32xbf16>
    %104 = vector.shape_cast %103 : vector<1x1x32x32xbf16> to vector<32x32xbf16>
    %cst_90 = arith.constant dense<0.000000e+00> : vector<256x32xf32>
    %105 = tpu.matmul %102, %104, %cst_90 {dimension_numbers = #tpu.dot_dimension_numbers<[1], [0], [0], [1], [0, 0, 1, 1], [], []>} : vector<256x32xbf16>, vector<32x32xbf16>, vector<256x32xf32> -> vector<256x32xf32>
    %106 = arith.addf %100, %105 : vector<256x32xf32>
    %c52 = arith.constant 52 : index
    %c0_91 = arith.constant 0 : index
    %107 = vector.load %arg8[%c52, %c0_91] : memref<358x32xf32, #tpu.memory_space<vmem>>, vector<256x32xf32>
    %108 = arith.truncf %107 : vector<256x32xf32> to vector<256x32xbf16>
    %c0_92 = arith.constant 0 : index
    %c5_93 = arith.constant 5 : index
    %c0_94 = arith.constant 0 : index
    %c0_95 = arith.constant 0 : index
    %109 = vector.load %arg5[%c0_92, %c5_93, %c0_94, %c0_95] : memref<3x9x32x32xbf16, #tpu.memory_space<vmem>>, vector<1x1x32x32xbf16>
    %110 = vector.shape_cast %109 : vector<1x1x32x32xbf16> to vector<32x32xbf16>
    %cst_96 = arith.constant dense<0.000000e+00> : vector<256x32xf32>
    %111 = tpu.matmul %108, %110, %cst_96 {dimension_numbers = #tpu.dot_dimension_numbers<[1], [0], [0], [1], [0, 0, 1, 1], [], []>} : vector<256x32xbf16>, vector<32x32xbf16>, vector<256x32xf32> -> vector<256x32xf32>
    %112 = arith.addf %106, %111 : vector<256x32xf32>
    %c66 = arith.constant 66 : index
    %c0_97 = arith.constant 0 : index
    %113 = vector.load %arg8[%c66, %c0_97] : memref<358x32xf32, #tpu.memory_space<vmem>>, vector<256x32xf32>
    %114 = arith.truncf %113 : vector<256x32xf32> to vector<256x32xbf16>
    %c0_98 = arith.constant 0 : index
    %c6_99 = arith.constant 6 : index
    %c0_100 = arith.constant 0 : index
    %c0_101 = arith.constant 0 : index
    %115 = vector.load %arg5[%c0_98, %c6_99, %c0_100, %c0_101] : memref<3x9x32x32xbf16, #tpu.memory_space<vmem>>, vector<1x1x32x32xbf16>
    %116 = vector.shape_cast %115 : vector<1x1x32x32xbf16> to vector<32x32xbf16>
    %cst_102 = arith.constant dense<0.000000e+00> : vector<256x32xf32>
    %117 = tpu.matmul %114, %116, %cst_102 {dimension_numbers = #tpu.dot_dimension_numbers<[1], [0], [0], [1], [0, 0, 1, 1], [], []>} : vector<256x32xbf16>, vector<32x32xbf16>, vector<256x32xf32> -> vector<256x32xf32>
    %118 = arith.addf %112, %117 : vector<256x32xf32>
    %c67 = arith.constant 67 : index
    %c0_103 = arith.constant 0 : index
    %119 = vector.load %arg8[%c67, %c0_103] : memref<358x32xf32, #tpu.memory_space<vmem>>, vector<256x32xf32>
    %120 = arith.truncf %119 : vector<256x32xf32> to vector<256x32xbf16>
    %c0_104 = arith.constant 0 : index
    %c7_105 = arith.constant 7 : index
    %c0_106 = arith.constant 0 : index
    %c0_107 = arith.constant 0 : index
    %121 = vector.load %arg5[%c0_104, %c7_105, %c0_106, %c0_107] : memref<3x9x32x32xbf16, #tpu.memory_space<vmem>>, vector<1x1x32x32xbf16>
    %122 = vector.shape_cast %121 : vector<1x1x32x32xbf16> to vector<32x32xbf16>
    %cst_108 = arith.constant dense<0.000000e+00> : vector<256x32xf32>
    %123 = tpu.matmul %120, %122, %cst_108 {dimension_numbers = #tpu.dot_dimension_numbers<[1], [0], [0], [1], [0, 0, 1, 1], [], []>} : vector<256x32xbf16>, vector<32x32xbf16>, vector<256x32xf32> -> vector<256x32xf32>
    %124 = arith.addf %118, %123 : vector<256x32xf32>
    %c68 = arith.constant 68 : index
    %c0_109 = arith.constant 0 : index
    %125 = vector.load %arg8[%c68, %c0_109] : memref<358x32xf32, #tpu.memory_space<vmem>>, vector<256x32xf32>
    %126 = arith.truncf %125 : vector<256x32xf32> to vector<256x32xbf16>
    %c0_110 = arith.constant 0 : index
    %c8_111 = arith.constant 8 : index
    %c0_112 = arith.constant 0 : index
    %c0_113 = arith.constant 0 : index
    %127 = vector.load %arg5[%c0_110, %c8_111, %c0_112, %c0_113] : memref<3x9x32x32xbf16, #tpu.memory_space<vmem>>, vector<1x1x32x32xbf16>
    %128 = vector.shape_cast %127 : vector<1x1x32x32xbf16> to vector<32x32xbf16>
    %cst_114 = arith.constant dense<0.000000e+00> : vector<256x32xf32>
    %129 = tpu.matmul %126, %128, %cst_114 {dimension_numbers = #tpu.dot_dimension_numbers<[1], [0], [0], [1], [0, 0, 1, 1], [], []>} : vector<256x32xbf16>, vector<32x32xbf16>, vector<256x32xf32> -> vector<256x32xf32>
    %130 = arith.addf %124, %129 : vector<256x32xf32>
    %c0_115 = arith.constant 0 : index
    %c0_116 = arith.constant 0 : index
    %131 = vector.load %arg6[%c0_115, %c0_116] : memref<3x32xf32, #tpu.memory_space<vmem>>, vector<1x32xf32>
    %132 = vector.broadcast %131 : vector<1x32xf32> to vector<256x32xf32>
    %133 = arith.addf %130, %132 : vector<256x32xf32>
    %134 = arith.truncf %133 : vector<256x32xf32> to vector<256x32xbf16>
    %cst_117 = arith.constant 0.000000e+00 : f32
    %135 = vector.broadcast %cst_117 : f32 to vector<256x32xf32>
    %c17_118 = arith.constant 17 : index
    %c0_119 = arith.constant 0 : index
    %136 = vector.load %arg8[%c17_118, %c0_119] : memref<358x32xf32, #tpu.memory_space<vmem>>, vector<256x32xf32>
    %137 = arith.truncf %136 : vector<256x32xf32> to vector<256x32xbf16>
    %c1_120 = arith.constant 1 : index
    %c0_121 = arith.constant 0 : index
    %c0_122 = arith.constant 0 : index
    %c0_123 = arith.constant 0 : index
    %138 = vector.load %arg5[%c1_120, %c0_121, %c0_122, %c0_123] : memref<3x9x32x32xbf16, #tpu.memory_space<vmem>>, vector<1x1x32x32xbf16>
    %139 = vector.shape_cast %138 : vector<1x1x32x32xbf16> to vector<32x32xbf16>
    %cst_124 = arith.constant dense<0.000000e+00> : vector<256x32xf32>
    %140 = tpu.matmul %137, %139, %cst_124 {dimension_numbers = #tpu.dot_dimension_numbers<[1], [0], [0], [1], [0, 0, 1, 1], [], []>} : vector<256x32xbf16>, vector<32x32xbf16>, vector<256x32xf32> -> vector<256x32xf32>
    %141 = arith.addf %135, %140 : vector<256x32xf32>
    %c19 = arith.constant 19 : index
    %c0_125 = arith.constant 0 : index
    %142 = vector.load %arg8[%c19, %c0_125] : memref<358x32xf32, #tpu.memory_space<vmem>>, vector<256x32xf32>
    %143 = arith.truncf %142 : vector<256x32xf32> to vector<256x32xbf16>
    %c1_126 = arith.constant 1 : index
    %c1_127 = arith.constant 1 : index
    %c0_128 = arith.constant 0 : index
    %c0_129 = arith.constant 0 : index
    %144 = vector.load %arg5[%c1_126, %c1_127, %c0_128, %c0_129] : memref<3x9x32x32xbf16, #tpu.memory_space<vmem>>, vector<1x1x32x32xbf16>
    %145 = vector.shape_cast %144 : vector<1x1x32x32xbf16> to vector<32x32xbf16>
    %cst_130 = arith.constant dense<0.000000e+00> : vector<256x32xf32>
    %146 = tpu.matmul %143, %145, %cst_130 {dimension_numbers = #tpu.dot_dimension_numbers<[1], [0], [0], [1], [0, 0, 1, 1], [], []>} : vector<256x32xbf16>, vector<32x32xbf16>, vector<256x32xf32> -> vector<256x32xf32>
    %147 = arith.addf %141, %146 : vector<256x32xf32>
    %c21 = arith.constant 21 : index
    %c0_131 = arith.constant 0 : index
    %148 = vector.load %arg8[%c21, %c0_131] : memref<358x32xf32, #tpu.memory_space<vmem>>, vector<256x32xf32>
    %149 = arith.truncf %148 : vector<256x32xf32> to vector<256x32xbf16>
    %c1_132 = arith.constant 1 : index
    %c2_133 = arith.constant 2 : index
    %c0_134 = arith.constant 0 : index
    %c0_135 = arith.constant 0 : index
    %150 = vector.load %arg5[%c1_132, %c2_133, %c0_134, %c0_135] : memref<3x9x32x32xbf16, #tpu.memory_space<vmem>>, vector<1x1x32x32xbf16>
    %151 = vector.shape_cast %150 : vector<1x1x32x32xbf16> to vector<32x32xbf16>
    %cst_136 = arith.constant dense<0.000000e+00> : vector<256x32xf32>
    %152 = tpu.matmul %149, %151, %cst_136 {dimension_numbers = #tpu.dot_dimension_numbers<[1], [0], [0], [1], [0, 0, 1, 1], [], []>} : vector<256x32xbf16>, vector<32x32xbf16>, vector<256x32xf32> -> vector<256x32xf32>
    %153 = arith.addf %147, %152 : vector<256x32xf32>
    %c49 = arith.constant 49 : index
    %c0_137 = arith.constant 0 : index
    %154 = vector.load %arg8[%c49, %c0_137] : memref<358x32xf32, #tpu.memory_space<vmem>>, vector<256x32xf32>
    %155 = arith.truncf %154 : vector<256x32xf32> to vector<256x32xbf16>
    %c1_138 = arith.constant 1 : index
    %c3_139 = arith.constant 3 : index
    %c0_140 = arith.constant 0 : index
    %c0_141 = arith.constant 0 : index
    %156 = vector.load %arg5[%c1_138, %c3_139, %c0_140, %c0_141] : memref<3x9x32x32xbf16, #tpu.memory_space<vmem>>, vector<1x1x32x32xbf16>
    %157 = vector.shape_cast %156 : vector<1x1x32x32xbf16> to vector<32x32xbf16>
    %cst_142 = arith.constant dense<0.000000e+00> : vector<256x32xf32>
    %158 = tpu.matmul %155, %157, %cst_142 {dimension_numbers = #tpu.dot_dimension_numbers<[1], [0], [0], [1], [0, 0, 1, 1], [], []>} : vector<256x32xbf16>, vector<32x32xbf16>, vector<256x32xf32> -> vector<256x32xf32>
    %159 = arith.addf %153, %158 : vector<256x32xf32>
    %c51_143 = arith.constant 51 : index
    %c0_144 = arith.constant 0 : index
    %160 = vector.load %arg8[%c51_143, %c0_144] : memref<358x32xf32, #tpu.memory_space<vmem>>, vector<256x32xf32>
    %161 = arith.truncf %160 : vector<256x32xf32> to vector<256x32xbf16>
    %c1_145 = arith.constant 1 : index
    %c4_146 = arith.constant 4 : index
    %c0_147 = arith.constant 0 : index
    %c0_148 = arith.constant 0 : index
    %162 = vector.load %arg5[%c1_145, %c4_146, %c0_147, %c0_148] : memref<3x9x32x32xbf16, #tpu.memory_space<vmem>>, vector<1x1x32x32xbf16>
    %163 = vector.shape_cast %162 : vector<1x1x32x32xbf16> to vector<32x32xbf16>
    %cst_149 = arith.constant dense<0.000000e+00> : vector<256x32xf32>
    %164 = tpu.matmul %161, %163, %cst_149 {dimension_numbers = #tpu.dot_dimension_numbers<[1], [0], [0], [1], [0, 0, 1, 1], [], []>} : vector<256x32xbf16>, vector<32x32xbf16>, vector<256x32xf32> -> vector<256x32xf32>
    %165 = arith.addf %159, %164 : vector<256x32xf32>
    %c53 = arith.constant 53 : index
    %c0_150 = arith.constant 0 : index
    %166 = vector.load %arg8[%c53, %c0_150] : memref<358x32xf32, #tpu.memory_space<vmem>>, vector<256x32xf32>
    %167 = arith.truncf %166 : vector<256x32xf32> to vector<256x32xbf16>
    %c1_151 = arith.constant 1 : index
    %c5_152 = arith.constant 5 : index
    %c0_153 = arith.constant 0 : index
    %c0_154 = arith.constant 0 : index
    %168 = vector.load %arg5[%c1_151, %c5_152, %c0_153, %c0_154] : memref<3x9x32x32xbf16, #tpu.memory_space<vmem>>, vector<1x1x32x32xbf16>
    %169 = vector.shape_cast %168 : vector<1x1x32x32xbf16> to vector<32x32xbf16>
    %cst_155 = arith.constant dense<0.000000e+00> : vector<256x32xf32>
    %170 = tpu.matmul %167, %169, %cst_155 {dimension_numbers = #tpu.dot_dimension_numbers<[1], [0], [0], [1], [0, 0, 1, 1], [], []>} : vector<256x32xbf16>, vector<32x32xbf16>, vector<256x32xf32> -> vector<256x32xf32>
    %171 = arith.addf %165, %170 : vector<256x32xf32>
    %c81 = arith.constant 81 : index
    %c0_156 = arith.constant 0 : index
    %172 = vector.load %arg8[%c81, %c0_156] : memref<358x32xf32, #tpu.memory_space<vmem>>, vector<256x32xf32>
    %173 = arith.truncf %172 : vector<256x32xf32> to vector<256x32xbf16>
    %c1_157 = arith.constant 1 : index
    %c6_158 = arith.constant 6 : index
    %c0_159 = arith.constant 0 : index
    %c0_160 = arith.constant 0 : index
    %174 = vector.load %arg5[%c1_157, %c6_158, %c0_159, %c0_160] : memref<3x9x32x32xbf16, #tpu.memory_space<vmem>>, vector<1x1x32x32xbf16>
    %175 = vector.shape_cast %174 : vector<1x1x32x32xbf16> to vector<32x32xbf16>
    %cst_161 = arith.constant dense<0.000000e+00> : vector<256x32xf32>
    %176 = tpu.matmul %173, %175, %cst_161 {dimension_numbers = #tpu.dot_dimension_numbers<[1], [0], [0], [1], [0, 0, 1, 1], [], []>} : vector<256x32xbf16>, vector<32x32xbf16>, vector<256x32xf32> -> vector<256x32xf32>
    %177 = arith.addf %171, %176 : vector<256x32xf32>
    %c83 = arith.constant 83 : index
    %c0_162 = arith.constant 0 : index
    %178 = vector.load %arg8[%c83, %c0_162] : memref<358x32xf32, #tpu.memory_space<vmem>>, vector<256x32xf32>
    %179 = arith.truncf %178 : vector<256x32xf32> to vector<256x32xbf16>
    %c1_163 = arith.constant 1 : index
    %c7_164 = arith.constant 7 : index
    %c0_165 = arith.constant 0 : index
    %c0_166 = arith.constant 0 : index
    %180 = vector.load %arg5[%c1_163, %c7_164, %c0_165, %c0_166] : memref<3x9x32x32xbf16, #tpu.memory_space<vmem>>, vector<1x1x32x32xbf16>
    %181 = vector.shape_cast %180 : vector<1x1x32x32xbf16> to vector<32x32xbf16>
    %cst_167 = arith.constant dense<0.000000e+00> : vector<256x32xf32>
    %182 = tpu.matmul %179, %181, %cst_167 {dimension_numbers = #tpu.dot_dimension_numbers<[1], [0], [0], [1], [0, 0, 1, 1], [], []>} : vector<256x32xbf16>, vector<32x32xbf16>, vector<256x32xf32> -> vector<256x32xf32>
    %183 = arith.addf %177, %182 : vector<256x32xf32>
    %c85 = arith.constant 85 : index
    %c0_168 = arith.constant 0 : index
    %184 = vector.load %arg8[%c85, %c0_168] : memref<358x32xf32, #tpu.memory_space<vmem>>, vector<256x32xf32>
    %185 = arith.truncf %184 : vector<256x32xf32> to vector<256x32xbf16>
    %c1_169 = arith.constant 1 : index
    %c8_170 = arith.constant 8 : index
    %c0_171 = arith.constant 0 : index
    %c0_172 = arith.constant 0 : index
    %186 = vector.load %arg5[%c1_169, %c8_170, %c0_171, %c0_172] : memref<3x9x32x32xbf16, #tpu.memory_space<vmem>>, vector<1x1x32x32xbf16>
    %187 = vector.shape_cast %186 : vector<1x1x32x32xbf16> to vector<32x32xbf16>
    %cst_173 = arith.constant dense<0.000000e+00> : vector<256x32xf32>
    %188 = tpu.matmul %185, %187, %cst_173 {dimension_numbers = #tpu.dot_dimension_numbers<[1], [0], [0], [1], [0, 0, 1, 1], [], []>} : vector<256x32xbf16>, vector<32x32xbf16>, vector<256x32xf32> -> vector<256x32xf32>
    %189 = arith.addf %183, %188 : vector<256x32xf32>
    %c1_174 = arith.constant 1 : index
    %c0_175 = arith.constant 0 : index
    %190 = vector.load %arg6[%c1_174, %c0_175] : memref<3x32xf32, #tpu.memory_space<vmem>>, vector<1x32xf32>
    %191 = vector.broadcast %190 : vector<1x32xf32> to vector<256x32xf32>
    %192 = arith.addf %189, %191 : vector<256x32xf32>
    %193 = arith.truncf %192 : vector<256x32xf32> to vector<256x32xbf16>
    %cst_176 = arith.constant 0.000000e+00 : f32
    %194 = vector.broadcast %cst_176 : f32 to vector<256x32xf32>
    %c0_177 = arith.constant 0 : index
    %c0_178 = arith.constant 0 : index
    %195 = vector.load %arg8[%c0_177, %c0_178] : memref<358x32xf32, #tpu.memory_space<vmem>>, vector<256x32xf32>
    %196 = arith.truncf %195 : vector<256x32xf32> to vector<256x32xbf16>
    %c2_179 = arith.constant 2 : index
    %c0_180 = arith.constant 0 : index
    %c0_181 = arith.constant 0 : index
    %c0_182 = arith.constant 0 : index
    %197 = vector.load %arg5[%c2_179, %c0_180, %c0_181, %c0_182] : memref<3x9x32x32xbf16, #tpu.memory_space<vmem>>, vector<1x1x32x32xbf16>
    %198 = vector.shape_cast %197 : vector<1x1x32x32xbf16> to vector<32x32xbf16>
    %cst_183 = arith.constant dense<0.000000e+00> : vector<256x32xf32>
    %199 = tpu.matmul %196, %198, %cst_183 {dimension_numbers = #tpu.dot_dimension_numbers<[1], [0], [0], [1], [0, 0, 1, 1], [], []>} : vector<256x32xbf16>, vector<32x32xbf16>, vector<256x32xf32> -> vector<256x32xf32>
    %200 = arith.addf %194, %199 : vector<256x32xf32>
    %c3_184 = arith.constant 3 : index
    %c0_185 = arith.constant 0 : index
    %201 = vector.load %arg8[%c3_184, %c0_185] : memref<358x32xf32, #tpu.memory_space<vmem>>, vector<256x32xf32>
    %202 = arith.truncf %201 : vector<256x32xf32> to vector<256x32xbf16>
    %c2_186 = arith.constant 2 : index
    %c1_187 = arith.constant 1 : index
    %c0_188 = arith.constant 0 : index
    %c0_189 = arith.constant 0 : index
    %203 = vector.load %arg5[%c2_186, %c1_187, %c0_188, %c0_189] : memref<3x9x32x32xbf16, #tpu.memory_space<vmem>>, vector<1x1x32x32xbf16>
    %204 = vector.shape_cast %203 : vector<1x1x32x32xbf16> to vector<32x32xbf16>
    %cst_190 = arith.constant dense<0.000000e+00> : vector<256x32xf32>
    %205 = tpu.matmul %202, %204, %cst_190 {dimension_numbers = #tpu.dot_dimension_numbers<[1], [0], [0], [1], [0, 0, 1, 1], [], []>} : vector<256x32xbf16>, vector<32x32xbf16>, vector<256x32xf32> -> vector<256x32xf32>
    %206 = arith.addf %200, %205 : vector<256x32xf32>
    %c6_191 = arith.constant 6 : index
    %c0_192 = arith.constant 0 : index
    %207 = vector.load %arg8[%c6_191, %c0_192] : memref<358x32xf32, #tpu.memory_space<vmem>>, vector<256x32xf32>
    %208 = arith.truncf %207 : vector<256x32xf32> to vector<256x32xbf16>
    %c2_193 = arith.constant 2 : index
    %c2_194 = arith.constant 2 : index
    %c0_195 = arith.constant 0 : index
    %c0_196 = arith.constant 0 : index
    %209 = vector.load %arg5[%c2_193, %c2_194, %c0_195, %c0_196] : memref<3x9x32x32xbf16, #tpu.memory_space<vmem>>, vector<1x1x32x32xbf16>
    %210 = vector.shape_cast %209 : vector<1x1x32x32xbf16> to vector<32x32xbf16>
    %cst_197 = arith.constant dense<0.000000e+00> : vector<256x32xf32>
    %211 = tpu.matmul %208, %210, %cst_197 {dimension_numbers = #tpu.dot_dimension_numbers<[1], [0], [0], [1], [0, 0, 1, 1], [], []>} : vector<256x32xbf16>, vector<32x32xbf16>, vector<256x32xf32> -> vector<256x32xf32>
    %212 = arith.addf %206, %211 : vector<256x32xf32>
    %c48 = arith.constant 48 : index
    %c0_198 = arith.constant 0 : index
    %213 = vector.load %arg8[%c48, %c0_198] : memref<358x32xf32, #tpu.memory_space<vmem>>, vector<256x32xf32>
    %214 = arith.truncf %213 : vector<256x32xf32> to vector<256x32xbf16>
    %c2_199 = arith.constant 2 : index
    %c3_200 = arith.constant 3 : index
    %c0_201 = arith.constant 0 : index
    %c0_202 = arith.constant 0 : index
    %215 = vector.load %arg5[%c2_199, %c3_200, %c0_201, %c0_202] : memref<3x9x32x32xbf16, #tpu.memory_space<vmem>>, vector<1x1x32x32xbf16>
    %216 = vector.shape_cast %215 : vector<1x1x32x32xbf16> to vector<32x32xbf16>
    %cst_203 = arith.constant dense<0.000000e+00> : vector<256x32xf32>
    %217 = tpu.matmul %214, %216, %cst_203 {dimension_numbers = #tpu.dot_dimension_numbers<[1], [0], [0], [1], [0, 0, 1, 1], [], []>} : vector<256x32xbf16>, vector<32x32xbf16>, vector<256x32xf32> -> vector<256x32xf32>
    %218 = arith.addf %212, %217 : vector<256x32xf32>
    %c51_204 = arith.constant 51 : index
    %c0_205 = arith.constant 0 : index
    %219 = vector.load %arg8[%c51_204, %c0_205] : memref<358x32xf32, #tpu.memory_space<vmem>>, vector<256x32xf32>
    %220 = arith.truncf %219 : vector<256x32xf32> to vector<256x32xbf16>
    %c2_206 = arith.constant 2 : index
    %c4_207 = arith.constant 4 : index
    %c0_208 = arith.constant 0 : index
    %c0_209 = arith.constant 0 : index
    %221 = vector.load %arg5[%c2_206, %c4_207, %c0_208, %c0_209] : memref<3x9x32x32xbf16, #tpu.memory_space<vmem>>, vector<1x1x32x32xbf16>
    %222 = vector.shape_cast %221 : vector<1x1x32x32xbf16> to vector<32x32xbf16>
    %cst_210 = arith.constant dense<0.000000e+00> : vector<256x32xf32>
    %223 = tpu.matmul %220, %222, %cst_210 {dimension_numbers = #tpu.dot_dimension_numbers<[1], [0], [0], [1], [0, 0, 1, 1], [], []>} : vector<256x32xbf16>, vector<32x32xbf16>, vector<256x32xf32> -> vector<256x32xf32>
    %224 = arith.addf %218, %223 : vector<256x32xf32>
    %c54 = arith.constant 54 : index
    %c0_211 = arith.constant 0 : index
    %225 = vector.load %arg8[%c54, %c0_211] : memref<358x32xf32, #tpu.memory_space<vmem>>, vector<256x32xf32>
    %226 = arith.truncf %225 : vector<256x32xf32> to vector<256x32xbf16>
    %c2_212 = arith.constant 2 : index
    %c5_213 = arith.constant 5 : index
    %c0_214 = arith.constant 0 : index
    %c0_215 = arith.constant 0 : index
    %227 = vector.load %arg5[%c2_212, %c5_213, %c0_214, %c0_215] : memref<3x9x32x32xbf16, #tpu.memory_space<vmem>>, vector<1x1x32x32xbf16>
    %228 = vector.shape_cast %227 : vector<1x1x32x32xbf16> to vector<32x32xbf16>
    %cst_216 = arith.constant dense<0.000000e+00> : vector<256x32xf32>
    %229 = tpu.matmul %226, %228, %cst_216 {dimension_numbers = #tpu.dot_dimension_numbers<[1], [0], [0], [1], [0, 0, 1, 1], [], []>} : vector<256x32xbf16>, vector<32x32xbf16>, vector<256x32xf32> -> vector<256x32xf32>
    %230 = arith.addf %224, %229 : vector<256x32xf32>
    %c96 = arith.constant 96 : index
    %c0_217 = arith.constant 0 : index
    %231 = vector.load %arg8[%c96, %c0_217] : memref<358x32xf32, #tpu.memory_space<vmem>>, vector<256x32xf32>
    %232 = arith.truncf %231 : vector<256x32xf32> to vector<256x32xbf16>
    %c2_218 = arith.constant 2 : index
    %c6_219 = arith.constant 6 : index
    %c0_220 = arith.constant 0 : index
    %c0_221 = arith.constant 0 : index
    %233 = vector.load %arg5[%c2_218, %c6_219, %c0_220, %c0_221] : memref<3x9x32x32xbf16, #tpu.memory_space<vmem>>, vector<1x1x32x32xbf16>
    %234 = vector.shape_cast %233 : vector<1x1x32x32xbf16> to vector<32x32xbf16>
    %cst_222 = arith.constant dense<0.000000e+00> : vector<256x32xf32>
    %235 = tpu.matmul %232, %234, %cst_222 {dimension_numbers = #tpu.dot_dimension_numbers<[1], [0], [0], [1], [0, 0, 1, 1], [], []>} : vector<256x32xbf16>, vector<32x32xbf16>, vector<256x32xf32> -> vector<256x32xf32>
    %236 = arith.addf %230, %235 : vector<256x32xf32>
    %c99 = arith.constant 99 : index
    %c0_223 = arith.constant 0 : index
    %237 = vector.load %arg8[%c99, %c0_223] : memref<358x32xf32, #tpu.memory_space<vmem>>, vector<256x32xf32>
    %238 = arith.truncf %237 : vector<256x32xf32> to vector<256x32xbf16>
    %c2_224 = arith.constant 2 : index
    %c7_225 = arith.constant 7 : index
    %c0_226 = arith.constant 0 : index
    %c0_227 = arith.constant 0 : index
    %239 = vector.load %arg5[%c2_224, %c7_225, %c0_226, %c0_227] : memref<3x9x32x32xbf16, #tpu.memory_space<vmem>>, vector<1x1x32x32xbf16>
    %240 = vector.shape_cast %239 : vector<1x1x32x32xbf16> to vector<32x32xbf16>
    %cst_228 = arith.constant dense<0.000000e+00> : vector<256x32xf32>
    %241 = tpu.matmul %238, %240, %cst_228 {dimension_numbers = #tpu.dot_dimension_numbers<[1], [0], [0], [1], [0, 0, 1, 1], [], []>} : vector<256x32xbf16>, vector<32x32xbf16>, vector<256x32xf32> -> vector<256x32xf32>
    %242 = arith.addf %236, %241 : vector<256x32xf32>
    %c102 = arith.constant 102 : index
    %c0_229 = arith.constant 0 : index
    %243 = vector.load %arg8[%c102, %c0_229] : memref<358x32xf32, #tpu.memory_space<vmem>>, vector<256x32xf32>
    %244 = arith.truncf %243 : vector<256x32xf32> to vector<256x32xbf16>
    %c2_230 = arith.constant 2 : index
    %c8_231 = arith.constant 8 : index
    %c0_232 = arith.constant 0 : index
    %c0_233 = arith.constant 0 : index
    %245 = vector.load %arg5[%c2_230, %c8_231, %c0_232, %c0_233] : memref<3x9x32x32xbf16, #tpu.memory_space<vmem>>, vector<1x1x32x32xbf16>
    %246 = vector.shape_cast %245 : vector<1x1x32x32xbf16> to vector<32x32xbf16>
    %cst_234 = arith.constant dense<0.000000e+00> : vector<256x32xf32>
    %247 = tpu.matmul %244, %246, %cst_234 {dimension_numbers = #tpu.dot_dimension_numbers<[1], [0], [0], [1], [0, 0, 1, 1], [], []>} : vector<256x32xbf16>, vector<32x32xbf16>, vector<256x32xf32> -> vector<256x32xf32>
    %248 = arith.addf %242, %247 : vector<256x32xf32>
    %c2_235 = arith.constant 2 : index
    %c0_236 = arith.constant 0 : index
    %249 = vector.load %arg6[%c2_235, %c0_236] : memref<3x32xf32, #tpu.memory_space<vmem>>, vector<1x32xf32>
    %250 = vector.broadcast %249 : vector<1x32xf32> to vector<256x32xf32>
    %251 = arith.addf %248, %250 : vector<256x32xf32>
    %252 = arith.truncf %251 : vector<256x32xf32> to vector<256x32xbf16>
    %253 = tpu.concatenate %134, %193, %252 in 1 : vector<256x32xbf16>, vector<256x32xbf16>, vector<256x32xbf16> -> vector<256x96xbf16>
    %c0_237 = arith.constant 0 : index
    %c0_238 = arith.constant 0 : index
    %c0_239 = arith.constant 0 : index
    %254 = vector.load %arg7[%c0_237, %c0_238, %c0_239] : memref<1x256x96xbf16, #tpu.memory_space<vmem>>, vector<1x256x96xbf16>
    %255 = vector.shape_cast %254 : vector<1x256x96xbf16> to vector<256x96xbf16>
    %256 = vector.shape_cast %253 : vector<256x96xbf16> to vector<1x256x96xbf16>
    tpu.vector_store %arg7[%c0_237, %c0_238, %c0_239], %256 {strides = array<i32>} : memref<1x256x96xbf16, #tpu.memory_space<vmem>>, vector<1x256x96xbf16>,
    return
  }
  func.func @transform_0(%arg0: i32) -> (i32, i32, i32) {
    %c0_i32 = arith.constant 0 : i32
    %c0_i32_0 = arith.constant 0 : i32
    %c0_i32_1 = arith.constant 0 : i32
    return %arg0, %c0_i32, %c0_i32_0 : i32, i32, i32
  }
  func.func @transform_1(%arg0: i32) -> (i32, i32) {
    %c0_i32 = arith.constant 0 : i32
    %c0_i32_0 = arith.constant 0 : i32
    %c0_i32_1 = arith.constant 0 : i32
    return %c0_i32, %c0_i32_0 : i32, i32
  }
  func.func @transform_2(%arg0: i32) -> (i32, i32, i32) {
    %c0_i32 = arith.constant 0 : i32
    %c0_i32_0 = arith.constant 0 : i32
    %c0_i32_1 = arith.constant 0 : i32
    %c0_i32_2 = arith.constant 0 : i32
    return %c0_i32, %c0_i32_0, %c0_i32_1 : i32, i32, i32
  }
  func.func @transform_3(%arg0: i32) -> (i32, i32) {
    %c0_i32 = arith.constant 0 : i32
    %c0_i32_0 = arith.constant 0 : i32
    %c0_i32_1 = arith.constant 0 : i32
    return %c0_i32, %c0_i32_0 : i32, i32
  }
  func.func @transform_4(%arg0: i32) -> (i32, i32, i32, i32) {
    %c0_i32 = arith.constant 0 : i32
    %c0_i32_0 = arith.constant 0 : i32
    %c0_i32_1 = arith.constant 0 : i32
    %c0_i32_2 = arith.constant 0 : i32
    %c0_i32_3 = arith.constant 0 : i32
    return %c0_i32, %c0_i32_0, %c0_i32_1, %c0_i32_2 : i32, i32, i32, i32
  }
  func.func @transform_5(%arg0: i32) -> (i32, i32) {
    %c0_i32 = arith.constant 0 : i32
    %c0_i32_0 = arith.constant 0 : i32
    %c0_i32_1 = arith.constant 0 : i32
    return %c0_i32, %c0_i32_0 : i32, i32
  }
  func.func @transform_6(%arg0: i32) -> (i32, i32, i32) {
    %c0_i32 = arith.constant 0 : i32
    %c0_i32_0 = arith.constant 0 : i32
    %c0_i32_1 = arith.constant 0 : i32
    return %arg0, %c0_i32, %c0_i32_0 : i32, i32, i32
  }
}

</mosaic_0001>

<llo_original>
// kernel: tpu_custom_call.1
$region0: #{tpu_custom_call.1}
  #allocation0 [shape = 'u32[]', space=smem, size = 0x4, offset = 0x4, fixed_abs, tag = 'smem constant byte address 0x4 - core index']
  #allocation1 [shape = 'u32[72,128]{1,0:T(1,128)}', space=vmem, size = 0x9000, scoped, tag = 'internal scratch']
  #allocation2 [shape = 'f32[358,32]{1,0:T(8,128)}', space=vmem, size = 0x2d000, scoped, tag = 'scratch operand']
  %s0 = inlined_call_operand.vmem [shape: f32[2,290,8], index: 0, kind: input, shape index: {}]
  %s1 = inlined_call_operand.vmem [shape: f32[256,1], index: 1, kind: input, shape index: {}]
  %s2 = inlined_call_operand.vmem [shape: bf16[9,8,32], index: 2, kind: input, shape index: {}]
  %s3 = inlined_call_operand.vmem [shape: f32[1,32], index: 3, kind: input, shape index: {}]
  %s4 = inlined_call_operand.vmem [shape: bf16[3,9,32,32], index: 4, kind: input, shape index: {}]
  %s5 = inlined_call_operand.vmem [shape: f32[3,32], index: 5, kind: input, shape index: {}]
  %s6 = inlined_call_operand.vmem [shape: bf16[2,256,96], index: 6, kind: output, shape index: {}]
  %s7 = sld [smem:[#allocation0]]
  $region57: #{tpu_custom_call.1} parent=0
    _
  %s9 = ssub.s32 1, %s7
  %s10 = scalar_select 0, %s9, %s7
  loop: start=0, step=1, limit=4
  $region2: #{tpu_custom_call.1} parent=0 // loop_pre_header
    _
  $region3: #{tpu_custom_call.1} parent=0 // loop_header
    %s12 = sphi 0, %s16
    %p13 = scmp.ge.s32.totalorder %s12, 4
    %s22 = sphi 0, %s24
    %s25 = sphi 0, %s22
    %s26 = sphi 0, %s25
    %s42 = sphi 0, %s26
    %s46 = sphi 0, %s46
    %s48 = sphi 0, %s46
    %s49 = sphi 0, %s48
    %s63 = sphi 0, %s49
    %s67 = sphi 0, %s67
    %s69 = sphi 0, %s67
    %s70 = sphi 0, %s69
    %s84 = sphi 0, %s70
    %s88 = sphi 0, %s88
    %s90 = sphi 0, %s88
    %s91 = sphi 0, %s90
    %s105 = sphi 0, %s91
    %s109 = sphi 0, %s109
    %s111 = sphi 0, %s109
    %s112 = sphi 0, %s111
    %s126 = sphi 0, %s112
    %s130 = sphi 0, %s130
    %s132 = sphi 0, %s130
    %s133 = sphi 0, %s132
    %s147 = sphi 0, %s133
    %s153 = sphi 0, %s155
    %s156 = sphi 0, %s153
    %s157 = sphi 0, %s156
    %s173 = sphi 0, %s157
  $region4: #{tpu_custom_call.1} parent=0 // loop_header_branch
    %15 = sbr.rel (%p13) target = $region8
  $region5: #{tpu_custom_call.1} parent=0 // loop_body
    %s17 = ssub.s32 %s12, 1
    %s18 = ssub.s32 %s12, 2
    %s19 = sadd.s32 %s12, 1
    %s20 = ssub.s32 %s12, %s19
    %p21 = scmp.eq.s32.totalorder %s20, 0
    %s23 = sadd.s32 %s22, 1
    %s24 = scalar_select %p21, %s22, %s23
    %p27 = pneg %p21
    %p28 = scmp.eq.s32.totalorder %s12, 1
    %p29 = por %p27, %p28
    %p30 = scmp.ne.s32.totalorder %s22, %s25
    %p31 = scmp.eq.s32.totalorder %s12, 0
    %p32 = por %p30, %p31
    %p33 = scmp.ne.s32.totalorder %s22, %s25
    %p34 = scmp.eq.s32.totalorder %s17, 1
    %p35 = por %p33, %p34
    %p36 = scmp.ne.s32.totalorder %s25, %s26
    %p37 = scmp.eq.s32.totalorder %s17, 0
    %p38 = por %p36, %p37
    %p39 = scmp.ne.s32.totalorder %s25, %s26
    %p40 = scmp.eq.s32.totalorder %s18, 1
    %p41 = por %p39, %p40
    %p43 = scmp.ne.s32.totalorder %s26, %s42
    %p44 = scmp.eq.s32.totalorder %s18, 0
    %p45 = por %p43, %p44
    %s47 = sadd.s32 %s46, 1
    %p50 = scmp.eq.s32.totalorder %s12, 1
    %p51 = scmp.ne.s32.totalorder %s46, %s48
    %p52 = scmp.eq.s32.totalorder %s12, 0
    %p53 = por %p51, %p52
    %p54 = scmp.ne.s32.totalorder %s46, %s48
    %p55 = scmp.eq.s32.totalorder %s17, 1
    %p56 = por %p54, %p55
    %p57 = scmp.ne.s32.totalorder %s48, %s49
    %p58 = scmp.eq.s32.totalorder %s17, 0
    %p59 = por %p57, %p58
    %p60 = scmp.ne.s32.totalorder %s48, %s49
    %p61 = scmp.eq.s32.totalorder %s18, 1
    %p62 = por %p60, %p61
    %p64 = scmp.ne.s32.totalorder %s49, %s63
    %p65 = scmp.eq.s32.totalorder %s18, 0
    %p66 = por %p64, %p65
    %s68 = sadd.s32 %s67, 1
    %p71 = scmp.eq.s32.totalorder %s12, 1
    %p72 = scmp.ne.s32.totalorder %s67, %s69
    %p73 = scmp.eq.s32.totalorder %s12, 0
    %p74 = por %p72, %p73
    %p75 = scmp.ne.s32.totalorder %s67, %s69
    %p76 = scmp.eq.s32.totalorder %s17, 1
    %p77 = por %p75, %p76
    %p78 = scmp.ne.s32.totalorder %s69, %s70
    %p79 = scmp.eq.s32.totalorder %s17, 0
    %p80 = por %p78, %p79
    %p81 = scmp.ne.s32.totalorder %s69, %s70
    %p82 = scmp.eq.s32.totalorder %s18, 1
    %p83 = por %p81, %p82
    %p85 = scmp.ne.s32.totalorder %s70, %s84
    %p86 = scmp.eq.s32.totalorder %s18, 0
    %p87 = por %p85, %p86
    %s89 = sadd.s32 %s88, 1
    %p92 = scmp.eq.s32.totalorder %s12, 1
    %p93 = scmp.ne.s32.totalorder %s88, %s90
    %p94 = scmp.eq.s32.totalorder %s12, 0
    %p95 = por %p93, %p94
    %p96 = scmp.ne.s32.totalorder %s88, %s90
    %p97 = scmp.eq.s32.totalorder %s17, 1
    %p98 = por %p96, %p97
    %p99 = scmp.ne.s32.totalorder %s90, %s91
    %p100 = scmp.eq.s32.totalorder %s17, 0
    %p101 = por %p99, %p100
    %p102 = scmp.ne.s32.totalorder %s90, %s91
    %p103 = scmp.eq.s32.totalorder %s18, 1
    %p104 = por %p102, %p103
    %p106 = scmp.ne.s32.totalorder %s91, %s105
    %p107 = scmp.eq.s32.totalorder %s18, 0
    %p108 = por %p106, %p107
    %s110 = sadd.s32 %s109, 1
    %p113 = scmp.eq.s32.totalorder %s12, 1
    %p114 = scmp.ne.s32.totalorder %s109, %s111
    %p115 = scmp.eq.s32.totalorder %s12, 0
    %p116 = por %p114, %p115
    %p117 = scmp.ne.s32.totalorder %s109, %s111
    %p118 = scmp.eq.s32.totalorder %s17, 1
    %p119 = por %p117, %p118
    %p120 = scmp.ne.s32.totalorder %s111, %s112
    %p121 = scmp.eq.s32.totalorder %s17, 0
    %p122 = por %p120, %p121
    %p123 = scmp.ne.s32.totalorder %s111, %s112
    %p124 = scmp.eq.s32.totalorder %s18, 1
    %p125 = por %p123, %p124
    %p127 = scmp.ne.s32.totalorder %s112, %s126
    %p128 = scmp.eq.s32.totalorder %s18, 0
    %p129 = por %p127, %p128
    %s131 = sadd.s32 %s130, 1
    %p134 = scmp.eq.s32.totalorder %s12, 1
    %p135 = scmp.ne.s32.totalorder %s130, %s132
    %p136 = scmp.eq.s32.totalorder %s12, 0
    %p137 = por %p135, %p136
    %p138 = scmp.ne.s32.totalorder %s130, %s132
    %p139 = scmp.eq.s32.totalorder %s17, 1
    %p140 = por %p138, %p139
    %p141 = scmp.ne.s32.totalorder %s132, %s133
    %p142 = scmp.eq.s32.totalorder %s17, 0
    %p143 = por %p141, %p142
    %p144 = scmp.ne.s32.totalorder %s132, %s133
    %p145 = scmp.eq.s32.totalorder %s18, 1
    %p146 = por %p144, %p145
    %p148 = scmp.ne.s32.totalorder %s133, %s147
    %p149 = scmp.eq.s32.totalorder %s18, 0
    %p150 = por %p148, %p149
    %s151 = ssub.s32 %s12, %s19
    %p152 = scmp.eq.s32.totalorder %s151, 0
    %s154 = sadd.s32 %s153, 1
    %s155 = scalar_select %p152, %s153, %s154
    %p158 = pneg %p152
    %p159 = scmp.eq.s32.totalorder %s12, 1
    %p160 = por %p158, %p159
    %p161 = scmp.ne.s32.totalorder %s153, %s156
    %p162 = scmp.eq.s32.totalorder %s12, 0
    %p163 = por %p161, %p162
    %p164 = scmp.ne.s32.totalorder %s153, %s156
    %p165 = scmp.eq.s32.totalorder %s17, 1
    %p166 = por %p164, %p165
    %p167 = scmp.ne.s32.totalorder %s156, %s157
    %p168 = scmp.eq.s32.totalorder %s17, 0
    %p169 = por %p167, %p168
    %p170 = scmp.ne.s32.totalorder %s156, %s157
    %p171 = scmp.eq.s32.totalorder %s18, 1
    %p172 = por %p170, %p171
    %p174 = scmp.ne.s32.totalorder %s157, %s173
    %p175 = scmp.eq.s32.totalorder %s18, 0
    %p176 = por %p174, %p175
    %p177 = scmp.le.s32.totalorder 1, %s12
    %p178 = scmp.lt.s32.totalorder %s12, 3
    %p179 = pnand %p177, %p178
    %p180 = pneg %p179
    // Predicated region
    $region9: #{tpu_custom_call.1} parent=5 // pred_check
      _
    $region10: #{tpu_custom_call.1} parent=5 // pred_check_branch
      %182 = sbr.rel (%p179) target = $region12
    $region11: #{tpu_custom_call.1} parent=5 // pred_region
      %s183 = ssub.s32 %s12, 1
      // Predicated region
      $region13: #{tpu_custom_call.1} parent=11 // pred_check
        %p184 = pneg %p59
      $region14: #{tpu_custom_call.1} parent=11 // pred_check_branch
        %186 = sbr.rel (%p184) target = $region16
      $region15: #{tpu_custom_call.1} parent=11 // pred_region
        _
      $region16: #{tpu_custom_call.1} parent=11 // pred_fallthru
        _
      // Predicated region
      $region17: #{tpu_custom_call.1} parent=11 // pred_check
        %p187 = pneg %p80
      $region18: #{tpu_custom_call.1} parent=11 // pred_check_branch
        %189 = sbr.rel (%p187) target = $region20
      $region19: #{tpu_custom_call.1} parent=11 // pred_region
        _
      $region20: #{tpu_custom_call.1} parent=11 // pred_fallthru
        _
      // Predicated region
      $region21: #{tpu_custom_call.1} parent=11 // pred_check
        %p190 = pneg %p101
      $region22: #{tpu_custom_call.1} parent=11 // pred_check_branch
        %192 = sbr.rel (%p190) target = $region24
      $region23: #{tpu_custom_call.1} parent=11 // pred_region
        _
      $region24: #{tpu_custom_call.1} parent=11 // pred_fallthru
        _
      // Predicated region
      $region25: #{tpu_custom_call.1} parent=11 // pred_check
        %p193 = pneg %p122
      $region26: #{tpu_custom_call.1} parent=11 // pred_check_branch
        %195 = sbr.rel (%p193) target = $region28
      $region27: #{tpu_custom_call.1} parent=11 // pred_region
        _
      $region28: #{tpu_custom_call.1} parent=11 // pred_fallthru
        _
      // Predicated region
      $region29: #{tpu_custom_call.1} parent=11 // pred_check
        %p196 = pneg %p143
      $region30: #{tpu_custom_call.1} parent=11 // pred_check_branch
        %198 = sbr.rel (%p196) target = $region32
      $region31: #{tpu_custom_call.1} parent=11 // pred_region
        _
      $region32: #{tpu_custom_call.1} parent=11 // pred_fallthru
        _
    $region12: #{tpu_custom_call.1} parent=5 // pred_fallthru
      _
    %p199 = scmp.lt.s32.totalorder %s12, 2
    // Predicated region
    $region33: #{tpu_custom_call.1} parent=5 // pred_check
      %p200 = pneg %p199
    $region34: #{tpu_custom_call.1} parent=5 // pred_check_branch
      %202 = sbr.rel (%p200) target = $region36
    $region35: #{tpu_custom_call.1} parent=5 // pred_region
      // Predicated region
      $region37: #{tpu_custom_call.1} parent=35 // pred_check
        %p203 = pneg %p32
      $region38: #{tpu_custom_call.1} parent=35 // pred_check_branch
        %205 = sbr.rel (%p203) target = $region40
      $region39: #{tpu_custom_call.1} parent=35 // pred_region
        %p206 = scmp.lt.s32.totalorder %s12, 1
        %s207 = scalar_select %p206, %s12, 1
        %s208 = smul.addr %s207, 37
        %s209 = smul.addr %s208, 8
        %s210 = scalar_lea.vmem %s0, %s209
      $region40: #{tpu_custom_call.1} parent=35 // pred_fallthru
        _
    $region36: #{tpu_custom_call.1} parent=5 // pred_fallthru
      _
    %p211 = scmp.le.s32.totalorder 1, %s12
    %p212 = scmp.lt.s32.totalorder %s12, 3
    %p213 = pnand %p211, %p212
    %p214 = pneg %p213
    // Predicated region
    $region41: #{tpu_custom_call.1} parent=5 // pred_check
      _
    $region42: #{tpu_custom_call.1} parent=5 // pred_check_branch
      %216 = sbr.rel (%p213) target = $region44
    $region43: #{tpu_custom_call.1} parent=5 // pred_region
      %s217 = ssub.s32 %s12, 1
      %p218 = scmp.lt.s32.totalorder %s17, 1
      %s219 = scalar_select %p218, %s17, 1
      %s220 = smul.addr %s219, 37
      %s221 = smul.addr %s220, 8
      %s222 = scalar_lea.vmem %s0, %s221
      %p223 = pneg %p38
      %p224 = pneg %p35
      %p225 = pneg %p59
      %p226 = pneg %p56
      %p227 = pneg %p80
      %p228 = pneg %p77
      %p229 = pneg %p101
      %p230 = pneg %p98
      %p231 = pneg %p122
      %p232 = pneg %p119
      %p233 = pneg %p143
      %p234 = pneg %p140
      %p235 = pneg %p169
      %p236 = pneg %p166
      %p237 = scmp.lt.s32.totalorder %s17, 1
      %s238 = scalar_select %p237, %s17, 1
      %s239 = smul.addr %s238, 32
      %s240 = smul.addr %s239, 4
      %s241 = scalar_lea.vmem %s6, %s240
      %p242 = scmp.lt.s32.totalorder %s17, 1
      %s243 = scalar_select %p242, %s17, 1
      %s244 = smul.addr %s243, 37
      %s245 = smul.addr %s244, 8
      %s246 = scalar_lea.vmem %s0, %s245
      %p247 = scmp.lt.s32.totalorder %s17, 1
      %s248 = scalar_select %p247, %s17, 1
      %s249 = smul.addr %s248, 32
      %s250 = smul.addr %s249, 4
      %s251 = scalar_lea.vmem %s6, %s250
      %v253 = vld [vmem:[%s246] sm:$0xff]
      %v254 = vld [vmem:[%s246 + $0x8] sm:$0xff]
      %v255 = vld [vmem:[%s246 + $0x10] sm:$0xff]
      %v256 = vld [vmem:[%s246 + $0x18] sm:$0xff]
      %v257 = vld [vmem:[%s246 + $0x20] sm:$0xff]
      %v258 = vld [vmem:[%s246 + $0x28] sm:$0xff]
      %v259 = vld [vmem:[%s246 + $0x30] sm:$0xff]
      %v260 = vld [vmem:[%s246 + $0x38] sm:$0xff]
      %v261 = vld [vmem:[%s246 + $0x40] sm:$0xff]
      %v262 = vld [vmem:[%s246 + $0x48] sm:$0xff]
      %v263 = vld [vmem:[%s246 + $0x50] sm:$0xff]
      %v264 = vld [vmem:[%s246 + $0x58] sm:$0xff]
      %v265 = vld [vmem:[%s246 + $0x60] sm:$0xff]
      %v266 = vld [vmem:[%s246 + $0x68] sm:$0xff]
      %v267 = vld [vmem:[%s246 + $0x70] sm:$0xff]
      %v268 = vld [vmem:[%s246 + $0x78] sm:$0xff]
      %v269 = vld [vmem:[%s246 + $0x80] sm:$0xff]
      %v270 = vld [vmem:[%s246 + $0x88] sm:$0xff]
      %v271 = vld [vmem:[%s246 + $0x90] sm:$0xff]
      %v272 = vld [vmem:[%s246 + $0x98] sm:$0xff]
      %v273 = vld [vmem:[%s246 + $0xa0] sm:$0xff]
      %v274 = vld [vmem:[%s246 + $0xa8] sm:$0xff]
      %v275 = vld [vmem:[%s246 + $0xb0] sm:$0xff]
      %v276 = vld [vmem:[%s246 + $0xb8] sm:$0xff]
      %v277 = vld [vmem:[%s246 + $0xc0] sm:$0xff]
      %v278 = vld [vmem:[%s246 + $0xc8] sm:$0xff]
      %v279 = vld [vmem:[%s246 + $0xd0] sm:$0xff]
      %v280 = vld [vmem:[%s246 + $0xd8] sm:$0xff]
      %v281 = vld [vmem:[%s246 + $0xe0] sm:$0xff]
      %v282 = vld [vmem:[%s246 + $0xe8] sm:$0xff]
      %v283 = vld [vmem:[%s246 + $0xf0] sm:$0xff]
      %v284 = vld [vmem:[%s246 + $0xf8] sm:$0xff]
      %v285 = vpack.c.bf16 %v254, %v253
      %v286 = vpack.c.bf16 %v256, %v255
      %v287 = vpack.c.bf16 %v258, %v257
      %v288 = vpack.c.bf16 %v260, %v259
      %v289 = vpack.c.bf16 %v262, %v261
      %v290 = vpack.c.bf16 %v264, %v263
      %v291 = vpack.c.bf16 %v266, %v265
      %v292 = vpack.c.bf16 %v268, %v267
      %v293 = vpack.c.bf16 %v270, %v269
      %v294 = vpack.c.bf16 %v272, %v271
      %v295 = vpack.c.bf16 %v274, %v273
      %v296 = vpack.c.bf16 %v276, %v275
      %v297 = vpack.c.bf16 %v278, %v277
      %v298 = vpack.c.bf16 %v280, %v279
      %v299 = vpack.c.bf16 %v282, %v281
      %v300 = vpack.c.bf16 %v284, %v283
      %v301 = vld [vmem:[%s2] sm:$0xf]
      %v302 = vld [vmem:[%s246 + $0x1] sm:$0xff]
      %v303 = vld [vmem:[%s246 + $0x9] sm:$0xff]
      %v304 = vld [vmem:[%s246 + $0x11] sm:$0xff]
      %v305 = vld [vmem:[%s246 + $0x19] sm:$0xff]
      %v306 = vld [vmem:[%s246 + $0x21] sm:$0xff]
      %v307 = vld [vmem:[%s246 + $0x29] sm:$0xff]
      %v308 = vld [vmem:[%s246 + $0x31] sm:$0xff]
      %v309 = vld [vmem:[%s246 + $0x39] sm:$0xff]
      %v310 = vld [vmem:[%s246 + $0x41] sm:$0xff]
      %v311 = vld [vmem:[%s246 + $0x49] sm:$0xff]
      %v312 = vld [vmem:[%s246 + $0x51] sm:$0xff]
      %v313 = vld [vmem:[%s246 + $0x59] sm:$0xff]
      %v314 = vld [vmem:[%s246 + $0x61] sm:$0xff]
      %v315 = vld [vmem:[%s246 + $0x69] sm:$0xff]
      %v316 = vld [vmem:[%s246 + $0x71] sm:$0xff]
      %v317 = vld [vmem:[%s246 + $0x79] sm:$0xff]
      %v318 = vld [vmem:[%s246 + $0x81] sm:$0xff]
      %v319 = vld [vmem:[%s246 + $0x89] sm:$0xff]
      %v320 = vld [vmem:[%s246 + $0x91] sm:$0xff]
      %v321 = vld [vmem:[%s246 + $0x99] sm:$0xff]
      %v322 = vld [vmem:[%s246 + $0xa1] sm:$0xff]
      %v323 = vld [vmem:[%s246 + $0xa9] sm:$0xff]
      %v324 = vld [vmem:[%s246 + $0xb1] sm:$0xff]
      %v325 = vld [vmem:[%s246 + $0xb9] sm:$0xff]
      %v326 = vld [vmem:[%s246 + $0xc1] sm:$0xff]
      %v327 = vld [vmem:[%s246 + $0xc9] sm:$0xff]
      %v328 = vld [vmem:[%s246 + $0xd1] sm:$0xff]
      %v329 = vld [vmem:[%s246 + $0xd9] sm:$0xff]
      %v330 = vld [vmem:[%s246 + $0xe1] sm:$0xff]
      %v331 = vld [vmem:[%s246 + $0xe9] sm:$0xff]
      %v332 = vld [vmem:[%s246 + $0xf1] sm:$0xff]
      %v333 = vld [vmem:[%s246 + $0xf9] sm:$0xff]
      %v334 = vpack.c.bf16 %v303, %v302
      %v335 = vpack.c.bf16 %v305, %v304
      %v336 = vpack.c.bf16 %v307, %v306
      %v337 = vpack.c.bf16 %v309, %v308
      %v338 = vpack.c.bf16 %v311, %v310
      %v339 = vpack.c.bf16 %v313, %v312
      %v340 = vpack.c.bf16 %v315, %v314
      %v341 = vpack.c.bf16 %v317, %v316
      %v342 = vpack.c.bf16 %v319, %v318
      %v343 = vpack.c.bf16 %v321, %v320
      %v344 = vpack.c.bf16 %v323, %v322
      %v345 = vpack.c.bf16 %v325, %v324
      %v346 = vpack.c.bf16 %v327, %v326
      %v347 = vpack.c.bf16 %v329, %v328
      %v348 = vpack.c.bf16 %v331, %v330
      %v349 = vpack.c.bf16 %v333, %v332
      %s350 = scalar_lea.vmem %s2, 4
      %v351 = vld [vmem:[%s350] sm:$0xf]
      %vm352 = vcmask 64512
      %v354 = vsel %vm352, %v334, 0
      %v357 = vsel %vm352, %v335, 0
      %v360 = vsel %vm352, %v336, 0
      %v363 = vsel %vm352, %v337, 0
      %v366 = vsel %vm352, %v338, 0
      %v369 = vsel %vm352, %v339, 0
      %v372 = vsel %vm352, %v340, 0
      %v375 = vsel %vm352, %v341, 0
      %v378 = vsel %vm352, %v342, 0
      %v381 = vsel %vm352, %v343, 0
      %v384 = vsel %vm352, %v344, 0
      %v387 = vsel %vm352, %v345, 0
      %v390 = vsel %vm352, %v346, 0
      %v393 = vsel %vm352, %v347, 0
      %v396 = vsel %vm352, %v348, 0
      %v399 = vsel %vm352, %v349, 0
      %vm401 = vcmask 1043456
      %v403 = vsel %vm401, %v351, 0
      %405 = vmatpush.bf16.msra.mxu0 0
      %406 = vmatpush.bf16.msra.mxu0 0
      %407 = vmatpush.bf16.msra.mxu0 0
      %408 = vmatpush.bf16.msra.mxu0 0
      %409 = vmatpush.bf16.msra.mxu0 0
      %410 = vmatpush.bf16.msra.mxu0 0
      %411 = vmatpush.bf16.msra.mxu0 0
      %412 = vmatpush.bf16.msra.mxu0 %v403
      %413 = vmatmul.bf16.gmra.mxu0 %v354
      %v414 = vpop.f32.mrf.mxu0
      %v415 = vadd.f32 0.0, %v414
      %v416 = vpop.f32.mrf.mxu0
      %v417 = vadd.f32 0.0, %v416
      %418 = vmatmul.bf16.gmra.mxu0 %v357
      %v419 = vpop.f32.mrf.mxu0
      %v420 = vadd.f32 0.0, %v419
      %v421 = vpop.f32.mrf.mxu0
      %v422 = vadd.f32 0.0, %v421
      %423 = vmatmul.bf16.gmra.mxu0 %v360
      %v424 = vpop.f32.mrf.mxu0
      %v425 = vadd.f32 0.0, %v424
      %v426 = vpop.f32.mrf.mxu0
      %v427 = vadd.f32 0.0, %v426
      %428 = vmatmul.bf16.gmra.mxu0 %v363
      %v429 = vpop.f32.mrf.mxu0
      %v430 = vadd.f32 0.0, %v429
      %v431 = vpop.f32.mrf.mxu0
      %v432 = vadd.f32 0.0, %v431
      %433 = vmatmul.bf16.gmra.mxu0 %v366
      %v434 = vpop.f32.mrf.mxu0
      %v435 = vadd.f32 0.0, %v434
      %v436 = vpop.f32.mrf.mxu0
      %v437 = vadd.f32 0.0, %v436
      %438 = vmatmul.bf16.gmra.mxu0 %v369
      %v439 = vpop.f32.mrf.mxu0
      %v440 = vadd.f32 0.0, %v439
      %v441 = vpop.f32.mrf.mxu0
      %v442 = vadd.f32 0.0, %v441
      %443 = vmatmul.bf16.gmra.mxu0 %v372
      %v444 = vpop.f32.mrf.mxu0
      %v445 = vadd.f32 0.0, %v444
      %v446 = vpop.f32.mrf.mxu0
      %v447 = vadd.f32 0.0, %v446
      %448 = vmatmul.bf16.gmra.mxu0 %v375
      %v449 = vpop.f32.mrf.mxu0
      %v450 = vadd.f32 0.0, %v449
      %v451 = vpop.f32.mrf.mxu0
      %v452 = vadd.f32 0.0, %v451
      %453 = vmatmul.bf16.gmra.mxu0 %v378
      %v454 = vpop.f32.mrf.mxu0
      %v455 = vadd.f32 0.0, %v454
      %v456 = vpop.f32.mrf.mxu0
      %v457 = vadd.f32 0.0, %v456
      %458 = vmatmul.bf16.gmra.mxu0 %v381
      %v459 = vpop.f32.mrf.mxu0
      %v460 = vadd.f32 0.0, %v459
      %v461 = vpop.f32.mrf.mxu0
      %v462 = vadd.f32 0.0, %v461
      %463 = vmatmul.bf16.gmra.mxu0 %v384
      %v464 = vpop.f32.mrf.mxu0
      %v465 = vadd.f32 0.0, %v464
      %v466 = vpop.f32.mrf.mxu0
      %v467 = vadd.f32 0.0, %v466
      %468 = vmatmul.bf16.gmra.mxu0 %v387
      %v469 = vpop.f32.mrf.mxu0
      %v470 = vadd.f32 0.0, %v469
      %v471 = vpop.f32.mrf.mxu0
      %v472 = vadd.f32 0.0, %v471
      %473 = vmatmul.bf16.gmra.mxu0 %v390
      %v474 = vpop.f32.mrf.mxu0
      %v475 = vadd.f32 0.0, %v474
      %v476 = vpop.f32.mrf.mxu0
      %v477 = vadd.f32 0.0, %v476
      %478 = vmatmul.bf16.gmra.mxu0 %v393
      %v479 = vpop.f32.mrf.mxu0
      %v480 = vadd.f32 0.0, %v479
      %v481 = vpop.f32.mrf.mxu0
      %v482 = vadd.f32 0.0, %v481
      %483 = vmatmul.bf16.gmra.mxu0 %v396
      %v484 = vpop.f32.mrf.mxu0
      %v485 = vadd.f32 0.0, %v484
      %v486 = vpop.f32.mrf.mxu0
      %v487 = vadd.f32 0.0, %v486
      %488 = vmatmul.bf16.gmra.mxu0 %v399
      %v489 = vpop.f32.mrf.mxu0
      %v490 = vadd.f32 0.0, %v489
      %v491 = vpop.f32.mrf.mxu0
      %v492 = vadd.f32 0.0, %v491
      %493 = vdwg.mxu0
      %v495 = vsel %vm352, %v285, 0
      %v498 = vsel %vm352, %v286, 0
      %v501 = vsel %vm352, %v287, 0
      %v504 = vsel %vm352, %v288, 0
      %v507 = vsel %vm352, %v289, 0
      %v510 = vsel %vm352, %v290, 0
      %v513 = vsel %vm352, %v291, 0
      %v516 = vsel %vm352, %v292, 0
      %v519 = vsel %vm352, %v293, 0
      %v522 = vsel %vm352, %v294, 0
      %v525 = vsel %vm352, %v295, 0
      %v528 = vsel %vm352, %v296, 0
      %v531 = vsel %vm352, %v297, 0
      %v534 = vsel %vm352, %v298, 0
      %v537 = vsel %vm352, %v299, 0
      %v540 = vsel %vm352, %v300, 0
      %v543 = vsel %vm401, %v301, 0
      %545 = vmatpush.bf16.msra.mxu0 0
      %546 = vmatpush.bf16.msra.mxu0 0
      %547 = vmatpush.bf16.msra.mxu0 0
      %548 = vmatpush.bf16.msra.mxu0 0
      %549 = vmatpush.bf16.msra.mxu0 0
      %550 = vmatpush.bf16.msra.mxu0 0
      %551 = vmatpush.bf16.msra.mxu0 0
      %552 = vmatpush.bf16.msra.mxu0 %v543
      %553 = vmatmul.bf16.gmra.mxu0 %v495
      %v554 = vpop.f32.mrf.mxu0
      %v555 = vadd.f32 %v415, %v554
      %v556 = vpop.f32.mrf.mxu0
      %v557 = vadd.f32 %v417, %v556
      %558 = vmatmul.bf16.gmra.mxu0 %v498
      %v559 = vpop.f32.mrf.mxu0
      %v560 = vadd.f32 %v420, %v559
      %v561 = vpop.f32.mrf.mxu0
      %v562 = vadd.f32 %v422, %v561
      %563 = vmatmul.bf16.gmra.mxu0 %v501
      %v564 = vpop.f32.mrf.mxu0
      %v565 = vadd.f32 %v425, %v564
      %v566 = vpop.f32.mrf.mxu0
      %v567 = vadd.f32 %v427, %v566
      %568 = vmatmul.bf16.gmra.mxu0 %v504
      %v569 = vpop.f32.mrf.mxu0
      %v570 = vadd.f32 %v430, %v569
      %v571 = vpop.f32.mrf.mxu0
      %v572 = vadd.f32 %v432, %v571
      %573 = vmatmul.bf16.gmra.mxu0 %v507
      %v574 = vpop.f32.mrf.mxu0
      %v575 = vadd.f32 %v435, %v574
      %v576 = vpop.f32.mrf.mxu0
      %v577 = vadd.f32 %v437, %v576
      %578 = vmatmul.bf16.gmra.mxu0 %v510
      %v579 = vpop.f32.mrf.mxu0
      %v580 = vadd.f32 %v440, %v579
      %v581 = vpop.f32.mrf.mxu0
      %v582 = vadd.f32 %v442, %v581
      %583 = vmatmul.bf16.gmra.mxu0 %v513
      %v584 = vpop.f32.mrf.mxu0
      %v585 = vadd.f32 %v445, %v584
      %v586 = vpop.f32.mrf.mxu0
      %v587 = vadd.f32 %v447, %v586
      %588 = vmatmul.bf16.gmra.mxu0 %v516
      %v589 = vpop.f32.mrf.mxu0
      %v590 = vadd.f32 %v450, %v589
      %v591 = vpop.f32.mrf.mxu0
      %v592 = vadd.f32 %v452, %v591
      %593 = vmatmul.bf16.gmra.mxu0 %v519
      %v594 = vpop.f32.mrf.mxu0
      %v595 = vadd.f32 %v455, %v594
      %v596 = vpop.f32.mrf.mxu0
      %v597 = vadd.f32 %v457, %v596
      %598 = vmatmul.bf16.gmra.mxu0 %v522
      %v599 = vpop.f32.mrf.mxu0
      %v600 = vadd.f32 %v460, %v599
      %v601 = vpop.f32.mrf.mxu0
      %v602 = vadd.f32 %v462, %v601
      %603 = vmatmul.bf16.gmra.mxu0 %v525
      %v604 = vpop.f32.mrf.mxu0
      %v605 = vadd.f32 %v465, %v604
      %v606 = vpop.f32.mrf.mxu0
      %v607 = vadd.f32 %v467, %v606
      %608 = vmatmul.bf16.gmra.mxu0 %v528
      %v609 = vpop.f32.mrf.mxu0
      %v610 = vadd.f32 %v470, %v609
      %v611 = vpop.f32.mrf.mxu0
      %v612 = vadd.f32 %v472, %v611
      %613 = vmatmul.bf16.gmra.mxu0 %v531
      %v614 = vpop.f32.mrf.mxu0
      %v615 = vadd.f32 %v475, %v614
      %v616 = vpop.f32.mrf.mxu0
      %v617 = vadd.f32 %v477, %v616
      %618 = vmatmul.bf16.gmra.mxu0 %v534
      %v619 = vpop.f32.mrf.mxu0
      %v620 = vadd.f32 %v480, %v619
      %v621 = vpop.f32.mrf.mxu0
      %v622 = vadd.f32 %v482, %v621
      %623 = vmatmul.bf16.gmra.mxu0 %v537
      %v624 = vpop.f32.mrf.mxu0
      %v625 = vadd.f32 %v485, %v624
      %v626 = vpop.f32.mrf.mxu0
      %v627 = vadd.f32 %v487, %v626
      %628 = vmatmul.bf16.gmra.mxu0 %v540
      %v629 = vpop.f32.mrf.mxu0
      %v630 = vadd.f32 %v490, %v629
      %v631 = vpop.f32.mrf.mxu0
      %v632 = vadd.f32 %v492, %v631
      %633 = vdwg.mxu0
      %v634 = vld [vmem:[%s246 + $0x2] sm:$0xff]
      %v635 = vld [vmem:[%s246 + $0xa] sm:$0xff]
      %v636 = vld [vmem:[%s246 + $0x12] sm:$0xff]
      %v637 = vld [vmem:[%s246 + $0x1a] sm:$0xff]
      %v638 = vld [vmem:[%s246 + $0x22] sm:$0xff]
      %v639 = vld [vmem:[%s246 + $0x2a] sm:$0xff]
      %v640 = vld [vmem:[%s246 + $0x32] sm:$0xff]
      %v641 = vld [vmem:[%s246 + $0x3a] sm:$0xff]
      %v642 = vld [vmem:[%s246 + $0x42] sm:$0xff]
      %v643 = vld [vmem:[%s246 + $0x4a] sm:$0xff]
      %v644 = vld [vmem:[%s246 + $0x52] sm:$0xff]
      %v645 = vld [vmem:[%s246 + $0x5a] sm:$0xff]
      %v646 = vld [vmem:[%s246 + $0x62] sm:$0xff]
      %v647 = vld [vmem:[%s246 + $0x6a] sm:$0xff]
      %v648 = vld [vmem:[%s246 + $0x72] sm:$0xff]
      %v649 = vld [vmem:[%s246 + $0x7a] sm:$0xff]
      %v650 = vld [vmem:[%s246 + $0x82] sm:$0xff]
      %v651 = vld [vmem:[%s246 + $0x8a] sm:$0xff]
      %v652 = vld [vmem:[%s246 + $0x92] sm:$0xff]
      %v653 = vld [vmem:[%s246 + $0x9a] sm:$0xff]
      %v654 = vld [vmem:[%s246 + $0xa2] sm:$0xff]
      %v655 = vld [vmem:[%s246 + $0xaa] sm:$0xff]
      %v656 = vld [vmem:[%s246 + $0xb2] sm:$0xff]
      %v657 = vld [vmem:[%s246 + $0xba] sm:$0xff]
      %v658 = vld [vmem:[%s246 + $0xc2] sm:$0xff]
      %v659 = vld [vmem:[%s246 + $0xca] sm:$0xff]
      %v660 = vld [vmem:[%s246 + $0xd2] sm:$0xff]
      %v661 = vld [vmem:[%s246 + $0xda] sm:$0xff]
      %v662 = vld [vmem:[%s246 + $0xe2] sm:$0xff]
      %v663 = vld [vmem:[%s246 + $0xea] sm:$0xff]
      %v664 = vld [vmem:[%s246 + $0xf2] sm:$0xff]
      %v665 = vld [vmem:[%s246 + $0xfa] sm:$0xff]
      %v666 = vpack.c.bf16 %v635, %v634
      %v667 = vpack.c.bf16 %v637, %v636
      %v668 = vpack.c.bf16 %v639, %v638
      %v669 = vpack.c.bf16 %v641, %v640
      %v670 = vpack.c.bf16 %v643, %v642
      %v671 = vpack.c.bf16 %v645, %v644
      %v672 = vpack.c.bf16 %v647, %v646
      %v673 = vpack.c.bf16 %v649, %v648
      %v674 = vpack.c.bf16 %v651, %v650
      %v675 = vpack.c.bf16 %v653, %v652
      %v676 = vpack.c.bf16 %v655, %v654
      %v677 = vpack.c.bf16 %v657, %v656
      %v678 = vpack.c.bf16 %v659, %v658
      %v679 = vpack.c.bf16 %v661, %v660
      %v680 = vpack.c.bf16 %v663, %v662
      %v681 = vpack.c.bf16 %v665, %v664
      %s682 = scalar_lea.vmem %s2, 8
      %v683 = vld [vmem:[%s682] sm:$0xf]
      %v685 = vsel %vm352, %v666, 0
      %v688 = vsel %vm352, %v667, 0
      %v691 = vsel %vm352, %v668, 0
      %v694 = vsel %vm352, %v669, 0
      %v697 = vsel %vm352, %v670, 0
      %v700 = vsel %vm352, %v671, 0
      %v703 = vsel %vm352, %v672, 0
      %v706 = vsel %vm352, %v673, 0
      %v709 = vsel %vm352, %v674, 0
      %v712 = vsel %vm352, %v675, 0
      %v715 = vsel %vm352, %v676, 0
      %v718 = vsel %vm352, %v677, 0
      %v721 = vsel %vm352, %v678, 0
      %v724 = vsel %vm352, %v679, 0
      %v727 = vsel %vm352, %v680, 0
      %v730 = vsel %vm352, %v681, 0
      %v733 = vsel %vm401, %v683, 0
      %735 = vmatpush.bf16.msra.mxu0 0
      %736 = vmatpush.bf16.msra.mxu0 0
      %737 = vmatpush.bf16.msra.mxu0 0
      %738 = vmatpush.bf16.msra.mxu0 0
      %739 = vmatpush.bf16.msra.mxu0 0
      %740 = vmatpush.bf16.msra.mxu0 0
      %741 = vmatpush.bf16.msra.mxu0 0
      %742 = vmatpush.bf16.msra.mxu0 %v733
      %743 = vmatmul.bf16.gmra.mxu0 %v685
      %v744 = vpop.f32.mrf.mxu0
      %v745 = vadd.f32 0.0, %v744
      %v746 = vpop.f32.mrf.mxu0
      %v747 = vadd.f32 0.0, %v746
      %748 = vmatmul.bf16.gmra.mxu0 %v688
      %v749 = vpop.f32.mrf.mxu0
      %v750 = vadd.f32 0.0, %v749
      %v751 = vpop.f32.mrf.mxu0
      %v752 = vadd.f32 0.0, %v751
      %753 = vmatmul.bf16.gmra.mxu0 %v691
      %v754 = vpop.f32.mrf.mxu0
      %v755 = vadd.f32 0.0, %v754
      %v756 = vpop.f32.mrf.mxu0
      %v757 = vadd.f32 0.0, %v756
      %758 = vmatmul.bf16.gmra.mxu0 %v694
      %v759 = vpop.f32.mrf.mxu0
      %v760 = vadd.f32 0.0, %v759
      %v761 = vpop.f32.mrf.mxu0
      %v762 = vadd.f32 0.0, %v761
      %763 = vmatmul.bf16.gmra.mxu0 %v697
      %v764 = vpop.f32.mrf.mxu0
      %v765 = vadd.f32 0.0, %v764
      %v766 = vpop.f32.mrf.mxu0
      %v767 = vadd.f32 0.0, %v766
      %768 = vmatmul.bf16.gmra.mxu0 %v700
      %v769 = vpop.f32.mrf.mxu0
      %v770 = vadd.f32 0.0, %v769
      %v771 = vpop.f32.mrf.mxu0
      %v772 = vadd.f32 0.0, %v771
      %773 = vmatmul.bf16.gmra.mxu0 %v703
      %v774 = vpop.f32.mrf.mxu0
      %v775 = vadd.f32 0.0, %v774
      %v776 = vpop.f32.mrf.mxu0
      %v777 = vadd.f32 0.0, %v776
      %778 = vmatmul.bf16.gmra.mxu0 %v706
      %v779 = vpop.f32.mrf.mxu0
      %v780 = vadd.f32 0.0, %v779
      %v781 = vpop.f32.mrf.mxu0
      %v782 = vadd.f32 0.0, %v781
      %783 = vmatmul.bf16.gmra.mxu0 %v709
      %v784 = vpop.f32.mrf.mxu0
      %v785 = vadd.f32 0.0, %v784
      %v786 = vpop.f32.mrf.mxu0
      %v787 = vadd.f32 0.0, %v786
      %788 = vmatmul.bf16.gmra.mxu0 %v712
      %v789 = vpop.f32.mrf.mxu0
      %v790 = vadd.f32 0.0, %v789
      %v791 = vpop.f32.mrf.mxu0
      %v792 = vadd.f32 0.0, %v791
      %793 = vmatmul.bf16.gmra.mxu0 %v715
      %v794 = vpop.f32.mrf.mxu0
      %v795 = vadd.f32 0.0, %v794
      %v796 = vpop.f32.mrf.mxu0
      %v797 = vadd.f32 0.0, %v796
      %798 = vmatmul.bf16.gmra.mxu0 %v718
      %v799 = vpop.f32.mrf.mxu0
      %v800 = vadd.f32 0.0, %v799
      %v801 = vpop.f32.mrf.mxu0
      %v802 = vadd.f32 0.0, %v801
      %803 = vmatmul.bf16.gmra.mxu0 %v721
      %v804 = vpop.f32.mrf.mxu0
      %v805 = vadd.f32 0.0, %v804
      %v806 = vpop.f32.mrf.mxu0
      %v807 = vadd.f32 0.0, %v806
      %808 = vmatmul.bf16.gmra.mxu0 %v724
      %v809 = vpop.f32.mrf.mxu0
      %v810 = vadd.f32 0.0, %v809
      %v811 = vpop.f32.mrf.mxu0
      %v812 = vadd.f32 0.0, %v811
      %813 = vmatmul.bf16.gmra.mxu0 %v727
      %v814 = vpop.f32.mrf.mxu0
      %v815 = vadd.f32 0.0, %v814
      %v816 = vpop.f32.mrf.mxu0
      %v817 = vadd.f32 0.0, %v816
      %818 = vmatmul.bf16.gmra.mxu0 %v730
      %v819 = vpop.f32.mrf.mxu0
      %v820 = vadd.f32 0.0, %v819
      %v821 = vpop.f32.mrf.mxu0
      %v822 = vadd.f32 0.0, %v821
      %823 = vdwg.mxu0
      %v824 = vadd.f32 %v555, %v745
      %v825 = vadd.f32 %v557, %v747
      %v826 = vadd.f32 %v560, %v750
      %v827 = vadd.f32 %v562, %v752
      %v828 = vadd.f32 %v565, %v755
      %v829 = vadd.f32 %v567, %v757
      %v830 = vadd.f32 %v570, %v760
      %v831 = vadd.f32 %v572, %v762
      %v832 = vadd.f32 %v575, %v765
      %v833 = vadd.f32 %v577, %v767
      %v834 = vadd.f32 %v580, %v770
      %v835 = vadd.f32 %v582, %v772
      %v836 = vadd.f32 %v585, %v775
      %v837 = vadd.f32 %v587, %v777
      %v838 = vadd.f32 %v590, %v780
      %v839 = vadd.f32 %v592, %v782
      %v840 = vadd.f32 %v595, %v785
      %v841 = vadd.f32 %v597, %v787
      %v842 = vadd.f32 %v600, %v790
      %v843 = vadd.f32 %v602, %v792
      %v844 = vadd.f32 %v605, %v795
      %v845 = vadd.f32 %v607, %v797
      %v846 = vadd.f32 %v610, %v800
      %v847 = vadd.f32 %v612, %v802
      %v848 = vadd.f32 %v615, %v805
      %v849 = vadd.f32 %v617, %v807
      %v850 = vadd.f32 %v620, %v810
      %v851 = vadd.f32 %v622, %v812
      %v852 = vadd.f32 %v625, %v815
      %v853 = vadd.f32 %v627, %v817
      %v854 = vadd.f32 %v630, %v820
      %v855 = vadd.f32 %v632, %v822
      %v856 = vld [vmem:[%s246 + $0x10] sm:$0xff]
      %v857 = vld [vmem:[%s246 + $0x18] sm:$0xff]
      %v858 = vld [vmem:[%s246 + $0x20] sm:$0xff]
      %v859 = vld [vmem:[%s246 + $0x28] sm:$0xff]
      %v860 = vld [vmem:[%s246 + $0x30] sm:$0xff]
      %v861 = vld [vmem:[%s246 + $0x38] sm:$0xff]
      %v862 = vld [vmem:[%s246 + $0x40] sm:$0xff]
      %v863 = vld [vmem:[%s246 + $0x48] sm:$0xff]
      %v864 = vld [vmem:[%s246 + $0x50] sm:$0xff]
      %v865 = vld [vmem:[%s246 + $0x58] sm:$0xff]
      %v866 = vld [vmem:[%s246 + $0x60] sm:$0xff]
      %v867 = vld [vmem:[%s246 + $0x68] sm:$0xff]
      %v868 = vld [vmem:[%s246 + $0x70] sm:$0xff]
      %v869 = vld [vmem:[%s246 + $0x78] sm:$0xff]
      %v870 = vld [vmem:[%s246 + $0x80] sm:$0xff]
      %v871 = vld [vmem:[%s246 + $0x88] sm:$0xff]
      %v872 = vld [vmem:[%s246 + $0x90] sm:$0xff]
      %v873 = vld [vmem:[%s246 + $0x98] sm:$0xff]
      %v874 = vld [vmem:[%s246 + $0xa0] sm:$0xff]
      %v875 = vld [vmem:[%s246 + $0xa8] sm:$0xff]
      %v876 = vld [vmem:[%s246 + $0xb0] sm:$0xff]
      %v877 = vld [vmem:[%s246 + $0xb8] sm:$0xff]
      %v878 = vld [vmem:[%s246 + $0xc0] sm:$0xff]
      %v879 = vld [vmem:[%s246 + $0xc8] sm:$0xff]
      %v880 = vld [vmem:[%s246 + $0xd0] sm:$0xff]
      %v881 = vld [vmem:[%s246 + $0xd8] sm:$0xff]
      %v882 = vld [vmem:[%s246 + $0xe0] sm:$0xff]
      %v883 = vld [vmem:[%s246 + $0xe8] sm:$0xff]
      %v884 = vld [vmem:[%s246 + $0xf0] sm:$0xff]
      %v885 = vld [vmem:[%s246 + $0xf8] sm:$0xff]
      %v886 = vld [vmem:[%s246 + $0x100] sm:$0xff]
      %v887 = vld [vmem:[%s246 + $0x108] sm:$0xff]
      %v888 = vpack.c.bf16 %v857, %v856
      %v889 = vpack.c.bf16 %v859, %v858
      %v890 = vpack.c.bf16 %v861, %v860
      %v891 = vpack.c.bf16 %v863, %v862
      %v892 = vpack.c.bf16 %v865, %v864
      %v893 = vpack.c.bf16 %v867, %v866
      %v894 = vpack.c.bf16 %v869, %v868
      %v895 = vpack.c.bf16 %v871, %v870
      %v896 = vpack.c.bf16 %v873, %v872
      %v897 = vpack.c.bf16 %v875, %v874
      %v898 = vpack.c.bf16 %v877, %v876
      %v899 = vpack.c.bf16 %v879, %v878
      %v900 = vpack.c.bf16 %v881, %v880
      %v901 = vpack.c.bf16 %v883, %v882
      %v902 = vpack.c.bf16 %v885, %v884
      %v903 = vpack.c.bf16 %v887, %v886
      %s904 = scalar_lea.vmem %s2, 12
      %v905 = vld [vmem:[%s904] sm:$0xf]
      %v907 = vsel %vm352, %v888, 0
      %v910 = vsel %vm352, %v889, 0
      %v913 = vsel %vm352, %v890, 0
      %v916 = vsel %vm352, %v891, 0
      %v919 = vsel %vm352, %v892, 0
      %v922 = vsel %vm352, %v893, 0
      %v925 = vsel %vm352, %v894, 0
      %v928 = vsel %vm352, %v895, 0
      %v931 = vsel %vm352, %v896, 0
      %v934 = vsel %vm352, %v897, 0
      %v937 = vsel %vm352, %v898, 0
      %v940 = vsel %vm352, %v899, 0
      %v943 = vsel %vm352, %v900, 0
      %v946 = vsel %vm352, %v901, 0
      %v949 = vsel %vm352, %v902, 0
      %v952 = vsel %vm352, %v903, 0
      %v955 = vsel %vm401, %v905, 0
      %957 = vmatpush.bf16.msra.mxu0 0
      %958 = vmatpush.bf16.msra.mxu0 0
      %959 = vmatpush.bf16.msra.mxu0 0
      %960 = vmatpush.bf16.msra.mxu0 0
      %961 = vmatpush.bf16.msra.mxu0 0
      %962 = vmatpush.bf16.msra.mxu0 0
      %963 = vmatpush.bf16.msra.mxu0 0
      %964 = vmatpush.bf16.msra.mxu0 %v955
      %965 = vmatmul.bf16.gmra.mxu0 %v907
      %v966 = vpop.f32.mrf.mxu0
      %v967 = vadd.f32 0.0, %v966
      %v968 = vpop.f32.mrf.mxu0
      %v969 = vadd.f32 0.0, %v968
      %970 = vmatmul.bf16.gmra.mxu0 %v910
      %v971 = vpop.f32.mrf.mxu0
      %v972 = vadd.f32 0.0, %v971
      %v973 = vpop.f32.mrf.mxu0
      %v974 = vadd.f32 0.0, %v973
      %975 = vmatmul.bf16.gmra.mxu0 %v913
      %v976 = vpop.f32.mrf.mxu0
      %v977 = vadd.f32 0.0, %v976
      %v978 = vpop.f32.mrf.mxu0
      %v979 = vadd.f32 0.0, %v978
      %980 = vmatmul.bf16.gmra.mxu0 %v916
      %v981 = vpop.f32.mrf.mxu0
      %v982 = vadd.f32 0.0, %v981
      %v983 = vpop.f32.mrf.mxu0
      %v984 = vadd.f32 0.0, %v983
      %985 = vmatmul.bf16.gmra.mxu0 %v919
      %v986 = vpop.f32.mrf.mxu0
      %v987 = vadd.f32 0.0, %v986
      %v988 = vpop.f32.mrf.mxu0
      %v989 = vadd.f32 0.0, %v988
      %990 = vmatmul.bf16.gmra.mxu0 %v922
      %v991 = vpop.f32.mrf.mxu0
      %v992 = vadd.f32 0.0, %v991
      %v993 = vpop.f32.mrf.mxu0
      %v994 = vadd.f32 0.0, %v993
      %995 = vmatmul.bf16.gmra.mxu0 %v925
      %v996 = vpop.f32.mrf.mxu0
      %v997 = vadd.f32 0.0, %v996
      %v998 = vpop.f32.mrf.mxu0
      %v999 = vadd.f32 0.0, %v998
      %1000 = vmatmul.bf16.gmra.mxu0 %v928
      %v1001 = vpop.f32.mrf.mxu0
      %v1002 = vadd.f32 0.0, %v1001
      %v1003 = vpop.f32.mrf.mxu0
      %v1004 = vadd.f32 0.0, %v1003
      %1005 = vmatmul.bf16.gmra.mxu0 %v931
      %v1006 = vpop.f32.mrf.mxu0
      %v1007 = vadd.f32 0.0, %v1006
      %v1008 = vpop.f32.mrf.mxu0
      %v1009 = vadd.f32 0.0, %v1008
      %1010 = vmatmul.bf16.gmra.mxu0 %v934
      %v1011 = vpop.f32.mrf.mxu0
      %v1012 = vadd.f32 0.0, %v1011
      %v1013 = vpop.f32.mrf.mxu0
      %v1014 = vadd.f32 0.0, %v1013
      %1015 = vmatmul.bf16.gmra.mxu0 %v937
      %v1016 = vpop.f32.mrf.mxu0
      %v1017 = vadd.f32 0.0, %v1016
      %v1018 = vpop.f32.mrf.mxu0
      %v1019 = vadd.f32 0.0, %v1018
      %1020 = vmatmul.bf16.gmra.mxu0 %v940
      %v1021 = vpop.f32.mrf.mxu0
      %v1022 = vadd.f32 0.0, %v1021
      %v1023 = vpop.f32.mrf.mxu0
      %v1024 = vadd.f32 0.0, %v1023
      %1025 = vmatmul.bf16.gmra.mxu0 %v943
      %v1026 = vpop.f32.mrf.mxu0
      %v1027 = vadd.f32 0.0, %v1026
      %v1028 = vpop.f32.mrf.mxu0
      %v1029 = vadd.f32 0.0, %v1028
      %1030 = vmatmul.bf16.gmra.mxu0 %v946
      %v1031 = vpop.f32.mrf.mxu0
      %v1032 = vadd.f32 0.0, %v1031
      %v1033 = vpop.f32.mrf.mxu0
      %v1034 = vadd.f32 0.0, %v1033
      %1035 = vmatmul.bf16.gmra.mxu0 %v949
      %v1036 = vpop.f32.mrf.mxu0
      %v1037 = vadd.f32 0.0, %v1036
      %v1038 = vpop.f32.mrf.mxu0
      %v1039 = vadd.f32 0.0, %v1038
      %1040 = vmatmul.bf16.gmra.mxu0 %v952
      %v1041 = vpop.f32.mrf.mxu0
      %v1042 = vadd.f32 0.0, %v1041
      %v1043 = vpop.f32.mrf.mxu0
      %v1044 = vadd.f32 0.0, %v1043
      %1045 = vdwg.mxu0
      %v1046 = vadd.f32 %v824, %v967
      %v1047 = vadd.f32 %v825, %v969
      %v1048 = vadd.f32 %v826, %v972
      %v1049 = vadd.f32 %v827, %v974
      %v1050 = vadd.f32 %v828, %v977
      %v1051 = vadd.f32 %v829, %v979
      %v1052 = vadd.f32 %v830, %v982
      %v1053 = vadd.f32 %v831, %v984
      %v1054 = vadd.f32 %v832, %v987
      %v1055 = vadd.f32 %v833, %v989
      %v1056 = vadd.f32 %v834, %v992
      %v1057 = vadd.f32 %v835, %v994
      %v1058 = vadd.f32 %v836, %v997
      %v1059 = vadd.f32 %v837, %v999
      %v1060 = vadd.f32 %v838, %v1002
      %v1061 = vadd.f32 %v839, %v1004
      %v1062 = vadd.f32 %v840, %v1007
      %v1063 = vadd.f32 %v841, %v1009
      %v1064 = vadd.f32 %v842, %v1012
      %v1065 = vadd.f32 %v843, %v1014
      %v1066 = vadd.f32 %v844, %v1017
      %v1067 = vadd.f32 %v845, %v1019
      %v1068 = vadd.f32 %v846, %v1022
      %v1069 = vadd.f32 %v847, %v1024
      %v1070 = vadd.f32 %v848, %v1027
      %v1071 = vadd.f32 %v849, %v1029
      %v1072 = vadd.f32 %v850, %v1032
      %v1073 = vadd.f32 %v851, %v1034
      %v1074 = vadd.f32 %v852, %v1037
      %v1075 = vadd.f32 %v853, %v1039
      %v1076 = vadd.f32 %v854, %v1042
      %v1077 = vadd.f32 %v855, %v1044
      %v1078 = vld [vmem:[%s246 + $0x11] sm:$0xff]
      %v1079 = vld [vmem:[%s246 + $0x19] sm:$0xff]
      %v1080 = vld [vmem:[%s246 + $0x21] sm:$0xff]
      %v1081 = vld [vmem:[%s246 + $0x29] sm:$0xff]
      %v1082 = vld [vmem:[%s246 + $0x31] sm:$0xff]
      %v1083 = vld [vmem:[%s246 + $0x39] sm:$0xff]
      %v1084 = vld [vmem:[%s246 + $0x41] sm:$0xff]
      %v1085 = vld [vmem:[%s246 + $0x49] sm:$0xff]
      %v1086 = vld [vmem:[%s246 + $0x51] sm:$0xff]
      %v1087 = vld [vmem:[%s246 + $0x59] sm:$0xff]
      %v1088 = vld [vmem:[%s246 + $0x61] sm:$0xff]
      %v1089 = vld [vmem:[%s246 + $0x69] sm:$0xff]
      %v1090 = vld [vmem:[%s246 + $0x71] sm:$0xff]
      %v1091 = vld [vmem:[%s246 + $0x79] sm:$0xff]
      %v1092 = vld [vmem:[%s246 + $0x81] sm:$0xff]
      %v1093 = vld [vmem:[%s246 + $0x89] sm:$0xff]
      %v1094 = vld [vmem:[%s246 + $0x91] sm:$0xff]
      %v1095 = vld [vmem:[%s246 + $0x99] sm:$0xff]
      %v1096 = vld [vmem:[%s246 + $0xa1] sm:$0xff]
      %v1097 = vld [vmem:[%s246 + $0xa9] sm:$0xff]
      %v1098 = vld [vmem:[%s246 + $0xb1] sm:$0xff]
      %v1099 = vld [vmem:[%s246 + $0xb9] sm:$0xff]
      %v1100 = vld [vmem:[%s246 + $0xc1] sm:$0xff]
      %v1101 = vld [vmem:[%s246 + $0xc9] sm:$0xff]
      %v1102 = vld [vmem:[%s246 + $0xd1] sm:$0xff]
      %v1103 = vld [vmem:[%s246 + $0xd9] sm:$0xff]
      %v1104 = vld [vmem:[%s246 + $0xe1] sm:$0xff]
      %v1105 = vld [vmem:[%s246 + $0xe9] sm:$0xff]
      %v1106 = vld [vmem:[%s246 + $0xf1] sm:$0xff]
      %v1107 = vld [vmem:[%s246 + $0xf9] sm:$0xff]
      %v1108 = vld [vmem:[%s246 + $0x101] sm:$0xff]
      %v1109 = vld [vmem:[%s246 + $0x109] sm:$0xff]
      %v1110 = vpack.c.bf16 %v1079, %v1078
      %v1111 = vpack.c.bf16 %v1081, %v1080
      %v1112 = vpack.c.bf16 %v1083, %v1082
      %v1113 = vpack.c.bf16 %v1085, %v1084
      %v1114 = vpack.c.bf16 %v1087, %v1086
      %v1115 = vpack.c.bf16 %v1089, %v1088
      %v1116 = vpack.c.bf16 %v1091, %v1090
      %v1117 = vpack.c.bf16 %v1093, %v1092
      %v1118 = vpack.c.bf16 %v1095, %v1094
      %v1119 = vpack.c.bf16 %v1097, %v1096
      %v1120 = vpack.c.bf16 %v1099, %v1098
      %v1121 = vpack.c.bf16 %v1101, %v1100
      %v1122 = vpack.c.bf16 %v1103, %v1102
      %v1123 = vpack.c.bf16 %v1105, %v1104
      %v1124 = vpack.c.bf16 %v1107, %v1106
      %v1125 = vpack.c.bf16 %v1109, %v1108
      %s1126 = scalar_lea.vmem %s2, 16
      %v1127 = vld [vmem:[%s1126] sm:$0xf]
      %v1129 = vsel %vm352, %v1110, 0
      %v1132 = vsel %vm352, %v1111, 0
      %v1135 = vsel %vm352, %v1112, 0
      %v1138 = vsel %vm352, %v1113, 0
      %v1141 = vsel %vm352, %v1114, 0
      %v1144 = vsel %vm352, %v1115, 0
      %v1147 = vsel %vm352, %v1116, 0
      %v1150 = vsel %vm352, %v1117, 0
      %v1153 = vsel %vm352, %v1118, 0
      %v1156 = vsel %vm352, %v1119, 0
      %v1159 = vsel %vm352, %v1120, 0
      %v1162 = vsel %vm352, %v1121, 0
      %v1165 = vsel %vm352, %v1122, 0
      %v1168 = vsel %vm352, %v1123, 0
      %v1171 = vsel %vm352, %v1124, 0
      %v1174 = vsel %vm352, %v1125, 0
      %v1177 = vsel %vm401, %v1127, 0
      %1179 = vmatpush.bf16.msra.mxu0 0
      %1180 = vmatpush.bf16.msra.mxu0 0
      %1181 = vmatpush.bf16.msra.mxu0 0
      %1182 = vmatpush.bf16.msra.mxu0 0
      %1183 = vmatpush.bf16.msra.mxu0 0
      %1184 = vmatpush.bf16.msra.mxu0 0
      %1185 = vmatpush.bf16.msra.mxu0 0
      %1186 = vmatpush.bf16.msra.mxu0 %v1177
      %1187 = vmatmul.bf16.gmra.mxu0 %v1129
      %v1188 = vpop.f32.mrf.mxu0
      %v1189 = vadd.f32 0.0, %v1188
      %v1190 = vpop.f32.mrf.mxu0
      %v1191 = vadd.f32 0.0, %v1190
      %1192 = vmatmul.bf16.gmra.mxu0 %v1132
      %v1193 = vpop.f32.mrf.mxu0
      %v1194 = vadd.f32 0.0, %v1193
      %v1195 = vpop.f32.mrf.mxu0
      %v1196 = vadd.f32 0.0, %v1195
      %1197 = vmatmul.bf16.gmra.mxu0 %v1135
      %v1198 = vpop.f32.mrf.mxu0
      %v1199 = vadd.f32 0.0, %v1198
      %v1200 = vpop.f32.mrf.mxu0
      %v1201 = vadd.f32 0.0, %v1200
      %1202 = vmatmul.bf16.gmra.mxu0 %v1138
      %v1203 = vpop.f32.mrf.mxu0
      %v1204 = vadd.f32 0.0, %v1203
      %v1205 = vpop.f32.mrf.mxu0
      %v1206 = vadd.f32 0.0, %v1205
      %1207 = vmatmul.bf16.gmra.mxu0 %v1141
      %v1208 = vpop.f32.mrf.mxu0
      %v1209 = vadd.f32 0.0, %v1208
      %v1210 = vpop.f32.mrf.mxu0
      %v1211 = vadd.f32 0.0, %v1210
      %1212 = vmatmul.bf16.gmra.mxu0 %v1144
      %v1213 = vpop.f32.mrf.mxu0
      %v1214 = vadd.f32 0.0, %v1213
      %v1215 = vpop.f32.mrf.mxu0
      %v1216 = vadd.f32 0.0, %v1215
      %1217 = vmatmul.bf16.gmra.mxu0 %v1147
      %v1218 = vpop.f32.mrf.mxu0
      %v1219 = vadd.f32 0.0, %v1218
      %v1220 = vpop.f32.mrf.mxu0
      %v1221 = vadd.f32 0.0, %v1220
      %1222 = vmatmul.bf16.gmra.mxu0 %v1150
      %v1223 = vpop.f32.mrf.mxu0
      %v1224 = vadd.f32 0.0, %v1223
      %v1225 = vpop.f32.mrf.mxu0
      %v1226 = vadd.f32 0.0, %v1225
      %1227 = vmatmul.bf16.gmra.mxu0 %v1153
      %v1228 = vpop.f32.mrf.mxu0
      %v1229 = vadd.f32 0.0, %v1228
      %v1230 = vpop.f32.mrf.mxu0
      %v1231 = vadd.f32 0.0, %v1230
      %1232 = vmatmul.bf16.gmra.mxu0 %v1156
      %v1233 = vpop.f32.mrf.mxu0
      %v1234 = vadd.f32 0.0, %v1233
      %v1235 = vpop.f32.mrf.mxu0
      %v1236 = vadd.f32 0.0, %v1235
      %1237 = vmatmul.bf16.gmra.mxu0 %v1159
      %v1238 = vpop.f32.mrf.mxu0
      %v1239 = vadd.f32 0.0, %v1238
      %v1240 = vpop.f32.mrf.mxu0
      %v1241 = vadd.f32 0.0, %v1240
      %1242 = vmatmul.bf16.gmra.mxu0 %v1162
      %v1243 = vpop.f32.mrf.mxu0
      %v1244 = vadd.f32 0.0, %v1243
      %v1245 = vpop.f32.mrf.mxu0
      %v1246 = vadd.f32 0.0, %v1245
      %1247 = vmatmul.bf16.gmra.mxu0 %v1165
      %v1248 = vpop.f32.mrf.mxu0
      %v1249 = vadd.f32 0.0, %v1248
      %v1250 = vpop.f32.mrf.mxu0
      %v1251 = vadd.f32 0.0, %v1250
      %1252 = vmatmul.bf16.gmra.mxu0 %v1168
      %v1253 = vpop.f32.mrf.mxu0
      %v1254 = vadd.f32 0.0, %v1253
      %v1255 = vpop.f32.mrf.mxu0
      %v1256 = vadd.f32 0.0, %v1255
      %1257 = vmatmul.bf16.gmra.mxu0 %v1171
      %v1258 = vpop.f32.mrf.mxu0
      %v1259 = vadd.f32 0.0, %v1258
      %v1260 = vpop.f32.mrf.mxu0
      %v1261 = vadd.f32 0.0, %v1260
      %1262 = vmatmul.bf16.gmra.mxu0 %v1174
      %v1263 = vpop.f32.mrf.mxu0
      %v1264 = vadd.f32 0.0, %v1263
      %v1265 = vpop.f32.mrf.mxu0
      %v1266 = vadd.f32 0.0, %v1265
      %1267 = vdwg.mxu0
      %v1268 = vadd.f32 %v1046, %v1189
      %v1269 = vadd.f32 %v1047, %v1191
      %v1270 = vadd.f32 %v1048, %v1194
      %v1271 = vadd.f32 %v1049, %v1196
      %v1272 = vadd.f32 %v1050, %v1199
      %v1273 = vadd.f32 %v1051, %v1201
      %v1274 = vadd.f32 %v1052, %v1204
      %v1275 = vadd.f32 %v1053, %v1206
      %v1276 = vadd.f32 %v1054, %v1209
      %v1277 = vadd.f32 %v1055, %v1211
      %v1278 = vadd.f32 %v1056, %v1214
      %v1279 = vadd.f32 %v1057, %v1216
      %v1280 = vadd.f32 %v1058, %v1219
      %v1281 = vadd.f32 %v1059, %v1221
      %v1282 = vadd.f32 %v1060, %v1224
      %v1283 = vadd.f32 %v1061, %v1226
      %v1284 = vadd.f32 %v1062, %v1229
      %v1285 = vadd.f32 %v1063, %v1231
      %v1286 = vadd.f32 %v1064, %v1234
      %v1287 = vadd.f32 %v1065, %v1236
      %v1288 = vadd.f32 %v1066, %v1239
      %v1289 = vadd.f32 %v1067, %v1241
      %v1290 = vadd.f32 %v1068, %v1244
      %v1291 = vadd.f32 %v1069, %v1246
      %v1292 = vadd.f32 %v1070, %v1249
      %v1293 = vadd.f32 %v1071, %v1251
      %v1294 = vadd.f32 %v1072, %v1254
      %v1295 = vadd.f32 %v1073, %v1256
      %v1296 = vadd.f32 %v1074, %v1259
      %v1297 = vadd.f32 %v1075, %v1261
      %v1298 = vadd.f32 %v1076, %v1264
      %v1299 = vadd.f32 %v1077, %v1266
      %v1300 = vld [vmem:[%s246 + $0x12] sm:$0xff]
      %v1301 = vld [vmem:[%s246 + $0x1a] sm:$0xff]
      %v1302 = vld [vmem:[%s246 + $0x22] sm:$0xff]
      %v1303 = vld [vmem:[%s246 + $0x2a] sm:$0xff]
      %v1304 = vld [vmem:[%s246 + $0x32] sm:$0xff]
      %v1305 = vld [vmem:[%s246 + $0x3a] sm:$0xff]
      %v1306 = vld [vmem:[%s246 + $0x42] sm:$0xff]
      %v1307 = vld [vmem:[%s246 + $0x4a] sm:$0xff]
      %v1308 = vld [vmem:[%s246 + $0x52] sm:$0xff]
      %v1309 = vld [vmem:[%s246 + $0x5a] sm:$0xff]
      %v1310 = vld [vmem:[%s246 + $0x62] sm:$0xff]
      %v1311 = vld [vmem:[%s246 + $0x6a] sm:$0xff]
      %v1312 = vld [vmem:[%s246 + $0x72] sm:$0xff]
      %v1313 = vld [vmem:[%s246 + $0x7a] sm:$0xff]
      %v1314 = vld [vmem:[%s246 + $0x82] sm:$0xff]
      %v1315 = vld [vmem:[%s246 + $0x8a] sm:$0xff]
      %v1316 = vld [vmem:[%s246 + $0x92] sm:$0xff]
      %v1317 = vld [vmem:[%s246 + $0x9a] sm:$0xff]
      %v1318 = vld [vmem:[%s246 + $0xa2] sm:$0xff]
      %v1319 = vld [vmem:[%s246 + $0xaa] sm:$0xff]
      %v1320 = vld [vmem:[%s246 + $0xb2] sm:$0xff]
      %v1321 = vld [vmem:[%s246 + $0xba] sm:$0xff]
      %v1322 = vld [vmem:[%s246 + $0xc2] sm:$0xff]
      %v1323 = vld [vmem:[%s246 + $0xca] sm:$0xff]
      %v1324 = vld [vmem:[%s246 + $0xd2] sm:$0xff]
      %v1325 = vld [vmem:[%s246 + $0xda] sm:$0xff]
      %v1326 = vld [vmem:[%s246 + $0xe2] sm:$0xff]
      %v1327 = vld [vmem:[%s246 + $0xea] sm:$0xff]
      %v1328 = vld [vmem:[%s246 + $0xf2] sm:$0xff]
      %v1329 = vld [vmem:[%s246 + $0xfa] sm:$0xff]
      %v1330 = vld [vmem:[%s246 + $0x102] sm:$0xff]
      %v1331 = vld [vmem:[%s246 + $0x10a] sm:$0xff]
      %v1332 = vpack.c.bf16 %v1301, %v1300
      %v1333 = vpack.c.bf16 %v1303, %v1302
      %v1334 = vpack.c.bf16 %v1305, %v1304
      %v1335 = vpack.c.bf16 %v1307, %v1306
      %v1336 = vpack.c.bf16 %v1309, %v1308
      %v1337 = vpack.c.bf16 %v1311, %v1310
      %v1338 = vpack.c.bf16 %v1313, %v1312
      %v1339 = vpack.c.bf16 %v1315, %v1314
      %v1340 = vpack.c.bf16 %v1317, %v1316
      %v1341 = vpack.c.bf16 %v1319, %v1318
      %v1342 = vpack.c.bf16 %v1321, %v1320
      %v1343 = vpack.c.bf16 %v1323, %v1322
      %v1344 = vpack.c.bf16 %v1325, %v1324
      %v1345 = vpack.c.bf16 %v1327, %v1326
      %v1346 = vpack.c.bf16 %v1329, %v1328
      %v1347 = vpack.c.bf16 %v1331, %v1330
      %s1348 = scalar_lea.vmem %s2, 20
      %v1349 = vld [vmem:[%s1348] sm:$0xf]
      %v1351 = vsel %vm352, %v1332, 0
      %v1354 = vsel %vm352, %v1333, 0
      %v1357 = vsel %vm352, %v1334, 0
      %v1360 = vsel %vm352, %v1335, 0
      %v1363 = vsel %vm352, %v1336, 0
      %v1366 = vsel %vm352, %v1337, 0
      %v1369 = vsel %vm352, %v1338, 0
      %v1372 = vsel %vm352, %v1339, 0
      %v1375 = vsel %vm352, %v1340, 0
      %v1378 = vsel %vm352, %v1341, 0
      %v1381 = vsel %vm352, %v1342, 0
      %v1384 = vsel %vm352, %v1343, 0
      %v1387 = vsel %vm352, %v1344, 0
      %v1390 = vsel %vm352, %v1345, 0
      %v1393 = vsel %vm352, %v1346, 0
      %v1396 = vsel %vm352, %v1347, 0
      %v1399 = vsel %vm401, %v1349, 0
      %1401 = vmatpush.bf16.msra.mxu0 0
      %1402 = vmatpush.bf16.msra.mxu0 0
      %1403 = vmatpush.bf16.msra.mxu0 0
      %1404 = vmatpush.bf16.msra.mxu0 0
      %1405 = vmatpush.bf16.msra.mxu0 0
      %1406 = vmatpush.bf16.msra.mxu0 0
      %1407 = vmatpush.bf16.msra.mxu0 0
      %1408 = vmatpush.bf16.msra.mxu0 %v1399
      %1409 = vmatmul.bf16.gmra.mxu0 %v1351
      %v1410 = vpop.f32.mrf.mxu0
      %v1411 = vadd.f32 0.0, %v1410
      %v1412 = vpop.f32.mrf.mxu0
      %v1413 = vadd.f32 0.0, %v1412
      %1414 = vmatmul.bf16.gmra.mxu0 %v1354
      %v1415 = vpop.f32.mrf.mxu0
      %v1416 = vadd.f32 0.0, %v1415
      %v1417 = vpop.f32.mrf.mxu0
      %v1418 = vadd.f32 0.0, %v1417
      %1419 = vmatmul.bf16.gmra.mxu0 %v1357
      %v1420 = vpop.f32.mrf.mxu0
      %v1421 = vadd.f32 0.0, %v1420
      %v1422 = vpop.f32.mrf.mxu0
      %v1423 = vadd.f32 0.0, %v1422
      %1424 = vmatmul.bf16.gmra.mxu0 %v1360
      %v1425 = vpop.f32.mrf.mxu0
      %v1426 = vadd.f32 0.0, %v1425
      %v1427 = vpop.f32.mrf.mxu0
      %v1428 = vadd.f32 0.0, %v1427
      %1429 = vmatmul.bf16.gmra.mxu0 %v1363
      %v1430 = vpop.f32.mrf.mxu0
      %v1431 = vadd.f32 0.0, %v1430
      %v1432 = vpop.f32.mrf.mxu0
      %v1433 = vadd.f32 0.0, %v1432
      %1434 = vmatmul.bf16.gmra.mxu0 %v1366
      %v1435 = vpop.f32.mrf.mxu0
      %v1436 = vadd.f32 0.0, %v1435
      %v1437 = vpop.f32.mrf.mxu0
      %v1438 = vadd.f32 0.0, %v1437
      %1439 = vmatmul.bf16.gmra.mxu0 %v1369
      %v1440 = vpop.f32.mrf.mxu0
      %v1441 = vadd.f32 0.0, %v1440
      %v1442 = vpop.f32.mrf.mxu0
      %v1443 = vadd.f32 0.0, %v1442
      %1444 = vmatmul.bf16.gmra.mxu0 %v1372
      %v1445 = vpop.f32.mrf.mxu0
      %v1446 = vadd.f32 0.0, %v1445
      %v1447 = vpop.f32.mrf.mxu0
      %v1448 = vadd.f32 0.0, %v1447
      %1449 = vmatmul.bf16.gmra.mxu0 %v1375
      %v1450 = vpop.f32.mrf.mxu0
      %v1451 = vadd.f32 0.0, %v1450
      %v1452 = vpop.f32.mrf.mxu0
      %v1453 = vadd.f32 0.0, %v1452
      %1454 = vmatmul.bf16.gmra.mxu0 %v1378
      %v1455 = vpop.f32.mrf.mxu0
      %v1456 = vadd.f32 0.0, %v1455
      %v1457 = vpop.f32.mrf.mxu0
      %v1458 = vadd.f32 0.0, %v1457
      %1459 = vmatmul.bf16.gmra.mxu0 %v1381
      %v1460 = vpop.f32.mrf.mxu0
      %v1461 = vadd.f32 0.0, %v1460
      %v1462 = vpop.f32.mrf.mxu0
      %v1463 = vadd.f32 0.0, %v1462
      %1464 = vmatmul.bf16.gmra.mxu0 %v1384
      %v1465 = vpop.f32.mrf.mxu0
      %v1466 = vadd.f32 0.0, %v1465
      %v1467 = vpop.f32.mrf.mxu0
      %v1468 = vadd.f32 0.0, %v1467
      %1469 = vmatmul.bf16.gmra.mxu0 %v1387
      %v1470 = vpop.f32.mrf.mxu0
      %v1471 = vadd.f32 0.0, %v1470
      %v1472 = vpop.f32.mrf.mxu0
      %v1473 = vadd.f32 0.0, %v1472
      %1474 = vmatmul.bf16.gmra.mxu0 %v1390
      %v1475 = vpop.f32.mrf.mxu0
      %v1476 = vadd.f32 0.0, %v1475
      %v1477 = vpop.f32.mrf.mxu0
      %v1478 = vadd.f32 0.0, %v1477
      %1479 = vmatmul.bf16.gmra.mxu0 %v1393
      %v1480 = vpop.f32.mrf.mxu0
      %v1481 = vadd.f32 0.0, %v1480
      %v1482 = vpop.f32.mrf.mxu0
      %v1483 = vadd.f32 0.0, %v1482
      %1484 = vmatmul.bf16.gmra.mxu0 %v1396
      %v1485 = vpop.f32.mrf.mxu0
      %v1486 = vadd.f32 0.0, %v1485
      %v1487 = vpop.f32.mrf.mxu0
      %v1488 = vadd.f32 0.0, %v1487
      %1489 = vdwg.mxu0
      %v1490 = vadd.f32 %v1268, %v1411
      %v1491 = vadd.f32 %v1269, %v1413
      %v1492 = vadd.f32 %v1270, %v1416
      %v1493 = vadd.f32 %v1271, %v1418
      %v1494 = vadd.f32 %v1272, %v1421
      %v1495 = vadd.f32 %v1273, %v1423
      %v1496 = vadd.f32 %v1274, %v1426
      %v1497 = vadd.f32 %v1275, %v1428
      %v1498 = vadd.f32 %v1276, %v1431
      %v1499 = vadd.f32 %v1277, %v1433
      %v1500 = vadd.f32 %v1278, %v1436
      %v1501 = vadd.f32 %v1279, %v1438
      %v1502 = vadd.f32 %v1280, %v1441
      %v1503 = vadd.f32 %v1281, %v1443
      %v1504 = vadd.f32 %v1282, %v1446
      %v1505 = vadd.f32 %v1283, %v1448
      %v1506 = vadd.f32 %v1284, %v1451
      %v1507 = vadd.f32 %v1285, %v1453
      %v1508 = vadd.f32 %v1286, %v1456
      %v1509 = vadd.f32 %v1287, %v1458
      %v1510 = vadd.f32 %v1288, %v1461
      %v1511 = vadd.f32 %v1289, %v1463
      %v1512 = vadd.f32 %v1290, %v1466
      %v1513 = vadd.f32 %v1291, %v1468
      %v1514 = vadd.f32 %v1292, %v1471
      %v1515 = vadd.f32 %v1293, %v1473
      %v1516 = vadd.f32 %v1294, %v1476
      %v1517 = vadd.f32 %v1295, %v1478
      %v1518 = vadd.f32 %v1296, %v1481
      %v1519 = vadd.f32 %v1297, %v1483
      %v1520 = vadd.f32 %v1298, %v1486
      %v1521 = vadd.f32 %v1299, %v1488
      %v1522 = vld [vmem:[%s246 + $0x20] sm:$0xff]
      %v1523 = vld [vmem:[%s246 + $0x28] sm:$0xff]
      %v1524 = vld [vmem:[%s246 + $0x30] sm:$0xff]
      %v1525 = vld [vmem:[%s246 + $0x38] sm:$0xff]
      %v1526 = vld [vmem:[%s246 + $0x40] sm:$0xff]
      %v1527 = vld [vmem:[%s246 + $0x48] sm:$0xff]
      %v1528 = vld [vmem:[%s246 + $0x50] sm:$0xff]
      %v1529 = vld [vmem:[%s246 + $0x58] sm:$0xff]
      %v1530 = vld [vmem:[%s246 + $0x60] sm:$0xff]
      %v1531 = vld [vmem:[%s246 + $0x68] sm:$0xff]
      %v1532 = vld [vmem:[%s246 + $0x70] sm:$0xff]
      %v1533 = vld [vmem:[%s246 + $0x78] sm:$0xff]
      %v1534 = vld [vmem:[%s246 + $0x80] sm:$0xff]
      %v1535 = vld [vmem:[%s246 + $0x88] sm:$0xff]
      %v1536 = vld [vmem:[%s246 + $0x90] sm:$0xff]
      %v1537 = vld [vmem:[%s246 + $0x98] sm:$0xff]
      %v1538 = vld [vmem:[%s246 + $0xa0] sm:$0xff]
      %v1539 = vld [vmem:[%s246 + $0xa8] sm:$0xff]
      %v1540 = vld [vmem:[%s246 + $0xb0] sm:$0xff]
      %v1541 = vld [vmem:[%s246 + $0xb8] sm:$0xff]
      %v1542 = vld [vmem:[%s246 + $0xc0] sm:$0xff]
      %v1543 = vld [vmem:[%s246 + $0xc8] sm:$0xff]
      %v1544 = vld [vmem:[%s246 + $0xd0] sm:$0xff]
      %v1545 = vld [vmem:[%s246 + $0xd8] sm:$0xff]
      %v1546 = vld [vmem:[%s246 + $0xe0] sm:$0xff]
      %v1547 = vld [vmem:[%s246 + $0xe8] sm:$0xff]
      %v1548 = vld [vmem:[%s246 + $0xf0] sm:$0xff]
      %v1549 = vld [vmem:[%s246 + $0xf8] sm:$0xff]
      %v1550 = vld [vmem:[%s246 + $0x100] sm:$0xff]
      %v1551 = vld [vmem:[%s246 + $0x108] sm:$0xff]
      %v1552 = vld [vmem:[%s246 + $0x110] sm:$0xff]
      %v1553 = vld [vmem:[%s246 + $0x118] sm:$0xff]
      %v1554 = vpack.c.bf16 %v1523, %v1522
      %v1555 = vpack.c.bf16 %v1525, %v1524
      %v1556 = vpack.c.bf16 %v1527, %v1526
      %v1557 = vpack.c.bf16 %v1529, %v1528
      %v1558 = vpack.c.bf16 %v1531, %v1530
      %v1559 = vpack.c.bf16 %v1533, %v1532
      %v1560 = vpack.c.bf16 %v1535, %v1534
      %v1561 = vpack.c.bf16 %v1537, %v1536
      %v1562 = vpack.c.bf16 %v1539, %v1538
      %v1563 = vpack.c.bf16 %v1541, %v1540
      %v1564 = vpack.c.bf16 %v1543, %v1542
      %v1565 = vpack.c.bf16 %v1545, %v1544
      %v1566 = vpack.c.bf16 %v1547, %v1546
      %v1567 = vpack.c.bf16 %v1549, %v1548
      %v1568 = vpack.c.bf16 %v1551, %v1550
      %v1569 = vpack.c.bf16 %v1553, %v1552
      %s1570 = scalar_lea.vmem %s2, 24
      %v1571 = vld [vmem:[%s1570] sm:$0xf]
      %v1573 = vsel %vm352, %v1554, 0
      %v1576 = vsel %vm352, %v1555, 0
      %v1579 = vsel %vm352, %v1556, 0
      %v1582 = vsel %vm352, %v1557, 0
      %v1585 = vsel %vm352, %v1558, 0
      %v1588 = vsel %vm352, %v1559, 0
      %v1591 = vsel %vm352, %v1560, 0
      %v1594 = vsel %vm352, %v1561, 0
      %v1597 = vsel %vm352, %v1562, 0
      %v1600 = vsel %vm352, %v1563, 0
      %v1603 = vsel %vm352, %v1564, 0
      %v1606 = vsel %vm352, %v1565, 0
      %v1609 = vsel %vm352, %v1566, 0
      %v1612 = vsel %vm352, %v1567, 0
      %v1615 = vsel %vm352, %v1568, 0
      %v1618 = vsel %vm352, %v1569, 0
      %v1621 = vsel %vm401, %v1571, 0
      %1623 = vmatpush.bf16.msra.mxu0 0
      %1624 = vmatpush.bf16.msra.mxu0 0
      %1625 = vmatpush.bf16.msra.mxu0 0
      %1626 = vmatpush.bf16.msra.mxu0 0
      %1627 = vmatpush.bf16.msra.mxu0 0
      %1628 = vmatpush.bf16.msra.mxu0 0
      %1629 = vmatpush.bf16.msra.mxu0 0
      %1630 = vmatpush.bf16.msra.mxu0 %v1621
      %1631 = vmatmul.bf16.gmra.mxu0 %v1573
      %v1632 = vpop.f32.mrf.mxu0
      %v1633 = vadd.f32 0.0, %v1632
      %v1634 = vpop.f32.mrf.mxu0
      %v1635 = vadd.f32 0.0, %v1634
      %1636 = vmatmul.bf16.gmra.mxu0 %v1576
      %v1637 = vpop.f32.mrf.mxu0
      %v1638 = vadd.f32 0.0, %v1637
      %v1639 = vpop.f32.mrf.mxu0
      %v1640 = vadd.f32 0.0, %v1639
      %1641 = vmatmul.bf16.gmra.mxu0 %v1579
      %v1642 = vpop.f32.mrf.mxu0
      %v1643 = vadd.f32 0.0, %v1642
      %v1644 = vpop.f32.mrf.mxu0
      %v1645 = vadd.f32 0.0, %v1644
      %1646 = vmatmul.bf16.gmra.mxu0 %v1582
      %v1647 = vpop.f32.mrf.mxu0
      %v1648 = vadd.f32 0.0, %v1647
      %v1649 = vpop.f32.mrf.mxu0
      %v1650 = vadd.f32 0.0, %v1649
      %1651 = vmatmul.bf16.gmra.mxu0 %v1585
      %v1652 = vpop.f32.mrf.mxu0
      %v1653 = vadd.f32 0.0, %v1652
      %v1654 = vpop.f32.mrf.mxu0
      %v1655 = vadd.f32 0.0, %v1654
      %1656 = vmatmul.bf16.gmra.mxu0 %v1588
      %v1657 = vpop.f32.mrf.mxu0
      %v1658 = vadd.f32 0.0, %v1657
      %v1659 = vpop.f32.mrf.mxu0
      %v1660 = vadd.f32 0.0, %v1659
      %1661 = vmatmul.bf16.gmra.mxu0 %v1591
      %v1662 = vpop.f32.mrf.mxu0
      %v1663 = vadd.f32 0.0, %v1662
      %v1664 = vpop.f32.mrf.mxu0
      %v1665 = vadd.f32 0.0, %v1664
      %1666 = vmatmul.bf16.gmra.mxu0 %v1594
      %v1667 = vpop.f32.mrf.mxu0
      %v1668 = vadd.f32 0.0, %v1667
      %v1669 = vpop.f32.mrf.mxu0
      %v1670 = vadd.f32 0.0, %v1669
      %1671 = vmatmul.bf16.gmra.mxu0 %v1597
      %v1672 = vpop.f32.mrf.mxu0
      %v1673 = vadd.f32 0.0, %v1672
      %v1674 = vpop.f32.mrf.mxu0
      %v1675 = vadd.f32 0.0, %v1674
      %1676 = vmatmul.bf16.gmra.mxu0 %v1600
      %v1677 = vpop.f32.mrf.mxu0
      %v1678 = vadd.f32 0.0, %v1677
      %v1679 = vpop.f32.mrf.mxu0
      %v1680 = vadd.f32 0.0, %v1679
      %1681 = vmatmul.bf16.gmra.mxu0 %v1603
      %v1682 = vpop.f32.mrf.mxu0
      %v1683 = vadd.f32 0.0, %v1682
      %v1684 = vpop.f32.mrf.mxu0
      %v1685 = vadd.f32 0.0, %v1684
      %1686 = vmatmul.bf16.gmra.mxu0 %v1606
      %v1687 = vpop.f32.mrf.mxu0
      %v1688 = vadd.f32 0.0, %v1687
      %v1689 = vpop.f32.mrf.mxu0
      %v1690 = vadd.f32 0.0, %v1689
      %1691 = vmatmul.bf16.gmra.mxu0 %v1609
      %v1692 = vpop.f32.mrf.mxu0
      %v1693 = vadd.f32 0.0, %v1692
      %v1694 = vpop.f32.mrf.mxu0
      %v1695 = vadd.f32 0.0, %v1694
      %1696 = vmatmul.bf16.gmra.mxu0 %v1612
      %v1697 = vpop.f32.mrf.mxu0
      %v1698 = vadd.f32 0.0, %v1697
      %v1699 = vpop.f32.mrf.mxu0
      %v1700 = vadd.f32 0.0, %v1699
      %1701 = vmatmul.bf16.gmra.mxu0 %v1615
      %v1702 = vpop.f32.mrf.mxu0
      %v1703 = vadd.f32 0.0, %v1702
      %v1704 = vpop.f32.mrf.mxu0
      %v1705 = vadd.f32 0.0, %v1704
      %1706 = vmatmul.bf16.gmra.mxu0 %v1618
      %v1707 = vpop.f32.mrf.mxu0
      %v1708 = vadd.f32 0.0, %v1707
      %v1709 = vpop.f32.mrf.mxu0
      %v1710 = vadd.f32 0.0, %v1709
      %1711 = vdwg.mxu0
      %v1712 = vadd.f32 %v1490, %v1633
      %v1713 = vadd.f32 %v1491, %v1635
      %v1714 = vadd.f32 %v1492, %v1638
      %v1715 = vadd.f32 %v1493, %v1640
      %v1716 = vadd.f32 %v1494, %v1643
      %v1717 = vadd.f32 %v1495, %v1645
      %v1718 = vadd.f32 %v1496, %v1648
      %v1719 = vadd.f32 %v1497, %v1650
      %v1720 = vadd.f32 %v1498, %v1653
      %v1721 = vadd.f32 %v1499, %v1655
      %v1722 = vadd.f32 %v1500, %v1658
      %v1723 = vadd.f32 %v1501, %v1660
      %v1724 = vadd.f32 %v1502, %v1663
      %v1725 = vadd.f32 %v1503, %v1665
      %v1726 = vadd.f32 %v1504, %v1668
      %v1727 = vadd.f32 %v1505, %v1670
      %v1728 = vadd.f32 %v1506, %v1673
      %v1729 = vadd.f32 %v1507, %v1675
      %v1730 = vadd.f32 %v1508, %v1678
      %v1731 = vadd.f32 %v1509, %v1680
      %v1732 = vadd.f32 %v1510, %v1683
      %v1733 = vadd.f32 %v1511, %v1685
      %v1734 = vadd.f32 %v1512, %v1688
      %v1735 = vadd.f32 %v1513, %v1690
      %v1736 = vadd.f32 %v1514, %v1693
      %v1737 = vadd.f32 %v1515, %v1695
      %v1738 = vadd.f32 %v1516, %v1698
      %v1739 = vadd.f32 %v1517, %v1700
      %v1740 = vadd.f32 %v1518, %v1703
      %v1741 = vadd.f32 %v1519, %v1705
      %v1742 = vadd.f32 %v1520, %v1708
      %v1743 = vadd.f32 %v1521, %v1710
      %v1744 = vld [vmem:[%s246 + $0x21] sm:$0xff]
      %v1745 = vld [vmem:[%s246 + $0x29] sm:$0xff]
      %v1746 = vld [vmem:[%s246 + $0x31] sm:$0xff]
      %v1747 = vld [vmem:[%s246 + $0x39] sm:$0xff]
      %v1748 = vld [vmem:[%s246 + $0x41] sm:$0xff]
      %v1749 = vld [vmem:[%s246 + $0x49] sm:$0xff]
      %v1750 = vld [vmem:[%s246 + $0x51] sm:$0xff]
      %v1751 = vld [vmem:[%s246 + $0x59] sm:$0xff]
      %v1752 = vld [vmem:[%s246 + $0x61] sm:$0xff]
      %v1753 = vld [vmem:[%s246 + $0x69] sm:$0xff]
      %v1754 = vld [vmem:[%s246 + $0x71] sm:$0xff]
      %v1755 = vld [vmem:[%s246 + $0x79] sm:$0xff]
      %v1756 = vld [vmem:[%s246 + $0x81] sm:$0xff]
      %v1757 = vld [vmem:[%s246 + $0x89] sm:$0xff]
      %v1758 = vld [vmem:[%s246 + $0x91] sm:$0xff]
      %v1759 = vld [vmem:[%s246 + $0x99] sm:$0xff]
      %v1760 = vld [vmem:[%s246 + $0xa1] sm:$0xff]
      %v1761 = vld [vmem:[%s246 + $0xa9] sm:$0xff]
      %v1762 = vld [vmem:[%s246 + $0xb1] sm:$0xff]
      %v1763 = vld [vmem:[%s246 + $0xb9] sm:$0xff]
      %v1764 = vld [vmem:[%s246 + $0xc1] sm:$0xff]
      %v1765 = vld [vmem:[%s246 + $0xc9] sm:$0xff]
      %v1766 = vld [vmem:[%s246 + $0xd1] sm:$0xff]
      %v1767 = vld [vmem:[%s246 + $0xd9] sm:$0xff]
      %v1768 = vld [vmem:[%s246 + $0xe1] sm:$0xff]
      %v1769 = vld [vmem:[%s246 + $0xe9] sm:$0xff]
      %v1770 = vld [vmem:[%s246 + $0xf1] sm:$0xff]
      %v1771 = vld [vmem:[%s246 + $0xf9] sm:$0xff]
      %v1772 = vld [vmem:[%s246 + $0x101] sm:$0xff]
      %v1773 = vld [vmem:[%s246 + $0x109] sm:$0xff]
      %v1774 = vld [vmem:[%s246 + $0x111] sm:$0xff]
      %v1775 = vld [vmem:[%s246 + $0x119] sm:$0xff]
      %v1776 = vpack.c.bf16 %v1745, %v1744
      %v1777 = vpack.c.bf16 %v1747, %v1746
      %v1778 = vpack.c.bf16 %v1749, %v1748
      %v1779 = vpack.c.bf16 %v1751, %v1750
      %v1780 = vpack.c.bf16 %v1753, %v1752
      %v1781 = vpack.c.bf16 %v1755, %v1754
      %v1782 = vpack.c.bf16 %v1757, %v1756
      %v1783 = vpack.c.bf16 %v1759, %v1758
      %v1784 = vpack.c.bf16 %v1761, %v1760
      %v1785 = vpack.c.bf16 %v1763, %v1762
      %v1786 = vpack.c.bf16 %v1765, %v1764
      %v1787 = vpack.c.bf16 %v1767, %v1766
      %v1788 = vpack.c.bf16 %v1769, %v1768
      %v1789 = vpack.c.bf16 %v1771, %v1770
      %v1790 = vpack.c.bf16 %v1773, %v1772
      %v1791 = vpack.c.bf16 %v1775, %v1774
      %s1792 = scalar_lea.vmem %s2, 28
      %v1793 = vld [vmem:[%s1792] sm:$0xf]
      %v1795 = vsel %vm352, %v1776, 0
      %v1798 = vsel %vm352, %v1777, 0
      %v1801 = vsel %vm352, %v1778, 0
      %v1804 = vsel %vm352, %v1779, 0
      %v1807 = vsel %vm352, %v1780, 0
      %v1810 = vsel %vm352, %v1781, 0
      %v1813 = vsel %vm352, %v1782, 0
      %v1816 = vsel %vm352, %v1783, 0
      %v1819 = vsel %vm352, %v1784, 0
      %v1822 = vsel %vm352, %v1785, 0
      %v1825 = vsel %vm352, %v1786, 0
      %v1828 = vsel %vm352, %v1787, 0
      %v1831 = vsel %vm352, %v1788, 0
      %v1834 = vsel %vm352, %v1789, 0
      %v1837 = vsel %vm352, %v1790, 0
      %v1840 = vsel %vm352, %v1791, 0
      %v1843 = vsel %vm401, %v1793, 0
      %1845 = vmatpush.bf16.msra.mxu0 0
      %1846 = vmatpush.bf16.msra.mxu0 0
      %1847 = vmatpush.bf16.msra.mxu0 0
      %1848 = vmatpush.bf16.msra.mxu0 0
      %1849 = vmatpush.bf16.msra.mxu0 0
      %1850 = vmatpush.bf16.msra.mxu0 0
      %1851 = vmatpush.bf16.msra.mxu0 0
      %1852 = vmatpush.bf16.msra.mxu0 %v1843
      %1853 = vmatmul.bf16.gmra.mxu0 %v1795
      %v1854 = vpop.f32.mrf.mxu0
      %v1855 = vadd.f32 0.0, %v1854
      %v1856 = vpop.f32.mrf.mxu0
      %v1857 = vadd.f32 0.0, %v1856
      %1858 = vmatmul.bf16.gmra.mxu0 %v1798
      %v1859 = vpop.f32.mrf.mxu0
      %v1860 = vadd.f32 0.0, %v1859
      %v1861 = vpop.f32.mrf.mxu0
      %v1862 = vadd.f32 0.0, %v1861
      %1863 = vmatmul.bf16.gmra.mxu0 %v1801
      %v1864 = vpop.f32.mrf.mxu0
      %v1865 = vadd.f32 0.0, %v1864
      %v1866 = vpop.f32.mrf.mxu0
      %v1867 = vadd.f32 0.0, %v1866
      %1868 = vmatmul.bf16.gmra.mxu0 %v1804
      %v1869 = vpop.f32.mrf.mxu0
      %v1870 = vadd.f32 0.0, %v1869
      %v1871 = vpop.f32.mrf.mxu0
      %v1872 = vadd.f32 0.0, %v1871
      %1873 = vmatmul.bf16.gmra.mxu0 %v1807
      %v1874 = vpop.f32.mrf.mxu0
      %v1875 = vadd.f32 0.0, %v1874
      %v1876 = vpop.f32.mrf.mxu0
      %v1877 = vadd.f32 0.0, %v1876
      %1878 = vmatmul.bf16.gmra.mxu0 %v1810
      %v1879 = vpop.f32.mrf.mxu0
      %v1880 = vadd.f32 0.0, %v1879
      %v1881 = vpop.f32.mrf.mxu0
      %v1882 = vadd.f32 0.0, %v1881
      %1883 = vmatmul.bf16.gmra.mxu0 %v1813
      %v1884 = vpop.f32.mrf.mxu0
      %v1885 = vadd.f32 0.0, %v1884
      %v1886 = vpop.f32.mrf.mxu0
      %v1887 = vadd.f32 0.0, %v1886
      %1888 = vmatmul.bf16.gmra.mxu0 %v1816
      %v1889 = vpop.f32.mrf.mxu0
      %v1890 = vadd.f32 0.0, %v1889
      %v1891 = vpop.f32.mrf.mxu0
      %v1892 = vadd.f32 0.0, %v1891
      %1893 = vmatmul.bf16.gmra.mxu0 %v1819
      %v1894 = vpop.f32.mrf.mxu0
      %v1895 = vadd.f32 0.0, %v1894
      %v1896 = vpop.f32.mrf.mxu0
      %v1897 = vadd.f32 0.0, %v1896
      %1898 = vmatmul.bf16.gmra.mxu0 %v1822
      %v1899 = vpop.f32.mrf.mxu0
      %v1900 = vadd.f32 0.0, %v1899
      %v1901 = vpop.f32.mrf.mxu0
      %v1902 = vadd.f32 0.0, %v1901
      %1903 = vmatmul.bf16.gmra.mxu0 %v1825
      %v1904 = vpop.f32.mrf.mxu0
      %v1905 = vadd.f32 0.0, %v1904
      %v1906 = vpop.f32.mrf.mxu0
      %v1907 = vadd.f32 0.0, %v1906
      %1908 = vmatmul.bf16.gmra.mxu0 %v1828
      %v1909 = vpop.f32.mrf.mxu0
      %v1910 = vadd.f32 0.0, %v1909
      %v1911 = vpop.f32.mrf.mxu0
      %v1912 = vadd.f32 0.0, %v1911
      %1913 = vmatmul.bf16.gmra.mxu0 %v1831
      %v1914 = vpop.f32.mrf.mxu0
      %v1915 = vadd.f32 0.0, %v1914
      %v1916 = vpop.f32.mrf.mxu0
      %v1917 = vadd.f32 0.0, %v1916
      %1918 = vmatmul.bf16.gmra.mxu0 %v1834
      %v1919 = vpop.f32.mrf.mxu0
      %v1920 = vadd.f32 0.0, %v1919
      %v1921 = vpop.f32.mrf.mxu0
      %v1922 = vadd.f32 0.0, %v1921
      %1923 = vmatmul.bf16.gmra.mxu0 %v1837
      %v1924 = vpop.f32.mrf.mxu0
      %v1925 = vadd.f32 0.0, %v1924
      %v1926 = vpop.f32.mrf.mxu0
      %v1927 = vadd.f32 0.0, %v1926
      %1928 = vmatmul.bf16.gmra.mxu0 %v1840
      %v1929 = vpop.f32.mrf.mxu0
      %v1930 = vadd.f32 0.0, %v1929
      %v1931 = vpop.f32.mrf.mxu0
      %v1932 = vadd.f32 0.0, %v1931
      %1933 = vdwg.mxu0
      %v1934 = vadd.f32 %v1712, %v1855
      %v1935 = vadd.f32 %v1713, %v1857
      %v1936 = vadd.f32 %v1714, %v1860
      %v1937 = vadd.f32 %v1715, %v1862
      %v1938 = vadd.f32 %v1716, %v1865
      %v1939 = vadd.f32 %v1717, %v1867
      %v1940 = vadd.f32 %v1718, %v1870
      %v1941 = vadd.f32 %v1719, %v1872
      %v1942 = vadd.f32 %v1720, %v1875
      %v1943 = vadd.f32 %v1721, %v1877
      %v1944 = vadd.f32 %v1722, %v1880
      %v1945 = vadd.f32 %v1723, %v1882
      %v1946 = vadd.f32 %v1724, %v1885
      %v1947 = vadd.f32 %v1725, %v1887
      %v1948 = vadd.f32 %v1726, %v1890
      %v1949 = vadd.f32 %v1727, %v1892
      %v1950 = vadd.f32 %v1728, %v1895
      %v1951 = vadd.f32 %v1729, %v1897
      %v1952 = vadd.f32 %v1730, %v1900
      %v1953 = vadd.f32 %v1731, %v1902
      %v1954 = vadd.f32 %v1732, %v1905
      %v1955 = vadd.f32 %v1733, %v1907
      %v1956 = vadd.f32 %v1734, %v1910
      %v1957 = vadd.f32 %v1735, %v1912
      %v1958 = vadd.f32 %v1736, %v1915
      %v1959 = vadd.f32 %v1737, %v1917
      %v1960 = vadd.f32 %v1738, %v1920
      %v1961 = vadd.f32 %v1739, %v1922
      %v1962 = vadd.f32 %v1740, %v1925
      %v1963 = vadd.f32 %v1741, %v1927
      %v1964 = vadd.f32 %v1742, %v1930
      %v1965 = vadd.f32 %v1743, %v1932
      %v1966 = vld [vmem:[%s246 + $0x22] sm:$0xff]
      %v1967 = vld [vmem:[%s246 + $0x2a] sm:$0xff]
      %v1968 = vld [vmem:[%s246 + $0x32] sm:$0xff]
      %v1969 = vld [vmem:[%s246 + $0x3a] sm:$0xff]
      %v1970 = vld [vmem:[%s246 + $0x42] sm:$0xff]
      %v1971 = vld [vmem:[%s246 + $0x4a] sm:$0xff]
      %v1972 = vld [vmem:[%s246 + $0x52] sm:$0xff]
      %v1973 = vld [vmem:[%s246 + $0x5a] sm:$0xff]
      %v1974 = vld [vmem:[%s246 + $0x62] sm:$0xff]
      %v1975 = vld [vmem:[%s246 + $0x6a] sm:$0xff]
      %v1976 = vld [vmem:[%s246 + $0x72] sm:$0xff]
      %v1977 = vld [vmem:[%s246 + $0x7a] sm:$0xff]
      %v1978 = vld [vmem:[%s246 + $0x82] sm:$0xff]
      %v1979 = vld [vmem:[%s246 + $0x8a] sm:$0xff]
      %v1980 = vld [vmem:[%s246 + $0x92] sm:$0xff]
      %v1981 = vld [vmem:[%s246 + $0x9a] sm:$0xff]
      %v1982 = vld [vmem:[%s246 + $0xa2] sm:$0xff]
      %v1983 = vld [vmem:[%s246 + $0xaa] sm:$0xff]
      %v1984 = vld [vmem:[%s246 + $0xb2] sm:$0xff]
      %v1985 = vld [vmem:[%s246 + $0xba] sm:$0xff]
      %v1986 = vld [vmem:[%s246 + $0xc2] sm:$0xff]
      %v1987 = vld [vmem:[%s246 + $0xca] sm:$0xff]
      %v1988 = vld [vmem:[%s246 + $0xd2] sm:$0xff]
      %v1989 = vld [vmem:[%s246 + $0xda] sm:$0xff]
      %v1990 = vld [vmem:[%s246 + $0xe2] sm:$0xff]
      %v1991 = vld [vmem:[%s246 + $0xea] sm:$0xff]
      %v1992 = vld [vmem:[%s246 + $0xf2] sm:$0xff]
      %v1993 = vld [vmem:[%s246 + $0xfa] sm:$0xff]
      %v1994 = vld [vmem:[%s246 + $0x102] sm:$0xff]
      %v1995 = vld [vmem:[%s246 + $0x10a] sm:$0xff]
      %v1996 = vld [vmem:[%s246 + $0x112] sm:$0xff]
      %v1997 = vld [vmem:[%s246 + $0x11a] sm:$0xff]
      %v1998 = vpack.c.bf16 %v1967, %v1966
      %v1999 = vpack.c.bf16 %v1969, %v1968
      %v2000 = vpack.c.bf16 %v1971, %v1970
      %v2001 = vpack.c.bf16 %v1973, %v1972
      %v2002 = vpack.c.bf16 %v1975, %v1974
      %v2003 = vpack.c.bf16 %v1977, %v1976
      %v2004 = vpack.c.bf16 %v1979, %v1978
      %v2005 = vpack.c.bf16 %v1981, %v1980
      %v2006 = vpack.c.bf16 %v1983, %v1982
      %v2007 = vpack.c.bf16 %v1985, %v1984
      %v2008 = vpack.c.bf16 %v1987, %v1986
      %v2009 = vpack.c.bf16 %v1989, %v1988
      %v2010 = vpack.c.bf16 %v1991, %v1990
      %v2011 = vpack.c.bf16 %v1993, %v1992
      %v2012 = vpack.c.bf16 %v1995, %v1994
      %v2013 = vpack.c.bf16 %v1997, %v1996
      %s2014 = scalar_lea.vmem %s2, 32
      %v2015 = vld [vmem:[%s2014] sm:$0xf]
      %v2017 = vsel %vm352, %v1998, 0
      %v2020 = vsel %vm352, %v1999, 0
      %v2023 = vsel %vm352, %v2000, 0
      %v2026 = vsel %vm352, %v2001, 0
      %v2029 = vsel %vm352, %v2002, 0
      %v2032 = vsel %vm352, %v2003, 0
      %v2035 = vsel %vm352, %v2004, 0
      %v2038 = vsel %vm352, %v2005, 0
      %v2041 = vsel %vm352, %v2006, 0
      %v2044 = vsel %vm352, %v2007, 0
      %v2047 = vsel %vm352, %v2008, 0
      %v2050 = vsel %vm352, %v2009, 0
      %v2053 = vsel %vm352, %v2010, 0
      %v2056 = vsel %vm352, %v2011, 0
      %v2059 = vsel %vm352, %v2012, 0
      %v2062 = vsel %vm352, %v2013, 0
      %v2065 = vsel %vm401, %v2015, 0
      %2067 = vmatpush.bf16.msra.mxu0 0
      %2068 = vmatpush.bf16.msra.mxu0 0
      %2069 = vmatpush.bf16.msra.mxu0 0
      %2070 = vmatpush.bf16.msra.mxu0 0
      %2071 = vmatpush.bf16.msra.mxu0 0
      %2072 = vmatpush.bf16.msra.mxu0 0
      %2073 = vmatpush.bf16.msra.mxu0 0
      %2074 = vmatpush.bf16.msra.mxu0 %v2065
      %2075 = vmatmul.bf16.gmra.mxu0 %v2017
      %v2076 = vpop.f32.mrf.mxu0
      %v2077 = vadd.f32 0.0, %v2076
      %v2078 = vpop.f32.mrf.mxu0
      %v2079 = vadd.f32 0.0, %v2078
      %2080 = vmatmul.bf16.gmra.mxu0 %v2020
      %v2081 = vpop.f32.mrf.mxu0
      %v2082 = vadd.f32 0.0, %v2081
      %v2083 = vpop.f32.mrf.mxu0
      %v2084 = vadd.f32 0.0, %v2083
      %2085 = vmatmul.bf16.gmra.mxu0 %v2023
      %v2086 = vpop.f32.mrf.mxu0
      %v2087 = vadd.f32 0.0, %v2086
      %v2088 = vpop.f32.mrf.mxu0
      %v2089 = vadd.f32 0.0, %v2088
      %2090 = vmatmul.bf16.gmra.mxu0 %v2026
      %v2091 = vpop.f32.mrf.mxu0
      %v2092 = vadd.f32 0.0, %v2091
      %v2093 = vpop.f32.mrf.mxu0
      %v2094 = vadd.f32 0.0, %v2093
      %2095 = vmatmul.bf16.gmra.mxu0 %v2029
      %v2096 = vpop.f32.mrf.mxu0
      %v2097 = vadd.f32 0.0, %v2096
      %v2098 = vpop.f32.mrf.mxu0
      %v2099 = vadd.f32 0.0, %v2098
      %2100 = vmatmul.bf16.gmra.mxu0 %v2032
      %v2101 = vpop.f32.mrf.mxu0
      %v2102 = vadd.f32 0.0, %v2101
      %v2103 = vpop.f32.mrf.mxu0
      %v2104 = vadd.f32 0.0, %v2103
      %2105 = vmatmul.bf16.gmra.mxu0 %v2035
      %v2106 = vpop.f32.mrf.mxu0
      %v2107 = vadd.f32 0.0, %v2106
      %v2108 = vpop.f32.mrf.mxu0
      %v2109 = vadd.f32 0.0, %v2108
      %2110 = vmatmul.bf16.gmra.mxu0 %v2038
      %v2111 = vpop.f32.mrf.mxu0
      %v2112 = vadd.f32 0.0, %v2111
      %v2113 = vpop.f32.mrf.mxu0
      %v2114 = vadd.f32 0.0, %v2113
      %2115 = vmatmul.bf16.gmra.mxu0 %v2041
      %v2116 = vpop.f32.mrf.mxu0
      %v2117 = vadd.f32 0.0, %v2116
      %v2118 = vpop.f32.mrf.mxu0
      %v2119 = vadd.f32 0.0, %v2118
      %2120 = vmatmul.bf16.gmra.mxu0 %v2044
      %v2121 = vpop.f32.mrf.mxu0
      %v2122 = vadd.f32 0.0, %v2121
      %v2123 = vpop.f32.mrf.mxu0
      %v2124 = vadd.f32 0.0, %v2123
      %2125 = vmatmul.bf16.gmra.mxu0 %v2047
      %v2126 = vpop.f32.mrf.mxu0
      %v2127 = vadd.f32 0.0, %v2126
      %v2128 = vpop.f32.mrf.mxu0
      %v2129 = vadd.f32 0.0, %v2128
      %2130 = vmatmul.bf16.gmra.mxu0 %v2050
      %v2131 = vpop.f32.mrf.mxu0
      %v2132 = vadd.f32 0.0, %v2131
      %v2133 = vpop.f32.mrf.mxu0
      %v2134 = vadd.f32 0.0, %v2133
      %2135 = vmatmul.bf16.gmra.mxu0 %v2053
      %v2136 = vpop.f32.mrf.mxu0
      %v2137 = vadd.f32 0.0, %v2136
      %v2138 = vpop.f32.mrf.mxu0
      %v2139 = vadd.f32 0.0, %v2138
      %2140 = vmatmul.bf16.gmra.mxu0 %v2056
      %v2141 = vpop.f32.mrf.mxu0
      %v2142 = vadd.f32 0.0, %v2141
      %v2143 = vpop.f32.mrf.mxu0
      %v2144 = vadd.f32 0.0, %v2143
      %2145 = vmatmul.bf16.gmra.mxu0 %v2059
      %v2146 = vpop.f32.mrf.mxu0
      %v2147 = vadd.f32 0.0, %v2146
      %v2148 = vpop.f32.mrf.mxu0
      %v2149 = vadd.f32 0.0, %v2148
      %2150 = vmatmul.bf16.gmra.mxu0 %v2062
      %v2151 = vpop.f32.mrf.mxu0
      %v2152 = vadd.f32 0.0, %v2151
      %v2153 = vpop.f32.mrf.mxu0
      %v2154 = vadd.f32 0.0, %v2153
      %2155 = vdwg.mxu0
      %v2156 = vadd.f32 %v1934, %v2077
      %v2157 = vadd.f32 %v1935, %v2079
      %v2158 = vadd.f32 %v1936, %v2082
      %v2159 = vadd.f32 %v1937, %v2084
      %v2160 = vadd.f32 %v1938, %v2087
      %v2161 = vadd.f32 %v1939, %v2089
      %v2162 = vadd.f32 %v1940, %v2092
      %v2163 = vadd.f32 %v1941, %v2094
      %v2164 = vadd.f32 %v1942, %v2097
      %v2165 = vadd.f32 %v1943, %v2099
      %v2166 = vadd.f32 %v1944, %v2102
      %v2167 = vadd.f32 %v1945, %v2104
      %v2168 = vadd.f32 %v1946, %v2107
      %v2169 = vadd.f32 %v1947, %v2109
      %v2170 = vadd.f32 %v1948, %v2112
      %v2171 = vadd.f32 %v1949, %v2114
      %v2172 = vadd.f32 %v1950, %v2117
      %v2173 = vadd.f32 %v1951, %v2119
      %v2174 = vadd.f32 %v1952, %v2122
      %v2175 = vadd.f32 %v1953, %v2124
      %v2176 = vadd.f32 %v1954, %v2127
      %v2177 = vadd.f32 %v1955, %v2129
      %v2178 = vadd.f32 %v1956, %v2132
      %v2179 = vadd.f32 %v1957, %v2134
      %v2180 = vadd.f32 %v1958, %v2137
      %v2181 = vadd.f32 %v1959, %v2139
      %v2182 = vadd.f32 %v1960, %v2142
      %v2183 = vadd.f32 %v1961, %v2144
      %v2184 = vadd.f32 %v1962, %v2147
      %v2185 = vadd.f32 %v1963, %v2149
      %v2186 = vadd.f32 %v1964, %v2152
      %v2187 = vadd.f32 %v1965, %v2154
      %v2188 = vld [vmem:[%s3] sm:$0x1]
      %v2190 = vperm.slane %v2188, 0
      %v2192 = vadd.f32 %v2156, %v2190
      %v2193 = vadd.f32 %v2157, %v2190
      %v2194 = vadd.f32 %v2158, %v2190
      %v2195 = vadd.f32 %v2159, %v2190
      %v2196 = vadd.f32 %v2160, %v2190
      %v2197 = vadd.f32 %v2161, %v2190
      %v2198 = vadd.f32 %v2162, %v2190
      %v2199 = vadd.f32 %v2163, %v2190
      %v2200 = vadd.f32 %v2164, %v2190
      %v2201 = vadd.f32 %v2165, %v2190
      %v2202 = vadd.f32 %v2166, %v2190
      %v2203 = vadd.f32 %v2167, %v2190
      %v2204 = vadd.f32 %v2168, %v2190
      %v2205 = vadd.f32 %v2169, %v2190
      %v2206 = vadd.f32 %v2170, %v2190
      %v2207 = vadd.f32 %v2171, %v2190
      %v2208 = vadd.f32 %v2172, %v2190
      %v2209 = vadd.f32 %v2173, %v2190
      %v2210 = vadd.f32 %v2174, %v2190
      %v2211 = vadd.f32 %v2175, %v2190
      %v2212 = vadd.f32 %v2176, %v2190
      %v2213 = vadd.f32 %v2177, %v2190
      %v2214 = vadd.f32 %v2178, %v2190
      %v2215 = vadd.f32 %v2179, %v2190
      %v2216 = vadd.f32 %v2180, %v2190
      %v2217 = vadd.f32 %v2181, %v2190
      %v2218 = vadd.f32 %v2182, %v2190
      %v2219 = vadd.f32 %v2183, %v2190
      %v2220 = vadd.f32 %v2184, %v2190
      %v2221 = vadd.f32 %v2185, %v2190
      %v2222 = vadd.f32 %v2186, %v2190
      %v2223 = vadd.f32 %v2187, %v2190
      %v2224 = vmax.f32 %v2192, 0.0
      %v2225 = vmax.f32 %v2193, 0.0
      %v2226 = vmax.f32 %v2194, 0.0
      %v2227 = vmax.f32 %v2195, 0.0
      %v2228 = vmax.f32 %v2196, 0.0
      %v2229 = vmax.f32 %v2197, 0.0
      %v2230 = vmax.f32 %v2198, 0.0
      %v2231 = vmax.f32 %v2199, 0.0
      %v2232 = vmax.f32 %v2200, 0.0
      %v2233 = vmax.f32 %v2201, 0.0
      %v2234 = vmax.f32 %v2202, 0.0
      %v2235 = vmax.f32 %v2203, 0.0
      %v2236 = vmax.f32 %v2204, 0.0
      %v2237 = vmax.f32 %v2205, 0.0
      %v2238 = vmax.f32 %v2206, 0.0
      %v2239 = vmax.f32 %v2207, 0.0
      %v2240 = vmax.f32 %v2208, 0.0
      %v2241 = vmax.f32 %v2209, 0.0
      %v2242 = vmax.f32 %v2210, 0.0
      %v2243 = vmax.f32 %v2211, 0.0
      %v2244 = vmax.f32 %v2212, 0.0
      %v2245 = vmax.f32 %v2213, 0.0
      %v2246 = vmax.f32 %v2214, 0.0
      %v2247 = vmax.f32 %v2215, 0.0
      %v2248 = vmax.f32 %v2216, 0.0
      %v2249 = vmax.f32 %v2217, 0.0
      %v2250 = vmax.f32 %v2218, 0.0
      %v2251 = vmax.f32 %v2219, 0.0
      %v2252 = vmax.f32 %v2220, 0.0
      %v2253 = vmax.f32 %v2221, 0.0
      %v2254 = vmax.f32 %v2222, 0.0
      %v2255 = vmax.f32 %v2223, 0.0
      %v2256 = vld [vmem:[%s1] sm:$0xff]
      %v2257 = vld [vmem:[%s1 + $0x8] sm:$0xff]
      %v2258 = vld [vmem:[%s1 + $0x10] sm:$0xff]
      %v2259 = vld [vmem:[%s1 + $0x18] sm:$0xff]
      %v2260 = vld [vmem:[%s1 + $0x20] sm:$0xff]
      %v2261 = vld [vmem:[%s1 + $0x28] sm:$0xff]
      %v2262 = vld [vmem:[%s1 + $0x30] sm:$0xff]
      %v2263 = vld [vmem:[%s1 + $0x38] sm:$0xff]
      %v2264 = vld [vmem:[%s1 + $0x40] sm:$0xff]
      %v2265 = vld [vmem:[%s1 + $0x48] sm:$0xff]
      %v2266 = vld [vmem:[%s1 + $0x50] sm:$0xff]
      %v2267 = vld [vmem:[%s1 + $0x58] sm:$0xff]
      %v2268 = vld [vmem:[%s1 + $0x60] sm:$0xff]
      %v2269 = vld [vmem:[%s1 + $0x68] sm:$0xff]
      %v2270 = vld [vmem:[%s1 + $0x70] sm:$0xff]
      %v2271 = vld [vmem:[%s1 + $0x78] sm:$0xff]
      %v2272 = vld [vmem:[%s1 + $0x80] sm:$0xff]
      %v2273 = vld [vmem:[%s1 + $0x88] sm:$0xff]
      %v2274 = vld [vmem:[%s1 + $0x90] sm:$0xff]
      %v2275 = vld [vmem:[%s1 + $0x98] sm:$0xff]
      %v2276 = vld [vmem:[%s1 + $0xa0] sm:$0xff]
      %v2277 = vld [vmem:[%s1 + $0xa8] sm:$0xff]
      %v2278 = vld [vmem:[%s1 + $0xb0] sm:$0xff]
      %v2279 = vld [vmem:[%s1 + $0xb8] sm:$0xff]
      %v2280 = vld [vmem:[%s1 + $0xc0] sm:$0xff]
      %v2281 = vld [vmem:[%s1 + $0xc8] sm:$0xff]
      %v2282 = vld [vmem:[%s1 + $0xd0] sm:$0xff]
      %v2283 = vld [vmem:[%s1 + $0xd8] sm:$0xff]
      %v2284 = vld [vmem:[%s1 + $0xe0] sm:$0xff]
      %v2285 = vld [vmem:[%s1 + $0xe8] sm:$0xff]
      %v2286 = vld [vmem:[%s1 + $0xf0] sm:$0xff]
      %v2287 = vld [vmem:[%s1 + $0xf8] sm:$0xff]
      %2289 = vset.pattern.permute.xlu0 0
      %2290 = vperm.xlu0 %2289, %v2256
      %v2291 = vpop.permute.xlu0 %2290
      %2294 = vset.pattern.permute.xlu0 0
      %2295 = vperm.xlu0 %2294, %v2257
      %v2296 = vpop.permute.xlu0 %2295
      %2299 = vset.pattern.permute.xlu0 0
      %2300 = vperm.xlu0 %2299, %v2258
      %v2301 = vpop.permute.xlu0 %2300
      %2304 = vset.pattern.permute.xlu0 0
      %2305 = vperm.xlu0 %2304, %v2259
      %v2306 = vpop.permute.xlu0 %2305
      %2309 = vset.pattern.permute.xlu0 0
      %2310 = vperm.xlu0 %2309, %v2260
      %v2311 = vpop.permute.xlu0 %2310
      %2314 = vset.pattern.permute.xlu0 0
      %2315 = vperm.xlu0 %2314, %v2261
      %v2316 = vpop.permute.xlu0 %2315
      %2319 = vset.pattern.permute.xlu0 0
      %2320 = vperm.xlu0 %2319, %v2262
      %v2321 = vpop.permute.xlu0 %2320
      %2324 = vset.pattern.permute.xlu0 0
      %2325 = vperm.xlu0 %2324, %v2263
      %v2326 = vpop.permute.xlu0 %2325
      %2329 = vset.pattern.permute.xlu0 0
      %2330 = vperm.xlu0 %2329, %v2264
      %v2331 = vpop.permute.xlu0 %2330
      %2334 = vset.pattern.permute.xlu0 0
      %2335 = vperm.xlu0 %2334, %v2265
      %v2336 = vpop.permute.xlu0 %2335
      %2339 = vset.pattern.permute.xlu0 0
      %2340 = vperm.xlu0 %2339, %v2266
      %v2341 = vpop.permute.xlu0 %2340
      %2344 = vset.pattern.permute.xlu0 0
      %2345 = vperm.xlu0 %2344, %v2267
      %v2346 = vpop.permute.xlu0 %2345
      %2349 = vset.pattern.permute.xlu0 0
      %2350 = vperm.xlu0 %2349, %v2268
      %v2351 = vpop.permute.xlu0 %2350
      %2354 = vset.pattern.permute.xlu0 0
      %2355 = vperm.xlu0 %2354, %v2269
      %v2356 = vpop.permute.xlu0 %2355
      %2359 = vset.pattern.permute.xlu0 0
      %2360 = vperm.xlu0 %2359, %v2270
      %v2361 = vpop.permute.xlu0 %2360
      %2364 = vset.pattern.permute.xlu0 0
      %2365 = vperm.xlu0 %2364, %v2271
      %v2366 = vpop.permute.xlu0 %2365
      %2369 = vset.pattern.permute.xlu0 0
      %2370 = vperm.xlu0 %2369, %v2272
      %v2371 = vpop.permute.xlu0 %2370
      %2374 = vset.pattern.permute.xlu0 0
      %2375 = vperm.xlu0 %2374, %v2273
      %v2376 = vpop.permute.xlu0 %2375
      %2379 = vset.pattern.permute.xlu0 0
      %2380 = vperm.xlu0 %2379, %v2274
      %v2381 = vpop.permute.xlu0 %2380
      %2384 = vset.pattern.permute.xlu0 0
      %2385 = vperm.xlu0 %2384, %v2275
      %v2386 = vpop.permute.xlu0 %2385
      %2389 = vset.pattern.permute.xlu0 0
      %2390 = vperm.xlu0 %2389, %v2276
      %v2391 = vpop.permute.xlu0 %2390
      %2394 = vset.pattern.permute.xlu0 0
      %2395 = vperm.xlu0 %2394, %v2277
      %v2396 = vpop.permute.xlu0 %2395
      %2399 = vset.pattern.permute.xlu0 0
      %2400 = vperm.xlu0 %2399, %v2278
      %v2401 = vpop.permute.xlu0 %2400
      %2404 = vset.pattern.permute.xlu0 0
      %2405 = vperm.xlu0 %2404, %v2279
      %v2406 = vpop.permute.xlu0 %2405
      %2409 = vset.pattern.permute.xlu0 0
      %2410 = vperm.xlu0 %2409, %v2280
      %v2411 = vpop.permute.xlu0 %2410
      %2414 = vset.pattern.permute.xlu0 0
      %2415 = vperm.xlu0 %2414, %v2281
      %v2416 = vpop.permute.xlu0 %2415
      %2419 = vset.pattern.permute.xlu0 0
      %2420 = vperm.xlu0 %2419, %v2282
      %v2421 = vpop.permute.xlu0 %2420
      %2424 = vset.pattern.permute.xlu0 0
      %2425 = vperm.xlu0 %2424, %v2283
      %v2426 = vpop.permute.xlu0 %2425
      %2429 = vset.pattern.permute.xlu0 0
      %2430 = vperm.xlu0 %2429, %v2284
      %v2431 = vpop.permute.xlu0 %2430
      %2434 = vset.pattern.permute.xlu0 0
      %2435 = vperm.xlu0 %2434, %v2285
      %v2436 = vpop.permute.xlu0 %2435
      %2439 = vset.pattern.permute.xlu0 0
      %2440 = vperm.xlu0 %2439, %v2286
      %v2441 = vpop.permute.xlu0 %2440
      %2444 = vset.pattern.permute.xlu0 0
      %2445 = vperm.xlu0 %2444, %v2287
      %v2446 = vpop.permute.xlu0 %2445
      %v2448 = vmul.f32 %v2224, %v2291
      %v2449 = vmul.f32 %v2225, %v2296
      %v2450 = vmul.f32 %v2226, %v2301
      %v2451 = vmul.f32 %v2227, %v2306
      %v2452 = vmul.f32 %v2228, %v2311
      %v2453 = vmul.f32 %v2229, %v2316
      %v2454 = vmul.f32 %v2230, %v2321
      %v2455 = vmul.f32 %v2231, %v2326
      %v2456 = vmul.f32 %v2232, %v2331
      %v2457 = vmul.f32 %v2233, %v2336
      %v2458 = vmul.f32 %v2234, %v2341
      %v2459 = vmul.f32 %v2235, %v2346
      %v2460 = vmul.f32 %v2236, %v2351
      %v2461 = vmul.f32 %v2237, %v2356
      %v2462 = vmul.f32 %v2238, %v2361
      %v2463 = vmul.f32 %v2239, %v2366
      %v2464 = vmul.f32 %v2240, %v2371
      %v2465 = vmul.f32 %v2241, %v2376
      %v2466 = vmul.f32 %v2242, %v2381
      %v2467 = vmul.f32 %v2243, %v2386
      %v2468 = vmul.f32 %v2244, %v2391
      %v2469 = vmul.f32 %v2245, %v2396
      %v2470 = vmul.f32 %v2246, %v2401
      %v2471 = vmul.f32 %v2247, %v2406
      %v2472 = vmul.f32 %v2248, %v2411
      %v2473 = vmul.f32 %v2249, %v2416
      %v2474 = vmul.f32 %v2250, %v2421
      %v2475 = vmul.f32 %v2251, %v2426
      %v2476 = vmul.f32 %v2252, %v2431
      %v2477 = vmul.f32 %v2253, %v2436
      %v2478 = vmul.f32 %v2254, %v2441
      %v2479 = vmul.f32 %v2255, %v2446
      %vm2480 = vcmask 261120
      %2481 = vst.msk [vmem:[#allocation2] sm:$0xff] %vm2480, 0.0
      %2482 = vst.msk [vmem:[#allocation2 + $0x8] sm:$0xff] %vm2480, 0.0
      %2483 = vst.msk [vmem:[#allocation2 + $0x10] sm:$0xff] %vm2480, 0.0
      %2484 = vst.msk [vmem:[#allocation2 + $0x18] sm:$0xff] %vm2480, 0.0
      %2485 = vst.msk [vmem:[#allocation2 + $0x20] sm:$0xff] %vm2480, 0.0
      %2486 = vst.msk [vmem:[#allocation2 + $0x28] sm:$0xff] %vm2480, 0.0
      %vm2487 = vcmask 256000
      %2488 = vst.msk [vmem:[#allocation2 + $0x30] sm:$0x7] %vm2487, 0.0
      %2489 = vst.msk [vmem:[#allocation2 + $0x133] sm:$0xff] %vm2480, 0.0
      %2490 = vst.msk [vmem:[#allocation2 + $0x13b] sm:$0xff] %vm2480, 0.0
      %2491 = vst.msk [vmem:[#allocation2 + $0x143] sm:$0xff] %vm2480, 0.0
      %2492 = vst.msk [vmem:[#allocation2 + $0x14b] sm:$0xff] %vm2480, 0.0
      %2493 = vst.msk [vmem:[#allocation2 + $0x153] sm:$0xff] %vm2480, 0.0
      %2494 = vst.msk [vmem:[#allocation2 + $0x15b] sm:$0xff] %vm2480, 0.0
      %2495 = vst.msk [vmem:[#allocation2 + $0x163] sm:$0x7] %vm2487, 0.0
      %2496 = vst.msk [vmem:[#allocation2 + $0x33] sm:$0xff] %vm2480, %v2448
      %2497 = vst.msk [vmem:[#allocation2 + $0x3b] sm:$0xff] %vm2480, %v2449
      %2498 = vst.msk [vmem:[#allocation2 + $0x43] sm:$0xff] %vm2480, %v2450
      %2499 = vst.msk [vmem:[#allocation2 + $0x4b] sm:$0xff] %vm2480, %v2451
      %2500 = vst.msk [vmem:[#allocation2 + $0x53] sm:$0xff] %vm2480, %v2452
      %2501 = vst.msk [vmem:[#allocation2 + $0x5b] sm:$0xff] %vm2480, %v2453
      %2502 = vst.msk [vmem:[#allocation2 + $0x63] sm:$0xff] %vm2480, %v2454
      %2503 = vst.msk [vmem:[#allocation2 + $0x6b] sm:$0xff] %vm2480, %v2455
      %2504 = vst.msk [vmem:[#allocation2 + $0x73] sm:$0xff] %vm2480, %v2456
      %2505 = vst.msk [vmem:[#allocation2 + $0x7b] sm:$0xff] %vm2480, %v2457
      %2506 = vst.msk [vmem:[#allocation2 + $0x83] sm:$0xff] %vm2480, %v2458
      %2507 = vst.msk [vmem:[#allocation2 + $0x8b] sm:$0xff] %vm2480, %v2459
      %2508 = vst.msk [vmem:[#allocation2 + $0x93] sm:$0xff] %vm2480, %v2460
      %2509 = vst.msk [vmem:[#allocation2 + $0x9b] sm:$0xff] %vm2480, %v2461
      %2510 = vst.msk [vmem:[#allocation2 + $0xa3] sm:$0xff] %vm2480, %v2462
      %2511 = vst.msk [vmem:[#allocation2 + $0xab] sm:$0xff] %vm2480, %v2463
      %2512 = vst.msk [vmem:[#allocation2 + $0xb3] sm:$0xff] %vm2480, %v2464
      %2513 = vst.msk [vmem:[#allocation2 + $0xbb] sm:$0xff] %vm2480, %v2465
      %2514 = vst.msk [vmem:[#allocation2 + $0xc3] sm:$0xff] %vm2480, %v2466
      %2515 = vst.msk [vmem:[#allocation2 + $0xcb] sm:$0xff] %vm2480, %v2467
      %2516 = vst.msk [vmem:[#allocation2 + $0xd3] sm:$0xff] %vm2480, %v2468
      %2517 = vst.msk [vmem:[#allocation2 + $0xdb] sm:$0xff] %vm2480, %v2469
      %2518 = vst.msk [vmem:[#allocation2 + $0xe3] sm:$0xff] %vm2480, %v2470
      %2519 = vst.msk [vmem:[#allocation2 + $0xeb] sm:$0xff] %vm2480, %v2471
      %2520 = vst.msk [vmem:[#allocation2 + $0xf3] sm:$0xff] %vm2480, %v2472
      %2521 = vst.msk [vmem:[#allocation2 + $0xfb] sm:$0xff] %vm2480, %v2473
      %2522 = vst.msk [vmem:[#allocation2 + $0x103] sm:$0xff] %vm2480, %v2474
      %2523 = vst.msk [vmem:[#allocation2 + $0x10b] sm:$0xff] %vm2480, %v2475
      %2524 = vst.msk [vmem:[#allocation2 + $0x113] sm:$0xff] %vm2480, %v2476
      %2525 = vst.msk [vmem:[#allocation2 + $0x11b] sm:$0xff] %vm2480, %v2477
      %2526 = vst.msk [vmem:[#allocation2 + $0x123] sm:$0xff] %vm2480, %v2478
      %2527 = vst.msk [vmem:[#allocation2 + $0x12b] sm:$0xff] %vm2480, %v2479
      %v2528 = vld [vmem:[#allocation2 + $0x22] sm:$0xff]
      %v2529 = vld [vmem:[#allocation2 + $0x2a] sm:$0xff]
      %v2530 = vld [vmem:[#allocation2 + $0x32] sm:$0xff]
      %v2531 = vld [vmem:[#allocation2 + $0x3a] sm:$0xff]
      %v2532 = vld [vmem:[#allocation2 + $0x42] sm:$0xff]
      %v2533 = vld [vmem:[#allocation2 + $0x4a] sm:$0xff]
      %v2534 = vld [vmem:[#allocation2 + $0x52] sm:$0xff]
      %v2535 = vld [vmem:[#allocation2 + $0x5a] sm:$0xff]
      %v2536 = vld [vmem:[#allocation2 + $0x62] sm:$0xff]
      %v2537 = vld [vmem:[#allocation2 + $0x6a] sm:$0xff]
      %v2538 = vld [vmem:[#allocation2 + $0x72] sm:$0xff]
      %v2539 = vld [vmem:[#allocation2 + $0x7a] sm:$0xff]
      %v2540 = vld [vmem:[#allocation2 + $0x82] sm:$0xff]
      %v2541 = vld [vmem:[#allocation2 + $0x8a] sm:$0xff]
      %v2542 = vld [vmem:[#allocation2 + $0x92] sm:$0xff]
      %v2543 = vld [vmem:[#allocation2 + $0x9a] sm:$0xff]
      %v2544 = vld [vmem:[#allocation2 + $0xa2] sm:$0xff]
      %v2545 = vld [vmem:[#allocation2 + $0xaa] sm:$0xff]
      %v2546 = vld [vmem:[#allocation2 + $0xb2] sm:$0xff]
      %v2547 = vld [vmem:[#allocation2 + $0xba] sm:$0xff]
      %v2548 = vld [vmem:[#allocation2 + $0xc2] sm:$0xff]
      %v2549 = vld [vmem:[#allocation2 + $0xca] sm:$0xff]
      %v2550 = vld [vmem:[#allocation2 + $0xd2] sm:$0xff]
      %v2551 = vld [vmem:[#allocation2 + $0xda] sm:$0xff]
      %v2552 = vld [vmem:[#allocation2 + $0xe2] sm:$0xff]
      %v2553 = vld [vmem:[#allocation2 + $0xea] sm:$0xff]
      %v2554 = vld [vmem:[#allocation2 + $0xf2] sm:$0xff]
      %v2555 = vld [vmem:[#allocation2 + $0xfa] sm:$0xff]
      %v2556 = vld [vmem:[#allocation2 + $0x102] sm:$0xff]
      %v2557 = vld [vmem:[#allocation2 + $0x10a] sm:$0xff]
      %v2558 = vld [vmem:[#allocation2 + $0x112] sm:$0xff]
      %v2559 = vld [vmem:[#allocation2 + $0x11a] sm:$0xff]
      %v2560 = vpack.c.bf16 %v2529, %v2528
      %v2561 = vpack.c.bf16 %v2531, %v2530
      %v2562 = vpack.c.bf16 %v2533, %v2532
      %v2563 = vpack.c.bf16 %v2535, %v2534
      %v2564 = vpack.c.bf16 %v2537, %v2536
      %v2565 = vpack.c.bf16 %v2539, %v2538
      %v2566 = vpack.c.bf16 %v2541, %v2540
      %v2567 = vpack.c.bf16 %v2543, %v2542
      %v2568 = vpack.c.bf16 %v2545, %v2544
      %v2569 = vpack.c.bf16 %v2547, %v2546
      %v2570 = vpack.c.bf16 %v2549, %v2548
      %v2571 = vpack.c.bf16 %v2551, %v2550
      %v2572 = vpack.c.bf16 %v2553, %v2552
      %v2573 = vpack.c.bf16 %v2555, %v2554
      %v2574 = vpack.c.bf16 %v2557, %v2556
      %v2575 = vpack.c.bf16 %v2559, %v2558
      %v2576 = vld [vmem:[%s4] sm:$0xf]
      %v2577 = vld [vmem:[%s4 + $0x4] sm:$0xf]
      %v2578 = vld [vmem:[%s4 + $0x8] sm:$0xf]
      %v2579 = vld [vmem:[%s4 + $0xc] sm:$0xf]
      %v2580 = vld [vmem:[#allocation2 + $0x23] sm:$0xff]
      %v2581 = vld [vmem:[#allocation2 + $0x2b] sm:$0xff]
      %v2582 = vld [vmem:[#allocation2 + $0x33] sm:$0xff]
      %v2583 = vld [vmem:[#allocation2 + $0x3b] sm:$0xff]
      %v2584 = vld [vmem:[#allocation2 + $0x43] sm:$0xff]
      %v2585 = vld [vmem:[#allocation2 + $0x4b] sm:$0xff]
      %v2586 = vld [vmem:[#allocation2 + $0x53] sm:$0xff]
      %v2587 = vld [vmem:[#allocation2 + $0x5b] sm:$0xff]
      %v2588 = vld [vmem:[#allocation2 + $0x63] sm:$0xff]
      %v2589 = vld [vmem:[#allocation2 + $0x6b] sm:$0xff]
      %v2590 = vld [vmem:[#allocation2 + $0x73] sm:$0xff]
      %v2591 = vld [vmem:[#allocation2 + $0x7b] sm:$0xff]
      %v2592 = vld [vmem:[#allocation2 + $0x83] sm:$0xff]
      %v2593 = vld [vmem:[#allocation2 + $0x8b] sm:$0xff]
      %v2594 = vld [vmem:[#allocation2 + $0x93] sm:$0xff]
      %v2595 = vld [vmem:[#allocation2 + $0x9b] sm:$0xff]
      %v2596 = vld [vmem:[#allocation2 + $0xa3] sm:$0xff]
      %v2597 = vld [vmem:[#allocation2 + $0xab] sm:$0xff]
      %v2598 = vld [vmem:[#allocation2 + $0xb3] sm:$0xff]
      %v2599 = vld [vmem:[#allocation2 + $0xbb] sm:$0xff]
      %v2600 = vld [vmem:[#allocation2 + $0xc3] sm:$0xff]
      %v2601 = vld [vmem:[#allocation2 + $0xcb] sm:$0xff]
      %v2602 = vld [vmem:[#allocation2 + $0xd3] sm:$0xff]
      %v2603 = vld [vmem:[#allocation2 + $0xdb] sm:$0xff]
      %v2604 = vld [vmem:[#allocation2 + $0xe3] sm:$0xff]
      %v2605 = vld [vmem:[#allocation2 + $0xeb] sm:$0xff]
      %v2606 = vld [vmem:[#allocation2 + $0xf3] sm:$0xff]
      %v2607 = vld [vmem:[#allocation2 + $0xfb] sm:$0xff]
      %v2608 = vld [vmem:[#allocation2 + $0x103] sm:$0xff]
      %v2609 = vld [vmem:[#allocation2 + $0x10b] sm:$0xff]
      %v2610 = vld [vmem:[#allocation2 + $0x113] sm:$0xff]
      %v2611 = vld [vmem:[#allocation2 + $0x11b] sm:$0xff]
      %v2612 = vpack.c.bf16 %v2581, %v2580
      %v2613 = vpack.c.bf16 %v2583, %v2582
      %v2614 = vpack.c.bf16 %v2585, %v2584
      %v2615 = vpack.c.bf16 %v2587, %v2586
      %v2616 = vpack.c.bf16 %v2589, %v2588
      %v2617 = vpack.c.bf16 %v2591, %v2590
      %v2618 = vpack.c.bf16 %v2593, %v2592
      %v2619 = vpack.c.bf16 %v2595, %v2594
      %v2620 = vpack.c.bf16 %v2597, %v2596
      %v2621 = vpack.c.bf16 %v2599, %v2598
      %v2622 = vpack.c.bf16 %v2601, %v2600
      %v2623 = vpack.c.bf16 %v2603, %v2602
      %v2624 = vpack.c.bf16 %v2605, %v2604
      %v2625 = vpack.c.bf16 %v2607, %v2606
      %v2626 = vpack.c.bf16 %v2609, %v2608
      %v2627 = vpack.c.bf16 %v2611, %v2610
      %s2628 = scalar_lea.vmem %s4, 16
      %v2629 = vld [vmem:[%s2628] sm:$0xf]
      %v2630 = vld [vmem:[%s2628 + $0x4] sm:$0xf]
      %v2631 = vld [vmem:[%s2628 + $0x8] sm:$0xf]
      %v2632 = vld [vmem:[%s2628 + $0xc] sm:$0xf]
      %v2637 = vunpack.c.l.b16 %v2629
      %v2638 = vunpack.c.l.b16 %v2630
      %v2639 = vunpack.c.l.b16 %v2631
      %v2640 = vunpack.c.l.b16 %v2632
      %v2641 = vpack.c.b16 %v2638, %v2637
      %v2642 = vpack.c.b16 %v2640, %v2639
      %v2646 = vsel %vm2480, %v2612, 0
      %v2649 = vsel %vm2480, %v2613, 0
      %v2652 = vsel %vm2480, %v2614, 0
      %v2655 = vsel %vm2480, %v2615, 0
      %v2658 = vsel %vm2480, %v2616, 0
      %v2661 = vsel %vm2480, %v2617, 0
      %v2664 = vsel %vm2480, %v2618, 0
      %v2667 = vsel %vm2480, %v2619, 0
      %v2670 = vsel %vm2480, %v2620, 0
      %v2673 = vsel %vm2480, %v2621, 0
      %v2676 = vsel %vm2480, %v2622, 0
      %v2679 = vsel %vm2480, %v2623, 0
      %v2682 = vsel %vm2480, %v2624, 0
      %v2685 = vsel %vm2480, %v2625, 0
      %v2688 = vsel %vm2480, %v2626, 0
      %v2691 = vsel %vm2480, %v2627, 0
      %2693 = vmatpush.bf16.msra.mxu0 0
      %2694 = vmatpush.bf16.msra.mxu0 0
      %2695 = vmatpush.bf16.msra.mxu0 0
      %2696 = vmatpush.bf16.msra.mxu0 0
      %2697 = vmatpush.bf16.msra.mxu0 0
      %2698 = vmatpush.bf16.msra.mxu0 0
      %2699 = vmatpush.bf16.msra.mxu0 %v2642
      %2700 = vmatpush.bf16.msra.mxu0 %v2641
      %2701 = vmatmul.bf16.gmra.mxu0 %v2646
      %v2702 = vpop.f32.mrf.mxu0
      %v2703 = vadd.f32 0.0, %v2702
      %v2704 = vpop.f32.mrf.mxu0
      %v2705 = vadd.f32 0.0, %v2704
      %2706 = vmatmul.bf16.gmra.mxu0 %v2649
      %v2707 = vpop.f32.mrf.mxu0
      %v2708 = vadd.f32 0.0, %v2707
      %v2709 = vpop.f32.mrf.mxu0
      %v2710 = vadd.f32 0.0, %v2709
      %2711 = vmatmul.bf16.gmra.mxu0 %v2652
      %v2712 = vpop.f32.mrf.mxu0
      %v2713 = vadd.f32 0.0, %v2712
      %v2714 = vpop.f32.mrf.mxu0
      %v2715 = vadd.f32 0.0, %v2714
      %2716 = vmatmul.bf16.gmra.mxu0 %v2655
      %v2717 = vpop.f32.mrf.mxu0
      %v2718 = vadd.f32 0.0, %v2717
      %v2719 = vpop.f32.mrf.mxu0
      %v2720 = vadd.f32 0.0, %v2719
      %2721 = vmatmul.bf16.gmra.mxu0 %v2658
      %v2722 = vpop.f32.mrf.mxu0
      %v2723 = vadd.f32 0.0, %v2722
      %v2724 = vpop.f32.mrf.mxu0
      %v2725 = vadd.f32 0.0, %v2724
      %2726 = vmatmul.bf16.gmra.mxu0 %v2661
      %v2727 = vpop.f32.mrf.mxu0
      %v2728 = vadd.f32 0.0, %v2727
      %v2729 = vpop.f32.mrf.mxu0
      %v2730 = vadd.f32 0.0, %v2729
      %2731 = vmatmul.bf16.gmra.mxu0 %v2664
      %v2732 = vpop.f32.mrf.mxu0
      %v2733 = vadd.f32 0.0, %v2732
      %v2734 = vpop.f32.mrf.mxu0
      %v2735 = vadd.f32 0.0, %v2734
      %2736 = vmatmul.bf16.gmra.mxu0 %v2667
      %v2737 = vpop.f32.mrf.mxu0
      %v2738 = vadd.f32 0.0, %v2737
      %v2739 = vpop.f32.mrf.mxu0
      %v2740 = vadd.f32 0.0, %v2739
      %2741 = vmatmul.bf16.gmra.mxu0 %v2670
      %v2742 = vpop.f32.mrf.mxu0
      %v2743 = vadd.f32 0.0, %v2742
      %v2744 = vpop.f32.mrf.mxu0
      %v2745 = vadd.f32 0.0, %v2744
      %2746 = vmatmul.bf16.gmra.mxu0 %v2673
      %v2747 = vpop.f32.mrf.mxu0
      %v2748 = vadd.f32 0.0, %v2747
      %v2749 = vpop.f32.mrf.mxu0
      %v2750 = vadd.f32 0.0, %v2749
      %2751 = vmatmul.bf16.gmra.mxu0 %v2676
      %v2752 = vpop.f32.mrf.mxu0
      %v2753 = vadd.f32 0.0, %v2752
      %v2754 = vpop.f32.mrf.mxu0
      %v2755 = vadd.f32 0.0, %v2754
      %2756 = vmatmul.bf16.gmra.mxu0 %v2679
      %v2757 = vpop.f32.mrf.mxu0
      %v2758 = vadd.f32 0.0, %v2757
      %v2759 = vpop.f32.mrf.mxu0
      %v2760 = vadd.f32 0.0, %v2759
      %2761 = vmatmul.bf16.gmra.mxu0 %v2682
      %v2762 = vpop.f32.mrf.mxu0
      %v2763 = vadd.f32 0.0, %v2762
      %v2764 = vpop.f32.mrf.mxu0
      %v2765 = vadd.f32 0.0, %v2764
      %2766 = vmatmul.bf16.gmra.mxu0 %v2685
      %v2767 = vpop.f32.mrf.mxu0
      %v2768 = vadd.f32 0.0, %v2767
      %v2769 = vpop.f32.mrf.mxu0
      %v2770 = vadd.f32 0.0, %v2769
      %2771 = vmatmul.bf16.gmra.mxu0 %v2688
      %v2772 = vpop.f32.mrf.mxu0
      %v2773 = vadd.f32 0.0, %v2772
      %v2774 = vpop.f32.mrf.mxu0
      %v2775 = vadd.f32 0.0, %v2774
      %2776 = vmatmul.bf16.gmra.mxu0 %v2691
      %v2777 = vpop.f32.mrf.mxu0
      %v2778 = vadd.f32 0.0, %v2777
      %v2779 = vpop.f32.mrf.mxu0
      %v2780 = vadd.f32 0.0, %v2779
      %2781 = vdwg.mxu0
      %v2786 = vunpack.c.l.b16 %v2576
      %v2787 = vunpack.c.l.b16 %v2577
      %v2788 = vunpack.c.l.b16 %v2578
      %v2789 = vunpack.c.l.b16 %v2579
      %v2790 = vpack.c.b16 %v2787, %v2786
      %v2791 = vpack.c.b16 %v2789, %v2788
      %v2795 = vsel %vm2480, %v2560, 0
      %v2798 = vsel %vm2480, %v2561, 0
      %v2801 = vsel %vm2480, %v2562, 0
      %v2804 = vsel %vm2480, %v2563, 0
      %v2807 = vsel %vm2480, %v2564, 0
      %v2810 = vsel %vm2480, %v2565, 0
      %v2813 = vsel %vm2480, %v2566, 0
      %v2816 = vsel %vm2480, %v2567, 0
      %v2819 = vsel %vm2480, %v2568, 0
      %v2822 = vsel %vm2480, %v2569, 0
      %v2825 = vsel %vm2480, %v2570, 0
      %v2828 = vsel %vm2480, %v2571, 0
      %v2831 = vsel %vm2480, %v2572, 0
      %v2834 = vsel %vm2480, %v2573, 0
      %v2837 = vsel %vm2480, %v2574, 0
      %v2840 = vsel %vm2480, %v2575, 0
      %2842 = vmatpush.bf16.msra.mxu0 0
      %2843 = vmatpush.bf16.msra.mxu0 0
      %2844 = vmatpush.bf16.msra.mxu0 0
      %2845 = vmatpush.bf16.msra.mxu0 0
      %2846 = vmatpush.bf16.msra.mxu0 0
      %2847 = vmatpush.bf16.msra.mxu0 0
      %2848 = vmatpush.bf16.msra.mxu0 %v2791
      %2849 = vmatpush.bf16.msra.mxu0 %v2790
      %2850 = vmatmul.bf16.gmra.mxu0 %v2795
      %v2851 = vpop.f32.mrf.mxu0
      %v2852 = vadd.f32 %v2703, %v2851
      %v2853 = vpop.f32.mrf.mxu0
      %v2854 = vadd.f32 %v2705, %v2853
      %2855 = vmatmul.bf16.gmra.mxu0 %v2798
      %v2856 = vpop.f32.mrf.mxu0
      %v2857 = vadd.f32 %v2708, %v2856
      %v2858 = vpop.f32.mrf.mxu0
      %v2859 = vadd.f32 %v2710, %v2858
      %2860 = vmatmul.bf16.gmra.mxu0 %v2801
      %v2861 = vpop.f32.mrf.mxu0
      %v2862 = vadd.f32 %v2713, %v2861
      %v2863 = vpop.f32.mrf.mxu0
      %v2864 = vadd.f32 %v2715, %v2863
      %2865 = vmatmul.bf16.gmra.mxu0 %v2804
      %v2866 = vpop.f32.mrf.mxu0
      %v2867 = vadd.f32 %v2718, %v2866
      %v2868 = vpop.f32.mrf.mxu0
      %v2869 = vadd.f32 %v2720, %v2868
      %2870 = vmatmul.bf16.gmra.mxu0 %v2807
      %v2871 = vpop.f32.mrf.mxu0
      %v2872 = vadd.f32 %v2723, %v2871
      %v2873 = vpop.f32.mrf.mxu0
      %v2874 = vadd.f32 %v2725, %v2873
      %2875 = vmatmul.bf16.gmra.mxu0 %v2810
      %v2876 = vpop.f32.mrf.mxu0
      %v2877 = vadd.f32 %v2728, %v2876
      %v2878 = vpop.f32.mrf.mxu0
      %v2879 = vadd.f32 %v2730, %v2878
      %2880 = vmatmul.bf16.gmra.mxu0 %v2813
      %v2881 = vpop.f32.mrf.mxu0
      %v2882 = vadd.f32 %v2733, %v2881
      %v2883 = vpop.f32.mrf.mxu0
      %v2884 = vadd.f32 %v2735, %v2883
      %2885 = vmatmul.bf16.gmra.mxu0 %v2816
      %v2886 = vpop.f32.mrf.mxu0
      %v2887 = vadd.f32 %v2738, %v2886
      %v2888 = vpop.f32.mrf.mxu0
      %v2889 = vadd.f32 %v2740, %v2888
      %2890 = vmatmul.bf16.gmra.mxu0 %v2819
      %v2891 = vpop.f32.mrf.mxu0
      %v2892 = vadd.f32 %v2743, %v2891
      %v2893 = vpop.f32.mrf.mxu0
      %v2894 = vadd.f32 %v2745, %v2893
      %2895 = vmatmul.bf16.gmra.mxu0 %v2822
      %v2896 = vpop.f32.mrf.mxu0
      %v2897 = vadd.f32 %v2748, %v2896
      %v2898 = vpop.f32.mrf.mxu0
      %v2899 = vadd.f32 %v2750, %v2898
      %2900 = vmatmul.bf16.gmra.mxu0 %v2825
      %v2901 = vpop.f32.mrf.mxu0
      %v2902 = vadd.f32 %v2753, %v2901
      %v2903 = vpop.f32.mrf.mxu0
      %v2904 = vadd.f32 %v2755, %v2903
      %2905 = vmatmul.bf16.gmra.mxu0 %v2828
      %v2906 = vpop.f32.mrf.mxu0
      %v2907 = vadd.f32 %v2758, %v2906
      %v2908 = vpop.f32.mrf.mxu0
      %v2909 = vadd.f32 %v2760, %v2908
      %2910 = vmatmul.bf16.gmra.mxu0 %v2831
      %v2911 = vpop.f32.mrf.mxu0
      %v2912 = vadd.f32 %v2763, %v2911
      %v2913 = vpop.f32.mrf.mxu0
      %v2914 = vadd.f32 %v2765, %v2913
      %2915 = vmatmul.bf16.gmra.mxu0 %v2834
      %v2916 = vpop.f32.mrf.mxu0
      %v2917 = vadd.f32 %v2768, %v2916
      %v2918 = vpop.f32.mrf.mxu0
      %v2919 = vadd.f32 %v2770, %v2918
      %2920 = vmatmul.bf16.gmra.mxu0 %v2837
      %v2921 = vpop.f32.mrf.mxu0
      %v2922 = vadd.f32 %v2773, %v2921
      %v2923 = vpop.f32.mrf.mxu0
      %v2924 = vadd.f32 %v2775, %v2923
      %2925 = vmatmul.bf16.gmra.mxu0 %v2840
      %v2926 = vpop.f32.mrf.mxu0
      %v2927 = vadd.f32 %v2778, %v2926
      %v2928 = vpop.f32.mrf.mxu0
      %v2929 = vadd.f32 %v2780, %v2928
      %2930 = vdwg.mxu0
      %v2931 = vld [vmem:[#allocation2 + $0x24] sm:$0xff]
      %v2932 = vld [vmem:[#allocation2 + $0x2c] sm:$0xff]
      %v2933 = vld [vmem:[#allocation2 + $0x34] sm:$0xff]
      %v2934 = vld [vmem:[#allocation2 + $0x3c] sm:$0xff]
      %v2935 = vld [vmem:[#allocation2 + $0x44] sm:$0xff]
      %v2936 = vld [vmem:[#allocation2 + $0x4c] sm:$0xff]
      %v2937 = vld [vmem:[#allocation2 + $0x54] sm:$0xff]
      %v2938 = vld [vmem:[#allocation2 + $0x5c] sm:$0xff]
      %v2939 = vld [vmem:[#allocation2 + $0x64] sm:$0xff]
      %v2940 = vld [vmem:[#allocation2 + $0x6c] sm:$0xff]
      %v2941 = vld [vmem:[#allocation2 + $0x74] sm:$0xff]
      %v2942 = vld [vmem:[#allocation2 + $0x7c] sm:$0xff]
      %v2943 = vld [vmem:[#allocation2 + $0x84] sm:$0xff]
      %v2944 = vld [vmem:[#allocation2 + $0x8c] sm:$0xff]
      %v2945 = vld [vmem:[#allocation2 + $0x94] sm:$0xff]
      %v2946 = vld [vmem:[#allocation2 + $0x9c] sm:$0xff]
      %v2947 = vld [vmem:[#allocation2 + $0xa4] sm:$0xff]
      %v2948 = vld [vmem:[#allocation2 + $0xac] sm:$0xff]
      %v2949 = vld [vmem:[#allocation2 + $0xb4] sm:$0xff]
      %v2950 = vld [vmem:[#allocation2 + $0xbc] sm:$0xff]
      %v2951 = vld [vmem:[#allocation2 + $0xc4] sm:$0xff]
      %v2952 = vld [vmem:[#allocation2 + $0xcc] sm:$0xff]
      %v2953 = vld [vmem:[#allocation2 + $0xd4] sm:$0xff]
      %v2954 = vld [vmem:[#allocation2 + $0xdc] sm:$0xff]
      %v2955 = vld [vmem:[#allocation2 + $0xe4] sm:$0xff]
      %v2956 = vld [vmem:[#allocation2 + $0xec] sm:$0xff]
      %v2957 = vld [vmem:[#allocation2 + $0xf4] sm:$0xff]
      %v2958 = vld [vmem:[#allocation2 + $0xfc] sm:$0xff]
      %v2959 = vld [vmem:[#allocation2 + $0x104] sm:$0xff]
      %v2960 = vld [vmem:[#allocation2 + $0x10c] sm:$0xff]
      %v2961 = vld [vmem:[#allocation2 + $0x114] sm:$0xff]
      %v2962 = vld [vmem:[#allocation2 + $0x11c] sm:$0xff]
      %v2963 = vpack.c.bf16 %v2932, %v2931
      %v2964 = vpack.c.bf16 %v2934, %v2933
      %v2965 = vpack.c.bf16 %v2936, %v2935
      %v2966 = vpack.c.bf16 %v2938, %v2937
      %v2967 = vpack.c.bf16 %v2940, %v2939
      %v2968 = vpack.c.bf16 %v2942, %v2941
      %v2969 = vpack.c.bf16 %v2944, %v2943
      %v2970 = vpack.c.bf16 %v2946, %v2945
      %v2971 = vpack.c.bf16 %v2948, %v2947
      %v2972 = vpack.c.bf16 %v2950, %v2949
      %v2973 = vpack.c.bf16 %v2952, %v2951
      %v2974 = vpack.c.bf16 %v2954, %v2953
      %v2975 = vpack.c.bf16 %v2956, %v2955
      %v2976 = vpack.c.bf16 %v2958, %v2957
      %v2977 = vpack.c.bf16 %v2960, %v2959
      %v2978 = vpack.c.bf16 %v2962, %v2961
      %s2979 = scalar_lea.vmem %s4, 32
      %v2980 = vld [vmem:[%s2979] sm:$0xf]
      %v2981 = vld [vmem:[%s2979 + $0x4] sm:$0xf]
      %v2982 = vld [vmem:[%s2979 + $0x8] sm:$0xf]
      %v2983 = vld [vmem:[%s2979 + $0xc] sm:$0xf]
      %v2988 = vunpack.c.l.b16 %v2980
      %v2989 = vunpack.c.l.b16 %v2981
      %v2990 = vunpack.c.l.b16 %v2982
      %v2991 = vunpack.c.l.b16 %v2983
      %v2992 = vpack.c.b16 %v2989, %v2988
      %v2993 = vpack.c.b16 %v2991, %v2990
      %v2997 = vsel %vm2480, %v2963, 0
      %v3000 = vsel %vm2480, %v2964, 0
      %v3003 = vsel %vm2480, %v2965, 0
      %v3006 = vsel %vm2480, %v2966, 0
      %v3009 = vsel %vm2480, %v2967, 0
      %v3012 = vsel %vm2480, %v2968, 0
      %v3015 = vsel %vm2480, %v2969, 0
      %v3018 = vsel %vm2480, %v2970, 0
      %v3021 = vsel %vm2480, %v2971, 0
      %v3024 = vsel %vm2480, %v2972, 0
      %v3027 = vsel %vm2480, %v2973, 0
      %v3030 = vsel %vm2480, %v2974, 0
      %v3033 = vsel %vm2480, %v2975, 0
      %v3036 = vsel %vm2480, %v2976, 0
      %v3039 = vsel %vm2480, %v2977, 0
      %v3042 = vsel %vm2480, %v2978, 0
      %3044 = vmatpush.bf16.msra.mxu0 0
      %3045 = vmatpush.bf16.msra.mxu0 0
      %3046 = vmatpush.bf16.msra.mxu0 0
      %3047 = vmatpush.bf16.msra.mxu0 0
      %3048 = vmatpush.bf16.msra.mxu0 0
      %3049 = vmatpush.bf16.msra.mxu0 0
      %3050 = vmatpush.bf16.msra.mxu0 %v2993
      %3051 = vmatpush.bf16.msra.mxu0 %v2992
      %3052 = vmatmul.bf16.gmra.mxu0 %v2997
      %v3053 = vpop.f32.mrf.mxu0
      %v3054 = vadd.f32 0.0, %v3053
      %v3055 = vpop.f32.mrf.mxu0
      %v3056 = vadd.f32 0.0, %v3055
      %3057 = vmatmul.bf16.gmra.mxu0 %v3000
      %v3058 = vpop.f32.mrf.mxu0
      %v3059 = vadd.f32 0.0, %v3058
      %v3060 = vpop.f32.mrf.mxu0
      %v3061 = vadd.f32 0.0, %v3060
      %3062 = vmatmul.bf16.gmra.mxu0 %v3003
      %v3063 = vpop.f32.mrf.mxu0
      %v3064 = vadd.f32 0.0, %v3063
      %v3065 = vpop.f32.mrf.mxu0
      %v3066 = vadd.f32 0.0, %v3065
      %3067 = vmatmul.bf16.gmra.mxu0 %v3006
      %v3068 = vpop.f32.mrf.mxu0
      %v3069 = vadd.f32 0.0, %v3068
      %v3070 = vpop.f32.mrf.mxu0
      %v3071 = vadd.f32 0.0, %v3070
      %3072 = vmatmul.bf16.gmra.mxu0 %v3009
      %v3073 = vpop.f32.mrf.mxu0
      %v3074 = vadd.f32 0.0, %v3073
      %v3075 = vpop.f32.mrf.mxu0
      %v3076 = vadd.f32 0.0, %v3075
      %3077 = vmatmul.bf16.gmra.mxu0 %v3012
      %v3078 = vpop.f32.mrf.mxu0
      %v3079 = vadd.f32 0.0, %v3078
      %v3080 = vpop.f32.mrf.mxu0
      %v3081 = vadd.f32 0.0, %v3080
      %3082 = vmatmul.bf16.gmra.mxu0 %v3015
      %v3083 = vpop.f32.mrf.mxu0
      %v3084 = vadd.f32 0.0, %v3083
      %v3085 = vpop.f32.mrf.mxu0
      %v3086 = vadd.f32 0.0, %v3085
      %3087 = vmatmul.bf16.gmra.mxu0 %v3018
      %v3088 = vpop.f32.mrf.mxu0
      %v3089 = vadd.f32 0.0, %v3088
      %v3090 = vpop.f32.mrf.mxu0
      %v3091 = vadd.f32 0.0, %v3090
      %3092 = vmatmul.bf16.gmra.mxu0 %v3021
      %v3093 = vpop.f32.mrf.mxu0
      %v3094 = vadd.f32 0.0, %v3093
      %v3095 = vpop.f32.mrf.mxu0
      %v3096 = vadd.f32 0.0, %v3095
      %3097 = vmatmul.bf16.gmra.mxu0 %v3024
      %v3098 = vpop.f32.mrf.mxu0
      %v3099 = vadd.f32 0.0, %v3098
      %v3100 = vpop.f32.mrf.mxu0
      %v3101 = vadd.f32 0.0, %v3100
      %3102 = vmatmul.bf16.gmra.mxu0 %v3027
      %v3103 = vpop.f32.mrf.mxu0
      %v3104 = vadd.f32 0.0, %v3103
      %v3105 = vpop.f32.mrf.mxu0
      %v3106 = vadd.f32 0.0, %v3105
      %3107 = vmatmul.bf16.gmra.mxu0 %v3030
      %v3108 = vpop.f32.mrf.mxu0
      %v3109 = vadd.f32 0.0, %v3108
      %v3110 = vpop.f32.mrf.mxu0
      %v3111 = vadd.f32 0.0, %v3110
      %3112 = vmatmul.bf16.gmra.mxu0 %v3033
      %v3113 = vpop.f32.mrf.mxu0
      %v3114 = vadd.f32 0.0, %v3113
      %v3115 = vpop.f32.mrf.mxu0
      %v3116 = vadd.f32 0.0, %v3115
      %3117 = vmatmul.bf16.gmra.mxu0 %v3036
      %v3118 = vpop.f32.mrf.mxu0
      %v3119 = vadd.f32 0.0, %v3118
      %v3120 = vpop.f32.mrf.mxu0
      %v3121 = vadd.f32 0.0, %v3120
      %3122 = vmatmul.bf16.gmra.mxu0 %v3039
      %v3123 = vpop.f32.mrf.mxu0
      %v3124 = vadd.f32 0.0, %v3123
      %v3125 = vpop.f32.mrf.mxu0
      %v3126 = vadd.f32 0.0, %v3125
      %3127 = vmatmul.bf16.gmra.mxu0 %v3042
      %v3128 = vpop.f32.mrf.mxu0
      %v3129 = vadd.f32 0.0, %v3128
      %v3130 = vpop.f32.mrf.mxu0
      %v3131 = vadd.f32 0.0, %v3130
      %3132 = vdwg.mxu0
      %v3133 = vadd.f32 %v2852, %v3054
      %v3134 = vadd.f32 %v2854, %v3056
      %v3135 = vadd.f32 %v2857, %v3059
      %v3136 = vadd.f32 %v2859, %v3061
      %v3137 = vadd.f32 %v2862, %v3064
      %v3138 = vadd.f32 %v2864, %v3066
      %v3139 = vadd.f32 %v2867, %v3069
      %v3140 = vadd.f32 %v2869, %v3071
      %v3141 = vadd.f32 %v2872, %v3074
      %v3142 = vadd.f32 %v2874, %v3076
      %v3143 = vadd.f32 %v2877, %v3079
      %v3144 = vadd.f32 %v2879, %v3081
      %v3145 = vadd.f32 %v2882, %v3084
      %v3146 = vadd.f32 %v2884, %v3086
      %v3147 = vadd.f32 %v2887, %v3089
      %v3148 = vadd.f32 %v2889, %v3091
      %v3149 = vadd.f32 %v2892, %v3094
      %v3150 = vadd.f32 %v2894, %v3096
      %v3151 = vadd.f32 %v2897, %v3099
      %v3152 = vadd.f32 %v2899, %v3101
      %v3153 = vadd.f32 %v2902, %v3104
      %v3154 = vadd.f32 %v2904, %v3106
      %v3155 = vadd.f32 %v2907, %v3109
      %v3156 = vadd.f32 %v2909, %v3111
      %v3157 = vadd.f32 %v2912, %v3114
      %v3158 = vadd.f32 %v2914, %v3116
      %v3159 = vadd.f32 %v2917, %v3119
      %v3160 = vadd.f32 %v2919, %v3121
      %v3161 = vadd.f32 %v2922, %v3124
      %v3162 = vadd.f32 %v2924, %v3126
      %v3163 = vadd.f32 %v2927, %v3129
      %v3164 = vadd.f32 %v2929, %v3131
      %v3165 = vld [vmem:[#allocation2 + $0x32] sm:$0xff]
      %v3166 = vld [vmem:[#allocation2 + $0x3a] sm:$0xff]
      %v3167 = vld [vmem:[#allocation2 + $0x42] sm:$0xff]
      %v3168 = vld [vmem:[#allocation2 + $0x4a] sm:$0xff]
      %v3169 = vld [vmem:[#allocation2 + $0x52] sm:$0xff]
      %v3170 = vld [vmem:[#allocation2 + $0x5a] sm:$0xff]
      %v3171 = vld [vmem:[#allocation2 + $0x62] sm:$0xff]
      %v3172 = vld [vmem:[#allocation2 + $0x6a] sm:$0xff]
      %v3173 = vld [vmem:[#allocation2 + $0x72] sm:$0xff]
      %v3174 = vld [vmem:[#allocation2 + $0x7a] sm:$0xff]
      %v3175 = vld [vmem:[#allocation2 + $0x82] sm:$0xff]
      %v3176 = vld [vmem:[#allocation2 + $0x8a] sm:$0xff]
      %v3177 = vld [vmem:[#allocation2 + $0x92] sm:$0xff]
      %v3178 = vld [vmem:[#allocation2 + $0x9a] sm:$0xff]
      %v3179 = vld [vmem:[#allocation2 + $0xa2] sm:$0xff]
      %v3180 = vld [vmem:[#allocation2 + $0xaa] sm:$0xff]
      %v3181 = vld [vmem:[#allocation2 + $0xb2] sm:$0xff]
      %v3182 = vld [vmem:[#allocation2 + $0xba] sm:$0xff]
      %v3183 = vld [vmem:[#allocation2 + $0xc2] sm:$0xff]
      %v3184 = vld [vmem:[#allocation2 + $0xca] sm:$0xff]
      %v3185 = vld [vmem:[#allocation2 + $0xd2] sm:$0xff]
      %v3186 = vld [vmem:[#allocation2 + $0xda] sm:$0xff]
      %v3187 = vld [vmem:[#allocation2 + $0xe2] sm:$0xff]
      %v3188 = vld [vmem:[#allocation2 + $0xea] sm:$0xff]
      %v3189 = vld [vmem:[#allocation2 + $0xf2] sm:$0xff]
      %v3190 = vld [vmem:[#allocation2 + $0xfa] sm:$0xff]
      %v3191 = vld [vmem:[#allocation2 + $0x102] sm:$0xff]
      %v3192 = vld [vmem:[#allocation2 + $0x10a] sm:$0xff]
      %v3193 = vld [vmem:[#allocation2 + $0x112] sm:$0xff]
      %v3194 = vld [vmem:[#allocation2 + $0x11a] sm:$0xff]
      %v3195 = vld [vmem:[#allocation2 + $0x122] sm:$0xff]
      %v3196 = vld [vmem:[#allocation2 + $0x12a] sm:$0xff]
      %v3197 = vpack.c.bf16 %v3166, %v3165
      %v3198 = vpack.c.bf16 %v3168, %v3167
      %v3199 = vpack.c.bf16 %v3170, %v3169
      %v3200 = vpack.c.bf16 %v3172, %v3171
      %v3201 = vpack.c.bf16 %v3174, %v3173
      %v3202 = vpack.c.bf16 %v3176, %v3175
      %v3203 = vpack.c.bf16 %v3178, %v3177
      %v3204 = vpack.c.bf16 %v3180, %v3179
      %v3205 = vpack.c.bf16 %v3182, %v3181
      %v3206 = vpack.c.bf16 %v3184, %v3183
      %v3207 = vpack.c.bf16 %v3186, %v3185
      %v3208 = vpack.c.bf16 %v3188, %v3187
      %v3209 = vpack.c.bf16 %v3190, %v3189
      %v3210 = vpack.c.bf16 %v3192, %v3191
      %v3211 = vpack.c.bf16 %v3194, %v3193
      %v3212 = vpack.c.bf16 %v3196, %v3195
      %s3213 = scalar_lea.vmem %s4, 48
      %v3214 = vld [vmem:[%s3213] sm:$0xf]
      %v3215 = vld [vmem:[%s3213 + $0x4] sm:$0xf]
      %v3216 = vld [vmem:[%s3213 + $0x8] sm:$0xf]
      %v3217 = vld [vmem:[%s3213 + $0xc] sm:$0xf]
      %v3222 = vunpack.c.l.b16 %v3214
      %v3223 = vunpack.c.l.b16 %v3215
      %v3224 = vunpack.c.l.b16 %v3216
      %v3225 = vunpack.c.l.b16 %v3217
      %v3226 = vpack.c.b16 %v3223, %v3222
      %v3227 = vpack.c.b16 %v3225, %v3224
      %v3231 = vsel %vm2480, %v3197, 0
      %v3234 = vsel %vm2480, %v3198, 0
      %v3237 = vsel %vm2480, %v3199, 0
      %v3240 = vsel %vm2480, %v3200, 0
      %v3243 = vsel %vm2480, %v3201, 0
      %v3246 = vsel %vm2480, %v3202, 0
      %v3249 = vsel %vm2480, %v3203, 0
      %v3252 = vsel %vm2480, %v3204, 0
      %v3255 = vsel %vm2480, %v3205, 0
      %v3258 = vsel %vm2480, %v3206, 0
      %v3261 = vsel %vm2480, %v3207, 0
      %v3264 = vsel %vm2480, %v3208, 0
      %v3267 = vsel %vm2480, %v3209, 0
      %v3270 = vsel %vm2480, %v3210, 0
      %v3273 = vsel %vm2480, %v3211, 0
      %v3276 = vsel %vm2480, %v3212, 0
      %3278 = vmatpush.bf16.msra.mxu0 0
      %3279 = vmatpush.bf16.msra.mxu0 0
      %3280 = vmatpush.bf16.msra.mxu0 0
      %3281 = vmatpush.bf16.msra.mxu0 0
      %3282 = vmatpush.bf16.msra.mxu0 0
      %3283 = vmatpush.bf16.msra.mxu0 0
      %3284 = vmatpush.bf16.msra.mxu0 %v3227
      %3285 = vmatpush.bf16.msra.mxu0 %v3226
      %3286 = vmatmul.bf16.gmra.mxu0 %v3231
      %v3287 = vpop.f32.mrf.mxu0
      %v3288 = vadd.f32 0.0, %v3287
      %v3289 = vpop.f32.mrf.mxu0
      %v3290 = vadd.f32 0.0, %v3289
      %3291 = vmatmul.bf16.gmra.mxu0 %v3234
      %v3292 = vpop.f32.mrf.mxu0
      %v3293 = vadd.f32 0.0, %v3292
      %v3294 = vpop.f32.mrf.mxu0
      %v3295 = vadd.f32 0.0, %v3294
      %3296 = vmatmul.bf16.gmra.mxu0 %v3237
      %v3297 = vpop.f32.mrf.mxu0
      %v3298 = vadd.f32 0.0, %v3297
      %v3299 = vpop.f32.mrf.mxu0
      %v3300 = vadd.f32 0.0, %v3299
      %3301 = vmatmul.bf16.gmra.mxu0 %v3240
      %v3302 = vpop.f32.mrf.mxu0
      %v3303 = vadd.f32 0.0, %v3302
      %v3304 = vpop.f32.mrf.mxu0
      %v3305 = vadd.f32 0.0, %v3304
      %3306 = vmatmul.bf16.gmra.mxu0 %v3243
      %v3307 = vpop.f32.mrf.mxu0
      %v3308 = vadd.f32 0.0, %v3307
      %v3309 = vpop.f32.mrf.mxu0
      %v3310 = vadd.f32 0.0, %v3309
      %3311 = vmatmul.bf16.gmra.mxu0 %v3246
      %v3312 = vpop.f32.mrf.mxu0
      %v3313 = vadd.f32 0.0, %v3312
      %v3314 = vpop.f32.mrf.mxu0
      %v3315 = vadd.f32 0.0, %v3314
      %3316 = vmatmul.bf16.gmra.mxu0 %v3249
      %v3317 = vpop.f32.mrf.mxu0
      %v3318 = vadd.f32 0.0, %v3317
      %v3319 = vpop.f32.mrf.mxu0
      %v3320 = vadd.f32 0.0, %v3319
      %3321 = vmatmul.bf16.gmra.mxu0 %v3252
      %v3322 = vpop.f32.mrf.mxu0
      %v3323 = vadd.f32 0.0, %v3322
      %v3324 = vpop.f32.mrf.mxu0
      %v3325 = vadd.f32 0.0, %v3324
      %3326 = vmatmul.bf16.gmra.mxu0 %v3255
      %v3327 = vpop.f32.mrf.mxu0
      %v3328 = vadd.f32 0.0, %v3327
      %v3329 = vpop.f32.mrf.mxu0
      %v3330 = vadd.f32 0.0, %v3329
      %3331 = vmatmul.bf16.gmra.mxu0 %v3258
      %v3332 = vpop.f32.mrf.mxu0
      %v3333 = vadd.f32 0.0, %v3332
      %v3334 = vpop.f32.mrf.mxu0
      %v3335 = vadd.f32 0.0, %v3334
      %3336 = vmatmul.bf16.gmra.mxu0 %v3261
      %v3337 = vpop.f32.mrf.mxu0
      %v3338 = vadd.f32 0.0, %v3337
      %v3339 = vpop.f32.mrf.mxu0
      %v3340 = vadd.f32 0.0, %v3339
      %3341 = vmatmul.bf16.gmra.mxu0 %v3264
      %v3342 = vpop.f32.mrf.mxu0
      %v3343 = vadd.f32 0.0, %v3342
      %v3344 = vpop.f32.mrf.mxu0
      %v3345 = vadd.f32 0.0, %v3344
      %3346 = vmatmul.bf16.gmra.mxu0 %v3267
      %v3347 = vpop.f32.mrf.mxu0
      %v3348 = vadd.f32 0.0, %v3347
      %v3349 = vpop.f32.mrf.mxu0
      %v3350 = vadd.f32 0.0, %v3349
      %3351 = vmatmul.bf16.gmra.mxu0 %v3270
      %v3352 = vpop.f32.mrf.mxu0
      %v3353 = vadd.f32 0.0, %v3352
      %v3354 = vpop.f32.mrf.mxu0
      %v3355 = vadd.f32 0.0, %v3354
      %3356 = vmatmul.bf16.gmra.mxu0 %v3273
      %v3357 = vpop.f32.mrf.mxu0
      %v3358 = vadd.f32 0.0, %v3357
      %v3359 = vpop.f32.mrf.mxu0
      %v3360 = vadd.f32 0.0, %v3359
      %3361 = vmatmul.bf16.gmra.mxu0 %v3276
      %v3362 = vpop.f32.mrf.mxu0
      %v3363 = vadd.f32 0.0, %v3362
      %v3364 = vpop.f32.mrf.mxu0
      %v3365 = vadd.f32 0.0, %v3364
      %3366 = vdwg.mxu0
      %v3367 = vadd.f32 %v3133, %v3288
      %v3368 = vadd.f32 %v3134, %v3290
      %v3369 = vadd.f32 %v3135, %v3293
      %v3370 = vadd.f32 %v3136, %v3295
      %v3371 = vadd.f32 %v3137, %v3298
      %v3372 = vadd.f32 %v3138, %v3300
      %v3373 = vadd.f32 %v3139, %v3303
      %v3374 = vadd.f32 %v3140, %v3305
      %v3375 = vadd.f32 %v3141, %v3308
      %v3376 = vadd.f32 %v3142, %v3310
      %v3377 = vadd.f32 %v3143, %v3313
      %v3378 = vadd.f32 %v3144, %v3315
      %v3379 = vadd.f32 %v3145, %v3318
      %v3380 = vadd.f32 %v3146, %v3320
      %v3381 = vadd.f32 %v3147, %v3323
      %v3382 = vadd.f32 %v3148, %v3325
      %v3383 = vadd.f32 %v3149, %v3328
      %v3384 = vadd.f32 %v3150, %v3330
      %v3385 = vadd.f32 %v3151, %v3333
      %v3386 = vadd.f32 %v3152, %v3335
      %v3387 = vadd.f32 %v3153, %v3338
      %v3388 = vadd.f32 %v3154, %v3340
      %v3389 = vadd.f32 %v3155, %v3343
      %v3390 = vadd.f32 %v3156, %v3345
      %v3391 = vadd.f32 %v3157, %v3348
      %v3392 = vadd.f32 %v3158, %v3350
      %v3393 = vadd.f32 %v3159, %v3353
      %v3394 = vadd.f32 %v3160, %v3355
      %v3395 = vadd.f32 %v3161, %v3358
      %v3396 = vadd.f32 %v3162, %v3360
      %v3397 = vadd.f32 %v3163, %v3363
      %v3398 = vadd.f32 %v3164, %v3365
      %v3399 = vld [vmem:[#allocation2 + $0x33] sm:$0xff]
      %v3400 = vld [vmem:[#allocation2 + $0x3b] sm:$0xff]
      %v3401 = vld [vmem:[#allocation2 + $0x43] sm:$0xff]
      %v3402 = vld [vmem:[#allocation2 + $0x4b] sm:$0xff]
      %v3403 = vld [vmem:[#allocation2 + $0x53] sm:$0xff]
      %v3404 = vld [vmem:[#allocation2 + $0x5b] sm:$0xff]
      %v3405 = vld [vmem:[#allocation2 + $0x63] sm:$0xff]
      %v3406 = vld [vmem:[#allocation2 + $0x6b] sm:$0xff]
      %v3407 = vld [vmem:[#allocation2 + $0x73] sm:$0xff]
      %v3408 = vld [vmem:[#allocation2 + $0x7b] sm:$0xff]
      %v3409 = vld [vmem:[#allocation2 + $0x83] sm:$0xff]
      %v3410 = vld [vmem:[#allocation2 + $0x8b] sm:$0xff]
      %v3411 = vld [vmem:[#allocation2 + $0x93] sm:$0xff]
      %v3412 = vld [vmem:[#allocation2 + $0x9b] sm:$0xff]
      %v3413 = vld [vmem:[#allocation2 + $0xa3] sm:$0xff]
      %v3414 = vld [vmem:[#allocation2 + $0xab] sm:$0xff]
      %v3415 = vld [vmem:[#allocation2 + $0xb3] sm:$0xff]
      %v3416 = vld [vmem:[#allocation2 + $0xbb] sm:$0xff]
      %v3417 = vld [vmem:[#allocation2 + $0xc3] sm:$0xff]
      %v3418 = vld [vmem:[#allocation2 + $0xcb] sm:$0xff]
      %v3419 = vld [vmem:[#allocation2 + $0xd3] sm:$0xff]
      %v3420 = vld [vmem:[#allocation2 + $0xdb] sm:$0xff]
      %v3421 = vld [vmem:[#allocation2 + $0xe3] sm:$0xff]
      %v3422 = vld [vmem:[#allocation2 + $0xeb] sm:$0xff]
      %v3423 = vld [vmem:[#allocation2 + $0xf3] sm:$0xff]
      %v3424 = vld [vmem:[#allocation2 + $0xfb] sm:$0xff]
      %v3425 = vld [vmem:[#allocation2 + $0x103] sm:$0xff]
      %v3426 = vld [vmem:[#allocation2 + $0x10b] sm:$0xff]
      %v3427 = vld [vmem:[#allocation2 + $0x113] sm:$0xff]
      %v3428 = vld [vmem:[#allocation2 + $0x11b] sm:$0xff]
      %v3429 = vld [vmem:[#allocation2 + $0x123] sm:$0xff]
      %v3430 = vld [vmem:[#allocation2 + $0x12b] sm:$0xff]
      %v3431 = vpack.c.bf16 %v3400, %v3399
      %v3432 = vpack.c.bf16 %v3402, %v3401
      %v3433 = vpack.c.bf16 %v3404, %v3403
      %v3434 = vpack.c.bf16 %v3406, %v3405
      %v3435 = vpack.c.bf16 %v3408, %v3407
      %v3436 = vpack.c.bf16 %v3410, %v3409
      %v3437 = vpack.c.bf16 %v3412, %v3411
      %v3438 = vpack.c.bf16 %v3414, %v3413
      %v3439 = vpack.c.bf16 %v3416, %v3415
      %v3440 = vpack.c.bf16 %v3418, %v3417
      %v3441 = vpack.c.bf16 %v3420, %v3419
      %v3442 = vpack.c.bf16 %v3422, %v3421
      %v3443 = vpack.c.bf16 %v3424, %v3423
      %v3444 = vpack.c.bf16 %v3426, %v3425
      %v3445 = vpack.c.bf16 %v3428, %v3427
      %v3446 = vpack.c.bf16 %v3430, %v3429
      %s3447 = scalar_lea.vmem %s4, 64
      %v3448 = vld [vmem:[%s3447] sm:$0xf]
      %v3449 = vld [vmem:[%s3447 + $0x4] sm:$0xf]
      %v3450 = vld [vmem:[%s3447 + $0x8] sm:$0xf]
      %v3451 = vld [vmem:[%s3447 + $0xc] sm:$0xf]
      %v3456 = vunpack.c.l.b16 %v3448
      %v3457 = vunpack.c.l.b16 %v3449
      %v3458 = vunpack.c.l.b16 %v3450
      %v3459 = vunpack.c.l.b16 %v3451
      %v3460 = vpack.c.b16 %v3457, %v3456
      %v3461 = vpack.c.b16 %v3459, %v3458
      %v3465 = vsel %vm2480, %v3431, 0
      %v3468 = vsel %vm2480, %v3432, 0
      %v3471 = vsel %vm2480, %v3433, 0
      %v3474 = vsel %vm2480, %v3434, 0
      %v3477 = vsel %vm2480, %v3435, 0
      %v3480 = vsel %vm2480, %v3436, 0
      %v3483 = vsel %vm2480, %v3437, 0
      %v3486 = vsel %vm2480, %v3438, 0
      %v3489 = vsel %vm2480, %v3439, 0
      %v3492 = vsel %vm2480, %v3440, 0
      %v3495 = vsel %vm2480, %v3441, 0
      %v3498 = vsel %vm2480, %v3442, 0
      %v3501 = vsel %vm2480, %v3443, 0
      %v3504 = vsel %vm2480, %v3444, 0
      %v3507 = vsel %vm2480, %v3445, 0
      %v3510 = vsel %vm2480, %v3446, 0
      %3512 = vmatpush.bf16.msra.mxu0 0
      %3513 = vmatpush.bf16.msra.mxu0 0
      %3514 = vmatpush.bf16.msra.mxu0 0
      %3515 = vmatpush.bf16.msra.mxu0 0
      %3516 = vmatpush.bf16.msra.mxu0 0
      %3517 = vmatpush.bf16.msra.mxu0 0
      %3518 = vmatpush.bf16.msra.mxu0 %v3461
      %3519 = vmatpush.bf16.msra.mxu0 %v3460
      %3520 = vmatmul.bf16.gmra.mxu0 %v3465
      %v3521 = vpop.f32.mrf.mxu0
      %v3522 = vadd.f32 0.0, %v3521
      %v3523 = vpop.f32.mrf.mxu0
      %v3524 = vadd.f32 0.0, %v3523
      %3525 = vmatmul.bf16.gmra.mxu0 %v3468
      %v3526 = vpop.f32.mrf.mxu0
      %v3527 = vadd.f32 0.0, %v3526
      %v3528 = vpop.f32.mrf.mxu0
      %v3529 = vadd.f32 0.0, %v3528
      %3530 = vmatmul.bf16.gmra.mxu0 %v3471
      %v3531 = vpop.f32.mrf.mxu0
      %v3532 = vadd.f32 0.0, %v3531
      %v3533 = vpop.f32.mrf.mxu0
      %v3534 = vadd.f32 0.0, %v3533
      %3535 = vmatmul.bf16.gmra.mxu0 %v3474
      %v3536 = vpop.f32.mrf.mxu0
      %v3537 = vadd.f32 0.0, %v3536
      %v3538 = vpop.f32.mrf.mxu0
      %v3539 = vadd.f32 0.0, %v3538
      %3540 = vmatmul.bf16.gmra.mxu0 %v3477
      %v3541 = vpop.f32.mrf.mxu0
      %v3542 = vadd.f32 0.0, %v3541
      %v3543 = vpop.f32.mrf.mxu0
      %v3544 = vadd.f32 0.0, %v3543
      %3545 = vmatmul.bf16.gmra.mxu0 %v3480
      %v3546 = vpop.f32.mrf.mxu0
      %v3547 = vadd.f32 0.0, %v3546
      %v3548 = vpop.f32.mrf.mxu0
      %v3549 = vadd.f32 0.0, %v3548
      %3550 = vmatmul.bf16.gmra.mxu0 %v3483
      %v3551 = vpop.f32.mrf.mxu0
      %v3552 = vadd.f32 0.0, %v3551
      %v3553 = vpop.f32.mrf.mxu0
      %v3554 = vadd.f32 0.0, %v3553
      %3555 = vmatmul.bf16.gmra.mxu0 %v3486
      %v3556 = vpop.f32.mrf.mxu0
      %v3557 = vadd.f32 0.0, %v3556
      %v3558 = vpop.f32.mrf.mxu0
      %v3559 = vadd.f32 0.0, %v3558
      %3560 = vmatmul.bf16.gmra.mxu0 %v3489
      %v3561 = vpop.f32.mrf.mxu0
      %v3562 = vadd.f32 0.0, %v3561
      %v3563 = vpop.f32.mrf.mxu0
      %v3564 = vadd.f32 0.0, %v3563
      %3565 = vmatmul.bf16.gmra.mxu0 %v3492
      %v3566 = vpop.f32.mrf.mxu0
      %v3567 = vadd.f32 0.0, %v3566
      %v3568 = vpop.f32.mrf.mxu0
      %v3569 = vadd.f32 0.0, %v3568
      %3570 = vmatmul.bf16.gmra.mxu0 %v3495
      %v3571 = vpop.f32.mrf.mxu0
      %v3572 = vadd.f32 0.0, %v3571
      %v3573 = vpop.f32.mrf.mxu0
      %v3574 = vadd.f32 0.0, %v3573
      %3575 = vmatmul.bf16.gmra.mxu0 %v3498
      %v3576 = vpop.f32.mrf.mxu0
      %v3577 = vadd.f32 0.0, %v3576
      %v3578 = vpop.f32.mrf.mxu0
      %v3579 = vadd.f32 0.0, %v3578
      %3580 = vmatmul.bf16.gmra.mxu0 %v3501
      %v3581 = vpop.f32.mrf.mxu0
      %v3582 = vadd.f32 0.0, %v3581
      %v3583 = vpop.f32.mrf.mxu0
      %v3584 = vadd.f32 0.0, %v3583
      %3585 = vmatmul.bf16.gmra.mxu0 %v3504
      %v3586 = vpop.f32.mrf.mxu0
      %v3587 = vadd.f32 0.0, %v3586
      %v3588 = vpop.f32.mrf.mxu0
      %v3589 = vadd.f32 0.0, %v3588
      %3590 = vmatmul.bf16.gmra.mxu0 %v3507
      %v3591 = vpop.f32.mrf.mxu0
      %v3592 = vadd.f32 0.0, %v3591
      %v3593 = vpop.f32.mrf.mxu0
      %v3594 = vadd.f32 0.0, %v3593
      %3595 = vmatmul.bf16.gmra.mxu0 %v3510
      %v3596 = vpop.f32.mrf.mxu0
      %v3597 = vadd.f32 0.0, %v3596
      %v3598 = vpop.f32.mrf.mxu0
      %v3599 = vadd.f32 0.0, %v3598
      %3600 = vdwg.mxu0
      %v3601 = vadd.f32 %v3367, %v3522
      %v3602 = vadd.f32 %v3368, %v3524
      %v3603 = vadd.f32 %v3369, %v3527
      %v3604 = vadd.f32 %v3370, %v3529
      %v3605 = vadd.f32 %v3371, %v3532
      %v3606 = vadd.f32 %v3372, %v3534
      %v3607 = vadd.f32 %v3373, %v3537
      %v3608 = vadd.f32 %v3374, %v3539
      %v3609 = vadd.f32 %v3375, %v3542
      %v3610 = vadd.f32 %v3376, %v3544
      %v3611 = vadd.f32 %v3377, %v3547
      %v3612 = vadd.f32 %v3378, %v3549
      %v3613 = vadd.f32 %v3379, %v3552
      %v3614 = vadd.f32 %v3380, %v3554
      %v3615 = vadd.f32 %v3381, %v3557
      %v3616 = vadd.f32 %v3382, %v3559
      %v3617 = vadd.f32 %v3383, %v3562
      %v3618 = vadd.f32 %v3384, %v3564
      %v3619 = vadd.f32 %v3385, %v3567
      %v3620 = vadd.f32 %v3386, %v3569
      %v3621 = vadd.f32 %v3387, %v3572
      %v3622 = vadd.f32 %v3388, %v3574
      %v3623 = vadd.f32 %v3389, %v3577
      %v3624 = vadd.f32 %v3390, %v3579
      %v3625 = vadd.f32 %v3391, %v3582
      %v3626 = vadd.f32 %v3392, %v3584
      %v3627 = vadd.f32 %v3393, %v3587
      %v3628 = vadd.f32 %v3394, %v3589
      %v3629 = vadd.f32 %v3395, %v3592
      %v3630 = vadd.f32 %v3396, %v3594
      %v3631 = vadd.f32 %v3397, %v3597
      %v3632 = vadd.f32 %v3398, %v3599
      %v3633 = vld [vmem:[#allocation2 + $0x34] sm:$0xff]
      %v3634 = vld [vmem:[#allocation2 + $0x3c] sm:$0xff]
      %v3635 = vld [vmem:[#allocation2 + $0x44] sm:$0xff]
      %v3636 = vld [vmem:[#allocation2 + $0x4c] sm:$0xff]
      %v3637 = vld [vmem:[#allocation2 + $0x54] sm:$0xff]
      %v3638 = vld [vmem:[#allocation2 + $0x5c] sm:$0xff]
      %v3639 = vld [vmem:[#allocation2 + $0x64] sm:$0xff]
      %v3640 = vld [vmem:[#allocation2 + $0x6c] sm:$0xff]
      %v3641 = vld [vmem:[#allocation2 + $0x74] sm:$0xff]
      %v3642 = vld [vmem:[#allocation2 + $0x7c] sm:$0xff]
      %v3643 = vld [vmem:[#allocation2 + $0x84] sm:$0xff]
      %v3644 = vld [vmem:[#allocation2 + $0x8c] sm:$0xff]
      %v3645 = vld [vmem:[#allocation2 + $0x94] sm:$0xff]
      %v3646 = vld [vmem:[#allocation2 + $0x9c] sm:$0xff]
      %v3647 = vld [vmem:[#allocation2 + $0xa4] sm:$0xff]
      %v3648 = vld [vmem:[#allocation2 + $0xac] sm:$0xff]
      %v3649 = vld [vmem:[#allocation2 + $0xb4] sm:$0xff]
      %v3650 = vld [vmem:[#allocation2 + $0xbc] sm:$0xff]
      %v3651 = vld [vmem:[#allocation2 + $0xc4] sm:$0xff]
      %v3652 = vld [vmem:[#allocation2 + $0xcc] sm:$0xff]
      %v3653 = vld [vmem:[#allocation2 + $0xd4] sm:$0xff]
      %v3654 = vld [vmem:[#allocation2 + $0xdc] sm:$0xff]
      %v3655 = vld [vmem:[#allocation2 + $0xe4] sm:$0xff]
      %v3656 = vld [vmem:[#allocation2 + $0xec] sm:$0xff]
      %v3657 = vld [vmem:[#allocation2 + $0xf4] sm:$0xff]
      %v3658 = vld [vmem:[#allocation2 + $0xfc] sm:$0xff]
      %v3659 = vld [vmem:[#allocation2 + $0x104] sm:$0xff]
      %v3660 = vld [vmem:[#allocation2 + $0x10c] sm:$0xff]
      %v3661 = vld [vmem:[#allocation2 + $0x114] sm:$0xff]
      %v3662 = vld [vmem:[#allocation2 + $0x11c] sm:$0xff]
      %v3663 = vld [vmem:[#allocation2 + $0x124] sm:$0xff]
      %v3664 = vld [vmem:[#allocation2 + $0x12c] sm:$0xff]
      %v3665 = vpack.c.bf16 %v3634, %v3633
      %v3666 = vpack.c.bf16 %v3636, %v3635
      %v3667 = vpack.c.bf16 %v3638, %v3637
      %v3668 = vpack.c.bf16 %v3640, %v3639
      %v3669 = vpack.c.bf16 %v3642, %v3641
      %v3670 = vpack.c.bf16 %v3644, %v3643
      %v3671 = vpack.c.bf16 %v3646, %v3645
      %v3672 = vpack.c.bf16 %v3648, %v3647
      %v3673 = vpack.c.bf16 %v3650, %v3649
      %v3674 = vpack.c.bf16 %v3652, %v3651
      %v3675 = vpack.c.bf16 %v3654, %v3653
      %v3676 = vpack.c.bf16 %v3656, %v3655
      %v3677 = vpack.c.bf16 %v3658, %v3657
      %v3678 = vpack.c.bf16 %v3660, %v3659
      %v3679 = vpack.c.bf16 %v3662, %v3661
      %v3680 = vpack.c.bf16 %v3664, %v3663
      %s3681 = scalar_lea.vmem %s4, 80
      %v3682 = vld [vmem:[%s3681] sm:$0xf]
      %v3683 = vld [vmem:[%s3681 + $0x4] sm:$0xf]
      %v3684 = vld [vmem:[%s3681 + $0x8] sm:$0xf]
      %v3685 = vld [vmem:[%s3681 + $0xc] sm:$0xf]
      %v3690 = vunpack.c.l.b16 %v3682
      %v3691 = vunpack.c.l.b16 %v3683
      %v3692 = vunpack.c.l.b16 %v3684
      %v3693 = vunpack.c.l.b16 %v3685
      %v3694 = vpack.c.b16 %v3691, %v3690
      %v3695 = vpack.c.b16 %v3693, %v3692
      %v3699 = vsel %vm2480, %v3665, 0
      %v3702 = vsel %vm2480, %v3666, 0
      %v3705 = vsel %vm2480, %v3667, 0
      %v3708 = vsel %vm2480, %v3668, 0
      %v3711 = vsel %vm2480, %v3669, 0
      %v3714 = vsel %vm2480, %v3670, 0
      %v3717 = vsel %vm2480, %v3671, 0
      %v3720 = vsel %vm2480, %v3672, 0
      %v3723 = vsel %vm2480, %v3673, 0
      %v3726 = vsel %vm2480, %v3674, 0
      %v3729 = vsel %vm2480, %v3675, 0
      %v3732 = vsel %vm2480, %v3676, 0
      %v3735 = vsel %vm2480, %v3677, 0
      %v3738 = vsel %vm2480, %v3678, 0
      %v3741 = vsel %vm2480, %v3679, 0
      %v3744 = vsel %vm2480, %v3680, 0
      %3746 = vmatpush.bf16.msra.mxu0 0
      %3747 = vmatpush.bf16.msra.mxu0 0
      %3748 = vmatpush.bf16.msra.mxu0 0
      %3749 = vmatpush.bf16.msra.mxu0 0
      %3750 = vmatpush.bf16.msra.mxu0 0
      %3751 = vmatpush.bf16.msra.mxu0 0
      %3752 = vmatpush.bf16.msra.mxu0 %v3695
      %3753 = vmatpush.bf16.msra.mxu0 %v3694
      %3754 = vmatmul.bf16.gmra.mxu0 %v3699
      %v3755 = vpop.f32.mrf.mxu0
      %v3756 = vadd.f32 0.0, %v3755
      %v3757 = vpop.f32.mrf.mxu0
      %v3758 = vadd.f32 0.0, %v3757
      %3759 = vmatmul.bf16.gmra.mxu0 %v3702
      %v3760 = vpop.f32.mrf.mxu0
      %v3761 = vadd.f32 0.0, %v3760
      %v3762 = vpop.f32.mrf.mxu0
      %v3763 = vadd.f32 0.0, %v3762
      %3764 = vmatmul.bf16.gmra.mxu0 %v3705
      %v3765 = vpop.f32.mrf.mxu0
      %v3766 = vadd.f32 0.0, %v3765
      %v3767 = vpop.f32.mrf.mxu0
      %v3768 = vadd.f32 0.0, %v3767
      %3769 = vmatmul.bf16.gmra.mxu0 %v3708
      %v3770 = vpop.f32.mrf.mxu0
      %v3771 = vadd.f32 0.0, %v3770
      %v3772 = vpop.f32.mrf.mxu0
      %v3773 = vadd.f32 0.0, %v3772
      %3774 = vmatmul.bf16.gmra.mxu0 %v3711
      %v3775 = vpop.f32.mrf.mxu0
      %v3776 = vadd.f32 0.0, %v3775
      %v3777 = vpop.f32.mrf.mxu0
      %v3778 = vadd.f32 0.0, %v3777
      %3779 = vmatmul.bf16.gmra.mxu0 %v3714
      %v3780 = vpop.f32.mrf.mxu0
      %v3781 = vadd.f32 0.0, %v3780
      %v3782 = vpop.f32.mrf.mxu0
      %v3783 = vadd.f32 0.0, %v3782
      %3784 = vmatmul.bf16.gmra.mxu0 %v3717
      %v3785 = vpop.f32.mrf.mxu0
      %v3786 = vadd.f32 0.0, %v3785
      %v3787 = vpop.f32.mrf.mxu0
      %v3788 = vadd.f32 0.0, %v3787
      %3789 = vmatmul.bf16.gmra.mxu0 %v3720
      %v3790 = vpop.f32.mrf.mxu0
      %v3791 = vadd.f32 0.0, %v3790
      %v3792 = vpop.f32.mrf.mxu0
      %v3793 = vadd.f32 0.0, %v3792
      %3794 = vmatmul.bf16.gmra.mxu0 %v3723
      %v3795 = vpop.f32.mrf.mxu0
      %v3796 = vadd.f32 0.0, %v3795
      %v3797 = vpop.f32.mrf.mxu0
      %v3798 = vadd.f32 0.0, %v3797
      %3799 = vmatmul.bf16.gmra.mxu0 %v3726
      %v3800 = vpop.f32.mrf.mxu0
      %v3801 = vadd.f32 0.0, %v3800
      %v3802 = vpop.f32.mrf.mxu0
      %v3803 = vadd.f32 0.0, %v3802
      %3804 = vmatmul.bf16.gmra.mxu0 %v3729
      %v3805 = vpop.f32.mrf.mxu0
      %v3806 = vadd.f32 0.0, %v3805
      %v3807 = vpop.f32.mrf.mxu0
      %v3808 = vadd.f32 0.0, %v3807
      %3809 = vmatmul.bf16.gmra.mxu0 %v3732
      %v3810 = vpop.f32.mrf.mxu0
      %v3811 = vadd.f32 0.0, %v3810
      %v3812 = vpop.f32.mrf.mxu0
      %v3813 = vadd.f32 0.0, %v3812
      %3814 = vmatmul.bf16.gmra.mxu0 %v3735
      %v3815 = vpop.f32.mrf.mxu0
      %v3816 = vadd.f32 0.0, %v3815
      %v3817 = vpop.f32.mrf.mxu0
      %v3818 = vadd.f32 0.0, %v3817
      %3819 = vmatmul.bf16.gmra.mxu0 %v3738
      %v3820 = vpop.f32.mrf.mxu0
      %v3821 = vadd.f32 0.0, %v3820
      %v3822 = vpop.f32.mrf.mxu0
      %v3823 = vadd.f32 0.0, %v3822
      %3824 = vmatmul.bf16.gmra.mxu0 %v3741
      %v3825 = vpop.f32.mrf.mxu0
      %v3826 = vadd.f32 0.0, %v3825
      %v3827 = vpop.f32.mrf.mxu0
      %v3828 = vadd.f32 0.0, %v3827
      %3829 = vmatmul.bf16.gmra.mxu0 %v3744
      %v3830 = vpop.f32.mrf.mxu0
      %v3831 = vadd.f32 0.0, %v3830
      %v3832 = vpop.f32.mrf.mxu0
      %v3833 = vadd.f32 0.0, %v3832
      %3834 = vdwg.mxu0
      %v3835 = vadd.f32 %v3601, %v3756
      %v3836 = vadd.f32 %v3602, %v3758
      %v3837 = vadd.f32 %v3603, %v3761
      %v3838 = vadd.f32 %v3604, %v3763
      %v3839 = vadd.f32 %v3605, %v3766
      %v3840 = vadd.f32 %v3606, %v3768
      %v3841 = vadd.f32 %v3607, %v3771
      %v3842 = vadd.f32 %v3608, %v3773
      %v3843 = vadd.f32 %v3609, %v3776
      %v3844 = vadd.f32 %v3610, %v3778
      %v3845 = vadd.f32 %v3611, %v3781
      %v3846 = vadd.f32 %v3612, %v3783
      %v3847 = vadd.f32 %v3613, %v3786
      %v3848 = vadd.f32 %v3614, %v3788
      %v3849 = vadd.f32 %v3615, %v3791
      %v3850 = vadd.f32 %v3616, %v3793
      %v3851 = vadd.f32 %v3617, %v3796
      %v3852 = vadd.f32 %v3618, %v3798
      %v3853 = vadd.f32 %v3619, %v3801
      %v3854 = vadd.f32 %v3620, %v3803
      %v3855 = vadd.f32 %v3621, %v3806
      %v3856 = vadd.f32 %v3622, %v3808
      %v3857 = vadd.f32 %v3623, %v3811
      %v3858 = vadd.f32 %v3624, %v3813
      %v3859 = vadd.f32 %v3625, %v3816
      %v3860 = vadd.f32 %v3626, %v3818
      %v3861 = vadd.f32 %v3627, %v3821
      %v3862 = vadd.f32 %v3628, %v3823
      %v3863 = vadd.f32 %v3629, %v3826
      %v3864 = vadd.f32 %v3630, %v3828
      %v3865 = vadd.f32 %v3631, %v3831
      %v3866 = vadd.f32 %v3632, %v3833
      %v3867 = vld [vmem:[#allocation2 + $0x42] sm:$0xff]
      %v3868 = vld [vmem:[#allocation2 + $0x4a] sm:$0xff]
      %v3869 = vld [vmem:[#allocation2 + $0x52] sm:$0xff]
      %v3870 = vld [vmem:[#allocation2 + $0x5a] sm:$0xff]
      %v3871 = vld [vmem:[#allocation2 + $0x62] sm:$0xff]
      %v3872 = vld [vmem:[#allocation2 + $0x6a] sm:$0xff]
      %v3873 = vld [vmem:[#allocation2 + $0x72] sm:$0xff]
      %v3874 = vld [vmem:[#allocation2 + $0x7a] sm:$0xff]
      %v3875 = vld [vmem:[#allocation2 + $0x82] sm:$0xff]
      %v3876 = vld [vmem:[#allocation2 + $0x8a] sm:$0xff]
      %v3877 = vld [vmem:[#allocation2 + $0x92] sm:$0xff]
      %v3878 = vld [vmem:[#allocation2 + $0x9a] sm:$0xff]
      %v3879 = vld [vmem:[#allocation2 + $0xa2] sm:$0xff]
      %v3880 = vld [vmem:[#allocation2 + $0xaa] sm:$0xff]
      %v3881 = vld [vmem:[#allocation2 + $0xb2] sm:$0xff]
      %v3882 = vld [vmem:[#allocation2 + $0xba] sm:$0xff]
      %v3883 = vld [vmem:[#allocation2 + $0xc2] sm:$0xff]
      %v3884 = vld [vmem:[#allocation2 + $0xca] sm:$0xff]
      %v3885 = vld [vmem:[#allocation2 + $0xd2] sm:$0xff]
      %v3886 = vld [vmem:[#allocation2 + $0xda] sm:$0xff]
      %v3887 = vld [vmem:[#allocation2 + $0xe2] sm:$0xff]
      %v3888 = vld [vmem:[#allocation2 + $0xea] sm:$0xff]
      %v3889 = vld [vmem:[#allocation2 + $0xf2] sm:$0xff]
      %v3890 = vld [vmem:[#allocation2 + $0xfa] sm:$0xff]
      %v3891 = vld [vmem:[#allocation2 + $0x102] sm:$0xff]
      %v3892 = vld [vmem:[#allocation2 + $0x10a] sm:$0xff]
      %v3893 = vld [vmem:[#allocation2 + $0x112] sm:$0xff]
      %v3894 = vld [vmem:[#allocation2 + $0x11a] sm:$0xff]
      %v3895 = vld [vmem:[#allocation2 + $0x122] sm:$0xff]
      %v3896 = vld [vmem:[#allocation2 + $0x12a] sm:$0xff]
      %v3897 = vld [vmem:[#allocation2 + $0x132] sm:$0xff]
      %v3898 = vld [vmem:[#allocation2 + $0x13a] sm:$0xff]
      %v3899 = vpack.c.bf16 %v3868, %v3867
      %v3900 = vpack.c.bf16 %v3870, %v3869
      %v3901 = vpack.c.bf16 %v3872, %v3871
      %v3902 = vpack.c.bf16 %v3874, %v3873
      %v3903 = vpack.c.bf16 %v3876, %v3875
      %v3904 = vpack.c.bf16 %v3878, %v3877
      %v3905 = vpack.c.bf16 %v3880, %v3879
      %v3906 = vpack.c.bf16 %v3882, %v3881
      %v3907 = vpack.c.bf16 %v3884, %v3883
      %v3908 = vpack.c.bf16 %v3886, %v3885
      %v3909 = vpack.c.bf16 %v3888, %v3887
      %v3910 = vpack.c.bf16 %v3890, %v3889
      %v3911 = vpack.c.bf16 %v3892, %v3891
      %v3912 = vpack.c.bf16 %v3894, %v3893
      %v3913 = vpack.c.bf16 %v3896, %v3895
      %v3914 = vpack.c.bf16 %v3898, %v3897
      %s3915 = scalar_lea.vmem %s4, 96
      %v3916 = vld [vmem:[%s3915] sm:$0xf]
      %v3917 = vld [vmem:[%s3915 + $0x4] sm:$0xf]
      %v3918 = vld [vmem:[%s3915 + $0x8] sm:$0xf]
      %v3919 = vld [vmem:[%s3915 + $0xc] sm:$0xf]
      %v3924 = vunpack.c.l.b16 %v3916
      %v3925 = vunpack.c.l.b16 %v3917
      %v3926 = vunpack.c.l.b16 %v3918
      %v3927 = vunpack.c.l.b16 %v3919
      %v3928 = vpack.c.b16 %v3925, %v3924
      %v3929 = vpack.c.b16 %v3927, %v3926
      %v3933 = vsel %vm2480, %v3899, 0
      %v3936 = vsel %vm2480, %v3900, 0
      %v3939 = vsel %vm2480, %v3901, 0
      %v3942 = vsel %vm2480, %v3902, 0
      %v3945 = vsel %vm2480, %v3903, 0
      %v3948 = vsel %vm2480, %v3904, 0
      %v3951 = vsel %vm2480, %v3905, 0
      %v3954 = vsel %vm2480, %v3906, 0
      %v3957 = vsel %vm2480, %v3907, 0
      %v3960 = vsel %vm2480, %v3908, 0
      %v3963 = vsel %vm2480, %v3909, 0
      %v3966 = vsel %vm2480, %v3910, 0
      %v3969 = vsel %vm2480, %v3911, 0
      %v3972 = vsel %vm2480, %v3912, 0
      %v3975 = vsel %vm2480, %v3913, 0
      %v3978 = vsel %vm2480, %v3914, 0
      %3980 = vmatpush.bf16.msra.mxu0 0
      %3981 = vmatpush.bf16.msra.mxu0 0
      %3982 = vmatpush.bf16.msra.mxu0 0
      %3983 = vmatpush.bf16.msra.mxu0 0
      %3984 = vmatpush.bf16.msra.mxu0 0
      %3985 = vmatpush.bf16.msra.mxu0 0
      %3986 = vmatpush.bf16.msra.mxu0 %v3929
      %3987 = vmatpush.bf16.msra.mxu0 %v3928
      %3988 = vmatmul.bf16.gmra.mxu0 %v3933
      %v3989 = vpop.f32.mrf.mxu0
      %v3990 = vadd.f32 0.0, %v3989
      %v3991 = vpop.f32.mrf.mxu0
      %v3992 = vadd.f32 0.0, %v3991
      %3993 = vmatmul.bf16.gmra.mxu0 %v3936
      %v3994 = vpop.f32.mrf.mxu0
      %v3995 = vadd.f32 0.0, %v3994
      %v3996 = vpop.f32.mrf.mxu0
      %v3997 = vadd.f32 0.0, %v3996
      %3998 = vmatmul.bf16.gmra.mxu0 %v3939
      %v3999 = vpop.f32.mrf.mxu0
      %v4000 = vadd.f32 0.0, %v3999
      %v4001 = vpop.f32.mrf.mxu0
      %v4002 = vadd.f32 0.0, %v4001
      %4003 = vmatmul.bf16.gmra.mxu0 %v3942
      %v4004 = vpop.f32.mrf.mxu0
      %v4005 = vadd.f32 0.0, %v4004
      %v4006 = vpop.f32.mrf.mxu0
      %v4007 = vadd.f32 0.0, %v4006
      %4008 = vmatmul.bf16.gmra.mxu0 %v3945
      %v4009 = vpop.f32.mrf.mxu0
      %v4010 = vadd.f32 0.0, %v4009
      %v4011 = vpop.f32.mrf.mxu0
      %v4012 = vadd.f32 0.0, %v4011
      %4013 = vmatmul.bf16.gmra.mxu0 %v3948
      %v4014 = vpop.f32.mrf.mxu0
      %v4015 = vadd.f32 0.0, %v4014
      %v4016 = vpop.f32.mrf.mxu0
      %v4017 = vadd.f32 0.0, %v4016
      %4018 = vmatmul.bf16.gmra.mxu0 %v3951
      %v4019 = vpop.f32.mrf.mxu0
      %v4020 = vadd.f32 0.0, %v4019
      %v4021 = vpop.f32.mrf.mxu0
      %v4022 = vadd.f32 0.0, %v4021
      %4023 = vmatmul.bf16.gmra.mxu0 %v3954
      %v4024 = vpop.f32.mrf.mxu0
      %v4025 = vadd.f32 0.0, %v4024
      %v4026 = vpop.f32.mrf.mxu0
      %v4027 = vadd.f32 0.0, %v4026
      %4028 = vmatmul.bf16.gmra.mxu0 %v3957
      %v4029 = vpop.f32.mrf.mxu0
      %v4030 = vadd.f32 0.0, %v4029
      %v4031 = vpop.f32.mrf.mxu0
      %v4032 = vadd.f32 0.0, %v4031
      %4033 = vmatmul.bf16.gmra.mxu0 %v3960
      %v4034 = vpop.f32.mrf.mxu0
      %v4035 = vadd.f32 0.0, %v4034
      %v4036 = vpop.f32.mrf.mxu0
      %v4037 = vadd.f32 0.0, %v4036
      %4038 = vmatmul.bf16.gmra.mxu0 %v3963
      %v4039 = vpop.f32.mrf.mxu0
      %v4040 = vadd.f32 0.0, %v4039
      %v4041 = vpop.f32.mrf.mxu0
      %v4042 = vadd.f32 0.0, %v4041
      %4043 = vmatmul.bf16.gmra.mxu0 %v3966
      %v4044 = vpop.f32.mrf.mxu0
      %v4045 = vadd.f32 0.0, %v4044
      %v4046 = vpop.f32.mrf.mxu0
      %v4047 = vadd.f32 0.0, %v4046
      %4048 = vmatmul.bf16.gmra.mxu0 %v3969
      %v4049 = vpop.f32.mrf.mxu0
      %v4050 = vadd.f32 0.0, %v4049
      %v4051 = vpop.f32.mrf.mxu0
      %v4052 = vadd.f32 0.0, %v4051
      %4053 = vmatmul.bf16.gmra.mxu0 %v3972
      %v4054 = vpop.f32.mrf.mxu0
      %v4055 = vadd.f32 0.0, %v4054
      %v4056 = vpop.f32.mrf.mxu0
      %v4057 = vadd.f32 0.0, %v4056
      %4058 = vmatmul.bf16.gmra.mxu0 %v3975
      %v4059 = vpop.f32.mrf.mxu0
      %v4060 = vadd.f32 0.0, %v4059
      %v4061 = vpop.f32.mrf.mxu0
      %v4062 = vadd.f32 0.0, %v4061
      %4063 = vmatmul.bf16.gmra.mxu0 %v3978
      %v4064 = vpop.f32.mrf.mxu0
      %v4065 = vadd.f32 0.0, %v4064
      %v4066 = vpop.f32.mrf.mxu0
      %v4067 = vadd.f32 0.0, %v4066
      %4068 = vdwg.mxu0
      %v4069 = vadd.f32 %v3835, %v3990
      %v4070 = vadd.f32 %v3836, %v3992
      %v4071 = vadd.f32 %v3837, %v3995
      %v4072 = vadd.f32 %v3838, %v3997
      %v4073 = vadd.f32 %v3839, %v4000
      %v4074 = vadd.f32 %v3840, %v4002
      %v4075 = vadd.f32 %v3841, %v4005
      %v4076 = vadd.f32 %v3842, %v4007
      %v4077 = vadd.f32 %v3843, %v4010
      %v4078 = vadd.f32 %v3844, %v4012
      %v4079 = vadd.f32 %v3845, %v4015
      %v4080 = vadd.f32 %v3846, %v4017
      %v4081 = vadd.f32 %v3847, %v4020
      %v4082 = vadd.f32 %v3848, %v4022
      %v4083 = vadd.f32 %v3849, %v4025
      %v4084 = vadd.f32 %v3850, %v4027
      %v4085 = vadd.f32 %v3851, %v4030
      %v4086 = vadd.f32 %v3852, %v4032
      %v4087 = vadd.f32 %v3853, %v4035
      %v4088 = vadd.f32 %v3854, %v4037
      %v4089 = vadd.f32 %v3855, %v4040
      %v4090 = vadd.f32 %v3856, %v4042
      %v4091 = vadd.f32 %v3857, %v4045
      %v4092 = vadd.f32 %v3858, %v4047
      %v4093 = vadd.f32 %v3859, %v4050
      %v4094 = vadd.f32 %v3860, %v4052
      %v4095 = vadd.f32 %v3861, %v4055
      %v4096 = vadd.f32 %v3862, %v4057
      %v4097 = vadd.f32 %v3863, %v4060
      %v4098 = vadd.f32 %v3864, %v4062
      %v4099 = vadd.f32 %v3865, %v4065
      %v4100 = vadd.f32 %v3866, %v4067
      %v4101 = vld [vmem:[#allocation2 + $0x43] sm:$0xff]
      %v4102 = vld [vmem:[#allocation2 + $0x4b] sm:$0xff]
      %v4103 = vld [vmem:[#allocation2 + $0x53] sm:$0xff]
      %v4104 = vld [vmem:[#allocation2 + $0x5b] sm:$0xff]
      %v4105 = vld [vmem:[#allocation2 + $0x63] sm:$0xff]
      %v4106 = vld [vmem:[#allocation2 + $0x6b] sm:$0xff]
      %v4107 = vld [vmem:[#allocation2 + $0x73] sm:$0xff]
      %v4108 = vld [vmem:[#allocation2 + $0x7b] sm:$0xff]
      %v4109 = vld [vmem:[#allocation2 + $0x83] sm:$0xff]
      %v4110 = vld [vmem:[#allocation2 + $0x8b] sm:$0xff]
      %v4111 = vld [vmem:[#allocation2 + $0x93] sm:$0xff]
      %v4112 = vld [vmem:[#allocation2 + $0x9b] sm:$0xff]
      %v4113 = vld [vmem:[#allocation2 + $0xa3] sm:$0xff]
      %v4114 = vld [vmem:[#allocation2 + $0xab] sm:$0xff]
      %v4115 = vld [vmem:[#allocation2 + $0xb3] sm:$0xff]
      %v4116 = vld [vmem:[#allocation2 + $0xbb] sm:$0xff]
      %v4117 = vld [vmem:[#allocation2 + $0xc3] sm:$0xff]
      %v4118 = vld [vmem:[#allocation2 + $0xcb] sm:$0xff]
      %v4119 = vld [vmem:[#allocation2 + $0xd3] sm:$0xff]
      %v4120 = vld [vmem:[#allocation2 + $0xdb] sm:$0xff]
      %v4121 = vld [vmem:[#allocation2 + $0xe3] sm:$0xff]
      %v4122 = vld [vmem:[#allocation2 + $0xeb] sm:$0xff]
      %v4123 = vld [vmem:[#allocation2 + $0xf3] sm:$0xff]
      %v4124 = vld [vmem:[#allocation2 + $0xfb] sm:$0xff]
      %v4125 = vld [vmem:[#allocation2 + $0x103] sm:$0xff]
      %v4126 = vld [vmem:[#allocation2 + $0x10b] sm:$0xff]
      %v4127 = vld [vmem:[#allocation2 + $0x113] sm:$0xff]
      %v4128 = vld [vmem:[#allocation2 + $0x11b] sm:$0xff]
      %v4129 = vld [vmem:[#allocation2 + $0x123] sm:$0xff]
      %v4130 = vld [vmem:[#allocation2 + $0x12b] sm:$0xff]
      %v4131 = vld [vmem:[#allocation2 + $0x133] sm:$0xff]
      %v4132 = vld [vmem:[#allocation2 + $0x13b] sm:$0xff]
      %v4133 = vpack.c.bf16 %v4102, %v4101
      %v4134 = vpack.c.bf16 %v4104, %v4103
      %v4135 = vpack.c.bf16 %v4106, %v4105
      %v4136 = vpack.c.bf16 %v4108, %v4107
      %v4137 = vpack.c.bf16 %v4110, %v4109
      %v4138 = vpack.c.bf16 %v4112, %v4111
      %v4139 = vpack.c.bf16 %v4114, %v4113
      %v4140 = vpack.c.bf16 %v4116, %v4115
      %v4141 = vpack.c.bf16 %v4118, %v4117
      %v4142 = vpack.c.bf16 %v4120, %v4119
      %v4143 = vpack.c.bf16 %v4122, %v4121
      %v4144 = vpack.c.bf16 %v4124, %v4123
      %v4145 = vpack.c.bf16 %v4126, %v4125
      %v4146 = vpack.c.bf16 %v4128, %v4127
      %v4147 = vpack.c.bf16 %v4130, %v4129
      %v4148 = vpack.c.bf16 %v4132, %v4131
      %s4149 = scalar_lea.vmem %s4, 112
      %v4150 = vld [vmem:[%s4149] sm:$0xf]
      %v4151 = vld [vmem:[%s4149 + $0x4] sm:$0xf]
      %v4152 = vld [vmem:[%s4149 + $0x8] sm:$0xf]
      %v4153 = vld [vmem:[%s4149 + $0xc] sm:$0xf]
      %v4158 = vunpack.c.l.b16 %v4150
      %v4159 = vunpack.c.l.b16 %v4151
      %v4160 = vunpack.c.l.b16 %v4152
      %v4161 = vunpack.c.l.b16 %v4153
      %v4162 = vpack.c.b16 %v4159, %v4158
      %v4163 = vpack.c.b16 %v4161, %v4160
      %v4167 = vsel %vm2480, %v4133, 0
      %v4170 = vsel %vm2480, %v4134, 0
      %v4173 = vsel %vm2480, %v4135, 0
      %v4176 = vsel %vm2480, %v4136, 0
      %v4179 = vsel %vm2480, %v4137, 0
      %v4182 = vsel %vm2480, %v4138, 0
      %v4185 = vsel %vm2480, %v4139, 0
      %v4188 = vsel %vm2480, %v4140, 0
      %v4191 = vsel %vm2480, %v4141, 0
      %v4194 = vsel %vm2480, %v4142, 0
      %v4197 = vsel %vm2480, %v4143, 0
      %v4200 = vsel %vm2480, %v4144, 0
      %v4203 = vsel %vm2480, %v4145, 0
      %v4206 = vsel %vm2480, %v4146, 0
      %v4209 = vsel %vm2480, %v4147, 0
      %v4212 = vsel %vm2480, %v4148, 0
      %4214 = vmatpush.bf16.msra.mxu0 0
      %4215 = vmatpush.bf16.msra.mxu0 0
      %4216 = vmatpush.bf16.msra.mxu0 0
      %4217 = vmatpush.bf16.msra.mxu0 0
      %4218 = vmatpush.bf16.msra.mxu0 0
      %4219 = vmatpush.bf16.msra.mxu0 0
      %4220 = vmatpush.bf16.msra.mxu0 %v4163
      %4221 = vmatpush.bf16.msra.mxu0 %v4162
      %4222 = vmatmul.bf16.gmra.mxu0 %v4167
      %v4223 = vpop.f32.mrf.mxu0
      %v4224 = vadd.f32 0.0, %v4223
      %v4225 = vpop.f32.mrf.mxu0
      %v4226 = vadd.f32 0.0, %v4225
      %4227 = vmatmul.bf16.gmra.mxu0 %v4170
      %v4228 = vpop.f32.mrf.mxu0
      %v4229 = vadd.f32 0.0, %v4228
      %v4230 = vpop.f32.mrf.mxu0
      %v4231 = vadd.f32 0.0, %v4230
      %4232 = vmatmul.bf16.gmra.mxu0 %v4173
      %v4233 = vpop.f32.mrf.mxu0
      %v4234 = vadd.f32 0.0, %v4233
      %v4235 = vpop.f32.mrf.mxu0
      %v4236 = vadd.f32 0.0, %v4235
      %4237 = vmatmul.bf16.gmra.mxu0 %v4176
      %v4238 = vpop.f32.mrf.mxu0
      %v4239 = vadd.f32 0.0, %v4238
      %v4240 = vpop.f32.mrf.mxu0
      %v4241 = vadd.f32 0.0, %v4240
      %4242 = vmatmul.bf16.gmra.mxu0 %v4179
      %v4243 = vpop.f32.mrf.mxu0
      %v4244 = vadd.f32 0.0, %v4243
      %v4245 = vpop.f32.mrf.mxu0
      %v4246 = vadd.f32 0.0, %v4245
      %4247 = vmatmul.bf16.gmra.mxu0 %v4182
      %v4248 = vpop.f32.mrf.mxu0
      %v4249 = vadd.f32 0.0, %v4248
      %v4250 = vpop.f32.mrf.mxu0
      %v4251 = vadd.f32 0.0, %v4250
      %4252 = vmatmul.bf16.gmra.mxu0 %v4185
      %v4253 = vpop.f32.mrf.mxu0
      %v4254 = vadd.f32 0.0, %v4253
      %v4255 = vpop.f32.mrf.mxu0
      %v4256 = vadd.f32 0.0, %v4255
      %4257 = vmatmul.bf16.gmra.mxu0 %v4188
      %v4258 = vpop.f32.mrf.mxu0
      %v4259 = vadd.f32 0.0, %v4258
      %v4260 = vpop.f32.mrf.mxu0
      %v4261 = vadd.f32 0.0, %v4260
      %4262 = vmatmul.bf16.gmra.mxu0 %v4191
      %v4263 = vpop.f32.mrf.mxu0
      %v4264 = vadd.f32 0.0, %v4263
      %v4265 = vpop.f32.mrf.mxu0
      %v4266 = vadd.f32 0.0, %v4265
      %4267 = vmatmul.bf16.gmra.mxu0 %v4194
      %v4268 = vpop.f32.mrf.mxu0
      %v4269 = vadd.f32 0.0, %v4268
      %v4270 = vpop.f32.mrf.mxu0
      %v4271 = vadd.f32 0.0, %v4270
      %4272 = vmatmul.bf16.gmra.mxu0 %v4197
      %v4273 = vpop.f32.mrf.mxu0
      %v4274 = vadd.f32 0.0, %v4273
      %v4275 = vpop.f32.mrf.mxu0
      %v4276 = vadd.f32 0.0, %v4275
      %4277 = vmatmul.bf16.gmra.mxu0 %v4200
      %v4278 = vpop.f32.mrf.mxu0
      %v4279 = vadd.f32 0.0, %v4278
      %v4280 = vpop.f32.mrf.mxu0
      %v4281 = vadd.f32 0.0, %v4280
      %4282 = vmatmul.bf16.gmra.mxu0 %v4203
      %v4283 = vpop.f32.mrf.mxu0
      %v4284 = vadd.f32 0.0, %v4283
      %v4285 = vpop.f32.mrf.mxu0
      %v4286 = vadd.f32 0.0, %v4285
      %4287 = vmatmul.bf16.gmra.mxu0 %v4206
      %v4288 = vpop.f32.mrf.mxu0
      %v4289 = vadd.f32 0.0, %v4288
      %v4290 = vpop.f32.mrf.mxu0
      %v4291 = vadd.f32 0.0, %v4290
      %4292 = vmatmul.bf16.gmra.mxu0 %v4209
      %v4293 = vpop.f32.mrf.mxu0
      %v4294 = vadd.f32 0.0, %v4293
      %v4295 = vpop.f32.mrf.mxu0
      %v4296 = vadd.f32 0.0, %v4295
      %4297 = vmatmul.bf16.gmra.mxu0 %v4212
      %v4298 = vpop.f32.mrf.mxu0
      %v4299 = vadd.f32 0.0, %v4298
      %v4300 = vpop.f32.mrf.mxu0
      %v4301 = vadd.f32 0.0, %v4300
      %4302 = vdwg.mxu0
      %v4303 = vadd.f32 %v4069, %v4224
      %v4304 = vadd.f32 %v4070, %v4226
      %v4305 = vadd.f32 %v4071, %v4229
      %v4306 = vadd.f32 %v4072, %v4231
      %v4307 = vadd.f32 %v4073, %v4234
      %v4308 = vadd.f32 %v4074, %v4236
      %v4309 = vadd.f32 %v4075, %v4239
      %v4310 = vadd.f32 %v4076, %v4241
      %v4311 = vadd.f32 %v4077, %v4244
      %v4312 = vadd.f32 %v4078, %v4246
      %v4313 = vadd.f32 %v4079, %v4249
      %v4314 = vadd.f32 %v4080, %v4251
      %v4315 = vadd.f32 %v4081, %v4254
      %v4316 = vadd.f32 %v4082, %v4256
      %v4317 = vadd.f32 %v4083, %v4259
      %v4318 = vadd.f32 %v4084, %v4261
      %v4319 = vadd.f32 %v4085, %v4264
      %v4320 = vadd.f32 %v4086, %v4266
      %v4321 = vadd.f32 %v4087, %v4269
      %v4322 = vadd.f32 %v4088, %v4271
      %v4323 = vadd.f32 %v4089, %v4274
      %v4324 = vadd.f32 %v4090, %v4276
      %v4325 = vadd.f32 %v4091, %v4279
      %v4326 = vadd.f32 %v4092, %v4281
      %v4327 = vadd.f32 %v4093, %v4284
      %v4328 = vadd.f32 %v4094, %v4286
      %v4329 = vadd.f32 %v4095, %v4289
      %v4330 = vadd.f32 %v4096, %v4291
      %v4331 = vadd.f32 %v4097, %v4294
      %v4332 = vadd.f32 %v4098, %v4296
      %v4333 = vadd.f32 %v4099, %v4299
      %v4334 = vadd.f32 %v4100, %v4301
      %v4335 = vld [vmem:[#allocation2 + $0x44] sm:$0xff]
      %v4336 = vld [vmem:[#allocation2 + $0x4c] sm:$0xff]
      %v4337 = vld [vmem:[#allocation2 + $0x54] sm:$0xff]
      %v4338 = vld [vmem:[#allocation2 + $0x5c] sm:$0xff]
      %v4339 = vld [vmem:[#allocation2 + $0x64] sm:$0xff]
      %v4340 = vld [vmem:[#allocation2 + $0x6c] sm:$0xff]
      %v4341 = vld [vmem:[#allocation2 + $0x74] sm:$0xff]
      %v4342 = vld [vmem:[#allocation2 + $0x7c] sm:$0xff]
      %v4343 = vld [vmem:[#allocation2 + $0x84] sm:$0xff]
      %v4344 = vld [vmem:[#allocation2 + $0x8c] sm:$0xff]
      %v4345 = vld [vmem:[#allocation2 + $0x94] sm:$0xff]
      %v4346 = vld [vmem:[#allocation2 + $0x9c] sm:$0xff]
      %v4347 = vld [vmem:[#allocation2 + $0xa4] sm:$0xff]
      %v4348 = vld [vmem:[#allocation2 + $0xac] sm:$0xff]
      %v4349 = vld [vmem:[#allocation2 + $0xb4] sm:$0xff]
      %v4350 = vld [vmem:[#allocation2 + $0xbc] sm:$0xff]
      %v4351 = vld [vmem:[#allocation2 + $0xc4] sm:$0xff]
      %v4352 = vld [vmem:[#allocation2 + $0xcc] sm:$0xff]
      %v4353 = vld [vmem:[#allocation2 + $0xd4] sm:$0xff]
      %v4354 = vld [vmem:[#allocation2 + $0xdc] sm:$0xff]
      %v4355 = vld [vmem:[#allocation2 + $0xe4] sm:$0xff]
      %v4356 = vld [vmem:[#allocation2 + $0xec] sm:$0xff]
      %v4357 = vld [vmem:[#allocation2 + $0xf4] sm:$0xff]
      %v4358 = vld [vmem:[#allocation2 + $0xfc] sm:$0xff]
      %v4359 = vld [vmem:[#allocation2 + $0x104] sm:$0xff]
      %v4360 = vld [vmem:[#allocation2 + $0x10c] sm:$0xff]
      %v4361 = vld [vmem:[#allocation2 + $0x114] sm:$0xff]
      %v4362 = vld [vmem:[#allocation2 + $0x11c] sm:$0xff]
      %v4363 = vld [vmem:[#allocation2 + $0x124] sm:$0xff]
      %v4364 = vld [vmem:[#allocation2 + $0x12c] sm:$0xff]
      %v4365 = vld [vmem:[#allocation2 + $0x134] sm:$0xff]
      %v4366 = vld [vmem:[#allocation2 + $0x13c] sm:$0xff]
      %v4367 = vpack.c.bf16 %v4336, %v4335
      %v4368 = vpack.c.bf16 %v4338, %v4337
      %v4369 = vpack.c.bf16 %v4340, %v4339
      %v4370 = vpack.c.bf16 %v4342, %v4341
      %v4371 = vpack.c.bf16 %v4344, %v4343
      %v4372 = vpack.c.bf16 %v4346, %v4345
      %v4373 = vpack.c.bf16 %v4348, %v4347
      %v4374 = vpack.c.bf16 %v4350, %v4349
      %v4375 = vpack.c.bf16 %v4352, %v4351
      %v4376 = vpack.c.bf16 %v4354, %v4353
      %v4377 = vpack.c.bf16 %v4356, %v4355
      %v4378 = vpack.c.bf16 %v4358, %v4357
      %v4379 = vpack.c.bf16 %v4360, %v4359
      %v4380 = vpack.c.bf16 %v4362, %v4361
      %v4381 = vpack.c.bf16 %v4364, %v4363
      %v4382 = vpack.c.bf16 %v4366, %v4365
      %s4383 = scalar_lea.vmem %s4, 128
      %v4384 = vld [vmem:[%s4383] sm:$0xf]
      %v4385 = vld [vmem:[%s4383 + $0x4] sm:$0xf]
      %v4386 = vld [vmem:[%s4383 + $0x8] sm:$0xf]
      %v4387 = vld [vmem:[%s4383 + $0xc] sm:$0xf]
      %v4392 = vunpack.c.l.b16 %v4384
      %v4393 = vunpack.c.l.b16 %v4385
      %v4394 = vunpack.c.l.b16 %v4386
      %v4395 = vunpack.c.l.b16 %v4387
      %v4396 = vpack.c.b16 %v4393, %v4392
      %v4397 = vpack.c.b16 %v4395, %v4394
      %v4401 = vsel %vm2480, %v4367, 0
      %v4404 = vsel %vm2480, %v4368, 0
      %v4407 = vsel %vm2480, %v4369, 0
      %v4410 = vsel %vm2480, %v4370, 0
      %v4413 = vsel %vm2480, %v4371, 0
      %v4416 = vsel %vm2480, %v4372, 0
      %v4419 = vsel %vm2480, %v4373, 0
      %v4422 = vsel %vm2480, %v4374, 0
      %v4425 = vsel %vm2480, %v4375, 0
      %v4428 = vsel %vm2480, %v4376, 0
      %v4431 = vsel %vm2480, %v4377, 0
      %v4434 = vsel %vm2480, %v4378, 0
      %v4437 = vsel %vm2480, %v4379, 0
      %v4440 = vsel %vm2480, %v4380, 0
      %v4443 = vsel %vm2480, %v4381, 0
      %v4446 = vsel %vm2480, %v4382, 0
      %4448 = vmatpush.bf16.msra.mxu0 0
      %4449 = vmatpush.bf16.msra.mxu0 0
      %4450 = vmatpush.bf16.msra.mxu0 0
      %4451 = vmatpush.bf16.msra.mxu0 0
      %4452 = vmatpush.bf16.msra.mxu0 0
      %4453 = vmatpush.bf16.msra.mxu0 0
      %4454 = vmatpush.bf16.msra.mxu0 %v4397
      %4455 = vmatpush.bf16.msra.mxu0 %v4396
      %4456 = vmatmul.bf16.gmra.mxu0 %v4401
      %v4457 = vpop.f32.mrf.mxu0
      %v4458 = vadd.f32 0.0, %v4457
      %v4459 = vpop.f32.mrf.mxu0
      %v4460 = vadd.f32 0.0, %v4459
      %4461 = vmatmul.bf16.gmra.mxu0 %v4404
      %v4462 = vpop.f32.mrf.mxu0
      %v4463 = vadd.f32 0.0, %v4462
      %v4464 = vpop.f32.mrf.mxu0
      %v4465 = vadd.f32 0.0, %v4464
      %4466 = vmatmul.bf16.gmra.mxu0 %v4407
      %v4467 = vpop.f32.mrf.mxu0
      %v4468 = vadd.f32 0.0, %v4467
      %v4469 = vpop.f32.mrf.mxu0
      %v4470 = vadd.f32 0.0, %v4469
      %4471 = vmatmul.bf16.gmra.mxu0 %v4410
      %v4472 = vpop.f32.mrf.mxu0
      %v4473 = vadd.f32 0.0, %v4472
      %v4474 = vpop.f32.mrf.mxu0
      %v4475 = vadd.f32 0.0, %v4474
      %4476 = vmatmul.bf16.gmra.mxu0 %v4413
      %v4477 = vpop.f32.mrf.mxu0
      %v4478 = vadd.f32 0.0, %v4477
      %v4479 = vpop.f32.mrf.mxu0
      %v4480 = vadd.f32 0.0, %v4479
      %4481 = vmatmul.bf16.gmra.mxu0 %v4416
      %v4482 = vpop.f32.mrf.mxu0
      %v4483 = vadd.f32 0.0, %v4482
      %v4484 = vpop.f32.mrf.mxu0
      %v4485 = vadd.f32 0.0, %v4484
      %4486 = vmatmul.bf16.gmra.mxu0 %v4419
      %v4487 = vpop.f32.mrf.mxu0
      %v4488 = vadd.f32 0.0, %v4487
      %v4489 = vpop.f32.mrf.mxu0
      %v4490 = vadd.f32 0.0, %v4489
      %4491 = vmatmul.bf16.gmra.mxu0 %v4422
      %v4492 = vpop.f32.mrf.mxu0
      %v4493 = vadd.f32 0.0, %v4492
      %v4494 = vpop.f32.mrf.mxu0
      %v4495 = vadd.f32 0.0, %v4494
      %4496 = vmatmul.bf16.gmra.mxu0 %v4425
      %v4497 = vpop.f32.mrf.mxu0
      %v4498 = vadd.f32 0.0, %v4497
      %v4499 = vpop.f32.mrf.mxu0
      %v4500 = vadd.f32 0.0, %v4499
      %4501 = vmatmul.bf16.gmra.mxu0 %v4428
      %v4502 = vpop.f32.mrf.mxu0
      %v4503 = vadd.f32 0.0, %v4502
      %v4504 = vpop.f32.mrf.mxu0
      %v4505 = vadd.f32 0.0, %v4504
      %4506 = vmatmul.bf16.gmra.mxu0 %v4431
      %v4507 = vpop.f32.mrf.mxu0
      %v4508 = vadd.f32 0.0, %v4507
      %v4509 = vpop.f32.mrf.mxu0
      %v4510 = vadd.f32 0.0, %v4509
      %4511 = vmatmul.bf16.gmra.mxu0 %v4434
      %v4512 = vpop.f32.mrf.mxu0
      %v4513 = vadd.f32 0.0, %v4512
      %v4514 = vpop.f32.mrf.mxu0
      %v4515 = vadd.f32 0.0, %v4514
      %4516 = vmatmul.bf16.gmra.mxu0 %v4437
      %v4517 = vpop.f32.mrf.mxu0
      %v4518 = vadd.f32 0.0, %v4517
      %v4519 = vpop.f32.mrf.mxu0
      %v4520 = vadd.f32 0.0, %v4519
      %4521 = vmatmul.bf16.gmra.mxu0 %v4440
      %v4522 = vpop.f32.mrf.mxu0
      %v4523 = vadd.f32 0.0, %v4522
      %v4524 = vpop.f32.mrf.mxu0
      %v4525 = vadd.f32 0.0, %v4524
      %4526 = vmatmul.bf16.gmra.mxu0 %v4443
      %v4527 = vpop.f32.mrf.mxu0
      %v4528 = vadd.f32 0.0, %v4527
      %v4529 = vpop.f32.mrf.mxu0
      %v4530 = vadd.f32 0.0, %v4529
      %4531 = vmatmul.bf16.gmra.mxu0 %v4446
      %v4532 = vpop.f32.mrf.mxu0
      %v4533 = vadd.f32 0.0, %v4532
      %v4534 = vpop.f32.mrf.mxu0
      %v4535 = vadd.f32 0.0, %v4534
      %4536 = vdwg.mxu0
      %v4537 = vadd.f32 %v4303, %v4458
      %v4538 = vadd.f32 %v4304, %v4460
      %v4539 = vadd.f32 %v4305, %v4463
      %v4540 = vadd.f32 %v4306, %v4465
      %v4541 = vadd.f32 %v4307, %v4468
      %v4542 = vadd.f32 %v4308, %v4470
      %v4543 = vadd.f32 %v4309, %v4473
      %v4544 = vadd.f32 %v4310, %v4475
      %v4545 = vadd.f32 %v4311, %v4478
      %v4546 = vadd.f32 %v4312, %v4480
      %v4547 = vadd.f32 %v4313, %v4483
      %v4548 = vadd.f32 %v4314, %v4485
      %v4549 = vadd.f32 %v4315, %v4488
      %v4550 = vadd.f32 %v4316, %v4490
      %v4551 = vadd.f32 %v4317, %v4493
      %v4552 = vadd.f32 %v4318, %v4495
      %v4553 = vadd.f32 %v4319, %v4498
      %v4554 = vadd.f32 %v4320, %v4500
      %v4555 = vadd.f32 %v4321, %v4503
      %v4556 = vadd.f32 %v4322, %v4505
      %v4557 = vadd.f32 %v4323, %v4508
      %v4558 = vadd.f32 %v4324, %v4510
      %v4559 = vadd.f32 %v4325, %v4513
      %v4560 = vadd.f32 %v4326, %v4515
      %v4561 = vadd.f32 %v4327, %v4518
      %v4562 = vadd.f32 %v4328, %v4520
      %v4563 = vadd.f32 %v4329, %v4523
      %v4564 = vadd.f32 %v4330, %v4525
      %v4565 = vadd.f32 %v4331, %v4528
      %v4566 = vadd.f32 %v4332, %v4530
      %v4567 = vadd.f32 %v4333, %v4533
      %v4568 = vadd.f32 %v4334, %v4535
      %v4569 = vld [vmem:[%s5] sm:$0x1]
      %v4570 = vperm.slane %v4569, 0
      %v4571 = vadd.f32 %v4537, %v4570
      %v4572 = vadd.f32 %v4538, %v4570
      %v4573 = vadd.f32 %v4539, %v4570
      %v4574 = vadd.f32 %v4540, %v4570
      %v4575 = vadd.f32 %v4541, %v4570
      %v4576 = vadd.f32 %v4542, %v4570
      %v4577 = vadd.f32 %v4543, %v4570
      %v4578 = vadd.f32 %v4544, %v4570
      %v4579 = vadd.f32 %v4545, %v4570
      %v4580 = vadd.f32 %v4546, %v4570
      %v4581 = vadd.f32 %v4547, %v4570
      %v4582 = vadd.f32 %v4548, %v4570
      %v4583 = vadd.f32 %v4549, %v4570
      %v4584 = vadd.f32 %v4550, %v4570
      %v4585 = vadd.f32 %v4551, %v4570
      %v4586 = vadd.f32 %v4552, %v4570
      %v4587 = vadd.f32 %v4553, %v4570
      %v4588 = vadd.f32 %v4554, %v4570
      %v4589 = vadd.f32 %v4555, %v4570
      %v4590 = vadd.f32 %v4556, %v4570
      %v4591 = vadd.f32 %v4557, %v4570
      %v4592 = vadd.f32 %v4558, %v4570
      %v4593 = vadd.f32 %v4559, %v4570
      %v4594 = vadd.f32 %v4560, %v4570
      %v4595 = vadd.f32 %v4561, %v4570
      %v4596 = vadd.f32 %v4562, %v4570
      %v4597 = vadd.f32 %v4563, %v4570
      %v4598 = vadd.f32 %v4564, %v4570
      %v4599 = vadd.f32 %v4565, %v4570
      %v4600 = vadd.f32 %v4566, %v4570
      %v4601 = vadd.f32 %v4567, %v4570
      %v4602 = vadd.f32 %v4568, %v4570
      %v4603 = vpack.c.bf16 %v4571, %v4571
      %v4604 = vpack.c.bf16 %v4572, %v4572
      %v4605 = vpack.c.bf16 %v4573, %v4573
      %v4606 = vpack.c.bf16 %v4574, %v4574
      %v4607 = vpack.c.bf16 %v4575, %v4575
      %v4608 = vpack.c.bf16 %v4576, %v4576
      %v4609 = vpack.c.bf16 %v4577, %v4577
      %v4610 = vpack.c.bf16 %v4578, %v4578
      %v4611 = vpack.c.bf16 %v4579, %v4579
      %v4612 = vpack.c.bf16 %v4580, %v4580
      %v4613 = vpack.c.bf16 %v4581, %v4581
      %v4614 = vpack.c.bf16 %v4582, %v4582
      %v4615 = vpack.c.bf16 %v4583, %v4583
      %v4616 = vpack.c.bf16 %v4584, %v4584
      %v4617 = vpack.c.bf16 %v4585, %v4585
      %v4618 = vpack.c.bf16 %v4586, %v4586
      %v4619 = vpack.c.bf16 %v4587, %v4587
      %v4620 = vpack.c.bf16 %v4588, %v4588
      %v4621 = vpack.c.bf16 %v4589, %v4589
      %v4622 = vpack.c.bf16 %v4590, %v4590
      %v4623 = vpack.c.bf16 %v4591, %v4591
      %v4624 = vpack.c.bf16 %v4592, %v4592
      %v4625 = vpack.c.bf16 %v4593, %v4593
      %v4626 = vpack.c.bf16 %v4594, %v4594
      %v4627 = vpack.c.bf16 %v4595, %v4595
      %v4628 = vpack.c.bf16 %v4596, %v4596
      %v4629 = vpack.c.bf16 %v4597, %v4597
      %v4630 = vpack.c.bf16 %v4598, %v4598
      %v4631 = vpack.c.bf16 %v4599, %v4599
      %v4632 = vpack.c.bf16 %v4600, %v4600
      %v4633 = vpack.c.bf16 %v4601, %v4601
      %v4634 = vpack.c.bf16 %v4602, %v4602
      %v4635 = vld [vmem:[#allocation2 + $0x11] sm:$0xff]
      %v4636 = vld [vmem:[#allocation2 + $0x19] sm:$0xff]
      %v4637 = vld [vmem:[#allocation2 + $0x21] sm:$0xff]
      %v4638 = vld [vmem:[#allocation2 + $0x29] sm:$0xff]
      %v4639 = vld [vmem:[#allocation2 + $0x31] sm:$0xff]
      %v4640 = vld [vmem:[#allocation2 + $0x39] sm:$0xff]
      %v4641 = vld [vmem:[#allocation2 + $0x41] sm:$0xff]
      %v4642 = vld [vmem:[#allocation2 + $0x49] sm:$0xff]
      %v4643 = vld [vmem:[#allocation2 + $0x51] sm:$0xff]
      %v4644 = vld [vmem:[#allocation2 + $0x59] sm:$0xff]
      %v4645 = vld [vmem:[#allocation2 + $0x61] sm:$0xff]
      %v4646 = vld [vmem:[#allocation2 + $0x69] sm:$0xff]
      %v4647 = vld [vmem:[#allocation2 + $0x71] sm:$0xff]
      %v4648 = vld [vmem:[#allocation2 + $0x79] sm:$0xff]
      %v4649 = vld [vmem:[#allocation2 + $0x81] sm:$0xff]
      %v4650 = vld [vmem:[#allocation2 + $0x89] sm:$0xff]
      %v4651 = vld [vmem:[#allocation2 + $0x91] sm:$0xff]
      %v4652 = vld [vmem:[#allocation2 + $0x99] sm:$0xff]
      %v4653 = vld [vmem:[#allocation2 + $0xa1] sm:$0xff]
      %v4654 = vld [vmem:[#allocation2 + $0xa9] sm:$0xff]
      %v4655 = vld [vmem:[#allocation2 + $0xb1] sm:$0xff]
      %v4656 = vld [vmem:[#allocation2 + $0xb9] sm:$0xff]
      %v4657 = vld [vmem:[#allocation2 + $0xc1] sm:$0xff]
      %v4658 = vld [vmem:[#allocation2 + $0xc9] sm:$0xff]
      %v4659 = vld [vmem:[#allocation2 + $0xd1] sm:$0xff]
      %v4660 = vld [vmem:[#allocation2 + $0xd9] sm:$0xff]
      %v4661 = vld [vmem:[#allocation2 + $0xe1] sm:$0xff]
      %v4662 = vld [vmem:[#allocation2 + $0xe9] sm:$0xff]
      %v4663 = vld [vmem:[#allocation2 + $0xf1] sm:$0xff]
      %v4664 = vld [vmem:[#allocation2 + $0xf9] sm:$0xff]
      %v4665 = vld [vmem:[#allocation2 + $0x101] sm:$0xff]
      %v4666 = vld [vmem:[#allocation2 + $0x109] sm:$0xff]
      %v4667 = vpack.c.bf16 %v4636, %v4635
      %v4668 = vpack.c.bf16 %v4638, %v4637
      %v4669 = vpack.c.bf16 %v4640, %v4639
      %v4670 = vpack.c.bf16 %v4642, %v4641
      %v4671 = vpack.c.bf16 %v4644, %v4643
      %v4672 = vpack.c.bf16 %v4646, %v4645
      %v4673 = vpack.c.bf16 %v4648, %v4647
      %v4674 = vpack.c.bf16 %v4650, %v4649
      %v4675 = vpack.c.bf16 %v4652, %v4651
      %v4676 = vpack.c.bf16 %v4654, %v4653
      %v4677 = vpack.c.bf16 %v4656, %v4655
      %v4678 = vpack.c.bf16 %v4658, %v4657
      %v4679 = vpack.c.bf16 %v4660, %v4659
      %v4680 = vpack.c.bf16 %v4662, %v4661
      %v4681 = vpack.c.bf16 %v4664, %v4663
      %v4682 = vpack.c.bf16 %v4666, %v4665
      %s4683 = scalar_lea.vmem %s4, 144
      %v4684 = vld [vmem:[%s4683] sm:$0xf]
      %v4685 = vld [vmem:[%s4683 + $0x4] sm:$0xf]
      %v4686 = vld [vmem:[%s4683 + $0x8] sm:$0xf]
      %v4687 = vld [vmem:[%s4683 + $0xc] sm:$0xf]
      %v4688 = vld [vmem:[#allocation2 + $0x13] sm:$0xff]
      %v4689 = vld [vmem:[#allocation2 + $0x1b] sm:$0xff]
      %v4690 = vld [vmem:[#allocation2 + $0x23] sm:$0xff]
      %v4691 = vld [vmem:[#allocation2 + $0x2b] sm:$0xff]
      %v4692 = vld [vmem:[#allocation2 + $0x33] sm:$0xff]
      %v4693 = vld [vmem:[#allocation2 + $0x3b] sm:$0xff]
      %v4694 = vld [vmem:[#allocation2 + $0x43] sm:$0xff]
      %v4695 = vld [vmem:[#allocation2 + $0x4b] sm:$0xff]
      %v4696 = vld [vmem:[#allocation2 + $0x53] sm:$0xff]
      %v4697 = vld [vmem:[#allocation2 + $0x5b] sm:$0xff]
      %v4698 = vld [vmem:[#allocation2 + $0x63] sm:$0xff]
      %v4699 = vld [vmem:[#allocation2 + $0x6b] sm:$0xff]
      %v4700 = vld [vmem:[#allocation2 + $0x73] sm:$0xff]
      %v4701 = vld [vmem:[#allocation2 + $0x7b] sm:$0xff]
      %v4702 = vld [vmem:[#allocation2 + $0x83] sm:$0xff]
      %v4703 = vld [vmem:[#allocation2 + $0x8b] sm:$0xff]
      %v4704 = vld [vmem:[#allocation2 + $0x93] sm:$0xff]
      %v4705 = vld [vmem:[#allocation2 + $0x9b] sm:$0xff]
      %v4706 = vld [vmem:[#allocation2 + $0xa3] sm:$0xff]
      %v4707 = vld [vmem:[#allocation2 + $0xab] sm:$0xff]
      %v4708 = vld [vmem:[#allocation2 + $0xb3] sm:$0xff]
      %v4709 = vld [vmem:[#allocation2 + $0xbb] sm:$0xff]
      %v4710 = vld [vmem:[#allocation2 + $0xc3] sm:$0xff]
      %v4711 = vld [vmem:[#allocation2 + $0xcb] sm:$0xff]
      %v4712 = vld [vmem:[#allocation2 + $0xd3] sm:$0xff]
      %v4713 = vld [vmem:[#allocation2 + $0xdb] sm:$0xff]
      %v4714 = vld [vmem:[#allocation2 + $0xe3] sm:$0xff]
      %v4715 = vld [vmem:[#allocation2 + $0xeb] sm:$0xff]
      %v4716 = vld [vmem:[#allocation2 + $0xf3] sm:$0xff]
      %v4717 = vld [vmem:[#allocation2 + $0xfb] sm:$0xff]
      %v4718 = vld [vmem:[#allocation2 + $0x103] sm:$0xff]
      %v4719 = vld [vmem:[#allocation2 + $0x10b] sm:$0xff]
      %v4720 = vpack.c.bf16 %v4689, %v4688
      %v4721 = vpack.c.bf16 %v4691, %v4690
      %v4722 = vpack.c.bf16 %v4693, %v4692
      %v4723 = vpack.c.bf16 %v4695, %v4694
      %v4724 = vpack.c.bf16 %v4697, %v4696
      %v4725 = vpack.c.bf16 %v4699, %v4698
      %v4726 = vpack.c.bf16 %v4701, %v4700
      %v4727 = vpack.c.bf16 %v4703, %v4702
      %v4728 = vpack.c.bf16 %v4705, %v4704
      %v4729 = vpack.c.bf16 %v4707, %v4706
      %v4730 = vpack.c.bf16 %v4709, %v4708
      %v4731 = vpack.c.bf16 %v4711, %v4710
      %v4732 = vpack.c.bf16 %v4713, %v4712
      %v4733 = vpack.c.bf16 %v4715, %v4714
      %v4734 = vpack.c.bf16 %v4717, %v4716
      %v4735 = vpack.c.bf16 %v4719, %v4718
      %s4736 = scalar_lea.vmem %s4, 160
      %v4737 = vld [vmem:[%s4736] sm:$0xf]
      %v4738 = vld [vmem:[%s4736 + $0x4] sm:$0xf]
      %v4739 = vld [vmem:[%s4736 + $0x8] sm:$0xf]
      %v4740 = vld [vmem:[%s4736 + $0xc] sm:$0xf]
      %v4745 = vunpack.c.l.b16 %v4737
      %v4746 = vunpack.c.l.b16 %v4738
      %v4747 = vunpack.c.l.b16 %v4739
      %v4748 = vunpack.c.l.b16 %v4740
      %v4749 = vpack.c.b16 %v4746, %v4745
      %v4750 = vpack.c.b16 %v4748, %v4747
      %v4754 = vsel %vm2480, %v4720, 0
      %v4757 = vsel %vm2480, %v4721, 0
      %v4760 = vsel %vm2480, %v4722, 0
      %v4763 = vsel %vm2480, %v4723, 0
      %v4766 = vsel %vm2480, %v4724, 0
      %v4769 = vsel %vm2480, %v4725, 0
      %v4772 = vsel %vm2480, %v4726, 0
      %v4775 = vsel %vm2480, %v4727, 0
      %v4778 = vsel %vm2480, %v4728, 0
      %v4781 = vsel %vm2480, %v4729, 0
      %v4784 = vsel %vm2480, %v4730, 0
      %v4787 = vsel %vm2480, %v4731, 0
      %v4790 = vsel %vm2480, %v4732, 0
      %v4793 = vsel %vm2480, %v4733, 0
      %v4796 = vsel %vm2480, %v4734, 0
      %v4799 = vsel %vm2480, %v4735, 0
      %4801 = vmatpush.bf16.msra.mxu0 0
      %4802 = vmatpush.bf16.msra.mxu0 0
      %4803 = vmatpush.bf16.msra.mxu0 0
      %4804 = vmatpush.bf16.msra.mxu0 0
      %4805 = vmatpush.bf16.msra.mxu0 0
      %4806 = vmatpush.bf16.msra.mxu0 0
      %4807 = vmatpush.bf16.msra.mxu0 %v4750
      %4808 = vmatpush.bf16.msra.mxu0 %v4749
      %4809 = vmatmul.bf16.gmra.mxu0 %v4754
      %v4810 = vpop.f32.mrf.mxu0
      %v4811 = vadd.f32 0.0, %v4810
      %v4812 = vpop.f32.mrf.mxu0
      %v4813 = vadd.f32 0.0, %v4812
      %4814 = vmatmul.bf16.gmra.mxu0 %v4757
      %v4815 = vpop.f32.mrf.mxu0
      %v4816 = vadd.f32 0.0, %v4815
      %v4817 = vpop.f32.mrf.mxu0
      %v4818 = vadd.f32 0.0, %v4817
      %4819 = vmatmul.bf16.gmra.mxu0 %v4760
      %v4820 = vpop.f32.mrf.mxu0
      %v4821 = vadd.f32 0.0, %v4820
      %v4822 = vpop.f32.mrf.mxu0
      %v4823 = vadd.f32 0.0, %v4822
      %4824 = vmatmul.bf16.gmra.mxu0 %v4763
      %v4825 = vpop.f32.mrf.mxu0
      %v4826 = vadd.f32 0.0, %v4825
      %v4827 = vpop.f32.mrf.mxu0
      %v4828 = vadd.f32 0.0, %v4827
      %4829 = vmatmul.bf16.gmra.mxu0 %v4766
      %v4830 = vpop.f32.mrf.mxu0
      %v4831 = vadd.f32 0.0, %v4830
      %v4832 = vpop.f32.mrf.mxu0
      %v4833 = vadd.f32 0.0, %v4832
      %4834 = vmatmul.bf16.gmra.mxu0 %v4769
      %v4835 = vpop.f32.mrf.mxu0
      %v4836 = vadd.f32 0.0, %v4835
      %v4837 = vpop.f32.mrf.mxu0
      %v4838 = vadd.f32 0.0, %v4837
      %4839 = vmatmul.bf16.gmra.mxu0 %v4772
      %v4840 = vpop.f32.mrf.mxu0
      %v4841 = vadd.f32 0.0, %v4840
      %v4842 = vpop.f32.mrf.mxu0
      %v4843 = vadd.f32 0.0, %v4842
      %4844 = vmatmul.bf16.gmra.mxu0 %v4775
      %v4845 = vpop.f32.mrf.mxu0
      %v4846 = vadd.f32 0.0, %v4845
      %v4847 = vpop.f32.mrf.mxu0
      %v4848 = vadd.f32 0.0, %v4847
      %4849 = vmatmul.bf16.gmra.mxu0 %v4778
      %v4850 = vpop.f32.mrf.mxu0
      %v4851 = vadd.f32 0.0, %v4850
      %v4852 = vpop.f32.mrf.mxu0
      %v4853 = vadd.f32 0.0, %v4852
      %4854 = vmatmul.bf16.gmra.mxu0 %v4781
      %v4855 = vpop.f32.mrf.mxu0
      %v4856 = vadd.f32 0.0, %v4855
      %v4857 = vpop.f32.mrf.mxu0
      %v4858 = vadd.f32 0.0, %v4857
      %4859 = vmatmul.bf16.gmra.mxu0 %v4784
      %v4860 = vpop.f32.mrf.mxu0
      %v4861 = vadd.f32 0.0, %v4860
      %v4862 = vpop.f32.mrf.mxu0
      %v4863 = vadd.f32 0.0, %v4862
      %4864 = vmatmul.bf16.gmra.mxu0 %v4787
      %v4865 = vpop.f32.mrf.mxu0
      %v4866 = vadd.f32 0.0, %v4865
      %v4867 = vpop.f32.mrf.mxu0
      %v4868 = vadd.f32 0.0, %v4867
      %4869 = vmatmul.bf16.gmra.mxu0 %v4790
      %v4870 = vpop.f32.mrf.mxu0
      %v4871 = vadd.f32 0.0, %v4870
      %v4872 = vpop.f32.mrf.mxu0
      %v4873 = vadd.f32 0.0, %v4872
      %4874 = vmatmul.bf16.gmra.mxu0 %v4793
      %v4875 = vpop.f32.mrf.mxu0
      %v4876 = vadd.f32 0.0, %v4875
      %v4877 = vpop.f32.mrf.mxu0
      %v4878 = vadd.f32 0.0, %v4877
      %4879 = vmatmul.bf16.gmra.mxu0 %v4796
      %v4880 = vpop.f32.mrf.mxu0
      %v4881 = vadd.f32 0.0, %v4880
      %v4882 = vpop.f32.mrf.mxu0
      %v4883 = vadd.f32 0.0, %v4882
      %4884 = vmatmul.bf16.gmra.mxu0 %v4799
      %v4885 = vpop.f32.mrf.mxu0
      %v4886 = vadd.f32 0.0, %v4885
      %v4887 = vpop.f32.mrf.mxu0
      %v4888 = vadd.f32 0.0, %v4887
      %4889 = vdwg.mxu0
      %v4894 = vunpack.c.l.b16 %v4684
      %v4895 = vunpack.c.l.b16 %v4685
      %v4896 = vunpack.c.l.b16 %v4686
      %v4897 = vunpack.c.l.b16 %v4687
      %v4898 = vpack.c.b16 %v4895, %v4894
      %v4899 = vpack.c.b16 %v4897, %v4896
      %v4903 = vsel %vm2480, %v4667, 0
      %v4906 = vsel %vm2480, %v4668, 0
      %v4909 = vsel %vm2480, %v4669, 0
      %v4912 = vsel %vm2480, %v4670, 0
      %v4915 = vsel %vm2480, %v4671, 0
      %v4918 = vsel %vm2480, %v4672, 0
      %v4921 = vsel %vm2480, %v4673, 0
      %v4924 = vsel %vm2480, %v4674, 0
      %v4927 = vsel %vm2480, %v4675, 0
      %v4930 = vsel %vm2480, %v4676, 0
      %v4933 = vsel %vm2480, %v4677, 0
      %v4936 = vsel %vm2480, %v4678, 0
      %v4939 = vsel %vm2480, %v4679, 0
      %v4942 = vsel %vm2480, %v4680, 0
      %v4945 = vsel %vm2480, %v4681, 0
      %v4948 = vsel %vm2480, %v4682, 0
      %4950 = vmatpush.bf16.msra.mxu0 0
      %4951 = vmatpush.bf16.msra.mxu0 0
      %4952 = vmatpush.bf16.msra.mxu0 0
      %4953 = vmatpush.bf16.msra.mxu0 0
      %4954 = vmatpush.bf16.msra.mxu0 0
      %4955 = vmatpush.bf16.msra.mxu0 0
      %4956 = vmatpush.bf16.msra.mxu0 %v4899
      %4957 = vmatpush.bf16.msra.mxu0 %v4898
      %4958 = vmatmul.bf16.gmra.mxu0 %v4903
      %v4959 = vpop.f32.mrf.mxu0
      %v4960 = vadd.f32 %v4811, %v4959
      %v4961 = vpop.f32.mrf.mxu0
      %v4962 = vadd.f32 %v4813, %v4961
      %4963 = vmatmul.bf16.gmra.mxu0 %v4906
      %v4964 = vpop.f32.mrf.mxu0
      %v4965 = vadd.f32 %v4816, %v4964
      %v4966 = vpop.f32.mrf.mxu0
      %v4967 = vadd.f32 %v4818, %v4966
      %4968 = vmatmul.bf16.gmra.mxu0 %v4909
      %v4969 = vpop.f32.mrf.mxu0
      %v4970 = vadd.f32 %v4821, %v4969
      %v4971 = vpop.f32.mrf.mxu0
      %v4972 = vadd.f32 %v4823, %v4971
      %4973 = vmatmul.bf16.gmra.mxu0 %v4912
      %v4974 = vpop.f32.mrf.mxu0
      %v4975 = vadd.f32 %v4826, %v4974
      %v4976 = vpop.f32.mrf.mxu0
      %v4977 = vadd.f32 %v4828, %v4976
      %4978 = vmatmul.bf16.gmra.mxu0 %v4915
      %v4979 = vpop.f32.mrf.mxu0
      %v4980 = vadd.f32 %v4831, %v4979
      %v4981 = vpop.f32.mrf.mxu0
      %v4982 = vadd.f32 %v4833, %v4981
      %4983 = vmatmul.bf16.gmra.mxu0 %v4918
      %v4984 = vpop.f32.mrf.mxu0
      %v4985 = vadd.f32 %v4836, %v4984
      %v4986 = vpop.f32.mrf.mxu0
      %v4987 = vadd.f32 %v4838, %v4986
      %4988 = vmatmul.bf16.gmra.mxu0 %v4921
      %v4989 = vpop.f32.mrf.mxu0
      %v4990 = vadd.f32 %v4841, %v4989
      %v4991 = vpop.f32.mrf.mxu0
      %v4992 = vadd.f32 %v4843, %v4991
      %4993 = vmatmul.bf16.gmra.mxu0 %v4924
      %v4994 = vpop.f32.mrf.mxu0
      %v4995 = vadd.f32 %v4846, %v4994
      %v4996 = vpop.f32.mrf.mxu0
      %v4997 = vadd.f32 %v4848, %v4996
      %4998 = vmatmul.bf16.gmra.mxu0 %v4927
      %v4999 = vpop.f32.mrf.mxu0
      %v5000 = vadd.f32 %v4851, %v4999
      %v5001 = vpop.f32.mrf.mxu0
      %v5002 = vadd.f32 %v4853, %v5001
      %5003 = vmatmul.bf16.gmra.mxu0 %v4930
      %v5004 = vpop.f32.mrf.mxu0
      %v5005 = vadd.f32 %v4856, %v5004
      %v5006 = vpop.f32.mrf.mxu0
      %v5007 = vadd.f32 %v4858, %v5006
      %5008 = vmatmul.bf16.gmra.mxu0 %v4933
      %v5009 = vpop.f32.mrf.mxu0
      %v5010 = vadd.f32 %v4861, %v5009
      %v5011 = vpop.f32.mrf.mxu0
      %v5012 = vadd.f32 %v4863, %v5011
      %5013 = vmatmul.bf16.gmra.mxu0 %v4936
      %v5014 = vpop.f32.mrf.mxu0
      %v5015 = vadd.f32 %v4866, %v5014
      %v5016 = vpop.f32.mrf.mxu0
      %v5017 = vadd.f32 %v4868, %v5016
      %5018 = vmatmul.bf16.gmra.mxu0 %v4939
      %v5019 = vpop.f32.mrf.mxu0
      %v5020 = vadd.f32 %v4871, %v5019
      %v5021 = vpop.f32.mrf.mxu0
      %v5022 = vadd.f32 %v4873, %v5021
      %5023 = vmatmul.bf16.gmra.mxu0 %v4942
      %v5024 = vpop.f32.mrf.mxu0
      %v5025 = vadd.f32 %v4876, %v5024
      %v5026 = vpop.f32.mrf.mxu0
      %v5027 = vadd.f32 %v4878, %v5026
      %5028 = vmatmul.bf16.gmra.mxu0 %v4945
      %v5029 = vpop.f32.mrf.mxu0
      %v5030 = vadd.f32 %v4881, %v5029
      %v5031 = vpop.f32.mrf.mxu0
      %v5032 = vadd.f32 %v4883, %v5031
      %5033 = vmatmul.bf16.gmra.mxu0 %v4948
      %v5034 = vpop.f32.mrf.mxu0
      %v5035 = vadd.f32 %v4886, %v5034
      %v5036 = vpop.f32.mrf.mxu0
      %v5037 = vadd.f32 %v4888, %v5036
      %5038 = vdwg.mxu0
      %v5039 = vld [vmem:[#allocation2 + $0x15] sm:$0xff]
      %v5040 = vld [vmem:[#allocation2 + $0x1d] sm:$0xff]
      %v5041 = vld [vmem:[#allocation2 + $0x25] sm:$0xff]
      %v5042 = vld [vmem:[#allocation2 + $0x2d] sm:$0xff]
      %v5043 = vld [vmem:[#allocation2 + $0x35] sm:$0xff]
      %v5044 = vld [vmem:[#allocation2 + $0x3d] sm:$0xff]
      %v5045 = vld [vmem:[#allocation2 + $0x45] sm:$0xff]
      %v5046 = vld [vmem:[#allocation2 + $0x4d] sm:$0xff]
      %v5047 = vld [vmem:[#allocation2 + $0x55] sm:$0xff]
      %v5048 = vld [vmem:[#allocation2 + $0x5d] sm:$0xff]
      %v5049 = vld [vmem:[#allocation2 + $0x65] sm:$0xff]
      %v5050 = vld [vmem:[#allocation2 + $0x6d] sm:$0xff]
      %v5051 = vld [vmem:[#allocation2 + $0x75] sm:$0xff]
      %v5052 = vld [vmem:[#allocation2 + $0x7d] sm:$0xff]
      %v5053 = vld [vmem:[#allocation2 + $0x85] sm:$0xff]
      %v5054 = vld [vmem:[#allocation2 + $0x8d] sm:$0xff]
      %v5055 = vld [vmem:[#allocation2 + $0x95] sm:$0xff]
      %v5056 = vld [vmem:[#allocation2 + $0x9d] sm:$0xff]
      %v5057 = vld [vmem:[#allocation2 + $0xa5] sm:$0xff]
      %v5058 = vld [vmem:[#allocation2 + $0xad] sm:$0xff]
      %v5059 = vld [vmem:[#allocation2 + $0xb5] sm:$0xff]
      %v5060 = vld [vmem:[#allocation2 + $0xbd] sm:$0xff]
      %v5061 = vld [vmem:[#allocation2 + $0xc5] sm:$0xff]
      %v5062 = vld [vmem:[#allocation2 + $0xcd] sm:$0xff]
      %v5063 = vld [vmem:[#allocation2 + $0xd5] sm:$0xff]
      %v5064 = vld [vmem:[#allocation2 + $0xdd] sm:$0xff]
      %v5065 = vld [vmem:[#allocation2 + $0xe5] sm:$0xff]
      %v5066 = vld [vmem:[#allocation2 + $0xed] sm:$0xff]
      %v5067 = vld [vmem:[#allocation2 + $0xf5] sm:$0xff]
      %v5068 = vld [vmem:[#allocation2 + $0xfd] sm:$0xff]
      %v5069 = vld [vmem:[#allocation2 + $0x105] sm:$0xff]
      %v5070 = vld [vmem:[#allocation2 + $0x10d] sm:$0xff]
      %v5071 = vpack.c.bf16 %v5040, %v5039
      %v5072 = vpack.c.bf16 %v5042, %v5041
      %v5073 = vpack.c.bf16 %v5044, %v5043
      %v5074 = vpack.c.bf16 %v5046, %v5045
      %v5075 = vpack.c.bf16 %v5048, %v5047
      %v5076 = vpack.c.bf16 %v5050, %v5049
      %v5077 = vpack.c.bf16 %v5052, %v5051
      %v5078 = vpack.c.bf16 %v5054, %v5053
      %v5079 = vpack.c.bf16 %v5056, %v5055
      %v5080 = vpack.c.bf16 %v5058, %v5057
      %v5081 = vpack.c.bf16 %v5060, %v5059
      %v5082 = vpack.c.bf16 %v5062, %v5061
      %v5083 = vpack.c.bf16 %v5064, %v5063
      %v5084 = vpack.c.bf16 %v5066, %v5065
      %v5085 = vpack.c.bf16 %v5068, %v5067
      %v5086 = vpack.c.bf16 %v5070, %v5069
      %s5087 = scalar_lea.vmem %s4, 176
      %v5088 = vld [vmem:[%s5087] sm:$0xf]
      %v5089 = vld [vmem:[%s5087 + $0x4] sm:$0xf]
      %v5090 = vld [vmem:[%s5087 + $0x8] sm:$0xf]
      %v5091 = vld [vmem:[%s5087 + $0xc] sm:$0xf]
      %v5096 = vunpack.c.l.b16 %v5088
      %v5097 = vunpack.c.l.b16 %v5089
      %v5098 = vunpack.c.l.b16 %v5090
      %v5099 = vunpack.c.l.b16 %v5091
      %v5100 = vpack.c.b16 %v5097, %v5096
      %v5101 = vpack.c.b16 %v5099, %v5098
      %v5105 = vsel %vm2480, %v5071, 0
      %v5108 = vsel %vm2480, %v5072, 0
      %v5111 = vsel %vm2480, %v5073, 0
      %v5114 = vsel %vm2480, %v5074, 0
      %v5117 = vsel %vm2480, %v5075, 0
      %v5120 = vsel %vm2480, %v5076, 0
      %v5123 = vsel %vm2480, %v5077, 0
      %v5126 = vsel %vm2480, %v5078, 0
      %v5129 = vsel %vm2480, %v5079, 0
      %v5132 = vsel %vm2480, %v5080, 0
      %v5135 = vsel %vm2480, %v5081, 0
      %v5138 = vsel %vm2480, %v5082, 0
      %v5141 = vsel %vm2480, %v5083, 0
      %v5144 = vsel %vm2480, %v5084, 0
      %v5147 = vsel %vm2480, %v5085, 0
      %v5150 = vsel %vm2480, %v5086, 0
      %5152 = vmatpush.bf16.msra.mxu0 0
      %5153 = vmatpush.bf16.msra.mxu0 0
      %5154 = vmatpush.bf16.msra.mxu0 0
      %5155 = vmatpush.bf16.msra.mxu0 0
      %5156 = vmatpush.bf16.msra.mxu0 0
      %5157 = vmatpush.bf16.msra.mxu0 0
      %5158 = vmatpush.bf16.msra.mxu0 %v5101
      %5159 = vmatpush.bf16.msra.mxu0 %v5100
      %5160 = vmatmul.bf16.gmra.mxu0 %v5105
      %v5161 = vpop.f32.mrf.mxu0
      %v5162 = vadd.f32 0.0, %v5161
      %v5163 = vpop.f32.mrf.mxu0
      %v5164 = vadd.f32 0.0, %v5163
      %5165 = vmatmul.bf16.gmra.mxu0 %v5108
      %v5166 = vpop.f32.mrf.mxu0
      %v5167 = vadd.f32 0.0, %v5166
      %v5168 = vpop.f32.mrf.mxu0
      %v5169 = vadd.f32 0.0, %v5168
      %5170 = vmatmul.bf16.gmra.mxu0 %v5111
      %v5171 = vpop.f32.mrf.mxu0
      %v5172 = vadd.f32 0.0, %v5171
      %v5173 = vpop.f32.mrf.mxu0
      %v5174 = vadd.f32 0.0, %v5173
      %5175 = vmatmul.bf16.gmra.mxu0 %v5114
      %v5176 = vpop.f32.mrf.mxu0
      %v5177 = vadd.f32 0.0, %v5176
      %v5178 = vpop.f32.mrf.mxu0
      %v5179 = vadd.f32 0.0, %v5178
      %5180 = vmatmul.bf16.gmra.mxu0 %v5117
      %v5181 = vpop.f32.mrf.mxu0
      %v5182 = vadd.f32 0.0, %v5181
      %v5183 = vpop.f32.mrf.mxu0
      %v5184 = vadd.f32 0.0, %v5183
      %5185 = vmatmul.bf16.gmra.mxu0 %v5120
      %v5186 = vpop.f32.mrf.mxu0
      %v5187 = vadd.f32 0.0, %v5186
      %v5188 = vpop.f32.mrf.mxu0
      %v5189 = vadd.f32 0.0, %v5188
      %5190 = vmatmul.bf16.gmra.mxu0 %v5123
      %v5191 = vpop.f32.mrf.mxu0
      %v5192 = vadd.f32 0.0, %v5191
      %v5193 = vpop.f32.mrf.mxu0
      %v5194 = vadd.f32 0.0, %v5193
      %5195 = vmatmul.bf16.gmra.mxu0 %v5126
      %v5196 = vpop.f32.mrf.mxu0
      %v5197 = vadd.f32 0.0, %v5196
      %v5198 = vpop.f32.mrf.mxu0
      %v5199 = vadd.f32 0.0, %v5198
      %5200 = vmatmul.bf16.gmra.mxu0 %v5129
      %v5201 = vpop.f32.mrf.mxu0
      %v5202 = vadd.f32 0.0, %v5201
      %v5203 = vpop.f32.mrf.mxu0
      %v5204 = vadd.f32 0.0, %v5203
      %5205 = vmatmul.bf16.gmra.mxu0 %v5132
      %v5206 = vpop.f32.mrf.mxu0
      %v5207 = vadd.f32 0.0, %v5206
      %v5208 = vpop.f32.mrf.mxu0
      %v5209 = vadd.f32 0.0, %v5208
      %5210 = vmatmul.bf16.gmra.mxu0 %v5135
      %v5211 = vpop.f32.mrf.mxu0
      %v5212 = vadd.f32 0.0, %v5211
      %v5213 = vpop.f32.mrf.mxu0
      %v5214 = vadd.f32 0.0, %v5213
      %5215 = vmatmul.bf16.gmra.mxu0 %v5138
      %v5216 = vpop.f32.mrf.mxu0
      %v5217 = vadd.f32 0.0, %v5216
      %v5218 = vpop.f32.mrf.mxu0
      %v5219 = vadd.f32 0.0, %v5218
      %5220 = vmatmul.bf16.gmra.mxu0 %v5141
      %v5221 = vpop.f32.mrf.mxu0
      %v5222 = vadd.f32 0.0, %v5221
      %v5223 = vpop.f32.mrf.mxu0
      %v5224 = vadd.f32 0.0, %v5223
      %5225 = vmatmul.bf16.gmra.mxu0 %v5144
      %v5226 = vpop.f32.mrf.mxu0
      %v5227 = vadd.f32 0.0, %v5226
      %v5228 = vpop.f32.mrf.mxu0
      %v5229 = vadd.f32 0.0, %v5228
      %5230 = vmatmul.bf16.gmra.mxu0 %v5147
      %v5231 = vpop.f32.mrf.mxu0
      %v5232 = vadd.f32 0.0, %v5231
      %v5233 = vpop.f32.mrf.mxu0
      %v5234 = vadd.f32 0.0, %v5233
      %5235 = vmatmul.bf16.gmra.mxu0 %v5150
      %v5236 = vpop.f32.mrf.mxu0
      %v5237 = vadd.f32 0.0, %v5236
      %v5238 = vpop.f32.mrf.mxu0
      %v5239 = vadd.f32 0.0, %v5238
      %5240 = vdwg.mxu0
      %v5241 = vadd.f32 %v4960, %v5162
      %v5242 = vadd.f32 %v4962, %v5164
      %v5243 = vadd.f32 %v4965, %v5167
      %v5244 = vadd.f32 %v4967, %v5169
      %v5245 = vadd.f32 %v4970, %v5172
      %v5246 = vadd.f32 %v4972, %v5174
      %v5247 = vadd.f32 %v4975, %v5177
      %v5248 = vadd.f32 %v4977, %v5179
      %v5249 = vadd.f32 %v4980, %v5182
      %v5250 = vadd.f32 %v4982, %v5184
      %v5251 = vadd.f32 %v4985, %v5187
      %v5252 = vadd.f32 %v4987, %v5189
      %v5253 = vadd.f32 %v4990, %v5192
      %v5254 = vadd.f32 %v4992, %v5194
      %v5255 = vadd.f32 %v4995, %v5197
      %v5256 = vadd.f32 %v4997, %v5199
      %v5257 = vadd.f32 %v5000, %v5202
      %v5258 = vadd.f32 %v5002, %v5204
      %v5259 = vadd.f32 %v5005, %v5207
      %v5260 = vadd.f32 %v5007, %v5209
      %v5261 = vadd.f32 %v5010, %v5212
      %v5262 = vadd.f32 %v5012, %v5214
      %v5263 = vadd.f32 %v5015, %v5217
      %v5264 = vadd.f32 %v5017, %v5219
      %v5265 = vadd.f32 %v5020, %v5222
      %v5266 = vadd.f32 %v5022, %v5224
      %v5267 = vadd.f32 %v5025, %v5227
      %v5268 = vadd.f32 %v5027, %v5229
      %v5269 = vadd.f32 %v5030, %v5232
      %v5270 = vadd.f32 %v5032, %v5234
      %v5271 = vadd.f32 %v5035, %v5237
      %v5272 = vadd.f32 %v5037, %v5239
      %v5273 = vld [vmem:[#allocation2 + $0x31] sm:$0xff]
      %v5274 = vld [vmem:[#allocation2 + $0x39] sm:$0xff]
      %v5275 = vld [vmem:[#allocation2 + $0x41] sm:$0xff]
      %v5276 = vld [vmem:[#allocation2 + $0x49] sm:$0xff]
      %v5277 = vld [vmem:[#allocation2 + $0x51] sm:$0xff]
      %v5278 = vld [vmem:[#allocation2 + $0x59] sm:$0xff]
      %v5279 = vld [vmem:[#allocation2 + $0x61] sm:$0xff]
      %v5280 = vld [vmem:[#allocation2 + $0x69] sm:$0xff]
      %v5281 = vld [vmem:[#allocation2 + $0x71] sm:$0xff]
      %v5282 = vld [vmem:[#allocation2 + $0x79] sm:$0xff]
      %v5283 = vld [vmem:[#allocation2 + $0x81] sm:$0xff]
      %v5284 = vld [vmem:[#allocation2 + $0x89] sm:$0xff]
      %v5285 = vld [vmem:[#allocation2 + $0x91] sm:$0xff]
      %v5286 = vld [vmem:[#allocation2 + $0x99] sm:$0xff]
      %v5287 = vld [vmem:[#allocation2 + $0xa1] sm:$0xff]
      %v5288 = vld [vmem:[#allocation2 + $0xa9] sm:$0xff]
      %v5289 = vld [vmem:[#allocation2 + $0xb1] sm:$0xff]
      %v5290 = vld [vmem:[#allocation2 + $0xb9] sm:$0xff]
      %v5291 = vld [vmem:[#allocation2 + $0xc1] sm:$0xff]
      %v5292 = vld [vmem:[#allocation2 + $0xc9] sm:$0xff]
      %v5293 = vld [vmem:[#allocation2 + $0xd1] sm:$0xff]
      %v5294 = vld [vmem:[#allocation2 + $0xd9] sm:$0xff]
      %v5295 = vld [vmem:[#allocation2 + $0xe1] sm:$0xff]
      %v5296 = vld [vmem:[#allocation2 + $0xe9] sm:$0xff]
      %v5297 = vld [vmem:[#allocation2 + $0xf1] sm:$0xff]
      %v5298 = vld [vmem:[#allocation2 + $0xf9] sm:$0xff]
      %v5299 = vld [vmem:[#allocation2 + $0x101] sm:$0xff]
      %v5300 = vld [vmem:[#allocation2 + $0x109] sm:$0xff]
      %v5301 = vld [vmem:[#allocation2 + $0x111] sm:$0xff]
      %v5302 = vld [vmem:[#allocation2 + $0x119] sm:$0xff]
      %v5303 = vld [vmem:[#allocation2 + $0x121] sm:$0xff]
      %v5304 = vld [vmem:[#allocation2 + $0x129] sm:$0xff]
      %v5305 = vpack.c.bf16 %v5274, %v5273
      %v5306 = vpack.c.bf16 %v5276, %v5275
      %v5307 = vpack.c.bf16 %v5278, %v5277
      %v5308 = vpack.c.bf16 %v5280, %v5279
      %v5309 = vpack.c.bf16 %v5282, %v5281
      %v5310 = vpack.c.bf16 %v5284, %v5283
      %v5311 = vpack.c.bf16 %v5286, %v5285
      %v5312 = vpack.c.bf16 %v5288, %v5287
      %v5313 = vpack.c.bf16 %v5290, %v5289
      %v5314 = vpack.c.bf16 %v5292, %v5291
      %v5315 = vpack.c.bf16 %v5294, %v5293
      %v5316 = vpack.c.bf16 %v5296, %v5295
      %v5317 = vpack.c.bf16 %v5298, %v5297
      %v5318 = vpack.c.bf16 %v5300, %v5299
      %v5319 = vpack.c.bf16 %v5302, %v5301
      %v5320 = vpack.c.bf16 %v5304, %v5303
      %s5321 = scalar_lea.vmem %s4, 192
      %v5322 = vld [vmem:[%s5321] sm:$0xf]
      %v5323 = vld [vmem:[%s5321 + $0x4] sm:$0xf]
      %v5324 = vld [vmem:[%s5321 + $0x8] sm:$0xf]
      %v5325 = vld [vmem:[%s5321 + $0xc] sm:$0xf]
      %v5330 = vunpack.c.l.b16 %v5322
      %v5331 = vunpack.c.l.b16 %v5323
      %v5332 = vunpack.c.l.b16 %v5324
      %v5333 = vunpack.c.l.b16 %v5325
      %v5334 = vpack.c.b16 %v5331, %v5330
      %v5335 = vpack.c.b16 %v5333, %v5332
      %v5339 = vsel %vm2480, %v5305, 0
      %v5342 = vsel %vm2480, %v5306, 0
      %v5345 = vsel %vm2480, %v5307, 0
      %v5348 = vsel %vm2480, %v5308, 0
      %v5351 = vsel %vm2480, %v5309, 0
      %v5354 = vsel %vm2480, %v5310, 0
      %v5357 = vsel %vm2480, %v5311, 0
      %v5360 = vsel %vm2480, %v5312, 0
      %v5363 = vsel %vm2480, %v5313, 0
      %v5366 = vsel %vm2480, %v5314, 0
      %v5369 = vsel %vm2480, %v5315, 0
      %v5372 = vsel %vm2480, %v5316, 0
      %v5375 = vsel %vm2480, %v5317, 0
      %v5378 = vsel %vm2480, %v5318, 0
      %v5381 = vsel %vm2480, %v5319, 0
      %v5384 = vsel %vm2480, %v5320, 0
      %5386 = vmatpush.bf16.msra.mxu0 0
      %5387 = vmatpush.bf16.msra.mxu0 0
      %5388 = vmatpush.bf16.msra.mxu0 0
      %5389 = vmatpush.bf16.msra.mxu0 0
      %5390 = vmatpush.bf16.msra.mxu0 0
      %5391 = vmatpush.bf16.msra.mxu0 0
      %5392 = vmatpush.bf16.msra.mxu0 %v5335
      %5393 = vmatpush.bf16.msra.mxu0 %v5334
      %5394 = vmatmul.bf16.gmra.mxu0 %v5339
      %v5395 = vpop.f32.mrf.mxu0
      %v5396 = vadd.f32 0.0, %v5395
      %v5397 = vpop.f32.mrf.mxu0
      %v5398 = vadd.f32 0.0, %v5397
      %5399 = vmatmul.bf16.gmra.mxu0 %v5342
      %v5400 = vpop.f32.mrf.mxu0
      %v5401 = vadd.f32 0.0, %v5400
      %v5402 = vpop.f32.mrf.mxu0
      %v5403 = vadd.f32 0.0, %v5402
      %5404 = vmatmul.bf16.gmra.mxu0 %v5345
      %v5405 = vpop.f32.mrf.mxu0
      %v5406 = vadd.f32 0.0, %v5405
      %v5407 = vpop.f32.mrf.mxu0
      %v5408 = vadd.f32 0.0, %v5407
      %5409 = vmatmul.bf16.gmra.mxu0 %v5348
      %v5410 = vpop.f32.mrf.mxu0
      %v5411 = vadd.f32 0.0, %v5410
      %v5412 = vpop.f32.mrf.mxu0
      %v5413 = vadd.f32 0.0, %v5412
      %5414 = vmatmul.bf16.gmra.mxu0 %v5351
      %v5415 = vpop.f32.mrf.mxu0
      %v5416 = vadd.f32 0.0, %v5415
      %v5417 = vpop.f32.mrf.mxu0
      %v5418 = vadd.f32 0.0, %v5417
      %5419 = vmatmul.bf16.gmra.mxu0 %v5354
      %v5420 = vpop.f32.mrf.mxu0
      %v5421 = vadd.f32 0.0, %v5420
      %v5422 = vpop.f32.mrf.mxu0
      %v5423 = vadd.f32 0.0, %v5422
      %5424 = vmatmul.bf16.gmra.mxu0 %v5357
      %v5425 = vpop.f32.mrf.mxu0
      %v5426 = vadd.f32 0.0, %v5425
      %v5427 = vpop.f32.mrf.mxu0
      %v5428 = vadd.f32 0.0, %v5427
      %5429 = vmatmul.bf16.gmra.mxu0 %v5360
      %v5430 = vpop.f32.mrf.mxu0
      %v5431 = vadd.f32 0.0, %v5430
      %v5432 = vpop.f32.mrf.mxu0
      %v5433 = vadd.f32 0.0, %v5432
      %5434 = vmatmul.bf16.gmra.mxu0 %v5363
      %v5435 = vpop.f32.mrf.mxu0
      %v5436 = vadd.f32 0.0, %v5435
      %v5437 = vpop.f32.mrf.mxu0
      %v5438 = vadd.f32 0.0, %v5437
      %5439 = vmatmul.bf16.gmra.mxu0 %v5366
      %v5440 = vpop.f32.mrf.mxu0
      %v5441 = vadd.f32 0.0, %v5440
      %v5442 = vpop.f32.mrf.mxu0
      %v5443 = vadd.f32 0.0, %v5442
      %5444 = vmatmul.bf16.gmra.mxu0 %v5369
      %v5445 = vpop.f32.mrf.mxu0
      %v5446 = vadd.f32 0.0, %v5445
      %v5447 = vpop.f32.mrf.mxu0
      %v5448 = vadd.f32 0.0, %v5447
      %5449 = vmatmul.bf16.gmra.mxu0 %v5372
      %v5450 = vpop.f32.mrf.mxu0
      %v5451 = vadd.f32 0.0, %v5450
      %v5452 = vpop.f32.mrf.mxu0
      %v5453 = vadd.f32 0.0, %v5452
      %5454 = vmatmul.bf16.gmra.mxu0 %v5375
      %v5455 = vpop.f32.mrf.mxu0
      %v5456 = vadd.f32 0.0, %v5455
      %v5457 = vpop.f32.mrf.mxu0
      %v5458 = vadd.f32 0.0, %v5457
      %5459 = vmatmul.bf16.gmra.mxu0 %v5378
      %v5460 = vpop.f32.mrf.mxu0
      %v5461 = vadd.f32 0.0, %v5460
      %v5462 = vpop.f32.mrf.mxu0
      %v5463 = vadd.f32 0.0, %v5462
      %5464 = vmatmul.bf16.gmra.mxu0 %v5381
      %v5465 = vpop.f32.mrf.mxu0
      %v5466 = vadd.f32 0.0, %v5465
      %v5467 = vpop.f32.mrf.mxu0
      %v5468 = vadd.f32 0.0, %v5467
      %5469 = vmatmul.bf16.gmra.mxu0 %v5384
      %v5470 = vpop.f32.mrf.mxu0
      %v5471 = vadd.f32 0.0, %v5470
      %v5472 = vpop.f32.mrf.mxu0
      %v5473 = vadd.f32 0.0, %v5472
      %5474 = vdwg.mxu0
      %v5475 = vadd.f32 %v5241, %v5396
      %v5476 = vadd.f32 %v5242, %v5398
      %v5477 = vadd.f32 %v5243, %v5401
      %v5478 = vadd.f32 %v5244, %v5403
      %v5479 = vadd.f32 %v5245, %v5406
      %v5480 = vadd.f32 %v5246, %v5408
      %v5481 = vadd.f32 %v5247, %v5411
      %v5482 = vadd.f32 %v5248, %v5413
      %v5483 = vadd.f32 %v5249, %v5416
      %v5484 = vadd.f32 %v5250, %v5418
      %v5485 = vadd.f32 %v5251, %v5421
      %v5486 = vadd.f32 %v5252, %v5423
      %v5487 = vadd.f32 %v5253, %v5426
      %v5488 = vadd.f32 %v5254, %v5428
      %v5489 = vadd.f32 %v5255, %v5431
      %v5490 = vadd.f32 %v5256, %v5433
      %v5491 = vadd.f32 %v5257, %v5436
      %v5492 = vadd.f32 %v5258, %v5438
      %v5493 = vadd.f32 %v5259, %v5441
      %v5494 = vadd.f32 %v5260, %v5443
      %v5495 = vadd.f32 %v5261, %v5446
      %v5496 = vadd.f32 %v5262, %v5448
      %v5497 = vadd.f32 %v5263, %v5451
      %v5498 = vadd.f32 %v5264, %v5453
      %v5499 = vadd.f32 %v5265, %v5456
      %v5500 = vadd.f32 %v5266, %v5458
      %v5501 = vadd.f32 %v5267, %v5461
      %v5502 = vadd.f32 %v5268, %v5463
      %v5503 = vadd.f32 %v5269, %v5466
      %v5504 = vadd.f32 %v5270, %v5468
      %v5505 = vadd.f32 %v5271, %v5471
      %v5506 = vadd.f32 %v5272, %v5473
      %s5507 = scalar_lea.vmem %s4, 208
      %v5508 = vld [vmem:[%s5507] sm:$0xf]
      %v5509 = vld [vmem:[%s5507 + $0x4] sm:$0xf]
      %v5510 = vld [vmem:[%s5507 + $0x8] sm:$0xf]
      %v5511 = vld [vmem:[%s5507 + $0xc] sm:$0xf]
      %v5516 = vunpack.c.l.b16 %v5508
      %v5517 = vunpack.c.l.b16 %v5509
      %v5518 = vunpack.c.l.b16 %v5510
      %v5519 = vunpack.c.l.b16 %v5511
      %v5520 = vpack.c.b16 %v5517, %v5516
      %v5521 = vpack.c.b16 %v5519, %v5518
      %5524 = vmatpush.bf16.msra.mxu0 0
      %5525 = vmatpush.bf16.msra.mxu0 0
      %5526 = vmatpush.bf16.msra.mxu0 0
      %5527 = vmatpush.bf16.msra.mxu0 0
      %5528 = vmatpush.bf16.msra.mxu0 0
      %5529 = vmatpush.bf16.msra.mxu0 0
      %5530 = vmatpush.bf16.msra.mxu0 %v5521
      %5531 = vmatpush.bf16.msra.mxu0 %v5520
      %5532 = vmatmul.bf16.gmra.mxu0 %v3465
      %v5533 = vpop.f32.mrf.mxu0
      %v5534 = vadd.f32 0.0, %v5533
      %v5535 = vpop.f32.mrf.mxu0
      %v5536 = vadd.f32 0.0, %v5535
      %5537 = vmatmul.bf16.gmra.mxu0 %v3468
      %v5538 = vpop.f32.mrf.mxu0
      %v5539 = vadd.f32 0.0, %v5538
      %v5540 = vpop.f32.mrf.mxu0
      %v5541 = vadd.f32 0.0, %v5540
      %5542 = vmatmul.bf16.gmra.mxu0 %v3471
      %v5543 = vpop.f32.mrf.mxu0
      %v5544 = vadd.f32 0.0, %v5543
      %v5545 = vpop.f32.mrf.mxu0
      %v5546 = vadd.f32 0.0, %v5545
      %5547 = vmatmul.bf16.gmra.mxu0 %v3474
      %v5548 = vpop.f32.mrf.mxu0
      %v5549 = vadd.f32 0.0, %v5548
      %v5550 = vpop.f32.mrf.mxu0
      %v5551 = vadd.f32 0.0, %v5550
      %5552 = vmatmul.bf16.gmra.mxu0 %v3477
      %v5553 = vpop.f32.mrf.mxu0
      %v5554 = vadd.f32 0.0, %v5553
      %v5555 = vpop.f32.mrf.mxu0
      %v5556 = vadd.f32 0.0, %v5555
      %5557 = vmatmul.bf16.gmra.mxu0 %v3480
      %v5558 = vpop.f32.mrf.mxu0
      %v5559 = vadd.f32 0.0, %v5558
      %v5560 = vpop.f32.mrf.mxu0
      %v5561 = vadd.f32 0.0, %v5560
      %5562 = vmatmul.bf16.gmra.mxu0 %v3483
      %v5563 = vpop.f32.mrf.mxu0
      %v5564 = vadd.f32 0.0, %v5563
      %v5565 = vpop.f32.mrf.mxu0
      %v5566 = vadd.f32 0.0, %v5565
      %5567 = vmatmul.bf16.gmra.mxu0 %v3486
      %v5568 = vpop.f32.mrf.mxu0
      %v5569 = vadd.f32 0.0, %v5568
      %v5570 = vpop.f32.mrf.mxu0
      %v5571 = vadd.f32 0.0, %v5570
      %5572 = vmatmul.bf16.gmra.mxu0 %v3489
      %v5573 = vpop.f32.mrf.mxu0
      %v5574 = vadd.f32 0.0, %v5573
      %v5575 = vpop.f32.mrf.mxu0
      %v5576 = vadd.f32 0.0, %v5575
      %5577 = vmatmul.bf16.gmra.mxu0 %v3492
      %v5578 = vpop.f32.mrf.mxu0
      %v5579 = vadd.f32 0.0, %v5578
      %v5580 = vpop.f32.mrf.mxu0
      %v5581 = vadd.f32 0.0, %v5580
      %5582 = vmatmul.bf16.gmra.mxu0 %v3495
      %v5583 = vpop.f32.mrf.mxu0
      %v5584 = vadd.f32 0.0, %v5583
      %v5585 = vpop.f32.mrf.mxu0
      %v5586 = vadd.f32 0.0, %v5585
      %5587 = vmatmul.bf16.gmra.mxu0 %v3498
      %v5588 = vpop.f32.mrf.mxu0
      %v5589 = vadd.f32 0.0, %v5588
      %v5590 = vpop.f32.mrf.mxu0
      %v5591 = vadd.f32 0.0, %v5590
      %5592 = vmatmul.bf16.gmra.mxu0 %v3501
      %v5593 = vpop.f32.mrf.mxu0
      %v5594 = vadd.f32 0.0, %v5593
      %v5595 = vpop.f32.mrf.mxu0
      %v5596 = vadd.f32 0.0, %v5595
      %5597 = vmatmul.bf16.gmra.mxu0 %v3504
      %v5598 = vpop.f32.mrf.mxu0
      %v5599 = vadd.f32 0.0, %v5598
      %v5600 = vpop.f32.mrf.mxu0
      %v5601 = vadd.f32 0.0, %v5600
      %5602 = vmatmul.bf16.gmra.mxu0 %v3507
      %v5603 = vpop.f32.mrf.mxu0
      %v5604 = vadd.f32 0.0, %v5603
      %v5605 = vpop.f32.mrf.mxu0
      %v5606 = vadd.f32 0.0, %v5605
      %5607 = vmatmul.bf16.gmra.mxu0 %v3510
      %v5608 = vpop.f32.mrf.mxu0
      %v5609 = vadd.f32 0.0, %v5608
      %v5610 = vpop.f32.mrf.mxu0
      %v5611 = vadd.f32 0.0, %v5610
      %5612 = vdwg.mxu0
      %v5613 = vadd.f32 %v5475, %v5534
      %v5614 = vadd.f32 %v5476, %v5536
      %v5615 = vadd.f32 %v5477, %v5539
      %v5616 = vadd.f32 %v5478, %v5541
      %v5617 = vadd.f32 %v5479, %v5544
      %v5618 = vadd.f32 %v5480, %v5546
      %v5619 = vadd.f32 %v5481, %v5549
      %v5620 = vadd.f32 %v5482, %v5551
      %v5621 = vadd.f32 %v5483, %v5554
      %v5622 = vadd.f32 %v5484, %v5556
      %v5623 = vadd.f32 %v5485, %v5559
      %v5624 = vadd.f32 %v5486, %v5561
      %v5625 = vadd.f32 %v5487, %v5564
      %v5626 = vadd.f32 %v5488, %v5566
      %v5627 = vadd.f32 %v5489, %v5569
      %v5628 = vadd.f32 %v5490, %v5571
      %v5629 = vadd.f32 %v5491, %v5574
      %v5630 = vadd.f32 %v5492, %v5576
      %v5631 = vadd.f32 %v5493, %v5579
      %v5632 = vadd.f32 %v5494, %v5581
      %v5633 = vadd.f32 %v5495, %v5584
      %v5634 = vadd.f32 %v5496, %v5586
      %v5635 = vadd.f32 %v5497, %v5589
      %v5636 = vadd.f32 %v5498, %v5591
      %v5637 = vadd.f32 %v5499, %v5594
      %v5638 = vadd.f32 %v5500, %v5596
      %v5639 = vadd.f32 %v5501, %v5599
      %v5640 = vadd.f32 %v5502, %v5601
      %v5641 = vadd.f32 %v5503, %v5604
      %v5642 = vadd.f32 %v5504, %v5606
      %v5643 = vadd.f32 %v5505, %v5609
      %v5644 = vadd.f32 %v5506, %v5611
      %v5645 = vld [vmem:[#allocation2 + $0x35] sm:$0xff]
      %v5646 = vld [vmem:[#allocation2 + $0x3d] sm:$0xff]
      %v5647 = vld [vmem:[#allocation2 + $0x45] sm:$0xff]
      %v5648 = vld [vmem:[#allocation2 + $0x4d] sm:$0xff]
      %v5649 = vld [vmem:[#allocation2 + $0x55] sm:$0xff]
      %v5650 = vld [vmem:[#allocation2 + $0x5d] sm:$0xff]
      %v5651 = vld [vmem:[#allocation2 + $0x65] sm:$0xff]
      %v5652 = vld [vmem:[#allocation2 + $0x6d] sm:$0xff]
      %v5653 = vld [vmem:[#allocation2 + $0x75] sm:$0xff]
      %v5654 = vld [vmem:[#allocation2 + $0x7d] sm:$0xff]
      %v5655 = vld [vmem:[#allocation2 + $0x85] sm:$0xff]
      %v5656 = vld [vmem:[#allocation2 + $0x8d] sm:$0xff]
      %v5657 = vld [vmem:[#allocation2 + $0x95] sm:$0xff]
      %v5658 = vld [vmem:[#allocation2 + $0x9d] sm:$0xff]
      %v5659 = vld [vmem:[#allocation2 + $0xa5] sm:$0xff]
      %v5660 = vld [vmem:[#allocation2 + $0xad] sm:$0xff]
      %v5661 = vld [vmem:[#allocation2 + $0xb5] sm:$0xff]
      %v5662 = vld [vmem:[#allocation2 + $0xbd] sm:$0xff]
      %v5663 = vld [vmem:[#allocation2 + $0xc5] sm:$0xff]
      %v5664 = vld [vmem:[#allocation2 + $0xcd] sm:$0xff]
      %v5665 = vld [vmem:[#allocation2 + $0xd5] sm:$0xff]
      %v5666 = vld [vmem:[#allocation2 + $0xdd] sm:$0xff]
      %v5667 = vld [vmem:[#allocation2 + $0xe5] sm:$0xff]
      %v5668 = vld [vmem:[#allocation2 + $0xed] sm:$0xff]
      %v5669 = vld [vmem:[#allocation2 + $0xf5] sm:$0xff]
      %v5670 = vld [vmem:[#allocation2 + $0xfd] sm:$0xff]
      %v5671 = vld [vmem:[#allocation2 + $0x105] sm:$0xff]
      %v5672 = vld [vmem:[#allocation2 + $0x10d] sm:$0xff]
      %v5673 = vld [vmem:[#allocation2 + $0x115] sm:$0xff]
      %v5674 = vld [vmem:[#allocation2 + $0x11d] sm:$0xff]
      %v5675 = vld [vmem:[#allocation2 + $0x125] sm:$0xff]
      %v5676 = vld [vmem:[#allocation2 + $0x12d] sm:$0xff]
      %v5677 = vpack.c.bf16 %v5646, %v5645
      %v5678 = vpack.c.bf16 %v5648, %v5647
      %v5679 = vpack.c.bf16 %v5650, %v5649
      %v5680 = vpack.c.bf16 %v5652, %v5651
      %v5681 = vpack.c.bf16 %v5654, %v5653
      %v5682 = vpack.c.bf16 %v5656, %v5655
      %v5683 = vpack.c.bf16 %v5658, %v5657
      %v5684 = vpack.c.bf16 %v5660, %v5659
      %v5685 = vpack.c.bf16 %v5662, %v5661
      %v5686 = vpack.c.bf16 %v5664, %v5663
      %v5687 = vpack.c.bf16 %v5666, %v5665
      %v5688 = vpack.c.bf16 %v5668, %v5667
      %v5689 = vpack.c.bf16 %v5670, %v5669
      %v5690 = vpack.c.bf16 %v5672, %v5671
      %v5691 = vpack.c.bf16 %v5674, %v5673
      %v5692 = vpack.c.bf16 %v5676, %v5675
      %s5693 = scalar_lea.vmem %s4, 224
      %v5694 = vld [vmem:[%s5693] sm:$0xf]
      %v5695 = vld [vmem:[%s5693 + $0x4] sm:$0xf]
      %v5696 = vld [vmem:[%s5693 + $0x8] sm:$0xf]
      %v5697 = vld [vmem:[%s5693 + $0xc] sm:$0xf]
      %v5702 = vunpack.c.l.b16 %v5694
      %v5703 = vunpack.c.l.b16 %v5695
      %v5704 = vunpack.c.l.b16 %v5696
      %v5705 = vunpack.c.l.b16 %v5697
      %v5706 = vpack.c.b16 %v5703, %v5702
      %v5707 = vpack.c.b16 %v5705, %v5704
      %v5711 = vsel %vm2480, %v5677, 0
      %v5714 = vsel %vm2480, %v5678, 0
      %v5717 = vsel %vm2480, %v5679, 0
      %v5720 = vsel %vm2480, %v5680, 0
      %v5723 = vsel %vm2480, %v5681, 0
      %v5726 = vsel %vm2480, %v5682, 0
      %v5729 = vsel %vm2480, %v5683, 0
      %v5732 = vsel %vm2480, %v5684, 0
      %v5735 = vsel %vm2480, %v5685, 0
      %v5738 = vsel %vm2480, %v5686, 0
      %v5741 = vsel %vm2480, %v5687, 0
      %v5744 = vsel %vm2480, %v5688, 0
      %v5747 = vsel %vm2480, %v5689, 0
      %v5750 = vsel %vm2480, %v5690, 0
      %v5753 = vsel %vm2480, %v5691, 0
      %v5756 = vsel %vm2480, %v5692, 0
      %5758 = vmatpush.bf16.msra.mxu0 0
      %5759 = vmatpush.bf16.msra.mxu0 0
      %5760 = vmatpush.bf16.msra.mxu0 0
      %5761 = vmatpush.bf16.msra.mxu0 0
      %5762 = vmatpush.bf16.msra.mxu0 0
      %5763 = vmatpush.bf16.msra.mxu0 0
      %5764 = vmatpush.bf16.msra.mxu0 %v5707
      %5765 = vmatpush.bf16.msra.mxu0 %v5706
      %5766 = vmatmul.bf16.gmra.mxu0 %v5711
      %v5767 = vpop.f32.mrf.mxu0
      %v5768 = vadd.f32 0.0, %v5767
      %v5769 = vpop.f32.mrf.mxu0
      %v5770 = vadd.f32 0.0, %v5769
      %5771 = vmatmul.bf16.gmra.mxu0 %v5714
      %v5772 = vpop.f32.mrf.mxu0
      %v5773 = vadd.f32 0.0, %v5772
      %v5774 = vpop.f32.mrf.mxu0
      %v5775 = vadd.f32 0.0, %v5774
      %5776 = vmatmul.bf16.gmra.mxu0 %v5717
      %v5777 = vpop.f32.mrf.mxu0
      %v5778 = vadd.f32 0.0, %v5777
      %v5779 = vpop.f32.mrf.mxu0
      %v5780 = vadd.f32 0.0, %v5779
      %5781 = vmatmul.bf16.gmra.mxu0 %v5720
      %v5782 = vpop.f32.mrf.mxu0
      %v5783 = vadd.f32 0.0, %v5782
      %v5784 = vpop.f32.mrf.mxu0
      %v5785 = vadd.f32 0.0, %v5784
      %5786 = vmatmul.bf16.gmra.mxu0 %v5723
      %v5787 = vpop.f32.mrf.mxu0
      %v5788 = vadd.f32 0.0, %v5787
      %v5789 = vpop.f32.mrf.mxu0
      %v5790 = vadd.f32 0.0, %v5789
      %5791 = vmatmul.bf16.gmra.mxu0 %v5726
      %v5792 = vpop.f32.mrf.mxu0
      %v5793 = vadd.f32 0.0, %v5792
      %v5794 = vpop.f32.mrf.mxu0
      %v5795 = vadd.f32 0.0, %v5794
      %5796 = vmatmul.bf16.gmra.mxu0 %v5729
      %v5797 = vpop.f32.mrf.mxu0
      %v5798 = vadd.f32 0.0, %v5797
      %v5799 = vpop.f32.mrf.mxu0
      %v5800 = vadd.f32 0.0, %v5799
      %5801 = vmatmul.bf16.gmra.mxu0 %v5732
      %v5802 = vpop.f32.mrf.mxu0
      %v5803 = vadd.f32 0.0, %v5802
      %v5804 = vpop.f32.mrf.mxu0
      %v5805 = vadd.f32 0.0, %v5804
      %5806 = vmatmul.bf16.gmra.mxu0 %v5735
      %v5807 = vpop.f32.mrf.mxu0
      %v5808 = vadd.f32 0.0, %v5807
      %v5809 = vpop.f32.mrf.mxu0
      %v5810 = vadd.f32 0.0, %v5809
      %5811 = vmatmul.bf16.gmra.mxu0 %v5738
      %v5812 = vpop.f32.mrf.mxu0
      %v5813 = vadd.f32 0.0, %v5812
      %v5814 = vpop.f32.mrf.mxu0
      %v5815 = vadd.f32 0.0, %v5814
      %5816 = vmatmul.bf16.gmra.mxu0 %v5741
      %v5817 = vpop.f32.mrf.mxu0
      %v5818 = vadd.f32 0.0, %v5817
      %v5819 = vpop.f32.mrf.mxu0
      %v5820 = vadd.f32 0.0, %v5819
      %5821 = vmatmul.bf16.gmra.mxu0 %v5744
      %v5822 = vpop.f32.mrf.mxu0
      %v5823 = vadd.f32 0.0, %v5822
      %v5824 = vpop.f32.mrf.mxu0
      %v5825 = vadd.f32 0.0, %v5824
      %5826 = vmatmul.bf16.gmra.mxu0 %v5747
      %v5827 = vpop.f32.mrf.mxu0
      %v5828 = vadd.f32 0.0, %v5827
      %v5829 = vpop.f32.mrf.mxu0
      %v5830 = vadd.f32 0.0, %v5829
      %5831 = vmatmul.bf16.gmra.mxu0 %v5750
      %v5832 = vpop.f32.mrf.mxu0
      %v5833 = vadd.f32 0.0, %v5832
      %v5834 = vpop.f32.mrf.mxu0
      %v5835 = vadd.f32 0.0, %v5834
      %5836 = vmatmul.bf16.gmra.mxu0 %v5753
      %v5837 = vpop.f32.mrf.mxu0
      %v5838 = vadd.f32 0.0, %v5837
      %v5839 = vpop.f32.mrf.mxu0
      %v5840 = vadd.f32 0.0, %v5839
      %5841 = vmatmul.bf16.gmra.mxu0 %v5756
      %v5842 = vpop.f32.mrf.mxu0
      %v5843 = vadd.f32 0.0, %v5842
      %v5844 = vpop.f32.mrf.mxu0
      %v5845 = vadd.f32 0.0, %v5844
      %5846 = vdwg.mxu0
      %v5847 = vadd.f32 %v5613, %v5768
      %v5848 = vadd.f32 %v5614, %v5770
      %v5849 = vadd.f32 %v5615, %v5773
      %v5850 = vadd.f32 %v5616, %v5775
      %v5851 = vadd.f32 %v5617, %v5778
      %v5852 = vadd.f32 %v5618, %v5780
      %v5853 = vadd.f32 %v5619, %v5783
      %v5854 = vadd.f32 %v5620, %v5785
      %v5855 = vadd.f32 %v5621, %v5788
      %v5856 = vadd.f32 %v5622, %v5790
      %v5857 = vadd.f32 %v5623, %v5793
      %v5858 = vadd.f32 %v5624, %v5795
      %v5859 = vadd.f32 %v5625, %v5798
      %v5860 = vadd.f32 %v5626, %v5800
      %v5861 = vadd.f32 %v5627, %v5803
      %v5862 = vadd.f32 %v5628, %v5805
      %v5863 = vadd.f32 %v5629, %v5808
      %v5864 = vadd.f32 %v5630, %v5810
      %v5865 = vadd.f32 %v5631, %v5813
      %v5866 = vadd.f32 %v5632, %v5815
      %v5867 = vadd.f32 %v5633, %v5818
      %v5868 = vadd.f32 %v5634, %v5820
      %v5869 = vadd.f32 %v5635, %v5823
      %v5870 = vadd.f32 %v5636, %v5825
      %v5871 = vadd.f32 %v5637, %v5828
      %v5872 = vadd.f32 %v5638, %v5830
      %v5873 = vadd.f32 %v5639, %v5833
      %v5874 = vadd.f32 %v5640, %v5835
      %v5875 = vadd.f32 %v5641, %v5838
      %v5876 = vadd.f32 %v5642, %v5840
      %v5877 = vadd.f32 %v5643, %v5843
      %v5878 = vadd.f32 %v5644, %v5845
      %v5879 = vld [vmem:[#allocation2 + $0x51] sm:$0xff]
      %v5880 = vld [vmem:[#allocation2 + $0x59] sm:$0xff]
      %v5881 = vld [vmem:[#allocation2 + $0x61] sm:$0xff]
      %v5882 = vld [vmem:[#allocation2 + $0x69] sm:$0xff]
      %v5883 = vld [vmem:[#allocation2 + $0x71] sm:$0xff]
      %v5884 = vld [vmem:[#allocation2 + $0x79] sm:$0xff]
      %v5885 = vld [vmem:[#allocation2 + $0x81] sm:$0xff]
      %v5886 = vld [vmem:[#allocation2 + $0x89] sm:$0xff]
      %v5887 = vld [vmem:[#allocation2 + $0x91] sm:$0xff]
      %v5888 = vld [vmem:[#allocation2 + $0x99] sm:$0xff]
      %v5889 = vld [vmem:[#allocation2 + $0xa1] sm:$0xff]
      %v5890 = vld [vmem:[#allocation2 + $0xa9] sm:$0xff]
      %v5891 = vld [vmem:[#allocation2 + $0xb1] sm:$0xff]
      %v5892 = vld [vmem:[#allocation2 + $0xb9] sm:$0xff]
      %v5893 = vld [vmem:[#allocation2 + $0xc1] sm:$0xff]
      %v5894 = vld [vmem:[#allocation2 + $0xc9] sm:$0xff]
      %v5895 = vld [vmem:[#allocation2 + $0xd1] sm:$0xff]
      %v5896 = vld [vmem:[#allocation2 + $0xd9] sm:$0xff]
      %v5897 = vld [vmem:[#allocation2 + $0xe1] sm:$0xff]
      %v5898 = vld [vmem:[#allocation2 + $0xe9] sm:$0xff]
      %v5899 = vld [vmem:[#allocation2 + $0xf1] sm:$0xff]
      %v5900 = vld [vmem:[#allocation2 + $0xf9] sm:$0xff]
      %v5901 = vld [vmem:[#allocation2 + $0x101] sm:$0xff]
      %v5902 = vld [vmem:[#allocation2 + $0x109] sm:$0xff]
      %v5903 = vld [vmem:[#allocation2 + $0x111] sm:$0xff]
      %v5904 = vld [vmem:[#allocation2 + $0x119] sm:$0xff]
      %v5905 = vld [vmem:[#allocation2 + $0x121] sm:$0xff]
      %v5906 = vld [vmem:[#allocation2 + $0x129] sm:$0xff]
      %v5907 = vld [vmem:[#allocation2 + $0x131] sm:$0xff]
      %v5908 = vld [vmem:[#allocation2 + $0x139] sm:$0xff]
      %v5909 = vld [vmem:[#allocation2 + $0x141] sm:$0xff]
      %v5910 = vld [vmem:[#allocation2 + $0x149] sm:$0xff]
      %v5911 = vpack.c.bf16 %v5880, %v5879
      %v5912 = vpack.c.bf16 %v5882, %v5881
      %v5913 = vpack.c.bf16 %v5884, %v5883
      %v5914 = vpack.c.bf16 %v5886, %v5885
      %v5915 = vpack.c.bf16 %v5888, %v5887
      %v5916 = vpack.c.bf16 %v5890, %v5889
      %v5917 = vpack.c.bf16 %v5892, %v5891
      %v5918 = vpack.c.bf16 %v5894, %v5893
      %v5919 = vpack.c.bf16 %v5896, %v5895
      %v5920 = vpack.c.bf16 %v5898, %v5897
      %v5921 = vpack.c.bf16 %v5900, %v5899
      %v5922 = vpack.c.bf16 %v5902, %v5901
      %v5923 = vpack.c.bf16 %v5904, %v5903
      %v5924 = vpack.c.bf16 %v5906, %v5905
      %v5925 = vpack.c.bf16 %v5908, %v5907
      %v5926 = vpack.c.bf16 %v5910, %v5909
      %s5927 = scalar_lea.vmem %s4, 240
      %v5928 = vld [vmem:[%s5927] sm:$0xf]
      %v5929 = vld [vmem:[%s5927 + $0x4] sm:$0xf]
      %v5930 = vld [vmem:[%s5927 + $0x8] sm:$0xf]
      %v5931 = vld [vmem:[%s5927 + $0xc] sm:$0xf]
      %v5936 = vunpack.c.l.b16 %v5928
      %v5937 = vunpack.c.l.b16 %v5929
      %v5938 = vunpack.c.l.b16 %v5930
      %v5939 = vunpack.c.l.b16 %v5931
      %v5940 = vpack.c.b16 %v5937, %v5936
      %v5941 = vpack.c.b16 %v5939, %v5938
      %v5945 = vsel %vm2480, %v5911, 0
      %v5948 = vsel %vm2480, %v5912, 0
      %v5951 = vsel %vm2480, %v5913, 0
      %v5954 = vsel %vm2480, %v5914, 0
      %v5957 = vsel %vm2480, %v5915, 0
      %v5960 = vsel %vm2480, %v5916, 0
      %v5963 = vsel %vm2480, %v5917, 0
      %v5966 = vsel %vm2480, %v5918, 0
      %v5969 = vsel %vm2480, %v5919, 0
      %v5972 = vsel %vm2480, %v5920, 0
      %v5975 = vsel %vm2480, %v5921, 0
      %v5978 = vsel %vm2480, %v5922, 0
      %v5981 = vsel %vm2480, %v5923, 0
      %v5984 = vsel %vm2480, %v5924, 0
      %v5987 = vsel %vm2480, %v5925, 0
      %v5990 = vsel %vm2480, %v5926, 0
      %5992 = vmatpush.bf16.msra.mxu0 0
      %5993 = vmatpush.bf16.msra.mxu0 0
      %5994 = vmatpush.bf16.msra.mxu0 0
      %5995 = vmatpush.bf16.msra.mxu0 0
      %5996 = vmatpush.bf16.msra.mxu0 0
      %5997 = vmatpush.bf16.msra.mxu0 0
      %5998 = vmatpush.bf16.msra.mxu0 %v5941
      %5999 = vmatpush.bf16.msra.mxu0 %v5940
      %6000 = vmatmul.bf16.gmra.mxu0 %v5945
      %v6001 = vpop.f32.mrf.mxu0
      %v6002 = vadd.f32 0.0, %v6001
      %v6003 = vpop.f32.mrf.mxu0
      %v6004 = vadd.f32 0.0, %v6003
      %6005 = vmatmul.bf16.gmra.mxu0 %v5948
      %v6006 = vpop.f32.mrf.mxu0
      %v6007 = vadd.f32 0.0, %v6006
      %v6008 = vpop.f32.mrf.mxu0
      %v6009 = vadd.f32 0.0, %v6008
      %6010 = vmatmul.bf16.gmra.mxu0 %v5951
      %v6011 = vpop.f32.mrf.mxu0
      %v6012 = vadd.f32 0.0, %v6011
      %v6013 = vpop.f32.mrf.mxu0
      %v6014 = vadd.f32 0.0, %v6013
      %6015 = vmatmul.bf16.gmra.mxu0 %v5954
      %v6016 = vpop.f32.mrf.mxu0
      %v6017 = vadd.f32 0.0, %v6016
      %v6018 = vpop.f32.mrf.mxu0
      %v6019 = vadd.f32 0.0, %v6018
      %6020 = vmatmul.bf16.gmra.mxu0 %v5957
      %v6021 = vpop.f32.mrf.mxu0
      %v6022 = vadd.f32 0.0, %v6021
      %v6023 = vpop.f32.mrf.mxu0
      %v6024 = vadd.f32 0.0, %v6023
      %6025 = vmatmul.bf16.gmra.mxu0 %v5960
      %v6026 = vpop.f32.mrf.mxu0
      %v6027 = vadd.f32 0.0, %v6026
      %v6028 = vpop.f32.mrf.mxu0
      %v6029 = vadd.f32 0.0, %v6028
      %6030 = vmatmul.bf16.gmra.mxu0 %v5963
      %v6031 = vpop.f32.mrf.mxu0
      %v6032 = vadd.f32 0.0, %v6031
      %v6033 = vpop.f32.mrf.mxu0
      %v6034 = vadd.f32 0.0, %v6033
      %6035 = vmatmul.bf16.gmra.mxu0 %v5966
      %v6036 = vpop.f32.mrf.mxu0
      %v6037 = vadd.f32 0.0, %v6036
      %v6038 = vpop.f32.mrf.mxu0
      %v6039 = vadd.f32 0.0, %v6038
      %6040 = vmatmul.bf16.gmra.mxu0 %v5969
      %v6041 = vpop.f32.mrf.mxu0
      %v6042 = vadd.f32 0.0, %v6041
      %v6043 = vpop.f32.mrf.mxu0
      %v6044 = vadd.f32 0.0, %v6043
      %6045 = vmatmul.bf16.gmra.mxu0 %v5972
      %v6046 = vpop.f32.mrf.mxu0
      %v6047 = vadd.f32 0.0, %v6046
      %v6048 = vpop.f32.mrf.mxu0
      %v6049 = vadd.f32 0.0, %v6048
      %6050 = vmatmul.bf16.gmra.mxu0 %v5975
      %v6051 = vpop.f32.mrf.mxu0
      %v6052 = vadd.f32 0.0, %v6051
      %v6053 = vpop.f32.mrf.mxu0
      %v6054 = vadd.f32 0.0, %v6053
      %6055 = vmatmul.bf16.gmra.mxu0 %v5978
      %v6056 = vpop.f32.mrf.mxu0
      %v6057 = vadd.f32 0.0, %v6056
      %v6058 = vpop.f32.mrf.mxu0
      %v6059 = vadd.f32 0.0, %v6058
      %6060 = vmatmul.bf16.gmra.mxu0 %v5981
      %v6061 = vpop.f32.mrf.mxu0
      %v6062 = vadd.f32 0.0, %v6061
      %v6063 = vpop.f32.mrf.mxu0
      %v6064 = vadd.f32 0.0, %v6063
      %6065 = vmatmul.bf16.gmra.mxu0 %v5984
      %v6066 = vpop.f32.mrf.mxu0
      %v6067 = vadd.f32 0.0, %v6066
      %v6068 = vpop.f32.mrf.mxu0
      %v6069 = vadd.f32 0.0, %v6068
      %6070 = vmatmul.bf16.gmra.mxu0 %v5987
      %v6071 = vpop.f32.mrf.mxu0
      %v6072 = vadd.f32 0.0, %v6071
      %v6073 = vpop.f32.mrf.mxu0
      %v6074 = vadd.f32 0.0, %v6073
      %6075 = vmatmul.bf16.gmra.mxu0 %v5990
      %v6076 = vpop.f32.mrf.mxu0
      %v6077 = vadd.f32 0.0, %v6076
      %v6078 = vpop.f32.mrf.mxu0
      %v6079 = vadd.f32 0.0, %v6078
      %6080 = vdwg.mxu0
      %v6081 = vadd.f32 %v5847, %v6002
      %v6082 = vadd.f32 %v5848, %v6004
      %v6083 = vadd.f32 %v5849, %v6007
      %v6084 = vadd.f32 %v5850, %v6009
      %v6085 = vadd.f32 %v5851, %v6012
      %v6086 = vadd.f32 %v5852, %v6014
      %v6087 = vadd.f32 %v5853, %v6017
      %v6088 = vadd.f32 %v5854, %v6019
      %v6089 = vadd.f32 %v5855, %v6022
      %v6090 = vadd.f32 %v5856, %v6024
      %v6091 = vadd.f32 %v5857, %v6027
      %v6092 = vadd.f32 %v5858, %v6029
      %v6093 = vadd.f32 %v5859, %v6032
      %v6094 = vadd.f32 %v5860, %v6034
      %v6095 = vadd.f32 %v5861, %v6037
      %v6096 = vadd.f32 %v5862, %v6039
      %v6097 = vadd.f32 %v5863, %v6042
      %v6098 = vadd.f32 %v5864, %v6044
      %v6099 = vadd.f32 %v5865, %v6047
      %v6100 = vadd.f32 %v5866, %v6049
      %v6101 = vadd.f32 %v5867, %v6052
      %v6102 = vadd.f32 %v5868, %v6054
      %v6103 = vadd.f32 %v5869, %v6057
      %v6104 = vadd.f32 %v5870, %v6059
      %v6105 = vadd.f32 %v5871, %v6062
      %v6106 = vadd.f32 %v5872, %v6064
      %v6107 = vadd.f32 %v5873, %v6067
      %v6108 = vadd.f32 %v5874, %v6069
      %v6109 = vadd.f32 %v5875, %v6072
      %v6110 = vadd.f32 %v5876, %v6074
      %v6111 = vadd.f32 %v5877, %v6077
      %v6112 = vadd.f32 %v5878, %v6079
      %v6113 = vld [vmem:[#allocation2 + $0x53] sm:$0xff]
      %v6114 = vld [vmem:[#allocation2 + $0x5b] sm:$0xff]
      %v6115 = vld [vmem:[#allocation2 + $0x63] sm:$0xff]
      %v6116 = vld [vmem:[#allocation2 + $0x6b] sm:$0xff]
      %v6117 = vld [vmem:[#allocation2 + $0x73] sm:$0xff]
      %v6118 = vld [vmem:[#allocation2 + $0x7b] sm:$0xff]
      %v6119 = vld [vmem:[#allocation2 + $0x83] sm:$0xff]
      %v6120 = vld [vmem:[#allocation2 + $0x8b] sm:$0xff]
      %v6121 = vld [vmem:[#allocation2 + $0x93] sm:$0xff]
      %v6122 = vld [vmem:[#allocation2 + $0x9b] sm:$0xff]
      %v6123 = vld [vmem:[#allocation2 + $0xa3] sm:$0xff]
      %v6124 = vld [vmem:[#allocation2 + $0xab] sm:$0xff]
      %v6125 = vld [vmem:[#allocation2 + $0xb3] sm:$0xff]
      %v6126 = vld [vmem:[#allocation2 + $0xbb] sm:$0xff]
      %v6127 = vld [vmem:[#allocation2 + $0xc3] sm:$0xff]
      %v6128 = vld [vmem:[#allocation2 + $0xcb] sm:$0xff]
      %v6129 = vld [vmem:[#allocation2 + $0xd3] sm:$0xff]
      %v6130 = vld [vmem:[#allocation2 + $0xdb] sm:$0xff]
      %v6131 = vld [vmem:[#allocation2 + $0xe3] sm:$0xff]
      %v6132 = vld [vmem:[#allocation2 + $0xeb] sm:$0xff]
      %v6133 = vld [vmem:[#allocation2 + $0xf3] sm:$0xff]
      %v6134 = vld [vmem:[#allocation2 + $0xfb] sm:$0xff]
      %v6135 = vld [vmem:[#allocation2 + $0x103] sm:$0xff]
      %v6136 = vld [vmem:[#allocation2 + $0x10b] sm:$0xff]
      %v6137 = vld [vmem:[#allocation2 + $0x113] sm:$0xff]
      %v6138 = vld [vmem:[#allocation2 + $0x11b] sm:$0xff]
      %v6139 = vld [vmem:[#allocation2 + $0x123] sm:$0xff]
      %v6140 = vld [vmem:[#allocation2 + $0x12b] sm:$0xff]
      %v6141 = vld [vmem:[#allocation2 + $0x133] sm:$0xff]
      %v6142 = vld [vmem:[#allocation2 + $0x13b] sm:$0xff]
      %v6143 = vld [vmem:[#allocation2 + $0x143] sm:$0xff]
      %v6144 = vld [vmem:[#allocation2 + $0x14b] sm:$0xff]
      %v6145 = vpack.c.bf16 %v6114, %v6113
      %v6146 = vpack.c.bf16 %v6116, %v6115
      %v6147 = vpack.c.bf16 %v6118, %v6117
      %v6148 = vpack.c.bf16 %v6120, %v6119
      %v6149 = vpack.c.bf16 %v6122, %v6121
      %v6150 = vpack.c.bf16 %v6124, %v6123
      %v6151 = vpack.c.bf16 %v6126, %v6125
      %v6152 = vpack.c.bf16 %v6128, %v6127
      %v6153 = vpack.c.bf16 %v6130, %v6129
      %v6154 = vpack.c.bf16 %v6132, %v6131
      %v6155 = vpack.c.bf16 %v6134, %v6133
      %v6156 = vpack.c.bf16 %v6136, %v6135
      %v6157 = vpack.c.bf16 %v6138, %v6137
      %v6158 = vpack.c.bf16 %v6140, %v6139
      %v6159 = vpack.c.bf16 %v6142, %v6141
      %v6160 = vpack.c.bf16 %v6144, %v6143
      %s6161 = scalar_lea.vmem %s4, 256
      %v6162 = vld [vmem:[%s6161] sm:$0xf]
      %v6163 = vld [vmem:[%s6161 + $0x4] sm:$0xf]
      %v6164 = vld [vmem:[%s6161 + $0x8] sm:$0xf]
      %v6165 = vld [vmem:[%s6161 + $0xc] sm:$0xf]
      %v6170 = vunpack.c.l.b16 %v6162
      %v6171 = vunpack.c.l.b16 %v6163
      %v6172 = vunpack.c.l.b16 %v6164
      %v6173 = vunpack.c.l.b16 %v6165
      %v6174 = vpack.c.b16 %v6171, %v6170
      %v6175 = vpack.c.b16 %v6173, %v6172
      %v6179 = vsel %vm2480, %v6145, 0
      %v6182 = vsel %vm2480, %v6146, 0
      %v6185 = vsel %vm2480, %v6147, 0
      %v6188 = vsel %vm2480, %v6148, 0
      %v6191 = vsel %vm2480, %v6149, 0
      %v6194 = vsel %vm2480, %v6150, 0
      %v6197 = vsel %vm2480, %v6151, 0
      %v6200 = vsel %vm2480, %v6152, 0
      %v6203 = vsel %vm2480, %v6153, 0
      %v6206 = vsel %vm2480, %v6154, 0
      %v6209 = vsel %vm2480, %v6155, 0
      %v6212 = vsel %vm2480, %v6156, 0
      %v6215 = vsel %vm2480, %v6157, 0
      %v6218 = vsel %vm2480, %v6158, 0
      %v6221 = vsel %vm2480, %v6159, 0
      %v6224 = vsel %vm2480, %v6160, 0
      %6226 = vmatpush.bf16.msra.mxu0 0
      %6227 = vmatpush.bf16.msra.mxu0 0
      %6228 = vmatpush.bf16.msra.mxu0 0
      %6229 = vmatpush.bf16.msra.mxu0 0
      %6230 = vmatpush.bf16.msra.mxu0 0
      %6231 = vmatpush.bf16.msra.mxu0 0
      %6232 = vmatpush.bf16.msra.mxu0 %v6175
      %6233 = vmatpush.bf16.msra.mxu0 %v6174
      %6234 = vmatmul.bf16.gmra.mxu0 %v6179
      %v6235 = vpop.f32.mrf.mxu0
      %v6236 = vadd.f32 0.0, %v6235
      %v6237 = vpop.f32.mrf.mxu0
      %v6238 = vadd.f32 0.0, %v6237
      %6239 = vmatmul.bf16.gmra.mxu0 %v6182
      %v6240 = vpop.f32.mrf.mxu0
      %v6241 = vadd.f32 0.0, %v6240
      %v6242 = vpop.f32.mrf.mxu0
      %v6243 = vadd.f32 0.0, %v6242
      %6244 = vmatmul.bf16.gmra.mxu0 %v6185
      %v6245 = vpop.f32.mrf.mxu0
      %v6246 = vadd.f32 0.0, %v6245
      %v6247 = vpop.f32.mrf.mxu0
      %v6248 = vadd.f32 0.0, %v6247
      %6249 = vmatmul.bf16.gmra.mxu0 %v6188
      %v6250 = vpop.f32.mrf.mxu0
      %v6251 = vadd.f32 0.0, %v6250
      %v6252 = vpop.f32.mrf.mxu0
      %v6253 = vadd.f32 0.0, %v6252
      %6254 = vmatmul.bf16.gmra.mxu0 %v6191
      %v6255 = vpop.f32.mrf.mxu0
      %v6256 = vadd.f32 0.0, %v6255
      %v6257 = vpop.f32.mrf.mxu0
      %v6258 = vadd.f32 0.0, %v6257
      %6259 = vmatmul.bf16.gmra.mxu0 %v6194
      %v6260 = vpop.f32.mrf.mxu0
      %v6261 = vadd.f32 0.0, %v6260
      %v6262 = vpop.f32.mrf.mxu0
      %v6263 = vadd.f32 0.0, %v6262
      %6264 = vmatmul.bf16.gmra.mxu0 %v6197
      %v6265 = vpop.f32.mrf.mxu0
      %v6266 = vadd.f32 0.0, %v6265
      %v6267 = vpop.f32.mrf.mxu0
      %v6268 = vadd.f32 0.0, %v6267
      %6269 = vmatmul.bf16.gmra.mxu0 %v6200
      %v6270 = vpop.f32.mrf.mxu0
      %v6271 = vadd.f32 0.0, %v6270
      %v6272 = vpop.f32.mrf.mxu0
      %v6273 = vadd.f32 0.0, %v6272
      %6274 = vmatmul.bf16.gmra.mxu0 %v6203
      %v6275 = vpop.f32.mrf.mxu0
      %v6276 = vadd.f32 0.0, %v6275
      %v6277 = vpop.f32.mrf.mxu0
      %v6278 = vadd.f32 0.0, %v6277
      %6279 = vmatmul.bf16.gmra.mxu0 %v6206
      %v6280 = vpop.f32.mrf.mxu0
      %v6281 = vadd.f32 0.0, %v6280
      %v6282 = vpop.f32.mrf.mxu0
      %v6283 = vadd.f32 0.0, %v6282
      %6284 = vmatmul.bf16.gmra.mxu0 %v6209
      %v6285 = vpop.f32.mrf.mxu0
      %v6286 = vadd.f32 0.0, %v6285
      %v6287 = vpop.f32.mrf.mxu0
      %v6288 = vadd.f32 0.0, %v6287
      %6289 = vmatmul.bf16.gmra.mxu0 %v6212
      %v6290 = vpop.f32.mrf.mxu0
      %v6291 = vadd.f32 0.0, %v6290
      %v6292 = vpop.f32.mrf.mxu0
      %v6293 = vadd.f32 0.0, %v6292
      %6294 = vmatmul.bf16.gmra.mxu0 %v6215
      %v6295 = vpop.f32.mrf.mxu0
      %v6296 = vadd.f32 0.0, %v6295
      %v6297 = vpop.f32.mrf.mxu0
      %v6298 = vadd.f32 0.0, %v6297
      %6299 = vmatmul.bf16.gmra.mxu0 %v6218
      %v6300 = vpop.f32.mrf.mxu0
      %v6301 = vadd.f32 0.0, %v6300
      %v6302 = vpop.f32.mrf.mxu0
      %v6303 = vadd.f32 0.0, %v6302
      %6304 = vmatmul.bf16.gmra.mxu0 %v6221
      %v6305 = vpop.f32.mrf.mxu0
      %v6306 = vadd.f32 0.0, %v6305
      %v6307 = vpop.f32.mrf.mxu0
      %v6308 = vadd.f32 0.0, %v6307
      %6309 = vmatmul.bf16.gmra.mxu0 %v6224
      %v6310 = vpop.f32.mrf.mxu0
      %v6311 = vadd.f32 0.0, %v6310
      %v6312 = vpop.f32.mrf.mxu0
      %v6313 = vadd.f32 0.0, %v6312
      %6314 = vdwg.mxu0
      %v6315 = vadd.f32 %v6081, %v6236
      %v6316 = vadd.f32 %v6082, %v6238
      %v6317 = vadd.f32 %v6083, %v6241
      %v6318 = vadd.f32 %v6084, %v6243
      %v6319 = vadd.f32 %v6085, %v6246
      %v6320 = vadd.f32 %v6086, %v6248
      %v6321 = vadd.f32 %v6087, %v6251
      %v6322 = vadd.f32 %v6088, %v6253
      %v6323 = vadd.f32 %v6089, %v6256
      %v6324 = vadd.f32 %v6090, %v6258
      %v6325 = vadd.f32 %v6091, %v6261
      %v6326 = vadd.f32 %v6092, %v6263
      %v6327 = vadd.f32 %v6093, %v6266
      %v6328 = vadd.f32 %v6094, %v6268
      %v6329 = vadd.f32 %v6095, %v6271
      %v6330 = vadd.f32 %v6096, %v6273
      %v6331 = vadd.f32 %v6097, %v6276
      %v6332 = vadd.f32 %v6098, %v6278
      %v6333 = vadd.f32 %v6099, %v6281
      %v6334 = vadd.f32 %v6100, %v6283
      %v6335 = vadd.f32 %v6101, %v6286
      %v6336 = vadd.f32 %v6102, %v6288
      %v6337 = vadd.f32 %v6103, %v6291
      %v6338 = vadd.f32 %v6104, %v6293
      %v6339 = vadd.f32 %v6105, %v6296
      %v6340 = vadd.f32 %v6106, %v6298
      %v6341 = vadd.f32 %v6107, %v6301
      %v6342 = vadd.f32 %v6108, %v6303
      %v6343 = vadd.f32 %v6109, %v6306
      %v6344 = vadd.f32 %v6110, %v6308
      %v6345 = vadd.f32 %v6111, %v6311
      %v6346 = vadd.f32 %v6112, %v6313
      %v6347 = vld [vmem:[#allocation2 + $0x55] sm:$0xff]
      %v6348 = vld [vmem:[#allocation2 + $0x5d] sm:$0xff]
      %v6349 = vld [vmem:[#allocation2 + $0x65] sm:$0xff]
      %v6350 = vld [vmem:[#allocation2 + $0x6d] sm:$0xff]
      %v6351 = vld [vmem:[#allocation2 + $0x75] sm:$0xff]
      %v6352 = vld [vmem:[#allocation2 + $0x7d] sm:$0xff]
      %v6353 = vld [vmem:[#allocation2 + $0x85] sm:$0xff]
      %v6354 = vld [vmem:[#allocation2 + $0x8d] sm:$0xff]
      %v6355 = vld [vmem:[#allocation2 + $0x95] sm:$0xff]
      %v6356 = vld [vmem:[#allocation2 + $0x9d] sm:$0xff]
      %v6357 = vld [vmem:[#allocation2 + $0xa5] sm:$0xff]
      %v6358 = vld [vmem:[#allocation2 + $0xad] sm:$0xff]
      %v6359 = vld [vmem:[#allocation2 + $0xb5] sm:$0xff]
      %v6360 = vld [vmem:[#allocation2 + $0xbd] sm:$0xff]
      %v6361 = vld [vmem:[#allocation2 + $0xc5] sm:$0xff]
      %v6362 = vld [vmem:[#allocation2 + $0xcd] sm:$0xff]
      %v6363 = vld [vmem:[#allocation2 + $0xd5] sm:$0xff]
      %v6364 = vld [vmem:[#allocation2 + $0xdd] sm:$0xff]
      %v6365 = vld [vmem:[#allocation2 + $0xe5] sm:$0xff]
      %v6366 = vld [vmem:[#allocation2 + $0xed] sm:$0xff]
      %v6367 = vld [vmem:[#allocation2 + $0xf5] sm:$0xff]
      %v6368 = vld [vmem:[#allocation2 + $0xfd] sm:$0xff]
      %v6369 = vld [vmem:[#allocation2 + $0x105] sm:$0xff]
      %v6370 = vld [vmem:[#allocation2 + $0x10d] sm:$0xff]
      %v6371 = vld [vmem:[#allocation2 + $0x115] sm:$0xff]
      %v6372 = vld [vmem:[#allocation2 + $0x11d] sm:$0xff]
      %v6373 = vld [vmem:[#allocation2 + $0x125] sm:$0xff]
      %v6374 = vld [vmem:[#allocation2 + $0x12d] sm:$0xff]
      %v6375 = vld [vmem:[#allocation2 + $0x135] sm:$0xff]
      %v6376 = vld [vmem:[#allocation2 + $0x13d] sm:$0xff]
      %v6377 = vld [vmem:[#allocation2 + $0x145] sm:$0xff]
      %v6378 = vld [vmem:[#allocation2 + $0x14d] sm:$0xff]
      %v6379 = vpack.c.bf16 %v6348, %v6347
      %v6380 = vpack.c.bf16 %v6350, %v6349
      %v6381 = vpack.c.bf16 %v6352, %v6351
      %v6382 = vpack.c.bf16 %v6354, %v6353
      %v6383 = vpack.c.bf16 %v6356, %v6355
      %v6384 = vpack.c.bf16 %v6358, %v6357
      %v6385 = vpack.c.bf16 %v6360, %v6359
      %v6386 = vpack.c.bf16 %v6362, %v6361
      %v6387 = vpack.c.bf16 %v6364, %v6363
      %v6388 = vpack.c.bf16 %v6366, %v6365
      %v6389 = vpack.c.bf16 %v6368, %v6367
      %v6390 = vpack.c.bf16 %v6370, %v6369
      %v6391 = vpack.c.bf16 %v6372, %v6371
      %v6392 = vpack.c.bf16 %v6374, %v6373
      %v6393 = vpack.c.bf16 %v6376, %v6375
      %v6394 = vpack.c.bf16 %v6378, %v6377
      %s6395 = scalar_lea.vmem %s4, 272
      %v6396 = vld [vmem:[%s6395] sm:$0xf]
      %v6397 = vld [vmem:[%s6395 + $0x4] sm:$0xf]
      %v6398 = vld [vmem:[%s6395 + $0x8] sm:$0xf]
      %v6399 = vld [vmem:[%s6395 + $0xc] sm:$0xf]
      %v6404 = vunpack.c.l.b16 %v6396
      %v6405 = vunpack.c.l.b16 %v6397
      %v6406 = vunpack.c.l.b16 %v6398
      %v6407 = vunpack.c.l.b16 %v6399
      %v6408 = vpack.c.b16 %v6405, %v6404
      %v6409 = vpack.c.b16 %v6407, %v6406
      %v6413 = vsel %vm2480, %v6379, 0
      %v6416 = vsel %vm2480, %v6380, 0
      %v6419 = vsel %vm2480, %v6381, 0
      %v6422 = vsel %vm2480, %v6382, 0
      %v6425 = vsel %vm2480, %v6383, 0
      %v6428 = vsel %vm2480, %v6384, 0
      %v6431 = vsel %vm2480, %v6385, 0
      %v6434 = vsel %vm2480, %v6386, 0
      %v6437 = vsel %vm2480, %v6387, 0
      %v6440 = vsel %vm2480, %v6388, 0
      %v6443 = vsel %vm2480, %v6389, 0
      %v6446 = vsel %vm2480, %v6390, 0
      %v6449 = vsel %vm2480, %v6391, 0
      %v6452 = vsel %vm2480, %v6392, 0
      %v6455 = vsel %vm2480, %v6393, 0
      %v6458 = vsel %vm2480, %v6394, 0
      %6460 = vmatpush.bf16.msra.mxu0 0
      %6461 = vmatpush.bf16.msra.mxu0 0
      %6462 = vmatpush.bf16.msra.mxu0 0
      %6463 = vmatpush.bf16.msra.mxu0 0
      %6464 = vmatpush.bf16.msra.mxu0 0
      %6465 = vmatpush.bf16.msra.mxu0 0
      %6466 = vmatpush.bf16.msra.mxu0 %v6409
      %6467 = vmatpush.bf16.msra.mxu0 %v6408
      %6468 = vmatmul.bf16.gmra.mxu0 %v6413
      %v6469 = vpop.f32.mrf.mxu0
      %v6470 = vadd.f32 0.0, %v6469
      %v6471 = vpop.f32.mrf.mxu0
      %v6472 = vadd.f32 0.0, %v6471
      %6473 = vmatmul.bf16.gmra.mxu0 %v6416
      %v6474 = vpop.f32.mrf.mxu0
      %v6475 = vadd.f32 0.0, %v6474
      %v6476 = vpop.f32.mrf.mxu0
      %v6477 = vadd.f32 0.0, %v6476
      %6478 = vmatmul.bf16.gmra.mxu0 %v6419
      %v6479 = vpop.f32.mrf.mxu0
      %v6480 = vadd.f32 0.0, %v6479
      %v6481 = vpop.f32.mrf.mxu0
      %v6482 = vadd.f32 0.0, %v6481
      %6483 = vmatmul.bf16.gmra.mxu0 %v6422
      %v6484 = vpop.f32.mrf.mxu0
      %v6485 = vadd.f32 0.0, %v6484
      %v6486 = vpop.f32.mrf.mxu0
      %v6487 = vadd.f32 0.0, %v6486
      %6488 = vmatmul.bf16.gmra.mxu0 %v6425
      %v6489 = vpop.f32.mrf.mxu0
      %v6490 = vadd.f32 0.0, %v6489
      %v6491 = vpop.f32.mrf.mxu0
      %v6492 = vadd.f32 0.0, %v6491
      %6493 = vmatmul.bf16.gmra.mxu0 %v6428
      %v6494 = vpop.f32.mrf.mxu0
      %v6495 = vadd.f32 0.0, %v6494
      %v6496 = vpop.f32.mrf.mxu0
      %v6497 = vadd.f32 0.0, %v6496
      %6498 = vmatmul.bf16.gmra.mxu0 %v6431
      %v6499 = vpop.f32.mrf.mxu0
      %v6500 = vadd.f32 0.0, %v6499
      %v6501 = vpop.f32.mrf.mxu0
      %v6502 = vadd.f32 0.0, %v6501
      %6503 = vmatmul.bf16.gmra.mxu0 %v6434
      %v6504 = vpop.f32.mrf.mxu0
      %v6505 = vadd.f32 0.0, %v6504
      %v6506 = vpop.f32.mrf.mxu0
      %v6507 = vadd.f32 0.0, %v6506
      %6508 = vmatmul.bf16.gmra.mxu0 %v6437
      %v6509 = vpop.f32.mrf.mxu0
      %v6510 = vadd.f32 0.0, %v6509
      %v6511 = vpop.f32.mrf.mxu0
      %v6512 = vadd.f32 0.0, %v6511
      %6513 = vmatmul.bf16.gmra.mxu0 %v6440
      %v6514 = vpop.f32.mrf.mxu0
      %v6515 = vadd.f32 0.0, %v6514
      %v6516 = vpop.f32.mrf.mxu0
      %v6517 = vadd.f32 0.0, %v6516
      %6518 = vmatmul.bf16.gmra.mxu0 %v6443
      %v6519 = vpop.f32.mrf.mxu0
      %v6520 = vadd.f32 0.0, %v6519
      %v6521 = vpop.f32.mrf.mxu0
      %v6522 = vadd.f32 0.0, %v6521
      %6523 = vmatmul.bf16.gmra.mxu0 %v6446
      %v6524 = vpop.f32.mrf.mxu0
      %v6525 = vadd.f32 0.0, %v6524
      %v6526 = vpop.f32.mrf.mxu0
      %v6527 = vadd.f32 0.0, %v6526
      %6528 = vmatmul.bf16.gmra.mxu0 %v6449
      %v6529 = vpop.f32.mrf.mxu0
      %v6530 = vadd.f32 0.0, %v6529
      %v6531 = vpop.f32.mrf.mxu0
      %v6532 = vadd.f32 0.0, %v6531
      %6533 = vmatmul.bf16.gmra.mxu0 %v6452
      %v6534 = vpop.f32.mrf.mxu0
      %v6535 = vadd.f32 0.0, %v6534
      %v6536 = vpop.f32.mrf.mxu0
      %v6537 = vadd.f32 0.0, %v6536
      %6538 = vmatmul.bf16.gmra.mxu0 %v6455
      %v6539 = vpop.f32.mrf.mxu0
      %v6540 = vadd.f32 0.0, %v6539
      %v6541 = vpop.f32.mrf.mxu0
      %v6542 = vadd.f32 0.0, %v6541
      %6543 = vmatmul.bf16.gmra.mxu0 %v6458
      %v6544 = vpop.f32.mrf.mxu0
      %v6545 = vadd.f32 0.0, %v6544
      %v6546 = vpop.f32.mrf.mxu0
      %v6547 = vadd.f32 0.0, %v6546
      %6548 = vdwg.mxu0
      %v6549 = vadd.f32 %v6315, %v6470
      %v6550 = vadd.f32 %v6316, %v6472
      %v6551 = vadd.f32 %v6317, %v6475
      %v6552 = vadd.f32 %v6318, %v6477
      %v6553 = vadd.f32 %v6319, %v6480
      %v6554 = vadd.f32 %v6320, %v6482
      %v6555 = vadd.f32 %v6321, %v6485
      %v6556 = vadd.f32 %v6322, %v6487
      %v6557 = vadd.f32 %v6323, %v6490
      %v6558 = vadd.f32 %v6324, %v6492
      %v6559 = vadd.f32 %v6325, %v6495
      %v6560 = vadd.f32 %v6326, %v6497
      %v6561 = vadd.f32 %v6327, %v6500
      %v6562 = vadd.f32 %v6328, %v6502
      %v6563 = vadd.f32 %v6329, %v6505
      %v6564 = vadd.f32 %v6330, %v6507
      %v6565 = vadd.f32 %v6331, %v6510
      %v6566 = vadd.f32 %v6332, %v6512
      %v6567 = vadd.f32 %v6333, %v6515
      %v6568 = vadd.f32 %v6334, %v6517
      %v6569 = vadd.f32 %v6335, %v6520
      %v6570 = vadd.f32 %v6336, %v6522
      %v6571 = vadd.f32 %v6337, %v6525
      %v6572 = vadd.f32 %v6338, %v6527
      %v6573 = vadd.f32 %v6339, %v6530
      %v6574 = vadd.f32 %v6340, %v6532
      %v6575 = vadd.f32 %v6341, %v6535
      %v6576 = vadd.f32 %v6342, %v6537
      %v6577 = vadd.f32 %v6343, %v6540
      %v6578 = vadd.f32 %v6344, %v6542
      %v6579 = vadd.f32 %v6345, %v6545
      %v6580 = vadd.f32 %v6346, %v6547
      %v6581 = vld [vmem:[%s5 + $0x1] sm:$0x1]
      %v6582 = vperm.slane %v6581, 0
      %v6583 = vadd.f32 %v6549, %v6582
      %v6584 = vadd.f32 %v6550, %v6582
      %v6585 = vadd.f32 %v6551, %v6582
      %v6586 = vadd.f32 %v6552, %v6582
      %v6587 = vadd.f32 %v6553, %v6582
      %v6588 = vadd.f32 %v6554, %v6582
      %v6589 = vadd.f32 %v6555, %v6582
      %v6590 = vadd.f32 %v6556, %v6582
      %v6591 = vadd.f32 %v6557, %v6582
      %v6592 = vadd.f32 %v6558, %v6582
      %v6593 = vadd.f32 %v6559, %v6582
      %v6594 = vadd.f32 %v6560, %v6582
      %v6595 = vadd.f32 %v6561, %v6582
      %v6596 = vadd.f32 %v6562, %v6582
      %v6597 = vadd.f32 %v6563, %v6582
      %v6598 = vadd.f32 %v6564, %v6582
      %v6599 = vadd.f32 %v6565, %v6582
      %v6600 = vadd.f32 %v6566, %v6582
      %v6601 = vadd.f32 %v6567, %v6582
      %v6602 = vadd.f32 %v6568, %v6582
      %v6603 = vadd.f32 %v6569, %v6582
      %v6604 = vadd.f32 %v6570, %v6582
      %v6605 = vadd.f32 %v6571, %v6582
      %v6606 = vadd.f32 %v6572, %v6582
      %v6607 = vadd.f32 %v6573, %v6582
      %v6608 = vadd.f32 %v6574, %v6582
      %v6609 = vadd.f32 %v6575, %v6582
      %v6610 = vadd.f32 %v6576, %v6582
      %v6611 = vadd.f32 %v6577, %v6582
      %v6612 = vadd.f32 %v6578, %v6582
      %v6613 = vadd.f32 %v6579, %v6582
      %v6614 = vadd.f32 %v6580, %v6582
      %v6615 = vpack.c.bf16 %v6583, %v6583
      %v6616 = vpack.c.bf16 %v6584, %v6584
      %v6617 = vpack.c.bf16 %v6585, %v6585
      %v6618 = vpack.c.bf16 %v6586, %v6586
      %v6619 = vpack.c.bf16 %v6587, %v6587
      %v6620 = vpack.c.bf16 %v6588, %v6588
      %v6621 = vpack.c.bf16 %v6589, %v6589
      %v6622 = vpack.c.bf16 %v6590, %v6590
      %v6623 = vpack.c.bf16 %v6591, %v6591
      %v6624 = vpack.c.bf16 %v6592, %v6592
      %v6625 = vpack.c.bf16 %v6593, %v6593
      %v6626 = vpack.c.bf16 %v6594, %v6594
      %v6627 = vpack.c.bf16 %v6595, %v6595
      %v6628 = vpack.c.bf16 %v6596, %v6596
      %v6629 = vpack.c.bf16 %v6597, %v6597
      %v6630 = vpack.c.bf16 %v6598, %v6598
      %v6631 = vpack.c.bf16 %v6599, %v6599
      %v6632 = vpack.c.bf16 %v6600, %v6600
      %v6633 = vpack.c.bf16 %v6601, %v6601
      %v6634 = vpack.c.bf16 %v6602, %v6602
      %v6635 = vpack.c.bf16 %v6603, %v6603
      %v6636 = vpack.c.bf16 %v6604, %v6604
      %v6637 = vpack.c.bf16 %v6605, %v6605
      %v6638 = vpack.c.bf16 %v6606, %v6606
      %v6639 = vpack.c.bf16 %v6607, %v6607
      %v6640 = vpack.c.bf16 %v6608, %v6608
      %v6641 = vpack.c.bf16 %v6609, %v6609
      %v6642 = vpack.c.bf16 %v6610, %v6610
      %v6643 = vpack.c.bf16 %v6611, %v6611
      %v6644 = vpack.c.bf16 %v6612, %v6612
      %v6645 = vpack.c.bf16 %v6613, %v6613
      %v6646 = vpack.c.bf16 %v6614, %v6614
      %v6647 = vld [vmem:[#allocation2] sm:$0xff]
      %v6648 = vld [vmem:[#allocation2 + $0x8] sm:$0xff]
      %v6649 = vld [vmem:[#allocation2 + $0x10] sm:$0xff]
      %v6650 = vld [vmem:[#allocation2 + $0x18] sm:$0xff]
      %v6651 = vld [vmem:[#allocation2 + $0x20] sm:$0xff]
      %v6652 = vld [vmem:[#allocation2 + $0x28] sm:$0xff]
      %v6653 = vld [vmem:[#allocation2 + $0x30] sm:$0xff]
      %v6654 = vld [vmem:[#allocation2 + $0x38] sm:$0xff]
      %v6655 = vld [vmem:[#allocation2 + $0x40] sm:$0xff]
      %v6656 = vld [vmem:[#allocation2 + $0x48] sm:$0xff]
      %v6657 = vld [vmem:[#allocation2 + $0x50] sm:$0xff]
      %v6658 = vld [vmem:[#allocation2 + $0x58] sm:$0xff]
      %v6659 = vld [vmem:[#allocation2 + $0x60] sm:$0xff]
      %v6660 = vld [vmem:[#allocation2 + $0x68] sm:$0xff]
      %v6661 = vld [vmem:[#allocation2 + $0x70] sm:$0xff]
      %v6662 = vld [vmem:[#allocation2 + $0x78] sm:$0xff]
      %v6663 = vld [vmem:[#allocation2 + $0x80] sm:$0xff]
      %v6664 = vld [vmem:[#allocation2 + $0x88] sm:$0xff]
      %v6665 = vld [vmem:[#allocation2 + $0x90] sm:$0xff]
      %v6666 = vld [vmem:[#allocation2 + $0x98] sm:$0xff]
      %v6667 = vld [vmem:[#allocation2 + $0xa0] sm:$0xff]
      %v6668 = vld [vmem:[#allocation2 + $0xa8] sm:$0xff]
      %v6669 = vld [vmem:[#allocation2 + $0xb0] sm:$0xff]
      %v6670 = vld [vmem:[#allocation2 + $0xb8] sm:$0xff]
      %v6671 = vld [vmem:[#allocation2 + $0xc0] sm:$0xff]
      %v6672 = vld [vmem:[#allocation2 + $0xc8] sm:$0xff]
      %v6673 = vld [vmem:[#allocation2 + $0xd0] sm:$0xff]
      %v6674 = vld [vmem:[#allocation2 + $0xd8] sm:$0xff]
      %v6675 = vld [vmem:[#allocation2 + $0xe0] sm:$0xff]
      %v6676 = vld [vmem:[#allocation2 + $0xe8] sm:$0xff]
      %v6677 = vld [vmem:[#allocation2 + $0xf0] sm:$0xff]
      %v6678 = vld [vmem:[#allocation2 + $0xf8] sm:$0xff]
      %v6679 = vpack.c.bf16 %v6648, %v6647
      %v6680 = vpack.c.bf16 %v6650, %v6649
      %v6681 = vpack.c.bf16 %v6652, %v6651
      %v6682 = vpack.c.bf16 %v6654, %v6653
      %v6683 = vpack.c.bf16 %v6656, %v6655
      %v6684 = vpack.c.bf16 %v6658, %v6657
      %v6685 = vpack.c.bf16 %v6660, %v6659
      %v6686 = vpack.c.bf16 %v6662, %v6661
      %v6687 = vpack.c.bf16 %v6664, %v6663
      %v6688 = vpack.c.bf16 %v6666, %v6665
      %v6689 = vpack.c.bf16 %v6668, %v6667
      %v6690 = vpack.c.bf16 %v6670, %v6669
      %v6691 = vpack.c.bf16 %v6672, %v6671
      %v6692 = vpack.c.bf16 %v6674, %v6673
      %v6693 = vpack.c.bf16 %v6676, %v6675
      %v6694 = vpack.c.bf16 %v6678, %v6677
      %s6695 = scalar_lea.vmem %s4, 288
      %v6696 = vld [vmem:[%s6695] sm:$0xf]
      %v6697 = vld [vmem:[%s6695 + $0x4] sm:$0xf]
      %v6698 = vld [vmem:[%s6695 + $0x8] sm:$0xf]
      %v6699 = vld [vmem:[%s6695 + $0xc] sm:$0xf]
      %v6700 = vld [vmem:[#allocation2 + $0x3] sm:$0xff]
      %v6701 = vld [vmem:[#allocation2 + $0xb] sm:$0xff]
      %v6702 = vld [vmem:[#allocation2 + $0x13] sm:$0xff]
      %v6703 = vld [vmem:[#allocation2 + $0x1b] sm:$0xff]
      %v6704 = vld [vmem:[#allocation2 + $0x23] sm:$0xff]
      %v6705 = vld [vmem:[#allocation2 + $0x2b] sm:$0xff]
      %v6706 = vld [vmem:[#allocation2 + $0x33] sm:$0xff]
      %v6707 = vld [vmem:[#allocation2 + $0x3b] sm:$0xff]
      %v6708 = vld [vmem:[#allocation2 + $0x43] sm:$0xff]
      %v6709 = vld [vmem:[#allocation2 + $0x4b] sm:$0xff]
      %v6710 = vld [vmem:[#allocation2 + $0x53] sm:$0xff]
      %v6711 = vld [vmem:[#allocation2 + $0x5b] sm:$0xff]
      %v6712 = vld [vmem:[#allocation2 + $0x63] sm:$0xff]
      %v6713 = vld [vmem:[#allocation2 + $0x6b] sm:$0xff]
      %v6714 = vld [vmem:[#allocation2 + $0x73] sm:$0xff]
      %v6715 = vld [vmem:[#allocation2 + $0x7b] sm:$0xff]
      %v6716 = vld [vmem:[#allocation2 + $0x83] sm:$0xff]
      %v6717 = vld [vmem:[#allocation2 + $0x8b] sm:$0xff]
      %v6718 = vld [vmem:[#allocation2 + $0x93] sm:$0xff]
      %v6719 = vld [vmem:[#allocation2 + $0x9b] sm:$0xff]
      %v6720 = vld [vmem:[#allocation2 + $0xa3] sm:$0xff]
      %v6721 = vld [vmem:[#allocation2 + $0xab] sm:$0xff]
      %v6722 = vld [vmem:[#allocation2 + $0xb3] sm:$0xff]
      %v6723 = vld [vmem:[#allocation2 + $0xbb] sm:$0xff]
      %v6724 = vld [vmem:[#allocation2 + $0xc3] sm:$0xff]
      %v6725 = vld [vmem:[#allocation2 + $0xcb] sm:$0xff]
      %v6726 = vld [vmem:[#allocation2 + $0xd3] sm:$0xff]
      %v6727 = vld [vmem:[#allocation2 + $0xdb] sm:$0xff]
      %v6728 = vld [vmem:[#allocation2 + $0xe3] sm:$0xff]
      %v6729 = vld [vmem:[#allocation2 + $0xeb] sm:$0xff]
      %v6730 = vld [vmem:[#allocation2 + $0xf3] sm:$0xff]
      %v6731 = vld [vmem:[#allocation2 + $0xfb] sm:$0xff]
      %v6732 = vpack.c.bf16 %v6701, %v6700
      %v6733 = vpack.c.bf16 %v6703, %v6702
      %v6734 = vpack.c.bf16 %v6705, %v6704
      %v6735 = vpack.c.bf16 %v6707, %v6706
      %v6736 = vpack.c.bf16 %v6709, %v6708
      %v6737 = vpack.c.bf16 %v6711, %v6710
      %v6738 = vpack.c.bf16 %v6713, %v6712
      %v6739 = vpack.c.bf16 %v6715, %v6714
      %v6740 = vpack.c.bf16 %v6717, %v6716
      %v6741 = vpack.c.bf16 %v6719, %v6718
      %v6742 = vpack.c.bf16 %v6721, %v6720
      %v6743 = vpack.c.bf16 %v6723, %v6722
      %v6744 = vpack.c.bf16 %v6725, %v6724
      %v6745 = vpack.c.bf16 %v6727, %v6726
      %v6746 = vpack.c.bf16 %v6729, %v6728
      %v6747 = vpack.c.bf16 %v6731, %v6730
      %s6748 = scalar_lea.vmem %s4, 304
      %v6749 = vld [vmem:[%s6748] sm:$0xf]
      %v6750 = vld [vmem:[%s6748 + $0x4] sm:$0xf]
      %v6751 = vld [vmem:[%s6748 + $0x8] sm:$0xf]
      %v6752 = vld [vmem:[%s6748 + $0xc] sm:$0xf]
      %v6757 = vunpack.c.l.b16 %v6749
      %v6758 = vunpack.c.l.b16 %v6750
      %v6759 = vunpack.c.l.b16 %v6751
      %v6760 = vunpack.c.l.b16 %v6752
      %v6761 = vpack.c.b16 %v6758, %v6757
      %v6762 = vpack.c.b16 %v6760, %v6759
      %v6766 = vsel %vm2480, %v6732, 0
      %v6769 = vsel %vm2480, %v6733, 0
      %v6772 = vsel %vm2480, %v6734, 0
      %v6775 = vsel %vm2480, %v6735, 0
      %v6778 = vsel %vm2480, %v6736, 0
      %v6781 = vsel %vm2480, %v6737, 0
      %v6784 = vsel %vm2480, %v6738, 0
      %v6787 = vsel %vm2480, %v6739, 0
      %v6790 = vsel %vm2480, %v6740, 0
      %v6793 = vsel %vm2480, %v6741, 0
      %v6796 = vsel %vm2480, %v6742, 0
      %v6799 = vsel %vm2480, %v6743, 0
      %v6802 = vsel %vm2480, %v6744, 0
      %v6805 = vsel %vm2480, %v6745, 0
      %v6808 = vsel %vm2480, %v6746, 0
      %v6811 = vsel %vm2480, %v6747, 0
      %6813 = vmatpush.bf16.msra.mxu0 0
      %6814 = vmatpush.bf16.msra.mxu0 0
      %6815 = vmatpush.bf16.msra.mxu0 0
      %6816 = vmatpush.bf16.msra.mxu0 0
      %6817 = vmatpush.bf16.msra.mxu0 0
      %6818 = vmatpush.bf16.msra.mxu0 0
      %6819 = vmatpush.bf16.msra.mxu0 %v6762
      %6820 = vmatpush.bf16.msra.mxu0 %v6761
      %6821 = vmatmul.bf16.gmra.mxu0 %v6766
      %v6822 = vpop.f32.mrf.mxu0
      %v6823 = vadd.f32 0.0, %v6822
      %v6824 = vpop.f32.mrf.mxu0
      %v6825 = vadd.f32 0.0, %v6824
      %6826 = vmatmul.bf16.gmra.mxu0 %v6769
      %v6827 = vpop.f32.mrf.mxu0
      %v6828 = vadd.f32 0.0, %v6827
      %v6829 = vpop.f32.mrf.mxu0
      %v6830 = vadd.f32 0.0, %v6829
      %6831 = vmatmul.bf16.gmra.mxu0 %v6772
      %v6832 = vpop.f32.mrf.mxu0
      %v6833 = vadd.f32 0.0, %v6832
      %v6834 = vpop.f32.mrf.mxu0
      %v6835 = vadd.f32 0.0, %v6834
      %6836 = vmatmul.bf16.gmra.mxu0 %v6775
      %v6837 = vpop.f32.mrf.mxu0
      %v6838 = vadd.f32 0.0, %v6837
      %v6839 = vpop.f32.mrf.mxu0
      %v6840 = vadd.f32 0.0, %v6839
      %6841 = vmatmul.bf16.gmra.mxu0 %v6778
      %v6842 = vpop.f32.mrf.mxu0
      %v6843 = vadd.f32 0.0, %v6842
      %v6844 = vpop.f32.mrf.mxu0
      %v6845 = vadd.f32 0.0, %v6844
      %6846 = vmatmul.bf16.gmra.mxu0 %v6781
      %v6847 = vpop.f32.mrf.mxu0
      %v6848 = vadd.f32 0.0, %v6847
      %v6849 = vpop.f32.mrf.mxu0
      %v6850 = vadd.f32 0.0, %v6849
      %6851 = vmatmul.bf16.gmra.mxu0 %v6784
      %v6852 = vpop.f32.mrf.mxu0
      %v6853 = vadd.f32 0.0, %v6852
      %v6854 = vpop.f32.mrf.mxu0
      %v6855 = vadd.f32 0.0, %v6854
      %6856 = vmatmul.bf16.gmra.mxu0 %v6787
      %v6857 = vpop.f32.mrf.mxu0
      %v6858 = vadd.f32 0.0, %v6857
      %v6859 = vpop.f32.mrf.mxu0
      %v6860 = vadd.f32 0.0, %v6859
      %6861 = vmatmul.bf16.gmra.mxu0 %v6790
      %v6862 = vpop.f32.mrf.mxu0
      %v6863 = vadd.f32 0.0, %v6862
      %v6864 = vpop.f32.mrf.mxu0
      %v6865 = vadd.f32 0.0, %v6864
      %6866 = vmatmul.bf16.gmra.mxu0 %v6793
      %v6867 = vpop.f32.mrf.mxu0
      %v6868 = vadd.f32 0.0, %v6867
      %v6869 = vpop.f32.mrf.mxu0
      %v6870 = vadd.f32 0.0, %v6869
      %6871 = vmatmul.bf16.gmra.mxu0 %v6796
      %v6872 = vpop.f32.mrf.mxu0
      %v6873 = vadd.f32 0.0, %v6872
      %v6874 = vpop.f32.mrf.mxu0
      %v6875 = vadd.f32 0.0, %v6874
      %6876 = vmatmul.bf16.gmra.mxu0 %v6799
      %v6877 = vpop.f32.mrf.mxu0
      %v6878 = vadd.f32 0.0, %v6877
      %v6879 = vpop.f32.mrf.mxu0
      %v6880 = vadd.f32 0.0, %v6879
      %6881 = vmatmul.bf16.gmra.mxu0 %v6802
      %v6882 = vpop.f32.mrf.mxu0
      %v6883 = vadd.f32 0.0, %v6882
      %v6884 = vpop.f32.mrf.mxu0
      %v6885 = vadd.f32 0.0, %v6884
      %6886 = vmatmul.bf16.gmra.mxu0 %v6805
      %v6887 = vpop.f32.mrf.mxu0
      %v6888 = vadd.f32 0.0, %v6887
      %v6889 = vpop.f32.mrf.mxu0
      %v6890 = vadd.f32 0.0, %v6889
      %6891 = vmatmul.bf16.gmra.mxu0 %v6808
      %v6892 = vpop.f32.mrf.mxu0
      %v6893 = vadd.f32 0.0, %v6892
      %v6894 = vpop.f32.mrf.mxu0
      %v6895 = vadd.f32 0.0, %v6894
      %6896 = vmatmul.bf16.gmra.mxu0 %v6811
      %v6897 = vpop.f32.mrf.mxu0
      %v6898 = vadd.f32 0.0, %v6897
      %v6899 = vpop.f32.mrf.mxu0
      %v6900 = vadd.f32 0.0, %v6899
      %6901 = vdwg.mxu0
      %v6906 = vunpack.c.l.b16 %v6696
      %v6907 = vunpack.c.l.b16 %v6697
      %v6908 = vunpack.c.l.b16 %v6698
      %v6909 = vunpack.c.l.b16 %v6699
      %v6910 = vpack.c.b16 %v6907, %v6906
      %v6911 = vpack.c.b16 %v6909, %v6908
      %v6915 = vsel %vm2480, %v6679, 0
      %v6918 = vsel %vm2480, %v6680, 0
      %v6921 = vsel %vm2480, %v6681, 0
      %v6924 = vsel %vm2480, %v6682, 0
      %v6927 = vsel %vm2480, %v6683, 0
      %v6930 = vsel %vm2480, %v6684, 0
      %v6933 = vsel %vm2480, %v6685, 0
      %v6936 = vsel %vm2480, %v6686, 0
      %v6939 = vsel %vm2480, %v6687, 0
      %v6942 = vsel %vm2480, %v6688, 0
      %v6945 = vsel %vm2480, %v6689, 0
      %v6948 = vsel %vm2480, %v6690, 0
      %v6951 = vsel %vm2480, %v6691, 0
      %v6954 = vsel %vm2480, %v6692, 0
      %v6957 = vsel %vm2480, %v6693, 0
      %v6960 = vsel %vm2480, %v6694, 0
      %6962 = vmatpush.bf16.msra.mxu0 0
      %6963 = vmatpush.bf16.msra.mxu0 0
      %6964 = vmatpush.bf16.msra.mxu0 0
      %6965 = vmatpush.bf16.msra.mxu0 0
      %6966 = vmatpush.bf16.msra.mxu0 0
      %6967 = vmatpush.bf16.msra.mxu0 0
      %6968 = vmatpush.bf16.msra.mxu0 %v6911
      %6969 = vmatpush.bf16.msra.mxu0 %v6910
      %6970 = vmatmul.bf16.gmra.mxu0 %v6915
      %v6971 = vpop.f32.mrf.mxu0
      %v6972 = vadd.f32 %v6823, %v6971
      %v6973 = vpop.f32.mrf.mxu0
      %v6974 = vadd.f32 %v6825, %v6973
      %6975 = vmatmul.bf16.gmra.mxu0 %v6918
      %v6976 = vpop.f32.mrf.mxu0
      %v6977 = vadd.f32 %v6828, %v6976
      %v6978 = vpop.f32.mrf.mxu0
      %v6979 = vadd.f32 %v6830, %v6978
      %6980 = vmatmul.bf16.gmra.mxu0 %v6921
      %v6981 = vpop.f32.mrf.mxu0
      %v6982 = vadd.f32 %v6833, %v6981
      %v6983 = vpop.f32.mrf.mxu0
      %v6984 = vadd.f32 %v6835, %v6983
      %6985 = vmatmul.bf16.gmra.mxu0 %v6924
      %v6986 = vpop.f32.mrf.mxu0
      %v6987 = vadd.f32 %v6838, %v6986
      %v6988 = vpop.f32.mrf.mxu0
      %v6989 = vadd.f32 %v6840, %v6988
      %6990 = vmatmul.bf16.gmra.mxu0 %v6927
      %v6991 = vpop.f32.mrf.mxu0
      %v6992 = vadd.f32 %v6843, %v6991
      %v6993 = vpop.f32.mrf.mxu0
      %v6994 = vadd.f32 %v6845, %v6993
      %6995 = vmatmul.bf16.gmra.mxu0 %v6930
      %v6996 = vpop.f32.mrf.mxu0
      %v6997 = vadd.f32 %v6848, %v6996
      %v6998 = vpop.f32.mrf.mxu0
      %v6999 = vadd.f32 %v6850, %v6998
      %7000 = vmatmul.bf16.gmra.mxu0 %v6933
      %v7001 = vpop.f32.mrf.mxu0
      %v7002 = vadd.f32 %v6853, %v7001
      %v7003 = vpop.f32.mrf.mxu0
      %v7004 = vadd.f32 %v6855, %v7003
      %7005 = vmatmul.bf16.gmra.mxu0 %v6936
      %v7006 = vpop.f32.mrf.mxu0
      %v7007 = vadd.f32 %v6858, %v7006
      %v7008 = vpop.f32.mrf.mxu0
      %v7009 = vadd.f32 %v6860, %v7008
      %7010 = vmatmul.bf16.gmra.mxu0 %v6939
      %v7011 = vpop.f32.mrf.mxu0
      %v7012 = vadd.f32 %v6863, %v7011
      %v7013 = vpop.f32.mrf.mxu0
      %v7014 = vadd.f32 %v6865, %v7013
      %7015 = vmatmul.bf16.gmra.mxu0 %v6942
      %v7016 = vpop.f32.mrf.mxu0
      %v7017 = vadd.f32 %v6868, %v7016
      %v7018 = vpop.f32.mrf.mxu0
      %v7019 = vadd.f32 %v6870, %v7018
      %7020 = vmatmul.bf16.gmra.mxu0 %v6945
      %v7021 = vpop.f32.mrf.mxu0
      %v7022 = vadd.f32 %v6873, %v7021
      %v7023 = vpop.f32.mrf.mxu0
      %v7024 = vadd.f32 %v6875, %v7023
      %7025 = vmatmul.bf16.gmra.mxu0 %v6948
      %v7026 = vpop.f32.mrf.mxu0
      %v7027 = vadd.f32 %v6878, %v7026
      %v7028 = vpop.f32.mrf.mxu0
      %v7029 = vadd.f32 %v6880, %v7028
      %7030 = vmatmul.bf16.gmra.mxu0 %v6951
      %v7031 = vpop.f32.mrf.mxu0
      %v7032 = vadd.f32 %v6883, %v7031
      %v7033 = vpop.f32.mrf.mxu0
      %v7034 = vadd.f32 %v6885, %v7033
      %7035 = vmatmul.bf16.gmra.mxu0 %v6954
      %v7036 = vpop.f32.mrf.mxu0
      %v7037 = vadd.f32 %v6888, %v7036
      %v7038 = vpop.f32.mrf.mxu0
      %v7039 = vadd.f32 %v6890, %v7038
      %7040 = vmatmul.bf16.gmra.mxu0 %v6957
      %v7041 = vpop.f32.mrf.mxu0
      %v7042 = vadd.f32 %v6893, %v7041
      %v7043 = vpop.f32.mrf.mxu0
      %v7044 = vadd.f32 %v6895, %v7043
      %7045 = vmatmul.bf16.gmra.mxu0 %v6960
      %v7046 = vpop.f32.mrf.mxu0
      %v7047 = vadd.f32 %v6898, %v7046
      %v7048 = vpop.f32.mrf.mxu0
      %v7049 = vadd.f32 %v6900, %v7048
      %7050 = vdwg.mxu0
      %v7051 = vld [vmem:[#allocation2 + $0x6] sm:$0xff]
      %v7052 = vld [vmem:[#allocation2 + $0xe] sm:$0xff]
      %v7053 = vld [vmem:[#allocation2 + $0x16] sm:$0xff]
      %v7054 = vld [vmem:[#allocation2 + $0x1e] sm:$0xff]
      %v7055 = vld [vmem:[#allocation2 + $0x26] sm:$0xff]
      %v7056 = vld [vmem:[#allocation2 + $0x2e] sm:$0xff]
      %v7057 = vld [vmem:[#allocation2 + $0x36] sm:$0xff]
      %v7058 = vld [vmem:[#allocation2 + $0x3e] sm:$0xff]
      %v7059 = vld [vmem:[#allocation2 + $0x46] sm:$0xff]
      %v7060 = vld [vmem:[#allocation2 + $0x4e] sm:$0xff]
      %v7061 = vld [vmem:[#allocation2 + $0x56] sm:$0xff]
      %v7062 = vld [vmem:[#allocation2 + $0x5e] sm:$0xff]
      %v7063 = vld [vmem:[#allocation2 + $0x66] sm:$0xff]
      %v7064 = vld [vmem:[#allocation2 + $0x6e] sm:$0xff]
      %v7065 = vld [vmem:[#allocation2 + $0x76] sm:$0xff]
      %v7066 = vld [vmem:[#allocation2 + $0x7e] sm:$0xff]
      %v7067 = vld [vmem:[#allocation2 + $0x86] sm:$0xff]
      %v7068 = vld [vmem:[#allocation2 + $0x8e] sm:$0xff]
      %v7069 = vld [vmem:[#allocation2 + $0x96] sm:$0xff]
      %v7070 = vld [vmem:[#allocation2 + $0x9e] sm:$0xff]
      %v7071 = vld [vmem:[#allocation2 + $0xa6] sm:$0xff]
      %v7072 = vld [vmem:[#allocation2 + $0xae] sm:$0xff]
      %v7073 = vld [vmem:[#allocation2 + $0xb6] sm:$0xff]
      %v7074 = vld [vmem:[#allocation2 + $0xbe] sm:$0xff]
      %v7075 = vld [vmem:[#allocation2 + $0xc6] sm:$0xff]
      %v7076 = vld [vmem:[#allocation2 + $0xce] sm:$0xff]
      %v7077 = vld [vmem:[#allocation2 + $0xd6] sm:$0xff]
      %v7078 = vld [vmem:[#allocation2 + $0xde] sm:$0xff]
      %v7079 = vld [vmem:[#allocation2 + $0xe6] sm:$0xff]
      %v7080 = vld [vmem:[#allocation2 + $0xee] sm:$0xff]
      %v7081 = vld [vmem:[#allocation2 + $0xf6] sm:$0xff]
      %v7082 = vld [vmem:[#allocation2 + $0xfe] sm:$0xff]
      %v7083 = vpack.c.bf16 %v7052, %v7051
      %v7084 = vpack.c.bf16 %v7054, %v7053
      %v7085 = vpack.c.bf16 %v7056, %v7055
      %v7086 = vpack.c.bf16 %v7058, %v7057
      %v7087 = vpack.c.bf16 %v7060, %v7059
      %v7088 = vpack.c.bf16 %v7062, %v7061
      %v7089 = vpack.c.bf16 %v7064, %v7063
      %v7090 = vpack.c.bf16 %v7066, %v7065
      %v7091 = vpack.c.bf16 %v7068, %v7067
      %v7092 = vpack.c.bf16 %v7070, %v7069
      %v7093 = vpack.c.bf16 %v7072, %v7071
      %v7094 = vpack.c.bf16 %v7074, %v7073
      %v7095 = vpack.c.bf16 %v7076, %v7075
      %v7096 = vpack.c.bf16 %v7078, %v7077
      %v7097 = vpack.c.bf16 %v7080, %v7079
      %v7098 = vpack.c.bf16 %v7082, %v7081
      %s7099 = scalar_lea.vmem %s4, 320
      %v7100 = vld [vmem:[%s7099] sm:$0xf]
      %v7101 = vld [vmem:[%s7099 + $0x4] sm:$0xf]
      %v7102 = vld [vmem:[%s7099 + $0x8] sm:$0xf]
      %v7103 = vld [vmem:[%s7099 + $0xc] sm:$0xf]
      %v7108 = vunpack.c.l.b16 %v7100
      %v7109 = vunpack.c.l.b16 %v7101
      %v7110 = vunpack.c.l.b16 %v7102
      %v7111 = vunpack.c.l.b16 %v7103
      %v7112 = vpack.c.b16 %v7109, %v7108
      %v7113 = vpack.c.b16 %v7111, %v7110
      %v7117 = vsel %vm2480, %v7083, 0
      %v7120 = vsel %vm2480, %v7084, 0
      %v7123 = vsel %vm2480, %v7085, 0
      %v7126 = vsel %vm2480, %v7086, 0
      %v7129 = vsel %vm2480, %v7087, 0
      %v7132 = vsel %vm2480, %v7088, 0
      %v7135 = vsel %vm2480, %v7089, 0
      %v7138 = vsel %vm2480, %v7090, 0
      %v7141 = vsel %vm2480, %v7091, 0
      %v7144 = vsel %vm2480, %v7092, 0
      %v7147 = vsel %vm2480, %v7093, 0
      %v7150 = vsel %vm2480, %v7094, 0
      %v7153 = vsel %vm2480, %v7095, 0
      %v7156 = vsel %vm2480, %v7096, 0
      %v7159 = vsel %vm2480, %v7097, 0
      %v7162 = vsel %vm2480, %v7098, 0
      %7164 = vmatpush.bf16.msra.mxu0 0
      %7165 = vmatpush.bf16.msra.mxu0 0
      %7166 = vmatpush.bf16.msra.mxu0 0
      %7167 = vmatpush.bf16.msra.mxu0 0
      %7168 = vmatpush.bf16.msra.mxu0 0
      %7169 = vmatpush.bf16.msra.mxu0 0
      %7170 = vmatpush.bf16.msra.mxu0 %v7113
      %7171 = vmatpush.bf16.msra.mxu0 %v7112
      %7172 = vmatmul.bf16.gmra.mxu0 %v7117
      %v7173 = vpop.f32.mrf.mxu0
      %v7174 = vadd.f32 0.0, %v7173
      %v7175 = vpop.f32.mrf.mxu0
      %v7176 = vadd.f32 0.0, %v7175
      %7177 = vmatmul.bf16.gmra.mxu0 %v7120
      %v7178 = vpop.f32.mrf.mxu0
      %v7179 = vadd.f32 0.0, %v7178
      %v7180 = vpop.f32.mrf.mxu0
      %v7181 = vadd.f32 0.0, %v7180
      %7182 = vmatmul.bf16.gmra.mxu0 %v7123
      %v7183 = vpop.f32.mrf.mxu0
      %v7184 = vadd.f32 0.0, %v7183
      %v7185 = vpop.f32.mrf.mxu0
      %v7186 = vadd.f32 0.0, %v7185
      %7187 = vmatmul.bf16.gmra.mxu0 %v7126
      %v7188 = vpop.f32.mrf.mxu0
      %v7189 = vadd.f32 0.0, %v7188
      %v7190 = vpop.f32.mrf.mxu0
      %v7191 = vadd.f32 0.0, %v7190
      %7192 = vmatmul.bf16.gmra.mxu0 %v7129
      %v7193 = vpop.f32.mrf.mxu0
      %v7194 = vadd.f32 0.0, %v7193
      %v7195 = vpop.f32.mrf.mxu0
      %v7196 = vadd.f32 0.0, %v7195
      %7197 = vmatmul.bf16.gmra.mxu0 %v7132
      %v7198 = vpop.f32.mrf.mxu0
      %v7199 = vadd.f32 0.0, %v7198
      %v7200 = vpop.f32.mrf.mxu0
      %v7201 = vadd.f32 0.0, %v7200
      %7202 = vmatmul.bf16.gmra.mxu0 %v7135
      %v7203 = vpop.f32.mrf.mxu0
      %v7204 = vadd.f32 0.0, %v7203
      %v7205 = vpop.f32.mrf.mxu0
      %v7206 = vadd.f32 0.0, %v7205
      %7207 = vmatmul.bf16.gmra.mxu0 %v7138
      %v7208 = vpop.f32.mrf.mxu0
      %v7209 = vadd.f32 0.0, %v7208
      %v7210 = vpop.f32.mrf.mxu0
      %v7211 = vadd.f32 0.0, %v7210
      %7212 = vmatmul.bf16.gmra.mxu0 %v7141
      %v7213 = vpop.f32.mrf.mxu0
      %v7214 = vadd.f32 0.0, %v7213
      %v7215 = vpop.f32.mrf.mxu0
      %v7216 = vadd.f32 0.0, %v7215
      %7217 = vmatmul.bf16.gmra.mxu0 %v7144
      %v7218 = vpop.f32.mrf.mxu0
      %v7219 = vadd.f32 0.0, %v7218
      %v7220 = vpop.f32.mrf.mxu0
      %v7221 = vadd.f32 0.0, %v7220
      %7222 = vmatmul.bf16.gmra.mxu0 %v7147
      %v7223 = vpop.f32.mrf.mxu0
      %v7224 = vadd.f32 0.0, %v7223
      %v7225 = vpop.f32.mrf.mxu0
      %v7226 = vadd.f32 0.0, %v7225
      %7227 = vmatmul.bf16.gmra.mxu0 %v7150
      %v7228 = vpop.f32.mrf.mxu0
      %v7229 = vadd.f32 0.0, %v7228
      %v7230 = vpop.f32.mrf.mxu0
      %v7231 = vadd.f32 0.0, %v7230
      %7232 = vmatmul.bf16.gmra.mxu0 %v7153
      %v7233 = vpop.f32.mrf.mxu0
      %v7234 = vadd.f32 0.0, %v7233
      %v7235 = vpop.f32.mrf.mxu0
      %v7236 = vadd.f32 0.0, %v7235
      %7237 = vmatmul.bf16.gmra.mxu0 %v7156
      %v7238 = vpop.f32.mrf.mxu0
      %v7239 = vadd.f32 0.0, %v7238
      %v7240 = vpop.f32.mrf.mxu0
      %v7241 = vadd.f32 0.0, %v7240
      %7242 = vmatmul.bf16.gmra.mxu0 %v7159
      %v7243 = vpop.f32.mrf.mxu0
      %v7244 = vadd.f32 0.0, %v7243
      %v7245 = vpop.f32.mrf.mxu0
      %v7246 = vadd.f32 0.0, %v7245
      %7247 = vmatmul.bf16.gmra.mxu0 %v7162
      %v7248 = vpop.f32.mrf.mxu0
      %v7249 = vadd.f32 0.0, %v7248
      %v7250 = vpop.f32.mrf.mxu0
      %v7251 = vadd.f32 0.0, %v7250
      %7252 = vdwg.mxu0
      %v7253 = vadd.f32 %v6972, %v7174
      %v7254 = vadd.f32 %v6974, %v7176
      %v7255 = vadd.f32 %v6977, %v7179
      %v7256 = vadd.f32 %v6979, %v7181
      %v7257 = vadd.f32 %v6982, %v7184
      %v7258 = vadd.f32 %v6984, %v7186
      %v7259 = vadd.f32 %v6987, %v7189
      %v7260 = vadd.f32 %v6989, %v7191
      %v7261 = vadd.f32 %v6992, %v7194
      %v7262 = vadd.f32 %v6994, %v7196
      %v7263 = vadd.f32 %v6997, %v7199
      %v7264 = vadd.f32 %v6999, %v7201
      %v7265 = vadd.f32 %v7002, %v7204
      %v7266 = vadd.f32 %v7004, %v7206
      %v7267 = vadd.f32 %v7007, %v7209
      %v7268 = vadd.f32 %v7009, %v7211
      %v7269 = vadd.f32 %v7012, %v7214
      %v7270 = vadd.f32 %v7014, %v7216
      %v7271 = vadd.f32 %v7017, %v7219
      %v7272 = vadd.f32 %v7019, %v7221
      %v7273 = vadd.f32 %v7022, %v7224
      %v7274 = vadd.f32 %v7024, %v7226
      %v7275 = vadd.f32 %v7027, %v7229
      %v7276 = vadd.f32 %v7029, %v7231
      %v7277 = vadd.f32 %v7032, %v7234
      %v7278 = vadd.f32 %v7034, %v7236
      %v7279 = vadd.f32 %v7037, %v7239
      %v7280 = vadd.f32 %v7039, %v7241
      %v7281 = vadd.f32 %v7042, %v7244
      %v7282 = vadd.f32 %v7044, %v7246
      %v7283 = vadd.f32 %v7047, %v7249
      %v7284 = vadd.f32 %v7049, %v7251
      %v7285 = vld [vmem:[#allocation2 + $0x30] sm:$0xff]
      %v7286 = vld [vmem:[#allocation2 + $0x38] sm:$0xff]
      %v7287 = vld [vmem:[#allocation2 + $0x40] sm:$0xff]
      %v7288 = vld [vmem:[#allocation2 + $0x48] sm:$0xff]
      %v7289 = vld [vmem:[#allocation2 + $0x50] sm:$0xff]
      %v7290 = vld [vmem:[#allocation2 + $0x58] sm:$0xff]
      %v7291 = vld [vmem:[#allocation2 + $0x60] sm:$0xff]
      %v7292 = vld [vmem:[#allocation2 + $0x68] sm:$0xff]
      %v7293 = vld [vmem:[#allocation2 + $0x70] sm:$0xff]
      %v7294 = vld [vmem:[#allocation2 + $0x78] sm:$0xff]
      %v7295 = vld [vmem:[#allocation2 + $0x80] sm:$0xff]
      %v7296 = vld [vmem:[#allocation2 + $0x88] sm:$0xff]
      %v7297 = vld [vmem:[#allocation2 + $0x90] sm:$0xff]
      %v7298 = vld [vmem:[#allocation2 + $0x98] sm:$0xff]
      %v7299 = vld [vmem:[#allocation2 + $0xa0] sm:$0xff]
      %v7300 = vld [vmem:[#allocation2 + $0xa8] sm:$0xff]
      %v7301 = vld [vmem:[#allocation2 + $0xb0] sm:$0xff]
      %v7302 = vld [vmem:[#allocation2 + $0xb8] sm:$0xff]
      %v7303 = vld [vmem:[#allocation2 + $0xc0] sm:$0xff]
      %v7304 = vld [vmem:[#allocation2 + $0xc8] sm:$0xff]
      %v7305 = vld [vmem:[#allocation2 + $0xd0] sm:$0xff]
      %v7306 = vld [vmem:[#allocation2 + $0xd8] sm:$0xff]
      %v7307 = vld [vmem:[#allocation2 + $0xe0] sm:$0xff]
      %v7308 = vld [vmem:[#allocation2 + $0xe8] sm:$0xff]
      %v7309 = vld [vmem:[#allocation2 + $0xf0] sm:$0xff]
      %v7310 = vld [vmem:[#allocation2 + $0xf8] sm:$0xff]
      %v7311 = vld [vmem:[#allocation2 + $0x100] sm:$0xff]
      %v7312 = vld [vmem:[#allocation2 + $0x108] sm:$0xff]
      %v7313 = vld [vmem:[#allocation2 + $0x110] sm:$0xff]
      %v7314 = vld [vmem:[#allocation2 + $0x118] sm:$0xff]
      %v7315 = vld [vmem:[#allocation2 + $0x120] sm:$0xff]
      %v7316 = vld [vmem:[#allocation2 + $0x128] sm:$0xff]
      %v7317 = vpack.c.bf16 %v7286, %v7285
      %v7318 = vpack.c.bf16 %v7288, %v7287
      %v7319 = vpack.c.bf16 %v7290, %v7289
      %v7320 = vpack.c.bf16 %v7292, %v7291
      %v7321 = vpack.c.bf16 %v7294, %v7293
      %v7322 = vpack.c.bf16 %v7296, %v7295
      %v7323 = vpack.c.bf16 %v7298, %v7297
      %v7324 = vpack.c.bf16 %v7300, %v7299
      %v7325 = vpack.c.bf16 %v7302, %v7301
      %v7326 = vpack.c.bf16 %v7304, %v7303
      %v7327 = vpack.c.bf16 %v7306, %v7305
      %v7328 = vpack.c.bf16 %v7308, %v7307
      %v7329 = vpack.c.bf16 %v7310, %v7309
      %v7330 = vpack.c.bf16 %v7312, %v7311
      %v7331 = vpack.c.bf16 %v7314, %v7313
      %v7332 = vpack.c.bf16 %v7316, %v7315
      %s7333 = scalar_lea.vmem %s4, 336
      %v7334 = vld [vmem:[%s7333] sm:$0xf]
      %v7335 = vld [vmem:[%s7333 + $0x4] sm:$0xf]
      %v7336 = vld [vmem:[%s7333 + $0x8] sm:$0xf]
      %v7337 = vld [vmem:[%s7333 + $0xc] sm:$0xf]
      %v7342 = vunpack.c.l.b16 %v7334
      %v7343 = vunpack.c.l.b16 %v7335
      %v7344 = vunpack.c.l.b16 %v7336
      %v7345 = vunpack.c.l.b16 %v7337
      %v7346 = vpack.c.b16 %v7343, %v7342
      %v7347 = vpack.c.b16 %v7345, %v7344
      %v7351 = vsel %vm2480, %v7317, 0
      %v7354 = vsel %vm2480, %v7318, 0
      %v7357 = vsel %vm2480, %v7319, 0
      %v7360 = vsel %vm2480, %v7320, 0
      %v7363 = vsel %vm2480, %v7321, 0
      %v7366 = vsel %vm2480, %v7322, 0
      %v7369 = vsel %vm2480, %v7323, 0
      %v7372 = vsel %vm2480, %v7324, 0
      %v7375 = vsel %vm2480, %v7325, 0
      %v7378 = vsel %vm2480, %v7326, 0
      %v7381 = vsel %vm2480, %v7327, 0
      %v7384 = vsel %vm2480, %v7328, 0
      %v7387 = vsel %vm2480, %v7329, 0
      %v7390 = vsel %vm2480, %v7330, 0
      %v7393 = vsel %vm2480, %v7331, 0
      %v7396 = vsel %vm2480, %v7332, 0
      %7398 = vmatpush.bf16.msra.mxu0 0
      %7399 = vmatpush.bf16.msra.mxu0 0
      %7400 = vmatpush.bf16.msra.mxu0 0
      %7401 = vmatpush.bf16.msra.mxu0 0
      %7402 = vmatpush.bf16.msra.mxu0 0
      %7403 = vmatpush.bf16.msra.mxu0 0
      %7404 = vmatpush.bf16.msra.mxu0 %v7347
      %7405 = vmatpush.bf16.msra.mxu0 %v7346
      %7406 = vmatmul.bf16.gmra.mxu0 %v7351
      %v7407 = vpop.f32.mrf.mxu0
      %v7408 = vadd.f32 0.0, %v7407
      %v7409 = vpop.f32.mrf.mxu0
      %v7410 = vadd.f32 0.0, %v7409
      %7411 = vmatmul.bf16.gmra.mxu0 %v7354
      %v7412 = vpop.f32.mrf.mxu0
      %v7413 = vadd.f32 0.0, %v7412
      %v7414 = vpop.f32.mrf.mxu0
      %v7415 = vadd.f32 0.0, %v7414
      %7416 = vmatmul.bf16.gmra.mxu0 %v7357
      %v7417 = vpop.f32.mrf.mxu0
      %v7418 = vadd.f32 0.0, %v7417
      %v7419 = vpop.f32.mrf.mxu0
      %v7420 = vadd.f32 0.0, %v7419
      %7421 = vmatmul.bf16.gmra.mxu0 %v7360
      %v7422 = vpop.f32.mrf.mxu0
      %v7423 = vadd.f32 0.0, %v7422
      %v7424 = vpop.f32.mrf.mxu0
      %v7425 = vadd.f32 0.0, %v7424
      %7426 = vmatmul.bf16.gmra.mxu0 %v7363
      %v7427 = vpop.f32.mrf.mxu0
      %v7428 = vadd.f32 0.0, %v7427
      %v7429 = vpop.f32.mrf.mxu0
      %v7430 = vadd.f32 0.0, %v7429
      %7431 = vmatmul.bf16.gmra.mxu0 %v7366
      %v7432 = vpop.f32.mrf.mxu0
      %v7433 = vadd.f32 0.0, %v7432
      %v7434 = vpop.f32.mrf.mxu0
      %v7435 = vadd.f32 0.0, %v7434
      %7436 = vmatmul.bf16.gmra.mxu0 %v7369
      %v7437 = vpop.f32.mrf.mxu0
      %v7438 = vadd.f32 0.0, %v7437
      %v7439 = vpop.f32.mrf.mxu0
      %v7440 = vadd.f32 0.0, %v7439
      %7441 = vmatmul.bf16.gmra.mxu0 %v7372
      %v7442 = vpop.f32.mrf.mxu0
      %v7443 = vadd.f32 0.0, %v7442
      %v7444 = vpop.f32.mrf.mxu0
      %v7445 = vadd.f32 0.0, %v7444
      %7446 = vmatmul.bf16.gmra.mxu0 %v7375
      %v7447 = vpop.f32.mrf.mxu0
      %v7448 = vadd.f32 0.0, %v7447
      %v7449 = vpop.f32.mrf.mxu0
      %v7450 = vadd.f32 0.0, %v7449
      %7451 = vmatmul.bf16.gmra.mxu0 %v7378
      %v7452 = vpop.f32.mrf.mxu0
      %v7453 = vadd.f32 0.0, %v7452
      %v7454 = vpop.f32.mrf.mxu0
      %v7455 = vadd.f32 0.0, %v7454
      %7456 = vmatmul.bf16.gmra.mxu0 %v7381
      %v7457 = vpop.f32.mrf.mxu0
      %v7458 = vadd.f32 0.0, %v7457
      %v7459 = vpop.f32.mrf.mxu0
      %v7460 = vadd.f32 0.0, %v7459
      %7461 = vmatmul.bf16.gmra.mxu0 %v7384
      %v7462 = vpop.f32.mrf.mxu0
      %v7463 = vadd.f32 0.0, %v7462
      %v7464 = vpop.f32.mrf.mxu0
      %v7465 = vadd.f32 0.0, %v7464
      %7466 = vmatmul.bf16.gmra.mxu0 %v7387
      %v7467 = vpop.f32.mrf.mxu0
      %v7468 = vadd.f32 0.0, %v7467
      %v7469 = vpop.f32.mrf.mxu0
      %v7470 = vadd.f32 0.0, %v7469
      %7471 = vmatmul.bf16.gmra.mxu0 %v7390
      %v7472 = vpop.f32.mrf.mxu0
      %v7473 = vadd.f32 0.0, %v7472
      %v7474 = vpop.f32.mrf.mxu0
      %v7475 = vadd.f32 0.0, %v7474
      %7476 = vmatmul.bf16.gmra.mxu0 %v7393
      %v7477 = vpop.f32.mrf.mxu0
      %v7478 = vadd.f32 0.0, %v7477
      %v7479 = vpop.f32.mrf.mxu0
      %v7480 = vadd.f32 0.0, %v7479
      %7481 = vmatmul.bf16.gmra.mxu0 %v7396
      %v7482 = vpop.f32.mrf.mxu0
      %v7483 = vadd.f32 0.0, %v7482
      %v7484 = vpop.f32.mrf.mxu0
      %v7485 = vadd.f32 0.0, %v7484
      %7486 = vdwg.mxu0
      %v7487 = vadd.f32 %v7253, %v7408
      %v7488 = vadd.f32 %v7254, %v7410
      %v7489 = vadd.f32 %v7255, %v7413
      %v7490 = vadd.f32 %v7256, %v7415
      %v7491 = vadd.f32 %v7257, %v7418
      %v7492 = vadd.f32 %v7258, %v7420
      %v7493 = vadd.f32 %v7259, %v7423
      %v7494 = vadd.f32 %v7260, %v7425
      %v7495 = vadd.f32 %v7261, %v7428
      %v7496 = vadd.f32 %v7262, %v7430
      %v7497 = vadd.f32 %v7263, %v7433
      %v7498 = vadd.f32 %v7264, %v7435
      %v7499 = vadd.f32 %v7265, %v7438
      %v7500 = vadd.f32 %v7266, %v7440
      %v7501 = vadd.f32 %v7267, %v7443
      %v7502 = vadd.f32 %v7268, %v7445
      %v7503 = vadd.f32 %v7269, %v7448
      %v7504 = vadd.f32 %v7270, %v7450
      %v7505 = vadd.f32 %v7271, %v7453
      %v7506 = vadd.f32 %v7272, %v7455
      %v7507 = vadd.f32 %v7273, %v7458
      %v7508 = vadd.f32 %v7274, %v7460
      %v7509 = vadd.f32 %v7275, %v7463
      %v7510 = vadd.f32 %v7276, %v7465
      %v7511 = vadd.f32 %v7277, %v7468
      %v7512 = vadd.f32 %v7278, %v7470
      %v7513 = vadd.f32 %v7279, %v7473
      %v7514 = vadd.f32 %v7280, %v7475
      %v7515 = vadd.f32 %v7281, %v7478
      %v7516 = vadd.f32 %v7282, %v7480
      %v7517 = vadd.f32 %v7283, %v7483
      %v7518 = vadd.f32 %v7284, %v7485
      %s7519 = scalar_lea.vmem %s4, 352
      %v7520 = vld [vmem:[%s7519] sm:$0xf]
      %v7521 = vld [vmem:[%s7519 + $0x4] sm:$0xf]
      %v7522 = vld [vmem:[%s7519 + $0x8] sm:$0xf]
      %v7523 = vld [vmem:[%s7519 + $0xc] sm:$0xf]
      %v7528 = vunpack.c.l.b16 %v7520
      %v7529 = vunpack.c.l.b16 %v7521
      %v7530 = vunpack.c.l.b16 %v7522
      %v7531 = vunpack.c.l.b16 %v7523
      %v7532 = vpack.c.b16 %v7529, %v7528
      %v7533 = vpack.c.b16 %v7531, %v7530
      %7536 = vmatpush.bf16.msra.mxu0 0
      %7537 = vmatpush.bf16.msra.mxu0 0
      %7538 = vmatpush.bf16.msra.mxu0 0
      %7539 = vmatpush.bf16.msra.mxu0 0
      %7540 = vmatpush.bf16.msra.mxu0 0
      %7541 = vmatpush.bf16.msra.mxu0 0
      %7542 = vmatpush.bf16.msra.mxu0 %v7533
      %7543 = vmatpush.bf16.msra.mxu0 %v7532
      %7544 = vmatmul.bf16.gmra.mxu0 %v3465
      %v7545 = vpop.f32.mrf.mxu0
      %v7546 = vadd.f32 0.0, %v7545
      %v7547 = vpop.f32.mrf.mxu0
      %v7548 = vadd.f32 0.0, %v7547
      %7549 = vmatmul.bf16.gmra.mxu0 %v3468
      %v7550 = vpop.f32.mrf.mxu0
      %v7551 = vadd.f32 0.0, %v7550
      %v7552 = vpop.f32.mrf.mxu0
      %v7553 = vadd.f32 0.0, %v7552
      %7554 = vmatmul.bf16.gmra.mxu0 %v3471
      %v7555 = vpop.f32.mrf.mxu0
      %v7556 = vadd.f32 0.0, %v7555
      %v7557 = vpop.f32.mrf.mxu0
      %v7558 = vadd.f32 0.0, %v7557
      %7559 = vmatmul.bf16.gmra.mxu0 %v3474
      %v7560 = vpop.f32.mrf.mxu0
      %v7561 = vadd.f32 0.0, %v7560
      %v7562 = vpop.f32.mrf.mxu0
      %v7563 = vadd.f32 0.0, %v7562
      %7564 = vmatmul.bf16.gmra.mxu0 %v3477
      %v7565 = vpop.f32.mrf.mxu0
      %v7566 = vadd.f32 0.0, %v7565
      %v7567 = vpop.f32.mrf.mxu0
      %v7568 = vadd.f32 0.0, %v7567
      %7569 = vmatmul.bf16.gmra.mxu0 %v3480
      %v7570 = vpop.f32.mrf.mxu0
      %v7571 = vadd.f32 0.0, %v7570
      %v7572 = vpop.f32.mrf.mxu0
      %v7573 = vadd.f32 0.0, %v7572
      %7574 = vmatmul.bf16.gmra.mxu0 %v3483
      %v7575 = vpop.f32.mrf.mxu0
      %v7576 = vadd.f32 0.0, %v7575
      %v7577 = vpop.f32.mrf.mxu0
      %v7578 = vadd.f32 0.0, %v7577
      %7579 = vmatmul.bf16.gmra.mxu0 %v3486
      %v7580 = vpop.f32.mrf.mxu0
      %v7581 = vadd.f32 0.0, %v7580
      %v7582 = vpop.f32.mrf.mxu0
      %v7583 = vadd.f32 0.0, %v7582
      %7584 = vmatmul.bf16.gmra.mxu0 %v3489
      %v7585 = vpop.f32.mrf.mxu0
      %v7586 = vadd.f32 0.0, %v7585
      %v7587 = vpop.f32.mrf.mxu0
      %v7588 = vadd.f32 0.0, %v7587
      %7589 = vmatmul.bf16.gmra.mxu0 %v3492
      %v7590 = vpop.f32.mrf.mxu0
      %v7591 = vadd.f32 0.0, %v7590
      %v7592 = vpop.f32.mrf.mxu0
      %v7593 = vadd.f32 0.0, %v7592
      %7594 = vmatmul.bf16.gmra.mxu0 %v3495
      %v7595 = vpop.f32.mrf.mxu0
      %v7596 = vadd.f32 0.0, %v7595
      %v7597 = vpop.f32.mrf.mxu0
      %v7598 = vadd.f32 0.0, %v7597
      %7599 = vmatmul.bf16.gmra.mxu0 %v3498
      %v7600 = vpop.f32.mrf.mxu0
      %v7601 = vadd.f32 0.0, %v7600
      %v7602 = vpop.f32.mrf.mxu0
      %v7603 = vadd.f32 0.0, %v7602
      %7604 = vmatmul.bf16.gmra.mxu0 %v3501
      %v7605 = vpop.f32.mrf.mxu0
      %v7606 = vadd.f32 0.0, %v7605
      %v7607 = vpop.f32.mrf.mxu0
      %v7608 = vadd.f32 0.0, %v7607
      %7609 = vmatmul.bf16.gmra.mxu0 %v3504
      %v7610 = vpop.f32.mrf.mxu0
      %v7611 = vadd.f32 0.0, %v7610
      %v7612 = vpop.f32.mrf.mxu0
      %v7613 = vadd.f32 0.0, %v7612
      %7614 = vmatmul.bf16.gmra.mxu0 %v3507
      %v7615 = vpop.f32.mrf.mxu0
      %v7616 = vadd.f32 0.0, %v7615
      %v7617 = vpop.f32.mrf.mxu0
      %v7618 = vadd.f32 0.0, %v7617
      %7619 = vmatmul.bf16.gmra.mxu0 %v3510
      %v7620 = vpop.f32.mrf.mxu0
      %v7621 = vadd.f32 0.0, %v7620
      %v7622 = vpop.f32.mrf.mxu0
      %v7623 = vadd.f32 0.0, %v7622
      %7624 = vdwg.mxu0
      %v7625 = vadd.f32 %v7487, %v7546
      %v7626 = vadd.f32 %v7488, %v7548
      %v7627 = vadd.f32 %v7489, %v7551
      %v7628 = vadd.f32 %v7490, %v7553
      %v7629 = vadd.f32 %v7491, %v7556
      %v7630 = vadd.f32 %v7492, %v7558
      %v7631 = vadd.f32 %v7493, %v7561
      %v7632 = vadd.f32 %v7494, %v7563
      %v7633 = vadd.f32 %v7495, %v7566
      %v7634 = vadd.f32 %v7496, %v7568
      %v7635 = vadd.f32 %v7497, %v7571
      %v7636 = vadd.f32 %v7498, %v7573
      %v7637 = vadd.f32 %v7499, %v7576
      %v7638 = vadd.f32 %v7500, %v7578
      %v7639 = vadd.f32 %v7501, %v7581
      %v7640 = vadd.f32 %v7502, %v7583
      %v7641 = vadd.f32 %v7503, %v7586
      %v7642 = vadd.f32 %v7504, %v7588
      %v7643 = vadd.f32 %v7505, %v7591
      %v7644 = vadd.f32 %v7506, %v7593
      %v7645 = vadd.f32 %v7507, %v7596
      %v7646 = vadd.f32 %v7508, %v7598
      %v7647 = vadd.f32 %v7509, %v7601
      %v7648 = vadd.f32 %v7510, %v7603
      %v7649 = vadd.f32 %v7511, %v7606
      %v7650 = vadd.f32 %v7512, %v7608
      %v7651 = vadd.f32 %v7513, %v7611
      %v7652 = vadd.f32 %v7514, %v7613
      %v7653 = vadd.f32 %v7515, %v7616
      %v7654 = vadd.f32 %v7516, %v7618
      %v7655 = vadd.f32 %v7517, %v7621
      %v7656 = vadd.f32 %v7518, %v7623
      %v7657 = vld [vmem:[#allocation2 + $0x36] sm:$0xff]
      %v7658 = vld [vmem:[#allocation2 + $0x3e] sm:$0xff]
      %v7659 = vld [vmem:[#allocation2 + $0x46] sm:$0xff]
      %v7660 = vld [vmem:[#allocation2 + $0x4e] sm:$0xff]
      %v7661 = vld [vmem:[#allocation2 + $0x56] sm:$0xff]
      %v7662 = vld [vmem:[#allocation2 + $0x5e] sm:$0xff]
      %v7663 = vld [vmem:[#allocation2 + $0x66] sm:$0xff]
      %v7664 = vld [vmem:[#allocation2 + $0x6e] sm:$0xff]
      %v7665 = vld [vmem:[#allocation2 + $0x76] sm:$0xff]
      %v7666 = vld [vmem:[#allocation2 + $0x7e] sm:$0xff]
      %v7667 = vld [vmem:[#allocation2 + $0x86] sm:$0xff]
      %v7668 = vld [vmem:[#allocation2 + $0x8e] sm:$0xff]
      %v7669 = vld [vmem:[#allocation2 + $0x96] sm:$0xff]
      %v7670 = vld [vmem:[#allocation2 + $0x9e] sm:$0xff]
      %v7671 = vld [vmem:[#allocation2 + $0xa6] sm:$0xff]
      %v7672 = vld [vmem:[#allocation2 + $0xae] sm:$0xff]
      %v7673 = vld [vmem:[#allocation2 + $0xb6] sm:$0xff]
      %v7674 = vld [vmem:[#allocation2 + $0xbe] sm:$0xff]
      %v7675 = vld [vmem:[#allocation2 + $0xc6] sm:$0xff]
      %v7676 = vld [vmem:[#allocation2 + $0xce] sm:$0xff]
      %v7677 = vld [vmem:[#allocation2 + $0xd6] sm:$0xff]
      %v7678 = vld [vmem:[#allocation2 + $0xde] sm:$0xff]
      %v7679 = vld [vmem:[#allocation2 + $0xe6] sm:$0xff]
      %v7680 = vld [vmem:[#allocation2 + $0xee] sm:$0xff]
      %v7681 = vld [vmem:[#allocation2 + $0xf6] sm:$0xff]
      %v7682 = vld [vmem:[#allocation2 + $0xfe] sm:$0xff]
      %v7683 = vld [vmem:[#allocation2 + $0x106] sm:$0xff]
      %v7684 = vld [vmem:[#allocation2 + $0x10e] sm:$0xff]
      %v7685 = vld [vmem:[#allocation2 + $0x116] sm:$0xff]
      %v7686 = vld [vmem:[#allocation2 + $0x11e] sm:$0xff]
      %v7687 = vld [vmem:[#allocation2 + $0x126] sm:$0xff]
      %v7688 = vld [vmem:[#allocation2 + $0x12e] sm:$0xff]
      %v7689 = vpack.c.bf16 %v7658, %v7657
      %v7690 = vpack.c.bf16 %v7660, %v7659
      %v7691 = vpack.c.bf16 %v7662, %v7661
      %v7692 = vpack.c.bf16 %v7664, %v7663
      %v7693 = vpack.c.bf16 %v7666, %v7665
      %v7694 = vpack.c.bf16 %v7668, %v7667
      %v7695 = vpack.c.bf16 %v7670, %v7669
      %v7696 = vpack.c.bf16 %v7672, %v7671
      %v7697 = vpack.c.bf16 %v7674, %v7673
      %v7698 = vpack.c.bf16 %v7676, %v7675
      %v7699 = vpack.c.bf16 %v7678, %v7677
      %v7700 = vpack.c.bf16 %v7680, %v7679
      %v7701 = vpack.c.bf16 %v7682, %v7681
      %v7702 = vpack.c.bf16 %v7684, %v7683
      %v7703 = vpack.c.bf16 %v7686, %v7685
      %v7704 = vpack.c.bf16 %v7688, %v7687
      %s7705 = scalar_lea.vmem %s4, 368
      %v7706 = vld [vmem:[%s7705] sm:$0xf]
      %v7707 = vld [vmem:[%s7705 + $0x4] sm:$0xf]
      %v7708 = vld [vmem:[%s7705 + $0x8] sm:$0xf]
      %v7709 = vld [vmem:[%s7705 + $0xc] sm:$0xf]
      %v7714 = vunpack.c.l.b16 %v7706
      %v7715 = vunpack.c.l.b16 %v7707
      %v7716 = vunpack.c.l.b16 %v7708
      %v7717 = vunpack.c.l.b16 %v7709
      %v7718 = vpack.c.b16 %v7715, %v7714
      %v7719 = vpack.c.b16 %v7717, %v7716
      %v7723 = vsel %vm2480, %v7689, 0
      %v7726 = vsel %vm2480, %v7690, 0
      %v7729 = vsel %vm2480, %v7691, 0
      %v7732 = vsel %vm2480, %v7692, 0
      %v7735 = vsel %vm2480, %v7693, 0
      %v7738 = vsel %vm2480, %v7694, 0
      %v7741 = vsel %vm2480, %v7695, 0
      %v7744 = vsel %vm2480, %v7696, 0
      %v7747 = vsel %vm2480, %v7697, 0
      %v7750 = vsel %vm2480, %v7698, 0
      %v7753 = vsel %vm2480, %v7699, 0
      %v7756 = vsel %vm2480, %v7700, 0
      %v7759 = vsel %vm2480, %v7701, 0
      %v7762 = vsel %vm2480, %v7702, 0
      %v7765 = vsel %vm2480, %v7703, 0
      %v7768 = vsel %vm2480, %v7704, 0
      %7770 = vmatpush.bf16.msra.mxu0 0
      %7771 = vmatpush.bf16.msra.mxu0 0
      %7772 = vmatpush.bf16.msra.mxu0 0
      %7773 = vmatpush.bf16.msra.mxu0 0
      %7774 = vmatpush.bf16.msra.mxu0 0
      %7775 = vmatpush.bf16.msra.mxu0 0
      %7776 = vmatpush.bf16.msra.mxu0 %v7719
      %7777 = vmatpush.bf16.msra.mxu0 %v7718
      %7778 = vmatmul.bf16.gmra.mxu0 %v7723
      %v7779 = vpop.f32.mrf.mxu0
      %v7780 = vadd.f32 0.0, %v7779
      %v7781 = vpop.f32.mrf.mxu0
      %v7782 = vadd.f32 0.0, %v7781
      %7783 = vmatmul.bf16.gmra.mxu0 %v7726
      %v7784 = vpop.f32.mrf.mxu0
      %v7785 = vadd.f32 0.0, %v7784
      %v7786 = vpop.f32.mrf.mxu0
      %v7787 = vadd.f32 0.0, %v7786
      %7788 = vmatmul.bf16.gmra.mxu0 %v7729
      %v7789 = vpop.f32.mrf.mxu0
      %v7790 = vadd.f32 0.0, %v7789
      %v7791 = vpop.f32.mrf.mxu0
      %v7792 = vadd.f32 0.0, %v7791
      %7793 = vmatmul.bf16.gmra.mxu0 %v7732
      %v7794 = vpop.f32.mrf.mxu0
      %v7795 = vadd.f32 0.0, %v7794
      %v7796 = vpop.f32.mrf.mxu0
      %v7797 = vadd.f32 0.0, %v7796
      %7798 = vmatmul.bf16.gmra.mxu0 %v7735
      %v7799 = vpop.f32.mrf.mxu0
      %v7800 = vadd.f32 0.0, %v7799
      %v7801 = vpop.f32.mrf.mxu0
      %v7802 = vadd.f32 0.0, %v7801
      %7803 = vmatmul.bf16.gmra.mxu0 %v7738
      %v7804 = vpop.f32.mrf.mxu0
      %v7805 = vadd.f32 0.0, %v7804
      %v7806 = vpop.f32.mrf.mxu0
      %v7807 = vadd.f32 0.0, %v7806
      %7808 = vmatmul.bf16.gmra.mxu0 %v7741
      %v7809 = vpop.f32.mrf.mxu0
      %v7810 = vadd.f32 0.0, %v7809
      %v7811 = vpop.f32.mrf.mxu0
      %v7812 = vadd.f32 0.0, %v7811
      %7813 = vmatmul.bf16.gmra.mxu0 %v7744
      %v7814 = vpop.f32.mrf.mxu0
      %v7815 = vadd.f32 0.0, %v7814
      %v7816 = vpop.f32.mrf.mxu0
      %v7817 = vadd.f32 0.0, %v7816
      %7818 = vmatmul.bf16.gmra.mxu0 %v7747
      %v7819 = vpop.f32.mrf.mxu0
      %v7820 = vadd.f32 0.0, %v7819
      %v7821 = vpop.f32.mrf.mxu0
      %v7822 = vadd.f32 0.0, %v7821
      %7823 = vmatmul.bf16.gmra.mxu0 %v7750
      %v7824 = vpop.f32.mrf.mxu0
      %v7825 = vadd.f32 0.0, %v7824
      %v7826 = vpop.f32.mrf.mxu0
      %v7827 = vadd.f32 0.0, %v7826
      %7828 = vmatmul.bf16.gmra.mxu0 %v7753
      %v7829 = vpop.f32.mrf.mxu0
      %v7830 = vadd.f32 0.0, %v7829
      %v7831 = vpop.f32.mrf.mxu0
      %v7832 = vadd.f32 0.0, %v7831
      %7833 = vmatmul.bf16.gmra.mxu0 %v7756
      %v7834 = vpop.f32.mrf.mxu0
      %v7835 = vadd.f32 0.0, %v7834
      %v7836 = vpop.f32.mrf.mxu0
      %v7837 = vadd.f32 0.0, %v7836
      %7838 = vmatmul.bf16.gmra.mxu0 %v7759
      %v7839 = vpop.f32.mrf.mxu0
      %v7840 = vadd.f32 0.0, %v7839
      %v7841 = vpop.f32.mrf.mxu0
      %v7842 = vadd.f32 0.0, %v7841
      %7843 = vmatmul.bf16.gmra.mxu0 %v7762
      %v7844 = vpop.f32.mrf.mxu0
      %v7845 = vadd.f32 0.0, %v7844
      %v7846 = vpop.f32.mrf.mxu0
      %v7847 = vadd.f32 0.0, %v7846
      %7848 = vmatmul.bf16.gmra.mxu0 %v7765
      %v7849 = vpop.f32.mrf.mxu0
      %v7850 = vadd.f32 0.0, %v7849
      %v7851 = vpop.f32.mrf.mxu0
      %v7852 = vadd.f32 0.0, %v7851
      %7853 = vmatmul.bf16.gmra.mxu0 %v7768
      %v7854 = vpop.f32.mrf.mxu0
      %v7855 = vadd.f32 0.0, %v7854
      %v7856 = vpop.f32.mrf.mxu0
      %v7857 = vadd.f32 0.0, %v7856
      %7858 = vdwg.mxu0
      %v7859 = vadd.f32 %v7625, %v7780
      %v7860 = vadd.f32 %v7626, %v7782
      %v7861 = vadd.f32 %v7627, %v7785
      %v7862 = vadd.f32 %v7628, %v7787
      %v7863 = vadd.f32 %v7629, %v7790
      %v7864 = vadd.f32 %v7630, %v7792
      %v7865 = vadd.f32 %v7631, %v7795
      %v7866 = vadd.f32 %v7632, %v7797
      %v7867 = vadd.f32 %v7633, %v7800
      %v7868 = vadd.f32 %v7634, %v7802
      %v7869 = vadd.f32 %v7635, %v7805
      %v7870 = vadd.f32 %v7636, %v7807
      %v7871 = vadd.f32 %v7637, %v7810
      %v7872 = vadd.f32 %v7638, %v7812
      %v7873 = vadd.f32 %v7639, %v7815
      %v7874 = vadd.f32 %v7640, %v7817
      %v7875 = vadd.f32 %v7641, %v7820
      %v7876 = vadd.f32 %v7642, %v7822
      %v7877 = vadd.f32 %v7643, %v7825
      %v7878 = vadd.f32 %v7644, %v7827
      %v7879 = vadd.f32 %v7645, %v7830
      %v7880 = vadd.f32 %v7646, %v7832
      %v7881 = vadd.f32 %v7647, %v7835
      %v7882 = vadd.f32 %v7648, %v7837
      %v7883 = vadd.f32 %v7649, %v7840
      %v7884 = vadd.f32 %v7650, %v7842
      %v7885 = vadd.f32 %v7651, %v7845
      %v7886 = vadd.f32 %v7652, %v7847
      %v7887 = vadd.f32 %v7653, %v7850
      %v7888 = vadd.f32 %v7654, %v7852
      %v7889 = vadd.f32 %v7655, %v7855
      %v7890 = vadd.f32 %v7656, %v7857
      %v7891 = vld [vmem:[#allocation2 + $0x60] sm:$0xff]
      %v7892 = vld [vmem:[#allocation2 + $0x68] sm:$0xff]
      %v7893 = vld [vmem:[#allocation2 + $0x70] sm:$0xff]
      %v7894 = vld [vmem:[#allocation2 + $0x78] sm:$0xff]
      %v7895 = vld [vmem:[#allocation2 + $0x80] sm:$0xff]
      %v7896 = vld [vmem:[#allocation2 + $0x88] sm:$0xff]
      %v7897 = vld [vmem:[#allocation2 + $0x90] sm:$0xff]
      %v7898 = vld [vmem:[#allocation2 + $0x98] sm:$0xff]
      %v7899 = vld [vmem:[#allocation2 + $0xa0] sm:$0xff]
      %v7900 = vld [vmem:[#allocation2 + $0xa8] sm:$0xff]
      %v7901 = vld [vmem:[#allocation2 + $0xb0] sm:$0xff]
      %v7902 = vld [vmem:[#allocation2 + $0xb8] sm:$0xff]
      %v7903 = vld [vmem:[#allocation2 + $0xc0] sm:$0xff]
      %v7904 = vld [vmem:[#allocation2 + $0xc8] sm:$0xff]
      %v7905 = vld [vmem:[#allocation2 + $0xd0] sm:$0xff]
      %v7906 = vld [vmem:[#allocation2 + $0xd8] sm:$0xff]
      %v7907 = vld [vmem:[#allocation2 + $0xe0] sm:$0xff]
      %v7908 = vld [vmem:[#allocation2 + $0xe8] sm:$0xff]
      %v7909 = vld [vmem:[#allocation2 + $0xf0] sm:$0xff]
      %v7910 = vld [vmem:[#allocation2 + $0xf8] sm:$0xff]
      %v7911 = vld [vmem:[#allocation2 + $0x100] sm:$0xff]
      %v7912 = vld [vmem:[#allocation2 + $0x108] sm:$0xff]
      %v7913 = vld [vmem:[#allocation2 + $0x110] sm:$0xff]
      %v7914 = vld [vmem:[#allocation2 + $0x118] sm:$0xff]
      %v7915 = vld [vmem:[#allocation2 + $0x120] sm:$0xff]
      %v7916 = vld [vmem:[#allocation2 + $0x128] sm:$0xff]
      %v7917 = vld [vmem:[#allocation2 + $0x130] sm:$0xff]
      %v7918 = vld [vmem:[#allocation2 + $0x138] sm:$0xff]
      %v7919 = vld [vmem:[#allocation2 + $0x140] sm:$0xff]
      %v7920 = vld [vmem:[#allocation2 + $0x148] sm:$0xff]
      %v7921 = vld [vmem:[#allocation2 + $0x150] sm:$0xff]
      %v7922 = vld [vmem:[#allocation2 + $0x158] sm:$0xff]
      %v7923 = vpack.c.bf16 %v7892, %v7891
      %v7924 = vpack.c.bf16 %v7894, %v7893
      %v7925 = vpack.c.bf16 %v7896, %v7895
      %v7926 = vpack.c.bf16 %v7898, %v7897
      %v7927 = vpack.c.bf16 %v7900, %v7899
      %v7928 = vpack.c.bf16 %v7902, %v7901
      %v7929 = vpack.c.bf16 %v7904, %v7903
      %v7930 = vpack.c.bf16 %v7906, %v7905
      %v7931 = vpack.c.bf16 %v7908, %v7907
      %v7932 = vpack.c.bf16 %v7910, %v7909
      %v7933 = vpack.c.bf16 %v7912, %v7911
      %v7934 = vpack.c.bf16 %v7914, %v7913
      %v7935 = vpack.c.bf16 %v7916, %v7915
      %v7936 = vpack.c.bf16 %v7918, %v7917
      %v7937 = vpack.c.bf16 %v7920, %v7919
      %v7938 = vpack.c.bf16 %v7922, %v7921
      %s7939 = scalar_lea.vmem %s4, 384
      %v7940 = vld [vmem:[%s7939] sm:$0xf]
      %v7941 = vld [vmem:[%s7939 + $0x4] sm:$0xf]
      %v7942 = vld [vmem:[%s7939 + $0x8] sm:$0xf]
      %v7943 = vld [vmem:[%s7939 + $0xc] sm:$0xf]
      %v7948 = vunpack.c.l.b16 %v7940
      %v7949 = vunpack.c.l.b16 %v7941
      %v7950 = vunpack.c.l.b16 %v7942
      %v7951 = vunpack.c.l.b16 %v7943
      %v7952 = vpack.c.b16 %v7949, %v7948
      %v7953 = vpack.c.b16 %v7951, %v7950
      %v7957 = vsel %vm2480, %v7923, 0
      %v7960 = vsel %vm2480, %v7924, 0
      %v7963 = vsel %vm2480, %v7925, 0
      %v7966 = vsel %vm2480, %v7926, 0
      %v7969 = vsel %vm2480, %v7927, 0
      %v7972 = vsel %vm2480, %v7928, 0
      %v7975 = vsel %vm2480, %v7929, 0
      %v7978 = vsel %vm2480, %v7930, 0
      %v7981 = vsel %vm2480, %v7931, 0
      %v7984 = vsel %vm2480, %v7932, 0
      %v7987 = vsel %vm2480, %v7933, 0
      %v7990 = vsel %vm2480, %v7934, 0
      %v7993 = vsel %vm2480, %v7935, 0
      %v7996 = vsel %vm2480, %v7936, 0
      %v7999 = vsel %vm2480, %v7937, 0
      %v8002 = vsel %vm2480, %v7938, 0
      %8004 = vmatpush.bf16.msra.mxu0 0
      %8005 = vmatpush.bf16.msra.mxu0 0
      %8006 = vmatpush.bf16.msra.mxu0 0
      %8007 = vmatpush.bf16.msra.mxu0 0
      %8008 = vmatpush.bf16.msra.mxu0 0
      %8009 = vmatpush.bf16.msra.mxu0 0
      %8010 = vmatpush.bf16.msra.mxu0 %v7953
      %8011 = vmatpush.bf16.msra.mxu0 %v7952
      %8012 = vmatmul.bf16.gmra.mxu0 %v7957
      %v8013 = vpop.f32.mrf.mxu0
      %v8014 = vadd.f32 0.0, %v8013
      %v8015 = vpop.f32.mrf.mxu0
      %v8016 = vadd.f32 0.0, %v8015
      %8017 = vmatmul.bf16.gmra.mxu0 %v7960
      %v8018 = vpop.f32.mrf.mxu0
      %v8019 = vadd.f32 0.0, %v8018
      %v8020 = vpop.f32.mrf.mxu0
      %v8021 = vadd.f32 0.0, %v8020
      %8022 = vmatmul.bf16.gmra.mxu0 %v7963
      %v8023 = vpop.f32.mrf.mxu0
      %v8024 = vadd.f32 0.0, %v8023
      %v8025 = vpop.f32.mrf.mxu0
      %v8026 = vadd.f32 0.0, %v8025
      %8027 = vmatmul.bf16.gmra.mxu0 %v7966
      %v8028 = vpop.f32.mrf.mxu0
      %v8029 = vadd.f32 0.0, %v8028
      %v8030 = vpop.f32.mrf.mxu0
      %v8031 = vadd.f32 0.0, %v8030
      %8032 = vmatmul.bf16.gmra.mxu0 %v7969
      %v8033 = vpop.f32.mrf.mxu0
      %v8034 = vadd.f32 0.0, %v8033
      %v8035 = vpop.f32.mrf.mxu0
      %v8036 = vadd.f32 0.0, %v8035
      %8037 = vmatmul.bf16.gmra.mxu0 %v7972
      %v8038 = vpop.f32.mrf.mxu0
      %v8039 = vadd.f32 0.0, %v8038
      %v8040 = vpop.f32.mrf.mxu0
      %v8041 = vadd.f32 0.0, %v8040
      %8042 = vmatmul.bf16.gmra.mxu0 %v7975
      %v8043 = vpop.f32.mrf.mxu0
      %v8044 = vadd.f32 0.0, %v8043
      %v8045 = vpop.f32.mrf.mxu0
      %v8046 = vadd.f32 0.0, %v8045
      %8047 = vmatmul.bf16.gmra.mxu0 %v7978
      %v8048 = vpop.f32.mrf.mxu0
      %v8049 = vadd.f32 0.0, %v8048
      %v8050 = vpop.f32.mrf.mxu0
      %v8051 = vadd.f32 0.0, %v8050
      %8052 = vmatmul.bf16.gmra.mxu0 %v7981
      %v8053 = vpop.f32.mrf.mxu0
      %v8054 = vadd.f32 0.0, %v8053
      %v8055 = vpop.f32.mrf.mxu0
      %v8056 = vadd.f32 0.0, %v8055
      %8057 = vmatmul.bf16.gmra.mxu0 %v7984
      %v8058 = vpop.f32.mrf.mxu0
      %v8059 = vadd.f32 0.0, %v8058
      %v8060 = vpop.f32.mrf.mxu0
      %v8061 = vadd.f32 0.0, %v8060
      %8062 = vmatmul.bf16.gmra.mxu0 %v7987
      %v8063 = vpop.f32.mrf.mxu0
      %v8064 = vadd.f32 0.0, %v8063
      %v8065 = vpop.f32.mrf.mxu0
      %v8066 = vadd.f32 0.0, %v8065
      %8067 = vmatmul.bf16.gmra.mxu0 %v7990
      %v8068 = vpop.f32.mrf.mxu0
      %v8069 = vadd.f32 0.0, %v8068
      %v8070 = vpop.f32.mrf.mxu0
      %v8071 = vadd.f32 0.0, %v8070
      %8072 = vmatmul.bf16.gmra.mxu0 %v7993
      %v8073 = vpop.f32.mrf.mxu0
      %v8074 = vadd.f32 0.0, %v8073
      %v8075 = vpop.f32.mrf.mxu0
      %v8076 = vadd.f32 0.0, %v8075
      %8077 = vmatmul.bf16.gmra.mxu0 %v7996
      %v8078 = vpop.f32.mrf.mxu0
      %v8079 = vadd.f32 0.0, %v8078
      %v8080 = vpop.f32.mrf.mxu0
      %v8081 = vadd.f32 0.0, %v8080
      %8082 = vmatmul.bf16.gmra.mxu0 %v7999
      %v8083 = vpop.f32.mrf.mxu0
      %v8084 = vadd.f32 0.0, %v8083
      %v8085 = vpop.f32.mrf.mxu0
      %v8086 = vadd.f32 0.0, %v8085
      %8087 = vmatmul.bf16.gmra.mxu0 %v8002
      %v8088 = vpop.f32.mrf.mxu0
      %v8089 = vadd.f32 0.0, %v8088
      %v8090 = vpop.f32.mrf.mxu0
      %v8091 = vadd.f32 0.0, %v8090
      %8092 = vdwg.mxu0
      %v8093 = vadd.f32 %v7859, %v8014
      %v8094 = vadd.f32 %v7860, %v8016
      %v8095 = vadd.f32 %v7861, %v8019
      %v8096 = vadd.f32 %v7862, %v8021
      %v8097 = vadd.f32 %v7863, %v8024
      %v8098 = vadd.f32 %v7864, %v8026
      %v8099 = vadd.f32 %v7865, %v8029
      %v8100 = vadd.f32 %v7866, %v8031
      %v8101 = vadd.f32 %v7867, %v8034
      %v8102 = vadd.f32 %v7868, %v8036
      %v8103 = vadd.f32 %v7869, %v8039
      %v8104 = vadd.f32 %v7870, %v8041
      %v8105 = vadd.f32 %v7871, %v8044
      %v8106 = vadd.f32 %v7872, %v8046
      %v8107 = vadd.f32 %v7873, %v8049
      %v8108 = vadd.f32 %v7874, %v8051
      %v8109 = vadd.f32 %v7875, %v8054
      %v8110 = vadd.f32 %v7876, %v8056
      %v8111 = vadd.f32 %v7877, %v8059
      %v8112 = vadd.f32 %v7878, %v8061
      %v8113 = vadd.f32 %v7879, %v8064
      %v8114 = vadd.f32 %v7880, %v8066
      %v8115 = vadd.f32 %v7881, %v8069
      %v8116 = vadd.f32 %v7882, %v8071
      %v8117 = vadd.f32 %v7883, %v8074
      %v8118 = vadd.f32 %v7884, %v8076
      %v8119 = vadd.f32 %v7885, %v8079
      %v8120 = vadd.f32 %v7886, %v8081
      %v8121 = vadd.f32 %v7887, %v8084
      %v8122 = vadd.f32 %v7888, %v8086
      %v8123 = vadd.f32 %v7889, %v8089
      %v8124 = vadd.f32 %v7890, %v8091
      %v8125 = vld [vmem:[#allocation2 + $0x63] sm:$0xff]
      %v8126 = vld [vmem:[#allocation2 + $0x6b] sm:$0xff]
      %v8127 = vld [vmem:[#allocation2 + $0x73] sm:$0xff]
      %v8128 = vld [vmem:[#allocation2 + $0x7b] sm:$0xff]
      %v8129 = vld [vmem:[#allocation2 + $0x83] sm:$0xff]
      %v8130 = vld [vmem:[#allocation2 + $0x8b] sm:$0xff]
      %v8131 = vld [vmem:[#allocation2 + $0x93] sm:$0xff]
      %v8132 = vld [vmem:[#allocation2 + $0x9b] sm:$0xff]
      %v8133 = vld [vmem:[#allocation2 + $0xa3] sm:$0xff]
      %v8134 = vld [vmem:[#allocation2 + $0xab] sm:$0xff]
      %v8135 = vld [vmem:[#allocation2 + $0xb3] sm:$0xff]
      %v8136 = vld [vmem:[#allocation2 + $0xbb] sm:$0xff]
      %v8137 = vld [vmem:[#allocation2 + $0xc3] sm:$0xff]
      %v8138 = vld [vmem:[#allocation2 + $0xcb] sm:$0xff]
      %v8139 = vld [vmem:[#allocation2 + $0xd3] sm:$0xff]
      %v8140 = vld [vmem:[#allocation2 + $0xdb] sm:$0xff]
      %v8141 = vld [vmem:[#allocation2 + $0xe3] sm:$0xff]
      %v8142 = vld [vmem:[#allocation2 + $0xeb] sm:$0xff]
      %v8143 = vld [vmem:[#allocation2 + $0xf3] sm:$0xff]
      %v8144 = vld [vmem:[#allocation2 + $0xfb] sm:$0xff]
      %v8145 = vld [vmem:[#allocation2 + $0x103] sm:$0xff]
      %v8146 = vld [vmem:[#allocation2 + $0x10b] sm:$0xff]
      %v8147 = vld [vmem:[#allocation2 + $0x113] sm:$0xff]
      %v8148 = vld [vmem:[#allocation2 + $0x11b] sm:$0xff]
      %v8149 = vld [vmem:[#allocation2 + $0x123] sm:$0xff]
      %v8150 = vld [vmem:[#allocation2 + $0x12b] sm:$0xff]
      %v8151 = vld [vmem:[#allocation2 + $0x133] sm:$0xff]
      %v8152 = vld [vmem:[#allocation2 + $0x13b] sm:$0xff]
      %v8153 = vld [vmem:[#allocation2 + $0x143] sm:$0xff]
      %v8154 = vld [vmem:[#allocation2 + $0x14b] sm:$0xff]
      %v8155 = vld [vmem:[#allocation2 + $0x153] sm:$0xff]
      %v8156 = vld [vmem:[#allocation2 + $0x15b] sm:$0xff]
      %v8157 = vpack.c.bf16 %v8126, %v8125
      %v8158 = vpack.c.bf16 %v8128, %v8127
      %v8159 = vpack.c.bf16 %v8130, %v8129
      %v8160 = vpack.c.bf16 %v8132, %v8131
      %v8161 = vpack.c.bf16 %v8134, %v8133
      %v8162 = vpack.c.bf16 %v8136, %v8135
      %v8163 = vpack.c.bf16 %v8138, %v8137
      %v8164 = vpack.c.bf16 %v8140, %v8139
      %v8165 = vpack.c.bf16 %v8142, %v8141
      %v8166 = vpack.c.bf16 %v8144, %v8143
      %v8167 = vpack.c.bf16 %v8146, %v8145
      %v8168 = vpack.c.bf16 %v8148, %v8147
      %v8169 = vpack.c.bf16 %v8150, %v8149
      %v8170 = vpack.c.bf16 %v8152, %v8151
      %v8171 = vpack.c.bf16 %v8154, %v8153
      %v8172 = vpack.c.bf16 %v8156, %v8155
      %s8173 = scalar_lea.vmem %s4, 400
      %v8174 = vld [vmem:[%s8173] sm:$0xf]
      %v8175 = vld [vmem:[%s8173 + $0x4] sm:$0xf]
      %v8176 = vld [vmem:[%s8173 + $0x8] sm:$0xf]
      %v8177 = vld [vmem:[%s8173 + $0xc] sm:$0xf]
      %v8182 = vunpack.c.l.b16 %v8174
      %v8183 = vunpack.c.l.b16 %v8175
      %v8184 = vunpack.c.l.b16 %v8176
      %v8185 = vunpack.c.l.b16 %v8177
      %v8186 = vpack.c.b16 %v8183, %v8182
      %v8187 = vpack.c.b16 %v8185, %v8184
      %v8191 = vsel %vm2480, %v8157, 0
      %v8194 = vsel %vm2480, %v8158, 0
      %v8197 = vsel %vm2480, %v8159, 0
      %v8200 = vsel %vm2480, %v8160, 0
      %v8203 = vsel %vm2480, %v8161, 0
      %v8206 = vsel %vm2480, %v8162, 0
      %v8209 = vsel %vm2480, %v8163, 0
      %v8212 = vsel %vm2480, %v8164, 0
      %v8215 = vsel %vm2480, %v8165, 0
      %v8218 = vsel %vm2480, %v8166, 0
      %v8221 = vsel %vm2480, %v8167, 0
      %v8224 = vsel %vm2480, %v8168, 0
      %v8227 = vsel %vm2480, %v8169, 0
      %v8230 = vsel %vm2480, %v8170, 0
      %v8233 = vsel %vm2480, %v8171, 0
      %v8236 = vsel %vm2480, %v8172, 0
      %8238 = vmatpush.bf16.msra.mxu0 0
      %8239 = vmatpush.bf16.msra.mxu0 0
      %8240 = vmatpush.bf16.msra.mxu0 0
      %8241 = vmatpush.bf16.msra.mxu0 0
      %8242 = vmatpush.bf16.msra.mxu0 0
      %8243 = vmatpush.bf16.msra.mxu0 0
      %8244 = vmatpush.bf16.msra.mxu0 %v8187
      %8245 = vmatpush.bf16.msra.mxu0 %v8186
      %8246 = vmatmul.bf16.gmra.mxu0 %v8191
      %v8247 = vpop.f32.mrf.mxu0
      %v8248 = vadd.f32 0.0, %v8247
      %v8249 = vpop.f32.mrf.mxu0
      %v8250 = vadd.f32 0.0, %v8249
      %8251 = vmatmul.bf16.gmra.mxu0 %v8194
      %v8252 = vpop.f32.mrf.mxu0
      %v8253 = vadd.f32 0.0, %v8252
      %v8254 = vpop.f32.mrf.mxu0
      %v8255 = vadd.f32 0.0, %v8254
      %8256 = vmatmul.bf16.gmra.mxu0 %v8197
      %v8257 = vpop.f32.mrf.mxu0
      %v8258 = vadd.f32 0.0, %v8257
      %v8259 = vpop.f32.mrf.mxu0
      %v8260 = vadd.f32 0.0, %v8259
      %8261 = vmatmul.bf16.gmra.mxu0 %v8200
      %v8262 = vpop.f32.mrf.mxu0
      %v8263 = vadd.f32 0.0, %v8262
      %v8264 = vpop.f32.mrf.mxu0
      %v8265 = vadd.f32 0.0, %v8264
      %8266 = vmatmul.bf16.gmra.mxu0 %v8203
      %v8267 = vpop.f32.mrf.mxu0
      %v8268 = vadd.f32 0.0, %v8267
      %v8269 = vpop.f32.mrf.mxu0
      %v8270 = vadd.f32 0.0, %v8269
      %8271 = vmatmul.bf16.gmra.mxu0 %v8206
      %v8272 = vpop.f32.mrf.mxu0
      %v8273 = vadd.f32 0.0, %v8272
      %v8274 = vpop.f32.mrf.mxu0
      %v8275 = vadd.f32 0.0, %v8274
      %8276 = vmatmul.bf16.gmra.mxu0 %v8209
      %v8277 = vpop.f32.mrf.mxu0
      %v8278 = vadd.f32 0.0, %v8277
      %v8279 = vpop.f32.mrf.mxu0
      %v8280 = vadd.f32 0.0, %v8279
      %8281 = vmatmul.bf16.gmra.mxu0 %v8212
      %v8282 = vpop.f32.mrf.mxu0
      %v8283 = vadd.f32 0.0, %v8282
      %v8284 = vpop.f32.mrf.mxu0
      %v8285 = vadd.f32 0.0, %v8284
      %8286 = vmatmul.bf16.gmra.mxu0 %v8215
      %v8287 = vpop.f32.mrf.mxu0
      %v8288 = vadd.f32 0.0, %v8287
      %v8289 = vpop.f32.mrf.mxu0
      %v8290 = vadd.f32 0.0, %v8289
      %8291 = vmatmul.bf16.gmra.mxu0 %v8218
      %v8292 = vpop.f32.mrf.mxu0
      %v8293 = vadd.f32 0.0, %v8292
      %v8294 = vpop.f32.mrf.mxu0
      %v8295 = vadd.f32 0.0, %v8294
      %8296 = vmatmul.bf16.gmra.mxu0 %v8221
      %v8297 = vpop.f32.mrf.mxu0
      %v8298 = vadd.f32 0.0, %v8297
      %v8299 = vpop.f32.mrf.mxu0
      %v8300 = vadd.f32 0.0, %v8299
      %8301 = vmatmul.bf16.gmra.mxu0 %v8224
      %v8302 = vpop.f32.mrf.mxu0
      %v8303 = vadd.f32 0.0, %v8302
      %v8304 = vpop.f32.mrf.mxu0
      %v8305 = vadd.f32 0.0, %v8304
      %8306 = vmatmul.bf16.gmra.mxu0 %v8227
      %v8307 = vpop.f32.mrf.mxu0
      %v8308 = vadd.f32 0.0, %v8307
      %v8309 = vpop.f32.mrf.mxu0
      %v8310 = vadd.f32 0.0, %v8309
      %8311 = vmatmul.bf16.gmra.mxu0 %v8230
      %v8312 = vpop.f32.mrf.mxu0
      %v8313 = vadd.f32 0.0, %v8312
      %v8314 = vpop.f32.mrf.mxu0
      %v8315 = vadd.f32 0.0, %v8314
      %8316 = vmatmul.bf16.gmra.mxu0 %v8233
      %v8317 = vpop.f32.mrf.mxu0
      %v8318 = vadd.f32 0.0, %v8317
      %v8319 = vpop.f32.mrf.mxu0
      %v8320 = vadd.f32 0.0, %v8319
      %8321 = vmatmul.bf16.gmra.mxu0 %v8236
      %v8322 = vpop.f32.mrf.mxu0
      %v8323 = vadd.f32 0.0, %v8322
      %v8324 = vpop.f32.mrf.mxu0
      %v8325 = vadd.f32 0.0, %v8324
      %8326 = vdwg.mxu0
      %v8327 = vadd.f32 %v8093, %v8248
      %v8328 = vadd.f32 %v8094, %v8250
      %v8329 = vadd.f32 %v8095, %v8253
      %v8330 = vadd.f32 %v8096, %v8255
      %v8331 = vadd.f32 %v8097, %v8258
      %v8332 = vadd.f32 %v8098, %v8260
      %v8333 = vadd.f32 %v8099, %v8263
      %v8334 = vadd.f32 %v8100, %v8265
      %v8335 = vadd.f32 %v8101, %v8268
      %v8336 = vadd.f32 %v8102, %v8270
      %v8337 = vadd.f32 %v8103, %v8273
      %v8338 = vadd.f32 %v8104, %v8275
      %v8339 = vadd.f32 %v8105, %v8278
      %v8340 = vadd.f32 %v8106, %v8280
      %v8341 = vadd.f32 %v8107, %v8283
      %v8342 = vadd.f32 %v8108, %v8285
      %v8343 = vadd.f32 %v8109, %v8288
      %v8344 = vadd.f32 %v8110, %v8290
      %v8345 = vadd.f32 %v8111, %v8293
      %v8346 = vadd.f32 %v8112, %v8295
      %v8347 = vadd.f32 %v8113, %v8298
      %v8348 = vadd.f32 %v8114, %v8300
      %v8349 = vadd.f32 %v8115, %v8303
      %v8350 = vadd.f32 %v8116, %v8305
      %v8351 = vadd.f32 %v8117, %v8308
      %v8352 = vadd.f32 %v8118, %v8310
      %v8353 = vadd.f32 %v8119, %v8313
      %v8354 = vadd.f32 %v8120, %v8315
      %v8355 = vadd.f32 %v8121, %v8318
      %v8356 = vadd.f32 %v8122, %v8320
      %v8357 = vadd.f32 %v8123, %v8323
      %v8358 = vadd.f32 %v8124, %v8325
      %v8359 = vld [vmem:[#allocation2 + $0x66] sm:$0xff]
      %v8360 = vld [vmem:[#allocation2 + $0x6e] sm:$0xff]
      %v8361 = vld [vmem:[#allocation2 + $0x76] sm:$0xff]
      %v8362 = vld [vmem:[#allocation2 + $0x7e] sm:$0xff]
      %v8363 = vld [vmem:[#allocation2 + $0x86] sm:$0xff]
      %v8364 = vld [vmem:[#allocation2 + $0x8e] sm:$0xff]
      %v8365 = vld [vmem:[#allocation2 + $0x96] sm:$0xff]
      %v8366 = vld [vmem:[#allocation2 + $0x9e] sm:$0xff]
      %v8367 = vld [vmem:[#allocation2 + $0xa6] sm:$0xff]
      %v8368 = vld [vmem:[#allocation2 + $0xae] sm:$0xff]
      %v8369 = vld [vmem:[#allocation2 + $0xb6] sm:$0xff]
      %v8370 = vld [vmem:[#allocation2 + $0xbe] sm:$0xff]
      %v8371 = vld [vmem:[#allocation2 + $0xc6] sm:$0xff]
      %v8372 = vld [vmem:[#allocation2 + $0xce] sm:$0xff]
      %v8373 = vld [vmem:[#allocation2 + $0xd6] sm:$0xff]
      %v8374 = vld [vmem:[#allocation2 + $0xde] sm:$0xff]
      %v8375 = vld [vmem:[#allocation2 + $0xe6] sm:$0xff]
      %v8376 = vld [vmem:[#allocation2 + $0xee] sm:$0xff]
      %v8377 = vld [vmem:[#allocation2 + $0xf6] sm:$0xff]
      %v8378 = vld [vmem:[#allocation2 + $0xfe] sm:$0xff]
      %v8379 = vld [vmem:[#allocation2 + $0x106] sm:$0xff]
      %v8380 = vld [vmem:[#allocation2 + $0x10e] sm:$0xff]
      %v8381 = vld [vmem:[#allocation2 + $0x116] sm:$0xff]
      %v8382 = vld [vmem:[#allocation2 + $0x11e] sm:$0xff]
      %v8383 = vld [vmem:[#allocation2 + $0x126] sm:$0xff]
      %v8384 = vld [vmem:[#allocation2 + $0x12e] sm:$0xff]
      %v8385 = vld [vmem:[#allocation2 + $0x136] sm:$0xff]
      %v8386 = vld [vmem:[#allocation2 + $0x13e] sm:$0xff]
      %v8387 = vld [vmem:[#allocation2 + $0x146] sm:$0xff]
      %v8388 = vld [vmem:[#allocation2 + $0x14e] sm:$0xff]
      %v8389 = vld [vmem:[#allocation2 + $0x156] sm:$0xff]
      %v8390 = vld [vmem:[#allocation2 + $0x15e] sm:$0xff]
      %v8391 = vpack.c.bf16 %v8360, %v8359
      %v8392 = vpack.c.bf16 %v8362, %v8361
      %v8393 = vpack.c.bf16 %v8364, %v8363
      %v8394 = vpack.c.bf16 %v8366, %v8365
      %v8395 = vpack.c.bf16 %v8368, %v8367
      %v8396 = vpack.c.bf16 %v8370, %v8369
      %v8397 = vpack.c.bf16 %v8372, %v8371
      %v8398 = vpack.c.bf16 %v8374, %v8373
      %v8399 = vpack.c.bf16 %v8376, %v8375
      %v8400 = vpack.c.bf16 %v8378, %v8377
      %v8401 = vpack.c.bf16 %v8380, %v8379
      %v8402 = vpack.c.bf16 %v8382, %v8381
      %v8403 = vpack.c.bf16 %v8384, %v8383
      %v8404 = vpack.c.bf16 %v8386, %v8385
      %v8405 = vpack.c.bf16 %v8388, %v8387
      %v8406 = vpack.c.bf16 %v8390, %v8389
      %s8407 = scalar_lea.vmem %s4, 416
      %v8408 = vld [vmem:[%s8407] sm:$0xf]
      %v8409 = vld [vmem:[%s8407 + $0x4] sm:$0xf]
      %v8410 = vld [vmem:[%s8407 + $0x8] sm:$0xf]
      %v8411 = vld [vmem:[%s8407 + $0xc] sm:$0xf]
      %v8416 = vunpack.c.l.b16 %v8408
      %v8417 = vunpack.c.l.b16 %v8409
      %v8418 = vunpack.c.l.b16 %v8410
      %v8419 = vunpack.c.l.b16 %v8411
      %v8420 = vpack.c.b16 %v8417, %v8416
      %v8421 = vpack.c.b16 %v8419, %v8418
      %v8425 = vsel %vm2480, %v8391, 0
      %v8428 = vsel %vm2480, %v8392, 0
      %v8431 = vsel %vm2480, %v8393, 0
      %v8434 = vsel %vm2480, %v8394, 0
      %v8437 = vsel %vm2480, %v8395, 0
      %v8440 = vsel %vm2480, %v8396, 0
      %v8443 = vsel %vm2480, %v8397, 0
      %v8446 = vsel %vm2480, %v8398, 0
      %v8449 = vsel %vm2480, %v8399, 0
      %v8452 = vsel %vm2480, %v8400, 0
      %v8455 = vsel %vm2480, %v8401, 0
      %v8458 = vsel %vm2480, %v8402, 0
      %v8461 = vsel %vm2480, %v8403, 0
      %v8464 = vsel %vm2480, %v8404, 0
      %v8467 = vsel %vm2480, %v8405, 0
      %v8470 = vsel %vm2480, %v8406, 0
      %8472 = vmatpush.bf16.msra.mxu0 0
      %8473 = vmatpush.bf16.msra.mxu0 0
      %8474 = vmatpush.bf16.msra.mxu0 0
      %8475 = vmatpush.bf16.msra.mxu0 0
      %8476 = vmatpush.bf16.msra.mxu0 0
      %8477 = vmatpush.bf16.msra.mxu0 0
      %8478 = vmatpush.bf16.msra.mxu0 %v8421
      %8479 = vmatpush.bf16.msra.mxu0 %v8420
      %8480 = vmatmul.bf16.gmra.mxu0 %v8425
      %v8481 = vpop.f32.mrf.mxu0
      %v8482 = vadd.f32 0.0, %v8481
      %v8483 = vpop.f32.mrf.mxu0
      %v8484 = vadd.f32 0.0, %v8483
      %8485 = vmatmul.bf16.gmra.mxu0 %v8428
      %v8486 = vpop.f32.mrf.mxu0
      %v8487 = vadd.f32 0.0, %v8486
      %v8488 = vpop.f32.mrf.mxu0
      %v8489 = vadd.f32 0.0, %v8488
      %8490 = vmatmul.bf16.gmra.mxu0 %v8431
      %v8491 = vpop.f32.mrf.mxu0
      %v8492 = vadd.f32 0.0, %v8491
      %v8493 = vpop.f32.mrf.mxu0
      %v8494 = vadd.f32 0.0, %v8493
      %8495 = vmatmul.bf16.gmra.mxu0 %v8434
      %v8496 = vpop.f32.mrf.mxu0
      %v8497 = vadd.f32 0.0, %v8496
      %v8498 = vpop.f32.mrf.mxu0
      %v8499 = vadd.f32 0.0, %v8498
      %8500 = vmatmul.bf16.gmra.mxu0 %v8437
      %v8501 = vpop.f32.mrf.mxu0
      %v8502 = vadd.f32 0.0, %v8501
      %v8503 = vpop.f32.mrf.mxu0
      %v8504 = vadd.f32 0.0, %v8503
      %8505 = vmatmul.bf16.gmra.mxu0 %v8440
      %v8506 = vpop.f32.mrf.mxu0
      %v8507 = vadd.f32 0.0, %v8506
      %v8508 = vpop.f32.mrf.mxu0
      %v8509 = vadd.f32 0.0, %v8508
      %8510 = vmatmul.bf16.gmra.mxu0 %v8443
      %v8511 = vpop.f32.mrf.mxu0
      %v8512 = vadd.f32 0.0, %v8511
      %v8513 = vpop.f32.mrf.mxu0
      %v8514 = vadd.f32 0.0, %v8513
      %8515 = vmatmul.bf16.gmra.mxu0 %v8446
      %v8516 = vpop.f32.mrf.mxu0
      %v8517 = vadd.f32 0.0, %v8516
      %v8518 = vpop.f32.mrf.mxu0
      %v8519 = vadd.f32 0.0, %v8518
      %8520 = vmatmul.bf16.gmra.mxu0 %v8449
      %v8521 = vpop.f32.mrf.mxu0
      %v8522 = vadd.f32 0.0, %v8521
      %v8523 = vpop.f32.mrf.mxu0
      %v8524 = vadd.f32 0.0, %v8523
      %8525 = vmatmul.bf16.gmra.mxu0 %v8452
      %v8526 = vpop.f32.mrf.mxu0
      %v8527 = vadd.f32 0.0, %v8526
      %v8528 = vpop.f32.mrf.mxu0
      %v8529 = vadd.f32 0.0, %v8528
      %8530 = vmatmul.bf16.gmra.mxu0 %v8455
      %v8531 = vpop.f32.mrf.mxu0
      %v8532 = vadd.f32 0.0, %v8531
      %v8533 = vpop.f32.mrf.mxu0
      %v8534 = vadd.f32 0.0, %v8533
      %8535 = vmatmul.bf16.gmra.mxu0 %v8458
      %v8536 = vpop.f32.mrf.mxu0
      %v8537 = vadd.f32 0.0, %v8536
      %v8538 = vpop.f32.mrf.mxu0
      %v8539 = vadd.f32 0.0, %v8538
      %8540 = vmatmul.bf16.gmra.mxu0 %v8461
      %v8541 = vpop.f32.mrf.mxu0
      %v8542 = vadd.f32 0.0, %v8541
      %v8543 = vpop.f32.mrf.mxu0
      %v8544 = vadd.f32 0.0, %v8543
      %8545 = vmatmul.bf16.gmra.mxu0 %v8464
      %v8546 = vpop.f32.mrf.mxu0
      %v8547 = vadd.f32 0.0, %v8546
      %v8548 = vpop.f32.mrf.mxu0
      %v8549 = vadd.f32 0.0, %v8548
      %8550 = vmatmul.bf16.gmra.mxu0 %v8467
      %v8551 = vpop.f32.mrf.mxu0
      %v8552 = vadd.f32 0.0, %v8551
      %v8553 = vpop.f32.mrf.mxu0
      %v8554 = vadd.f32 0.0, %v8553
      %8555 = vmatmul.bf16.gmra.mxu0 %v8470
      %v8556 = vpop.f32.mrf.mxu0
      %v8557 = vadd.f32 0.0, %v8556
      %v8558 = vpop.f32.mrf.mxu0
      %v8559 = vadd.f32 0.0, %v8558
      %8560 = vdwg.mxu0
      %v8561 = vadd.f32 %v8327, %v8482
      %v8562 = vadd.f32 %v8328, %v8484
      %v8563 = vadd.f32 %v8329, %v8487
      %v8564 = vadd.f32 %v8330, %v8489
      %v8565 = vadd.f32 %v8331, %v8492
      %v8566 = vadd.f32 %v8332, %v8494
      %v8567 = vadd.f32 %v8333, %v8497
      %v8568 = vadd.f32 %v8334, %v8499
      %v8569 = vadd.f32 %v8335, %v8502
      %v8570 = vadd.f32 %v8336, %v8504
      %v8571 = vadd.f32 %v8337, %v8507
      %v8572 = vadd.f32 %v8338, %v8509
      %v8573 = vadd.f32 %v8339, %v8512
      %v8574 = vadd.f32 %v8340, %v8514
      %v8575 = vadd.f32 %v8341, %v8517
      %v8576 = vadd.f32 %v8342, %v8519
      %v8577 = vadd.f32 %v8343, %v8522
      %v8578 = vadd.f32 %v8344, %v8524
      %v8579 = vadd.f32 %v8345, %v8527
      %v8580 = vadd.f32 %v8346, %v8529
      %v8581 = vadd.f32 %v8347, %v8532
      %v8582 = vadd.f32 %v8348, %v8534
      %v8583 = vadd.f32 %v8349, %v8537
      %v8584 = vadd.f32 %v8350, %v8539
      %v8585 = vadd.f32 %v8351, %v8542
      %v8586 = vadd.f32 %v8352, %v8544
      %v8587 = vadd.f32 %v8353, %v8547
      %v8588 = vadd.f32 %v8354, %v8549
      %v8589 = vadd.f32 %v8355, %v8552
      %v8590 = vadd.f32 %v8356, %v8554
      %v8591 = vadd.f32 %v8357, %v8557
      %v8592 = vadd.f32 %v8358, %v8559
      %v8593 = vld [vmem:[%s5 + $0x2] sm:$0x1]
      %v8594 = vperm.slane %v8593, 0
      %v8595 = vadd.f32 %v8561, %v8594
      %v8596 = vadd.f32 %v8562, %v8594
      %v8597 = vadd.f32 %v8563, %v8594
      %v8598 = vadd.f32 %v8564, %v8594
      %v8599 = vadd.f32 %v8565, %v8594
      %v8600 = vadd.f32 %v8566, %v8594
      %v8601 = vadd.f32 %v8567, %v8594
      %v8602 = vadd.f32 %v8568, %v8594
      %v8603 = vadd.f32 %v8569, %v8594
      %v8604 = vadd.f32 %v8570, %v8594
      %v8605 = vadd.f32 %v8571, %v8594
      %v8606 = vadd.f32 %v8572, %v8594
      %v8607 = vadd.f32 %v8573, %v8594
      %v8608 = vadd.f32 %v8574, %v8594
      %v8609 = vadd.f32 %v8575, %v8594
      %v8610 = vadd.f32 %v8576, %v8594
      %v8611 = vadd.f32 %v8577, %v8594
      %v8612 = vadd.f32 %v8578, %v8594
      %v8613 = vadd.f32 %v8579, %v8594
      %v8614 = vadd.f32 %v8580, %v8594
      %v8615 = vadd.f32 %v8581, %v8594
      %v8616 = vadd.f32 %v8582, %v8594
      %v8617 = vadd.f32 %v8583, %v8594
      %v8618 = vadd.f32 %v8584, %v8594
      %v8619 = vadd.f32 %v8585, %v8594
      %v8620 = vadd.f32 %v8586, %v8594
      %v8621 = vadd.f32 %v8587, %v8594
      %v8622 = vadd.f32 %v8588, %v8594
      %v8623 = vadd.f32 %v8589, %v8594
      %v8624 = vadd.f32 %v8590, %v8594
      %v8625 = vadd.f32 %v8591, %v8594
      %v8626 = vadd.f32 %v8592, %v8594
      %v8627 = vpack.c.bf16 %v8595, %v8595
      %v8628 = vpack.c.bf16 %v8596, %v8596
      %v8629 = vpack.c.bf16 %v8597, %v8597
      %v8630 = vpack.c.bf16 %v8598, %v8598
      %v8631 = vpack.c.bf16 %v8599, %v8599
      %v8632 = vpack.c.bf16 %v8600, %v8600
      %v8633 = vpack.c.bf16 %v8601, %v8601
      %v8634 = vpack.c.bf16 %v8602, %v8602
      %v8635 = vpack.c.bf16 %v8603, %v8603
      %v8636 = vpack.c.bf16 %v8604, %v8604
      %v8637 = vpack.c.bf16 %v8605, %v8605
      %v8638 = vpack.c.bf16 %v8606, %v8606
      %v8639 = vpack.c.bf16 %v8607, %v8607
      %v8640 = vpack.c.bf16 %v8608, %v8608
      %v8641 = vpack.c.bf16 %v8609, %v8609
      %v8642 = vpack.c.bf16 %v8610, %v8610
      %v8643 = vpack.c.bf16 %v8611, %v8611
      %v8644 = vpack.c.bf16 %v8612, %v8612
      %v8645 = vpack.c.bf16 %v8613, %v8613
      %v8646 = vpack.c.bf16 %v8614, %v8614
      %v8647 = vpack.c.bf16 %v8615, %v8615
      %v8648 = vpack.c.bf16 %v8616, %v8616
      %v8649 = vpack.c.bf16 %v8617, %v8617
      %v8650 = vpack.c.bf16 %v8618, %v8618
      %v8651 = vpack.c.bf16 %v8619, %v8619
      %v8652 = vpack.c.bf16 %v8620, %v8620
      %v8653 = vpack.c.bf16 %v8621, %v8621
      %v8654 = vpack.c.bf16 %v8622, %v8622
      %v8655 = vpack.c.bf16 %v8623, %v8623
      %v8656 = vpack.c.bf16 %v8624, %v8624
      %v8657 = vpack.c.bf16 %v8625, %v8625
      %v8658 = vpack.c.bf16 %v8626, %v8626
      %v8691 = vunpack.c.l.b16 %v4603
      %v8692 = vunpack.c.l.b16 %v4604
      %v8693 = vunpack.c.l.b16 %v4605
      %v8694 = vunpack.c.l.b16 %v4606
      %v8695 = vunpack.c.l.b16 %v4607
      %v8696 = vunpack.c.l.b16 %v4608
      %v8697 = vunpack.c.l.b16 %v4609
      %v8698 = vunpack.c.l.b16 %v4610
      %v8699 = vunpack.c.l.b16 %v4611
      %v8700 = vunpack.c.l.b16 %v4612
      %v8701 = vunpack.c.l.b16 %v4613
      %v8702 = vunpack.c.l.b16 %v4614
      %v8703 = vunpack.c.l.b16 %v4615
      %v8704 = vunpack.c.l.b16 %v4616
      %v8705 = vunpack.c.l.b16 %v4617
      %v8706 = vunpack.c.l.b16 %v4618
      %v8707 = vunpack.c.l.b16 %v4619
      %v8708 = vunpack.c.l.b16 %v4620
      %v8709 = vunpack.c.l.b16 %v4621
      %v8710 = vunpack.c.l.b16 %v4622
      %v8711 = vunpack.c.l.b16 %v4623
      %v8712 = vunpack.c.l.b16 %v4624
      %v8713 = vunpack.c.l.b16 %v4625
      %v8714 = vunpack.c.l.b16 %v4626
      %v8715 = vunpack.c.l.b16 %v4627
      %v8716 = vunpack.c.l.b16 %v4628
      %v8717 = vunpack.c.l.b16 %v4629
      %v8718 = vunpack.c.l.b16 %v4630
      %v8719 = vunpack.c.l.b16 %v4631
      %v8720 = vunpack.c.l.b16 %v4632
      %v8721 = vunpack.c.l.b16 %v4633
      %v8722 = vunpack.c.l.b16 %v4634
      %v8723 = vpack.c.b16 %v8692, %v8691
      %v8724 = vpack.c.b16 %v8694, %v8693
      %v8725 = vpack.c.b16 %v8696, %v8695
      %v8726 = vpack.c.b16 %v8698, %v8697
      %v8727 = vpack.c.b16 %v8700, %v8699
      %v8728 = vpack.c.b16 %v8702, %v8701
      %v8729 = vpack.c.b16 %v8704, %v8703
      %v8730 = vpack.c.b16 %v8706, %v8705
      %v8731 = vpack.c.b16 %v8708, %v8707
      %v8732 = vpack.c.b16 %v8710, %v8709
      %v8733 = vpack.c.b16 %v8712, %v8711
      %v8734 = vpack.c.b16 %v8714, %v8713
      %v8735 = vpack.c.b16 %v8716, %v8715
      %v8736 = vpack.c.b16 %v8718, %v8717
      %v8737 = vpack.c.b16 %v8720, %v8719
      %v8738 = vpack.c.b16 %v8722, %v8721
      %v8771 = vunpack.c.l.b16 %v6615
      %v8772 = vunpack.c.l.b16 %v6616
      %v8773 = vunpack.c.l.b16 %v6617
      %v8774 = vunpack.c.l.b16 %v6618
      %v8775 = vunpack.c.l.b16 %v6619
      %v8776 = vunpack.c.l.b16 %v6620
      %v8777 = vunpack.c.l.b16 %v6621
      %v8778 = vunpack.c.l.b16 %v6622
      %v8779 = vunpack.c.l.b16 %v6623
      %v8780 = vunpack.c.l.b16 %v6624
      %v8781 = vunpack.c.l.b16 %v6625
      %v8782 = vunpack.c.l.b16 %v6626
      %v8783 = vunpack.c.l.b16 %v6627
      %v8784 = vunpack.c.l.b16 %v6628
      %v8785 = vunpack.c.l.b16 %v6629
      %v8786 = vunpack.c.l.b16 %v6630
      %v8787 = vunpack.c.l.b16 %v6631
      %v8788 = vunpack.c.l.b16 %v6632
      %v8789 = vunpack.c.l.b16 %v6633
      %v8790 = vunpack.c.l.b16 %v6634
      %v8791 = vunpack.c.l.b16 %v6635
      %v8792 = vunpack.c.l.b16 %v6636
      %v8793 = vunpack.c.l.b16 %v6637
      %v8794 = vunpack.c.l.b16 %v6638
      %v8795 = vunpack.c.l.b16 %v6639
      %v8796 = vunpack.c.l.b16 %v6640
      %v8797 = vunpack.c.l.b16 %v6641
      %v8798 = vunpack.c.l.b16 %v6642
      %v8799 = vunpack.c.l.b16 %v6643
      %v8800 = vunpack.c.l.b16 %v6644
      %v8801 = vunpack.c.l.b16 %v6645
      %v8802 = vunpack.c.l.b16 %v6646
      %v8803 = vpack.c.b16 %v8772, %v8771
      %v8804 = vpack.c.b16 %v8774, %v8773
      %v8805 = vpack.c.b16 %v8776, %v8775
      %v8806 = vpack.c.b16 %v8778, %v8777
      %v8807 = vpack.c.b16 %v8780, %v8779
      %v8808 = vpack.c.b16 %v8782, %v8781
      %v8809 = vpack.c.b16 %v8784, %v8783
      %v8810 = vpack.c.b16 %v8786, %v8785
      %v8811 = vpack.c.b16 %v8788, %v8787
      %v8812 = vpack.c.b16 %v8790, %v8789
      %v8813 = vpack.c.b16 %v8792, %v8791
      %v8814 = vpack.c.b16 %v8794, %v8793
      %v8815 = vpack.c.b16 %v8796, %v8795
      %v8816 = vpack.c.b16 %v8798, %v8797
      %v8817 = vpack.c.b16 %v8800, %v8799
      %v8818 = vpack.c.b16 %v8802, %v8801
      %8819 = vrot.lane.b32.xlu0 %v8803, 32
      %v8820 = vpop.permute.xlu0 %8819
      %8821 = vrot.lane.b32.xlu0 %v8804, 32
      %v8822 = vpop.permute.xlu0 %8821
      %8823 = vrot.lane.b32.xlu0 %v8805, 32
      %v8824 = vpop.permute.xlu0 %8823
      %8825 = vrot.lane.b32.xlu0 %v8806, 32
      %v8826 = vpop.permute.xlu0 %8825
      %8827 = vrot.lane.b32.xlu0 %v8807, 32
      %v8828 = vpop.permute.xlu0 %8827
      %8829 = vrot.lane.b32.xlu0 %v8808, 32
      %v8830 = vpop.permute.xlu0 %8829
      %8831 = vrot.lane.b32.xlu0 %v8809, 32
      %v8832 = vpop.permute.xlu0 %8831
      %8833 = vrot.lane.b32.xlu0 %v8810, 32
      %v8834 = vpop.permute.xlu0 %8833
      %8835 = vrot.lane.b32.xlu0 %v8811, 32
      %v8836 = vpop.permute.xlu0 %8835
      %8837 = vrot.lane.b32.xlu0 %v8812, 32
      %v8838 = vpop.permute.xlu0 %8837
      %8839 = vrot.lane.b32.xlu0 %v8813, 32
      %v8840 = vpop.permute.xlu0 %8839
      %8841 = vrot.lane.b32.xlu0 %v8814, 32
      %v8842 = vpop.permute.xlu0 %8841
      %8843 = vrot.lane.b32.xlu0 %v8815, 32
      %v8844 = vpop.permute.xlu0 %8843
      %8845 = vrot.lane.b32.xlu0 %v8816, 32
      %v8846 = vpop.permute.xlu0 %8845
      %8847 = vrot.lane.b32.xlu0 %v8817, 32
      %v8848 = vpop.permute.xlu0 %8847
      %8849 = vrot.lane.b32.xlu0 %v8818, 32
      %v8850 = vpop.permute.xlu0 %8849
      %v8883 = vunpack.c.l.b16 %v8627
      %v8884 = vunpack.c.l.b16 %v8628
      %v8885 = vunpack.c.l.b16 %v8629
      %v8886 = vunpack.c.l.b16 %v8630
      %v8887 = vunpack.c.l.b16 %v8631
      %v8888 = vunpack.c.l.b16 %v8632
      %v8889 = vunpack.c.l.b16 %v8633
      %v8890 = vunpack.c.l.b16 %v8634
      %v8891 = vunpack.c.l.b16 %v8635
      %v8892 = vunpack.c.l.b16 %v8636
      %v8893 = vunpack.c.l.b16 %v8637
      %v8894 = vunpack.c.l.b16 %v8638
      %v8895 = vunpack.c.l.b16 %v8639
      %v8896 = vunpack.c.l.b16 %v8640
      %v8897 = vunpack.c.l.b16 %v8641
      %v8898 = vunpack.c.l.b16 %v8642
      %v8899 = vunpack.c.l.b16 %v8643
      %v8900 = vunpack.c.l.b16 %v8644
      %v8901 = vunpack.c.l.b16 %v8645
      %v8902 = vunpack.c.l.b16 %v8646
      %v8903 = vunpack.c.l.b16 %v8647
      %v8904 = vunpack.c.l.b16 %v8648
      %v8905 = vunpack.c.l.b16 %v8649
      %v8906 = vunpack.c.l.b16 %v8650
      %v8907 = vunpack.c.l.b16 %v8651
      %v8908 = vunpack.c.l.b16 %v8652
      %v8909 = vunpack.c.l.b16 %v8653
      %v8910 = vunpack.c.l.b16 %v8654
      %v8911 = vunpack.c.l.b16 %v8655
      %v8912 = vunpack.c.l.b16 %v8656
      %v8913 = vunpack.c.l.b16 %v8657
      %v8914 = vunpack.c.l.b16 %v8658
      %v8915 = vpack.c.b16 %v8884, %v8883
      %v8916 = vpack.c.b16 %v8886, %v8885
      %v8917 = vpack.c.b16 %v8888, %v8887
      %v8918 = vpack.c.b16 %v8890, %v8889
      %v8919 = vpack.c.b16 %v8892, %v8891
      %v8920 = vpack.c.b16 %v8894, %v8893
      %v8921 = vpack.c.b16 %v8896, %v8895
      %v8922 = vpack.c.b16 %v8898, %v8897
      %v8923 = vpack.c.b16 %v8900, %v8899
      %v8924 = vpack.c.b16 %v8902, %v8901
      %v8925 = vpack.c.b16 %v8904, %v8903
      %v8926 = vpack.c.b16 %v8906, %v8905
      %v8927 = vpack.c.b16 %v8908, %v8907
      %v8928 = vpack.c.b16 %v8910, %v8909
      %v8929 = vpack.c.b16 %v8912, %v8911
      %v8930 = vpack.c.b16 %v8914, %v8913
      %8931 = vrot.lane.b32.xlu0 %v8915, 64
      %v8932 = vpop.permute.xlu0 %8931
      %8933 = vrot.lane.b32.xlu0 %v8916, 64
      %v8934 = vpop.permute.xlu0 %8933
      %8935 = vrot.lane.b32.xlu0 %v8917, 64
      %v8936 = vpop.permute.xlu0 %8935
      %8937 = vrot.lane.b32.xlu0 %v8918, 64
      %v8938 = vpop.permute.xlu0 %8937
      %8939 = vrot.lane.b32.xlu0 %v8919, 64
      %v8940 = vpop.permute.xlu0 %8939
      %8941 = vrot.lane.b32.xlu0 %v8920, 64
      %v8942 = vpop.permute.xlu0 %8941
      %8943 = vrot.lane.b32.xlu0 %v8921, 64
      %v8944 = vpop.permute.xlu0 %8943
      %8945 = vrot.lane.b32.xlu0 %v8922, 64
      %v8946 = vpop.permute.xlu0 %8945
      %8947 = vrot.lane.b32.xlu0 %v8923, 64
      %v8948 = vpop.permute.xlu0 %8947
      %8949 = vrot.lane.b32.xlu0 %v8924, 64
      %v8950 = vpop.permute.xlu0 %8949
      %8951 = vrot.lane.b32.xlu0 %v8925, 64
      %v8952 = vpop.permute.xlu0 %8951
      %8953 = vrot.lane.b32.xlu0 %v8926, 64
      %v8954 = vpop.permute.xlu0 %8953
      %8955 = vrot.lane.b32.xlu0 %v8927, 64
      %v8956 = vpop.permute.xlu0 %8955
      %8957 = vrot.lane.b32.xlu0 %v8928, 64
      %v8958 = vpop.permute.xlu0 %8957
      %8959 = vrot.lane.b32.xlu0 %v8929, 64
      %v8960 = vpop.permute.xlu0 %8959
      %8961 = vrot.lane.b32.xlu0 %v8930, 64
      %v8962 = vpop.permute.xlu0 %8961
      %v8965 = vsel %vm2480, %v8723, %v8820
      %v8968 = vsel %vm2480, %v8724, %v8822
      %v8971 = vsel %vm2480, %v8725, %v8824
      %v8974 = vsel %vm2480, %v8726, %v8826
      %v8977 = vsel %vm2480, %v8727, %v8828
      %v8980 = vsel %vm2480, %v8728, %v8830
      %v8983 = vsel %vm2480, %v8729, %v8832
      %v8986 = vsel %vm2480, %v8730, %v8834
      %v8989 = vsel %vm2480, %v8731, %v8836
      %v8992 = vsel %vm2480, %v8732, %v8838
      %v8995 = vsel %vm2480, %v8733, %v8840
      %v8998 = vsel %vm2480, %v8734, %v8842
      %v9001 = vsel %vm2480, %v8735, %v8844
      %v9004 = vsel %vm2480, %v8736, %v8846
      %v9007 = vsel %vm2480, %v8737, %v8848
      %v9010 = vsel %vm2480, %v8738, %v8850
      %vm9011 = vcmask 523264
      %v9013 = vsel %vm9011, %v8965, %v8932
      %v9015 = vsel %vm9011, %v8968, %v8934
      %v9017 = vsel %vm9011, %v8971, %v8936
      %v9019 = vsel %vm9011, %v8974, %v8938
      %v9021 = vsel %vm9011, %v8977, %v8940
      %v9023 = vsel %vm9011, %v8980, %v8942
      %v9025 = vsel %vm9011, %v8983, %v8944
      %v9027 = vsel %vm9011, %v8986, %v8946
      %v9029 = vsel %vm9011, %v8989, %v8948
      %v9031 = vsel %vm9011, %v8992, %v8950
      %v9033 = vsel %vm9011, %v8995, %v8952
      %v9035 = vsel %vm9011, %v8998, %v8954
      %v9037 = vsel %vm9011, %v9001, %v8956
      %v9039 = vsel %vm9011, %v9004, %v8958
      %v9041 = vsel %vm9011, %v9007, %v8960
      %v9043 = vsel %vm9011, %v9010, %v8962
      %v9060 = vunpack.c.l.b16 %v9013
      %v9061 = vunpack.c.h.b16 %v9013
      %v9062 = vunpack.c.l.b16 %v9015
      %v9063 = vunpack.c.h.b16 %v9015
      %v9064 = vunpack.c.l.b16 %v9017
      %v9065 = vunpack.c.h.b16 %v9017
      %v9066 = vunpack.c.l.b16 %v9019
      %v9067 = vunpack.c.h.b16 %v9019
      %v9068 = vunpack.c.l.b16 %v9021
      %v9069 = vunpack.c.h.b16 %v9021
      %v9070 = vunpack.c.l.b16 %v9023
      %v9071 = vunpack.c.h.b16 %v9023
      %v9072 = vunpack.c.l.b16 %v9025
      %v9073 = vunpack.c.h.b16 %v9025
      %v9074 = vunpack.c.l.b16 %v9027
      %v9075 = vunpack.c.h.b16 %v9027
      %v9076 = vunpack.c.l.b16 %v9029
      %v9077 = vunpack.c.h.b16 %v9029
      %v9078 = vunpack.c.l.b16 %v9031
      %v9079 = vunpack.c.h.b16 %v9031
      %v9080 = vunpack.c.l.b16 %v9033
      %v9081 = vunpack.c.h.b16 %v9033
      %v9082 = vunpack.c.l.b16 %v9035
      %v9083 = vunpack.c.h.b16 %v9035
      %v9084 = vunpack.c.l.b16 %v9037
      %v9085 = vunpack.c.h.b16 %v9037
      %v9086 = vunpack.c.l.b16 %v9039
      %v9087 = vunpack.c.h.b16 %v9039
      %v9088 = vunpack.c.l.b16 %v9041
      %v9089 = vunpack.c.h.b16 %v9041
      %v9090 = vunpack.c.l.b16 %v9043
      %v9091 = vunpack.c.h.b16 %v9043
      %v9092 = vpack.c.b16 %v9060, %v9060
      %v9093 = vpack.c.b16 %v9061, %v9061
      %v9094 = vpack.c.b16 %v9062, %v9062
      %v9095 = vpack.c.b16 %v9063, %v9063
      %v9096 = vpack.c.b16 %v9064, %v9064
      %v9097 = vpack.c.b16 %v9065, %v9065
      %v9098 = vpack.c.b16 %v9066, %v9066
      %v9099 = vpack.c.b16 %v9067, %v9067
      %v9100 = vpack.c.b16 %v9068, %v9068
      %v9101 = vpack.c.b16 %v9069, %v9069
      %v9102 = vpack.c.b16 %v9070, %v9070
      %v9103 = vpack.c.b16 %v9071, %v9071
      %v9104 = vpack.c.b16 %v9072, %v9072
      %v9105 = vpack.c.b16 %v9073, %v9073
      %v9106 = vpack.c.b16 %v9074, %v9074
      %v9107 = vpack.c.b16 %v9075, %v9075
      %v9108 = vpack.c.b16 %v9076, %v9076
      %v9109 = vpack.c.b16 %v9077, %v9077
      %v9110 = vpack.c.b16 %v9078, %v9078
      %v9111 = vpack.c.b16 %v9079, %v9079
      %v9112 = vpack.c.b16 %v9080, %v9080
      %v9113 = vpack.c.b16 %v9081, %v9081
      %v9114 = vpack.c.b16 %v9082, %v9082
      %v9115 = vpack.c.b16 %v9083, %v9083
      %v9116 = vpack.c.b16 %v9084, %v9084
      %v9117 = vpack.c.b16 %v9085, %v9085
      %v9118 = vpack.c.b16 %v9086, %v9086
      %v9119 = vpack.c.b16 %v9087, %v9087
      %v9120 = vpack.c.b16 %v9088, %v9088
      %v9121 = vpack.c.b16 %v9089, %v9089
      %v9122 = vpack.c.b16 %v9090, %v9090
      %v9123 = vpack.c.b16 %v9091, %v9091
      %vm9156 = vcmask 781312
      %9157 = vst.msk [vmem:[%s251] sm:$0xf] %vm9156, %v9092
      %9158 = vst.msk [vmem:[%s251 + $0x4] sm:$0xf] %vm9156, %v9093
      %9159 = vst.msk [vmem:[%s251 + $0x8] sm:$0xf] %vm9156, %v9094
      %9160 = vst.msk [vmem:[%s251 + $0xc] sm:$0xf] %vm9156, %v9095
      %9161 = vst.msk [vmem:[%s251 + $0x10] sm:$0xf] %vm9156, %v9096
      %9162 = vst.msk [vmem:[%s251 + $0x14] sm:$0xf] %vm9156, %v9097
      %9163 = vst.msk [vmem:[%s251 + $0x18] sm:$0xf] %vm9156, %v9098
      %9164 = vst.msk [vmem:[%s251 + $0x1c] sm:$0xf] %vm9156, %v9099
      %9165 = vst.msk [vmem:[%s251 + $0x20] sm:$0xf] %vm9156, %v9100
      %9166 = vst.msk [vmem:[%s251 + $0x24] sm:$0xf] %vm9156, %v9101
      %9167 = vst.msk [vmem:[%s251 + $0x28] sm:$0xf] %vm9156, %v9102
      %9168 = vst.msk [vmem:[%s251 + $0x2c] sm:$0xf] %vm9156, %v9103
      %9169 = vst.msk [vmem:[%s251 + $0x30] sm:$0xf] %vm9156, %v9104
      %9170 = vst.msk [vmem:[%s251 + $0x34] sm:$0xf] %vm9156, %v9105
      %9171 = vst.msk [vmem:[%s251 + $0x38] sm:$0xf] %vm9156, %v9106
      %9172 = vst.msk [vmem:[%s251 + $0x3c] sm:$0xf] %vm9156, %v9107
      %9173 = vst.msk [vmem:[%s251 + $0x40] sm:$0xf] %vm9156, %v9108
      %9174 = vst.msk [vmem:[%s251 + $0x44] sm:$0xf] %vm9156, %v9109
      %9175 = vst.msk [vmem:[%s251 + $0x48] sm:$0xf] %vm9156, %v9110
      %9176 = vst.msk [vmem:[%s251 + $0x4c] sm:$0xf] %vm9156, %v9111
      %9177 = vst.msk [vmem:[%s251 + $0x50] sm:$0xf] %vm9156, %v9112
      %9178 = vst.msk [vmem:[%s251 + $0x54] sm:$0xf] %vm9156, %v9113
      %9179 = vst.msk [vmem:[%s251 + $0x58] sm:$0xf] %vm9156, %v9114
      %9180 = vst.msk [vmem:[%s251 + $0x5c] sm:$0xf] %vm9156, %v9115
      %9181 = vst.msk [vmem:[%s251 + $0x60] sm:$0xf] %vm9156, %v9116
      %9182 = vst.msk [vmem:[%s251 + $0x64] sm:$0xf] %vm9156, %v9117
      %9183 = vst.msk [vmem:[%s251 + $0x68] sm:$0xf] %vm9156, %v9118
      %9184 = vst.msk [vmem:[%s251 + $0x6c] sm:$0xf] %vm9156, %v9119
      %9185 = vst.msk [vmem:[%s251 + $0x70] sm:$0xf] %vm9156, %v9120
      %9186 = vst.msk [vmem:[%s251 + $0x74] sm:$0xf] %vm9156, %v9121
      %9187 = vst.msk [vmem:[%s251 + $0x78] sm:$0xf] %vm9156, %v9122
      %9188 = vst.msk [vmem:[%s251 + $0x7c] sm:$0xf] %vm9156, %v9123
      %p9189 = scmp.lt.s32.totalorder %s17, 1
      %s9190 = scalar_select %p9189, %s17, 1
      %s9191 = smul.addr %s9190, 32
      %s9192 = smul.addr %s9191, 4
      %s9193 = scalar_lea.vmem %s6, %s9192
      // Predicated region
      $region45: #{tpu_custom_call.1} parent=43 // pred_check
        %p9194 = pneg %p166
      $region46: #{tpu_custom_call.1} parent=43 // pred_check_branch
        %9196 = sbr.rel (%p9194) target = $region48
      $region47: #{tpu_custom_call.1} parent=43 // pred_region
        _
      $region48: #{tpu_custom_call.1} parent=43 // pred_fallthru
        _
    $region44: #{tpu_custom_call.1} parent=5 // pred_fallthru
      _
    %p9197 = scmp.le.s32.totalorder 2, %s12
    // Predicated region
    $region49: #{tpu_custom_call.1} parent=5 // pred_check
      %p9198 = pneg %p9197
    $region50: #{tpu_custom_call.1} parent=5 // pred_check_branch
      %9200 = sbr.rel (%p9198) target = $region52
    $region51: #{tpu_custom_call.1} parent=5 // pred_region
      %s9201 = ssub.s32 %s12, 2
      // Predicated region
      $region53: #{tpu_custom_call.1} parent=51 // pred_check
        %p9202 = pneg %p172
      $region54: #{tpu_custom_call.1} parent=51 // pred_check_branch
        %9204 = sbr.rel (%p9202) target = $region56
      $region55: #{tpu_custom_call.1} parent=51 // pred_region
        %p9205 = scmp.lt.s32.totalorder %s18, 1
        %s9206 = scalar_select %p9205, %s18, 1
        %s9207 = smul.addr %s9206, 32
        %s9208 = smul.addr %s9207, 4
        %s9209 = scalar_lea.vmem %s6, %s9208
      $region56: #{tpu_custom_call.1} parent=51 // pred_fallthru
        _
    $region52: #{tpu_custom_call.1} parent=5 // pred_fallthru
      _
  $region6: #{tpu_custom_call.1} parent=0 // loop_footer
    %s16 = sadd.s32 1, %s12
  $region7: #{tpu_custom_call.1} parent=0 // loop_footer_branch
    %11 = sbr.rel target = $region3
  $region8: #{tpu_custom_call.1} parent=0 // loop_exit
    _

</llo_original>
